<compile_context>
chip_gen: v7x
topology: tpu7x:2x2x1
jax: 0.10.0
libtpu: 0.0.40
codegen_flags: <defaults>
</compile_context>

<pallas_src>
import jax
import jax.numpy as jnp
from jax import lax
from jax.experimental import pallas as pl
from jax.experimental.pallas import tpu as pltpu


# ------------------------------ Pallas kernel --------------------------------

def _fused_net_kernel(cols_ref, w1_ref, b1_ref, w2_ref, b2_ref,
                      f1w_ref, f1b_ref, f2w_ref, f2b_ref,
                      o_ref, p2_ref, acc_ref):
    """conv1(+ReLU) + K-tiled conv2 + ReLU + fc1 + fc2 + log_softmax, one call.

    Grid: (K2 // tk,) over the conv2 contraction dim.  The conv2 weight blocks
    are the only HBM stream that matters (9 MiB bf16); everything else is a
    small grid-invariant VMEM resident, so the pipeliner issues that stream in
    the prologue and conv1 (under pl.when(k==0)) plus the per-step matmul hide
    under the next block's DMA.
    """
    k = pl.program_id(0)
    nb = o_ref.shape[0]                # batch
    c1 = w1_ref.shape[1]               # conv1 output channels (256)
    tk = w2_ref.shape[0]               # conv2 K tile (4608)
    n_pos = cols_ref.shape[0] // nb    # conv1 output positions = conv2 taps (36)
    pps = tk // c1                     # positions covered per K step (18)

    @pl.when(k == 0)
    def _():
        acc_ref[...] = jnp.zeros_like(acc_ref)
        # conv1 as one MXU matmul: relu(cols @ w1 + b1).
        # cols rows are (position, batch); columns (c_in, kh, kw), zero-padded.
        y1 = jnp.dot(cols_ref[...], w1_ref[...],
                     preferred_element_type=jnp.float32)
        y1 = jnp.maximum(y1 + b1_ref[...], 0.0).astype(p2_ref.dtype)
        # Scatter the position-major conv1 output into conv2's im2col layout
        # p2[step, n, pos_in_step*c1 + c] using static slices only (one-off).
        for p in range(n_pos):
            j = p % pps
            p2_ref[p // pps, :, j * c1:(j + 1) * c1] = y1[p * nb:(p + 1) * nb, :]

    # conv2 partial product for this K block (f32 accumulator resident in VMEM).
    acc_ref[...] += jnp.dot(p2_ref[k], w2_ref[...],
                            preferred_element_type=jnp.float32)

    @pl.when(k == pl.num_programs(0) - 1)
    def _():
        h = jnp.maximum(acc_ref[...] + b2_ref[...], 0.0)      # conv2 bias + ReLU
        z1 = jnp.dot(h.astype(jnp.bfloat16), f1w_ref[...],
                     preferred_element_type=jnp.float32) + f1b_ref[...]
        # fc2 in f32 (negligible cost, tighter parity with the f32 module).
        z2 = jnp.dot(z1, f2w_ref[...],
                     preferred_element_type=jnp.float32) + f2b_ref[...]
        m = jnp.max(z2, axis=-1, keepdims=True)
        s = z2 - m
        lse = jnp.log(jnp.sum(jnp.exp(s), axis=-1, keepdims=True))
        o_ref[...] = (s - lse).astype(o_ref.dtype)


def fused_net(cols, w1, b1, w2, b2, f1w, f1b, f2w, f2b, *, n_batch, tk=4608):
    """cols: (n_pos*n_batch, 256) bf16 -> log-probs (n_batch, 2) f32."""
    Mc, K1 = cols.shape            # (72, 256)
    _, C1 = w1.shape               # 256
    K2, C2 = w2.shape              # (9216, 512)
    O = f2w.shape[1]               # 2
    assert K2 % tk == 0 and tk % C1 == 0
    assert (Mc // n_batch) * C1 == K2
    n_steps = K2 // tk

    return pl.pallas_call(
        _fused_net_kernel,
        out_shape=jax.ShapeDtypeStruct((n_batch, O), jnp.float32),
        grid_spec=pltpu.PrefetchScalarGridSpec(
            num_scalar_prefetch=0,
            grid=(n_steps,),
            in_specs=[pl.BlockSpec((Mc, K1), lambda k: (0, 0)),   # im2col cols
                      pl.BlockSpec((K1, C1), lambda k: (0, 0)),   # conv1 weight
                      pl.BlockSpec((1, C1), lambda k: (0, 0)),    # conv1 bias
                      pl.BlockSpec((tk, C2), lambda k: (k, 0)),   # conv2 weight (K-tiled)
                      pl.BlockSpec((1, C2), lambda k: (0, 0)),    # conv2 bias
                      pl.BlockSpec((C2, C2), lambda k: (0, 0)),   # fc1 weight
                      pl.BlockSpec((1, C2), lambda k: (0, 0)),    # fc1 bias
                      pl.BlockSpec((C2, O), lambda k: (0, 0)),    # fc2 weight
                      pl.BlockSpec((1, O), lambda k: (0, 0))],    # fc2 bias
            out_specs=pl.BlockSpec((n_batch, O), lambda k: (0, 0)),
            scratch_shapes=[pltpu.VMEM((n_steps, n_batch, tk), jnp.bfloat16),
                            pltpu.VMEM((n_batch, C2), jnp.float32)]),
        compiler_params=pltpu.CompilerParams(
            dimension_semantics=("arbitrary",),
            vmem_limit_bytes=32 * 1024 * 1024),
    )(cols, w1, b1, w2, b2, f1w, f1b, f2w, f2b)


# ------------------------------ JAX glue --------------------------------------

def im2col_posmajor(x, k, stride):
    """x: (N, C, H, W) -> cols (Ho*Wo*N, C*k*k); rows (pos, n), cols (c, i, j)."""
    N, C, H, W = x.shape
    Ho = (H - k) // stride + 1
    Wo = (W - k) // stride + 1
    patches = []
    for i in range(k):
        for j in range(k):
            patches.append(x[:, :, i:i + stride * Ho:stride,
                               j:j + stride * Wo:stride])      # (N, C, Ho, Wo)
    p = jnp.stack(patches, axis=2).reshape(N, C, k, k, Ho, Wo)
    p = p.transpose(4, 5, 0, 1, 2, 3)                           # (Ho, Wo, N, C, k, k)
    return p.reshape(Ho * Wo * N, C * k * k), Ho, Wo


def prepare_params(params):
    """One-time (outside jit) weight re-layout + cast. No per-call copies."""
    (c1w, c1b, c2w, c2b, f1w, f1b, f2w, f2b) = params
    bf = jnp.bfloat16
    # conv1: OIHW (256,6,6,6) -> (216, 256) rows in (c, i, j) order, K padded to 256.
    w1 = c1w.reshape(c1w.shape[0], -1).T
    kpad = ((w1.shape[0] + 127) // 128) * 128
    w1 = jnp.pad(w1, ((0, kpad - w1.shape[0]), (0, 0))).astype(bf)
    # conv2: rows reordered to (i, j, c) so the conv1 output scattered as
    # (pos, channel) IS the conv2 im2col matrix: (9216, 512).
    w2 = c2w.transpose(0, 2, 3, 1).reshape(c2w.shape[0], -1).T.astype(bf)
    return (w1, c1b.reshape(1, -1),
            w2, c2b.reshape(1, -1),
            f1w.T.astype(bf), f1b.reshape(1, -1),
            f2w.T.astype(jnp.float32), f2b.reshape(1, -1))


def net_forward(x, prep):
    (w1p, b1p, w2p, b2p, f1wp, f1bp, f2wp, f2bp) = prep
    N = x.shape[0]
    # conv1 im2col (tiny XLA glue): (Ho*Wo*N, 216), zero-pad K to 256 (lane-dense).
    cols, Ho, Wo = im2col_posmajor(x.astype(jnp.bfloat16), 6, 2)
    K1 = w1p.shape[0]
    cols = jnp.pad(cols, ((0, 0), (0, K1 - cols.shape[1])))
    # Single fused Pallas call: conv1 + conv2 + fc1 + fc2 + log_softmax.
    return fused_net(cols, w1p, b1p, w2p, b2p, f1wp, f1bp, f2wp, f2bp, n_batch=N)


# --------------------------- references (for checks) --------------------------

def ref_forward_bf16(x, params):
    """Same math as the kernel: bf16 matmul inputs, f32 accumulation, f32 fc2."""
    (c1w, c1b, c2w, c2b, f1w, f1b, f2w, f2b) = params
    bf = jnp.bfloat16
    dn = ('NCHW', 'OIHW', 'NCHW')
    y = lax.conv_general_dilated(x.astype(bf), c1w.astype(bf), (2, 2), 'VALID',
                                 dimension_numbers=dn,
                                 preferred_element_type=jnp.float32)
    y = jnp.maximum(y + c1b[None, :, None, None], 0.0)
    y = lax.conv_general_dilated(y.astype(bf), c2w.astype(bf), (2, 2), 'VALID',
                                 dimension_numbers=dn,
                                 preferred_element_type=jnp.float32)
    y = jnp.maximum(y + c2b[None, :, None, None], 0.0)
    h = y.reshape(y.shape[0], -1)
    z1 = jnp.dot(h.astype(bf), f1w.T.astype(bf),
                 preferred_element_type=jnp.float32) + f1b
    z2 = jnp.dot(z1, f2w.T, preferred_element_type=jnp.float32) + f2b
    return jax.nn.log_softmax(z2, axis=1)


def ref_forward_f32(x, params):
    """Full-precision reference of the original module."""
    (c1w, c1b, c2w, c2b, f1w, f1b, f2w, f2b) = params
    dn = ('NCHW', 'OIHW', 'NCHW')
    y = lax.conv_general_dilated(x, c1w, (2, 2), 'VALID',
                                 dimension_numbers=dn) + c1b[None, :, None, None]
    y = jnp.maximum(y, 0.0)
    y = lax.conv_general_dilated(y, c2w, (2, 2), 'VALID',
                                 dimension_numbers=dn) + c2b[None, :, None, None]
    y = jnp.maximum(y, 0.0)
    y = y.reshape(y.shape[0], -1)
    y = y @ f1w.T + f1b
    y = y @ f2w.T + f2b
    return jax.nn.log_softmax(y, axis=1)


# ------------------------------ main ------------------------------------------

if __name__ == "__main__":
    ks = jax.random.split(jax.random.PRNGKey(0), 9)
    params = (
        jax.random.normal(ks[0], (256, 6, 6, 6), jnp.float32) * 0.05,   # conv1.weight
        jax.random.normal(ks[1], (256,), jnp.float32) * 0.05,           # conv1.bias
        jax.random.normal(ks[2], (512, 256, 6, 6), jnp.float32) * 0.01, # conv2.weight
        jax.random.normal(ks[3], (512,), jnp.float32) * 0.01,           # conv2.bias
        jax.random.normal(ks[4], (512, 512), jnp.float32) * 0.02,       # fc1.weight
        jax.random.normal(ks[5], (512,), jnp.float32) * 0.02,           # fc1.bias
        jax.random.normal(ks[6], (2, 512), jnp.float32) * 0.02,         # fc2.weight
        jax.random.normal(ks[7], (2,), jnp.float32) * 0.02,             # fc2.bias
    )
    # Shape implied by the module: fc1 expects 512 features after two k=6, s=2
    # convs -> 6 input channels, 16x16 spatial.
    x = jax.random.normal(ks[8], (2, 6, 16, 16), jnp.float32)

    prep = prepare_params(params)   # one-time re-layout, outside jit

    out = jax.block_until_ready(jax.jit(net_forward)(x, prep))

    ref_bf = jax.block_until_ready(jax.jit(ref_forward_bf16)(x, params))
    ref_f32 = jax.block_until_ready(jax.jit(ref_forward_f32)(x, params))

    assert out.shape == (2, 2)
    # Tight check against a reference using identical bf16-input / f32-accum math.
    assert jnp.allclose(out, ref_bf, atol=1e-3, rtol=1e-3), (out, ref_bf)
    # Loose sanity check against the full-f32 module semantics.
    assert jnp.allclose(out, ref_f32, atol=5e-2, rtol=5e-2), (out, ref_f32)

    print("KERNEL_OK")
</pallas_src>

<mosaic_0001>
module attributes {stable_mosaic.version = 11 : i64} {
  func.func @_fused_net_kernel(%arg0: i32, %arg1: memref<72x256xbf16, #tpu.memory_space<vmem>>, %arg2: memref<256x256xbf16, #tpu.memory_space<vmem>>, %arg3: memref<1x256xf32, #tpu.memory_space<vmem>>, %arg4: memref<4608x512xbf16, #tpu.memory_space<vmem>>, %arg5: memref<1x512xf32, #tpu.memory_space<vmem>>, %arg6: memref<512x512xbf16, #tpu.memory_space<vmem>>, %arg7: memref<1x512xf32, #tpu.memory_space<vmem>>, %arg8: memref<512x2xf32, #tpu.memory_space<vmem>>, %arg9: memref<1x2xf32, #tpu.memory_space<vmem>>, %arg10: memref<2x2xf32, #tpu.memory_space<vmem>>, %arg11: memref<2x2x4608xbf16, #tpu.memory_space<vmem>>, %arg12: memref<2x512xf32, #tpu.memory_space<vmem>>) attributes {dimension_semantics = [#tpu.dimension_semantics<arbitrary>], iteration_bounds = array<i64: 2>, scalar_prefetch = 0 : i64, scratch_operands = 2 : i64, tpu.core_type = #tpu.core_type<tc>, window_params = [{pipeline_mode = #tpu.pipeline_mode<synchronous>, transform_indices = @transform_0, window_bounds = array<i64: 72, 256>}, {pipeline_mode = #tpu.pipeline_mode<synchronous>, transform_indices = @transform_1, window_bounds = array<i64: 256, 256>}, {pipeline_mode = #tpu.pipeline_mode<synchronous>, transform_indices = @transform_2, window_bounds = array<i64: 1, 256>}, {transform_indices = @transform_3, window_bounds = array<i64: 4608, 512>}, {pipeline_mode = #tpu.pipeline_mode<synchronous>, transform_indices = @transform_4, window_bounds = array<i64: 1, 512>}, {pipeline_mode = #tpu.pipeline_mode<synchronous>, transform_indices = @transform_5, window_bounds = array<i64: 512, 512>}, {pipeline_mode = #tpu.pipeline_mode<synchronous>, transform_indices = @transform_6, window_bounds = array<i64: 1, 512>}, {pipeline_mode = #tpu.pipeline_mode<synchronous>, transform_indices = @transform_7, window_bounds = array<i64: 512, 2>}, {pipeline_mode = #tpu.pipeline_mode<synchronous>, transform_indices = @transform_8, window_bounds = array<i64: 1, 2>}, {pipeline_mode = #tpu.pipeline_mode<synchronous>, transform_indices = @transform_9, window_bounds = array<i64: 2, 2>}]} {
    %c0_i32 = arith.constant 0 : i32
    %0 = arith.cmpi eq, %arg0, %c0_i32 : i32
    %1 = arith.extui %0 : i1 to i32
    %c0_i32_0 = arith.constant 0 : i32
    %2 = arith.cmpi ne, %1, %c0_i32_0 : i32
    scf.if %2 {
      %cst_9 = arith.constant 0.000000e+00 : f32
      %14 = vector.broadcast %cst_9 : f32 to vector<2x512xf32>
      %c0_10 = arith.constant 0 : index
      %c0_11 = arith.constant 0 : index
      %15 = vector.load %arg12[%c0_10, %c0_11] : memref<2x512xf32, #tpu.memory_space<vmem>>, vector<2x512xf32>
      tpu.vector_store %arg12[%c0_10, %c0_11], %14 {strides = array<i32>} : memref<2x512xf32, #tpu.memory_space<vmem>>, vector<2x512xf32>,
      %c0_12 = arith.constant 0 : index
      %c0_13 = arith.constant 0 : index
      %16 = vector.load %arg1[%c0_12, %c0_13] : memref<72x256xbf16, #tpu.memory_space<vmem>>, vector<72x256xbf16>
      %c0_14 = arith.constant 0 : index
      %c0_15 = arith.constant 0 : index
      %17 = vector.load %arg2[%c0_14, %c0_15] : memref<256x256xbf16, #tpu.memory_space<vmem>>, vector<256x256xbf16>
      %cst_16 = arith.constant dense<0.000000e+00> : vector<72x256xf32>
      %18 = tpu.matmul %16, %17, %cst_16 {dimension_numbers = #tpu.dot_dimension_numbers<[1], [0], [0], [1], [0, 0, 1, 1], [], []>} : vector<72x256xbf16>, vector<256x256xbf16>, vector<72x256xf32> -> vector<72x256xf32>
      %c0_17 = arith.constant 0 : index
      %c0_18 = arith.constant 0 : index
      %19 = vector.load %arg3[%c0_17, %c0_18] : memref<1x256xf32, #tpu.memory_space<vmem>>, vector<1x256xf32>
      %20 = vector.broadcast %19 : vector<1x256xf32> to vector<72x256xf32>
      %21 = arith.addf %18, %20 : vector<72x256xf32>
      %cst_19 = arith.constant 0.000000e+00 : f32
      %22 = vector.broadcast %cst_19 : f32 to vector<72x256xf32>
      %23 = arith.maximumf %21, %22 : vector<72x256xf32>
      %24 = arith.truncf %23 : vector<72x256xf32> to vector<72x256xbf16>
      %25 = vector.extract_strided_slice %24 {offsets = [0, 0], sizes = [2, 256], strides = [1, 1]} : vector<72x256xbf16> to vector<2x256xbf16>
      %c0_20 = arith.constant 0 : index
      %c0_21 = arith.constant 0 : index
      %c0_22 = arith.constant 0 : index
      %26 = vector.load %arg11[%c0_20, %c0_21, %c0_22] : memref<2x2x4608xbf16, #tpu.memory_space<vmem>>, vector<1x2x256xbf16>
      %27 = vector.shape_cast %26 : vector<1x2x256xbf16> to vector<2x256xbf16>
      %28 = vector.shape_cast %25 : vector<2x256xbf16> to vector<1x2x256xbf16>
      tpu.vector_store %arg11[%c0_20, %c0_21, %c0_22], %28 {strides = array<i32>} : memref<2x2x4608xbf16, #tpu.memory_space<vmem>>, vector<1x2x256xbf16>,
      %29 = vector.extract_strided_slice %24 {offsets = [2, 0], sizes = [2, 256], strides = [1, 1]} : vector<72x256xbf16> to vector<2x256xbf16>
      %c0_23 = arith.constant 0 : index
      %c0_24 = arith.constant 0 : index
      %c256 = arith.constant 256 : index
      %30 = vector.load %arg11[%c0_23, %c0_24, %c256] : memref<2x2x4608xbf16, #tpu.memory_space<vmem>>, vector<1x2x256xbf16>
      %31 = vector.shape_cast %30 : vector<1x2x256xbf16> to vector<2x256xbf16>
      %32 = vector.shape_cast %29 : vector<2x256xbf16> to vector<1x2x256xbf16>
      tpu.vector_store %arg11[%c0_23, %c0_24, %c256], %32 {strides = array<i32>} : memref<2x2x4608xbf16, #tpu.memory_space<vmem>>, vector<1x2x256xbf16>,
      %33 = vector.extract_strided_slice %24 {offsets = [4, 0], sizes = [2, 256], strides = [1, 1]} : vector<72x256xbf16> to vector<2x256xbf16>
      %c0_25 = arith.constant 0 : index
      %c0_26 = arith.constant 0 : index
      %c512 = arith.constant 512 : index
      %34 = vector.load %arg11[%c0_25, %c0_26, %c512] : memref<2x2x4608xbf16, #tpu.memory_space<vmem>>, vector<1x2x256xbf16>
      %35 = vector.shape_cast %34 : vector<1x2x256xbf16> to vector<2x256xbf16>
      %36 = vector.shape_cast %33 : vector<2x256xbf16> to vector<1x2x256xbf16>
      tpu.vector_store %arg11[%c0_25, %c0_26, %c512], %36 {strides = array<i32>} : memref<2x2x4608xbf16, #tpu.memory_space<vmem>>, vector<1x2x256xbf16>,
      %37 = vector.extract_strided_slice %24 {offsets = [6, 0], sizes = [2, 256], strides = [1, 1]} : vector<72x256xbf16> to vector<2x256xbf16>
      %c0_27 = arith.constant 0 : index
      %c0_28 = arith.constant 0 : index
      %c768 = arith.constant 768 : index
      %38 = vector.load %arg11[%c0_27, %c0_28, %c768] : memref<2x2x4608xbf16, #tpu.memory_space<vmem>>, vector<1x2x256xbf16>
      %39 = vector.shape_cast %38 : vector<1x2x256xbf16> to vector<2x256xbf16>
      %40 = vector.shape_cast %37 : vector<2x256xbf16> to vector<1x2x256xbf16>
      tpu.vector_store %arg11[%c0_27, %c0_28, %c768], %40 {strides = array<i32>} : memref<2x2x4608xbf16, #tpu.memory_space<vmem>>, vector<1x2x256xbf16>,
      %41 = vector.extract_strided_slice %24 {offsets = [8, 0], sizes = [2, 256], strides = [1, 1]} : vector<72x256xbf16> to vector<2x256xbf16>
      %c0_29 = arith.constant 0 : index
      %c0_30 = arith.constant 0 : index
      %c1024 = arith.constant 1024 : index
      %42 = vector.load %arg11[%c0_29, %c0_30, %c1024] : memref<2x2x4608xbf16, #tpu.memory_space<vmem>>, vector<1x2x256xbf16>
      %43 = vector.shape_cast %42 : vector<1x2x256xbf16> to vector<2x256xbf16>
      %44 = vector.shape_cast %41 : vector<2x256xbf16> to vector<1x2x256xbf16>
      tpu.vector_store %arg11[%c0_29, %c0_30, %c1024], %44 {strides = array<i32>} : memref<2x2x4608xbf16, #tpu.memory_space<vmem>>, vector<1x2x256xbf16>,
      %45 = vector.extract_strided_slice %24 {offsets = [10, 0], sizes = [2, 256], strides = [1, 1]} : vector<72x256xbf16> to vector<2x256xbf16>
      %c0_31 = arith.constant 0 : index
      %c0_32 = arith.constant 0 : index
      %c1280 = arith.constant 1280 : index
      %46 = vector.load %arg11[%c0_31, %c0_32, %c1280] : memref<2x2x4608xbf16, #tpu.memory_space<vmem>>, vector<1x2x256xbf16>
      %47 = vector.shape_cast %46 : vector<1x2x256xbf16> to vector<2x256xbf16>
      %48 = vector.shape_cast %45 : vector<2x256xbf16> to vector<1x2x256xbf16>
      tpu.vector_store %arg11[%c0_31, %c0_32, %c1280], %48 {strides = array<i32>} : memref<2x2x4608xbf16, #tpu.memory_space<vmem>>, vector<1x2x256xbf16>,
      %49 = vector.extract_strided_slice %24 {offsets = [12, 0], sizes = [2, 256], strides = [1, 1]} : vector<72x256xbf16> to vector<2x256xbf16>
      %c0_33 = arith.constant 0 : index
      %c0_34 = arith.constant 0 : index
      %c1536 = arith.constant 1536 : index
      %50 = vector.load %arg11[%c0_33, %c0_34, %c1536] : memref<2x2x4608xbf16, #tpu.memory_space<vmem>>, vector<1x2x256xbf16>
      %51 = vector.shape_cast %50 : vector<1x2x256xbf16> to vector<2x256xbf16>
      %52 = vector.shape_cast %49 : vector<2x256xbf16> to vector<1x2x256xbf16>
      tpu.vector_store %arg11[%c0_33, %c0_34, %c1536], %52 {strides = array<i32>} : memref<2x2x4608xbf16, #tpu.memory_space<vmem>>, vector<1x2x256xbf16>,
      %53 = vector.extract_strided_slice %24 {offsets = [14, 0], sizes = [2, 256], strides = [1, 1]} : vector<72x256xbf16> to vector<2x256xbf16>
      %c0_35 = arith.constant 0 : index
      %c0_36 = arith.constant 0 : index
      %c1792 = arith.constant 1792 : index
      %54 = vector.load %arg11[%c0_35, %c0_36, %c1792] : memref<2x2x4608xbf16, #tpu.memory_space<vmem>>, vector<1x2x256xbf16>
      %55 = vector.shape_cast %54 : vector<1x2x256xbf16> to vector<2x256xbf16>
      %56 = vector.shape_cast %53 : vector<2x256xbf16> to vector<1x2x256xbf16>
      tpu.vector_store %arg11[%c0_35, %c0_36, %c1792], %56 {strides = array<i32>} : memref<2x2x4608xbf16, #tpu.memory_space<vmem>>, vector<1x2x256xbf16>,
      %57 = vector.extract_strided_slice %24 {offsets = [16, 0], sizes = [2, 256], strides = [1, 1]} : vector<72x256xbf16> to vector<2x256xbf16>
      %c0_37 = arith.constant 0 : index
      %c0_38 = arith.constant 0 : index
      %c2048 = arith.constant 2048 : index
      %58 = vector.load %arg11[%c0_37, %c0_38, %c2048] : memref<2x2x4608xbf16, #tpu.memory_space<vmem>>, vector<1x2x256xbf16>
      %59 = vector.shape_cast %58 : vector<1x2x256xbf16> to vector<2x256xbf16>
      %60 = vector.shape_cast %57 : vector<2x256xbf16> to vector<1x2x256xbf16>
      tpu.vector_store %arg11[%c0_37, %c0_38, %c2048], %60 {strides = array<i32>} : memref<2x2x4608xbf16, #tpu.memory_space<vmem>>, vector<1x2x256xbf16>,
      %61 = vector.extract_strided_slice %24 {offsets = [18, 0], sizes = [2, 256], strides = [1, 1]} : vector<72x256xbf16> to vector<2x256xbf16>
      %c0_39 = arith.constant 0 : index
      %c0_40 = arith.constant 0 : index
      %c2304 = arith.constant 2304 : index
      %62 = vector.load %arg11[%c0_39, %c0_40, %c2304] : memref<2x2x4608xbf16, #tpu.memory_space<vmem>>, vector<1x2x256xbf16>
      %63 = vector.shape_cast %62 : vector<1x2x256xbf16> to vector<2x256xbf16>
      %64 = vector.shape_cast %61 : vector<2x256xbf16> to vector<1x2x256xbf16>
      tpu.vector_store %arg11[%c0_39, %c0_40, %c2304], %64 {strides = array<i32>} : memref<2x2x4608xbf16, #tpu.memory_space<vmem>>, vector<1x2x256xbf16>,
      %65 = vector.extract_strided_slice %24 {offsets = [20, 0], sizes = [2, 256], strides = [1, 1]} : vector<72x256xbf16> to vector<2x256xbf16>
      %c0_41 = arith.constant 0 : index
      %c0_42 = arith.constant 0 : index
      %c2560 = arith.constant 2560 : index
      %66 = vector.load %arg11[%c0_41, %c0_42, %c2560] : memref<2x2x4608xbf16, #tpu.memory_space<vmem>>, vector<1x2x256xbf16>
      %67 = vector.shape_cast %66 : vector<1x2x256xbf16> to vector<2x256xbf16>
      %68 = vector.shape_cast %65 : vector<2x256xbf16> to vector<1x2x256xbf16>
      tpu.vector_store %arg11[%c0_41, %c0_42, %c2560], %68 {strides = array<i32>} : memref<2x2x4608xbf16, #tpu.memory_space<vmem>>, vector<1x2x256xbf16>,
      %69 = vector.extract_strided_slice %24 {offsets = [22, 0], sizes = [2, 256], strides = [1, 1]} : vector<72x256xbf16> to vector<2x256xbf16>
      %c0_43 = arith.constant 0 : index
      %c0_44 = arith.constant 0 : index
      %c2816 = arith.constant 2816 : index
      %70 = vector.load %arg11[%c0_43, %c0_44, %c2816] : memref<2x2x4608xbf16, #tpu.memory_space<vmem>>, vector<1x2x256xbf16>
      %71 = vector.shape_cast %70 : vector<1x2x256xbf16> to vector<2x256xbf16>
      %72 = vector.shape_cast %69 : vector<2x256xbf16> to vector<1x2x256xbf16>
      tpu.vector_store %arg11[%c0_43, %c0_44, %c2816], %72 {strides = array<i32>} : memref<2x2x4608xbf16, #tpu.memory_space<vmem>>, vector<1x2x256xbf16>,
      %73 = vector.extract_strided_slice %24 {offsets = [24, 0], sizes = [2, 256], strides = [1, 1]} : vector<72x256xbf16> to vector<2x256xbf16>
      %c0_45 = arith.constant 0 : index
      %c0_46 = arith.constant 0 : index
      %c3072 = arith.constant 3072 : index
      %74 = vector.load %arg11[%c0_45, %c0_46, %c3072] : memref<2x2x4608xbf16, #tpu.memory_space<vmem>>, vector<1x2x256xbf16>
      %75 = vector.shape_cast %74 : vector<1x2x256xbf16> to vector<2x256xbf16>
      %76 = vector.shape_cast %73 : vector<2x256xbf16> to vector<1x2x256xbf16>
      tpu.vector_store %arg11[%c0_45, %c0_46, %c3072], %76 {strides = array<i32>} : memref<2x2x4608xbf16, #tpu.memory_space<vmem>>, vector<1x2x256xbf16>,
      %77 = vector.extract_strided_slice %24 {offsets = [26, 0], sizes = [2, 256], strides = [1, 1]} : vector<72x256xbf16> to vector<2x256xbf16>
      %c0_47 = arith.constant 0 : index
      %c0_48 = arith.constant 0 : index
      %c3328 = arith.constant 3328 : index
      %78 = vector.load %arg11[%c0_47, %c0_48, %c3328] : memref<2x2x4608xbf16, #tpu.memory_space<vmem>>, vector<1x2x256xbf16>
      %79 = vector.shape_cast %78 : vector<1x2x256xbf16> to vector<2x256xbf16>
      %80 = vector.shape_cast %77 : vector<2x256xbf16> to vector<1x2x256xbf16>
      tpu.vector_store %arg11[%c0_47, %c0_48, %c3328], %80 {strides = array<i32>} : memref<2x2x4608xbf16, #tpu.memory_space<vmem>>, vector<1x2x256xbf16>,
      %81 = vector.extract_strided_slice %24 {offsets = [28, 0], sizes = [2, 256], strides = [1, 1]} : vector<72x256xbf16> to vector<2x256xbf16>
      %c0_49 = arith.constant 0 : index
      %c0_50 = arith.constant 0 : index
      %c3584 = arith.constant 3584 : index
      %82 = vector.load %arg11[%c0_49, %c0_50, %c3584] : memref<2x2x4608xbf16, #tpu.memory_space<vmem>>, vector<1x2x256xbf16>
      %83 = vector.shape_cast %82 : vector<1x2x256xbf16> to vector<2x256xbf16>
      %84 = vector.shape_cast %81 : vector<2x256xbf16> to vector<1x2x256xbf16>
      tpu.vector_store %arg11[%c0_49, %c0_50, %c3584], %84 {strides = array<i32>} : memref<2x2x4608xbf16, #tpu.memory_space<vmem>>, vector<1x2x256xbf16>,
      %85 = vector.extract_strided_slice %24 {offsets = [30, 0], sizes = [2, 256], strides = [1, 1]} : vector<72x256xbf16> to vector<2x256xbf16>
      %c0_51 = arith.constant 0 : index
      %c0_52 = arith.constant 0 : index
      %c3840 = arith.constant 3840 : index
      %86 = vector.load %arg11[%c0_51, %c0_52, %c3840] : memref<2x2x4608xbf16, #tpu.memory_space<vmem>>, vector<1x2x256xbf16>
      %87 = vector.shape_cast %86 : vector<1x2x256xbf16> to vector<2x256xbf16>
      %88 = vector.shape_cast %85 : vector<2x256xbf16> to vector<1x2x256xbf16>
      tpu.vector_store %arg11[%c0_51, %c0_52, %c3840], %88 {strides = array<i32>} : memref<2x2x4608xbf16, #tpu.memory_space<vmem>>, vector<1x2x256xbf16>,
      %89 = vector.extract_strided_slice %24 {offsets = [32, 0], sizes = [2, 256], strides = [1, 1]} : vector<72x256xbf16> to vector<2x256xbf16>
      %c0_53 = arith.constant 0 : index
      %c0_54 = arith.constant 0 : index
      %c4096 = arith.constant 4096 : index
      %90 = vector.load %arg11[%c0_53, %c0_54, %c4096] : memref<2x2x4608xbf16, #tpu.memory_space<vmem>>, vector<1x2x256xbf16>
      %91 = vector.shape_cast %90 : vector<1x2x256xbf16> to vector<2x256xbf16>
      %92 = vector.shape_cast %89 : vector<2x256xbf16> to vector<1x2x256xbf16>
      tpu.vector_store %arg11[%c0_53, %c0_54, %c4096], %92 {strides = array<i32>} : memref<2x2x4608xbf16, #tpu.memory_space<vmem>>, vector<1x2x256xbf16>,
      %93 = vector.extract_strided_slice %24 {offsets = [34, 0], sizes = [2, 256], strides = [1, 1]} : vector<72x256xbf16> to vector<2x256xbf16>
      %c0_55 = arith.constant 0 : index
      %c0_56 = arith.constant 0 : index
      %c4352 = arith.constant 4352 : index
      %94 = vector.load %arg11[%c0_55, %c0_56, %c4352] : memref<2x2x4608xbf16, #tpu.memory_space<vmem>>, vector<1x2x256xbf16>
      %95 = vector.shape_cast %94 : vector<1x2x256xbf16> to vector<2x256xbf16>
      %96 = vector.shape_cast %93 : vector<2x256xbf16> to vector<1x2x256xbf16>
      tpu.vector_store %arg11[%c0_55, %c0_56, %c4352], %96 {strides = array<i32>} : memref<2x2x4608xbf16, #tpu.memory_space<vmem>>, vector<1x2x256xbf16>,
      %97 = vector.extract_strided_slice %24 {offsets = [36, 0], sizes = [2, 256], strides = [1, 1]} : vector<72x256xbf16> to vector<2x256xbf16>
      %c1 = arith.constant 1 : index
      %c0_57 = arith.constant 0 : index
      %c0_58 = arith.constant 0 : index
      %98 = vector.load %arg11[%c1, %c0_57, %c0_58] : memref<2x2x4608xbf16, #tpu.memory_space<vmem>>, vector<1x2x256xbf16>
      %99 = vector.shape_cast %98 : vector<1x2x256xbf16> to vector<2x256xbf16>
      %100 = vector.shape_cast %97 : vector<2x256xbf16> to vector<1x2x256xbf16>
      tpu.vector_store %arg11[%c1, %c0_57, %c0_58], %100 {strides = array<i32>} : memref<2x2x4608xbf16, #tpu.memory_space<vmem>>, vector<1x2x256xbf16>,
      %101 = vector.extract_strided_slice %24 {offsets = [38, 0], sizes = [2, 256], strides = [1, 1]} : vector<72x256xbf16> to vector<2x256xbf16>
      %c1_59 = arith.constant 1 : index
      %c0_60 = arith.constant 0 : index
      %c256_61 = arith.constant 256 : index
      %102 = vector.load %arg11[%c1_59, %c0_60, %c256_61] : memref<2x2x4608xbf16, #tpu.memory_space<vmem>>, vector<1x2x256xbf16>
      %103 = vector.shape_cast %102 : vector<1x2x256xbf16> to vector<2x256xbf16>
      %104 = vector.shape_cast %101 : vector<2x256xbf16> to vector<1x2x256xbf16>
      tpu.vector_store %arg11[%c1_59, %c0_60, %c256_61], %104 {strides = array<i32>} : memref<2x2x4608xbf16, #tpu.memory_space<vmem>>, vector<1x2x256xbf16>,
      %105 = vector.extract_strided_slice %24 {offsets = [40, 0], sizes = [2, 256], strides = [1, 1]} : vector<72x256xbf16> to vector<2x256xbf16>
      %c1_62 = arith.constant 1 : index
      %c0_63 = arith.constant 0 : index
      %c512_64 = arith.constant 512 : index
      %106 = vector.load %arg11[%c1_62, %c0_63, %c512_64] : memref<2x2x4608xbf16, #tpu.memory_space<vmem>>, vector<1x2x256xbf16>
      %107 = vector.shape_cast %106 : vector<1x2x256xbf16> to vector<2x256xbf16>
      %108 = vector.shape_cast %105 : vector<2x256xbf16> to vector<1x2x256xbf16>
      tpu.vector_store %arg11[%c1_62, %c0_63, %c512_64], %108 {strides = array<i32>} : memref<2x2x4608xbf16, #tpu.memory_space<vmem>>, vector<1x2x256xbf16>,
      %109 = vector.extract_strided_slice %24 {offsets = [42, 0], sizes = [2, 256], strides = [1, 1]} : vector<72x256xbf16> to vector<2x256xbf16>
      %c1_65 = arith.constant 1 : index
      %c0_66 = arith.constant 0 : index
      %c768_67 = arith.constant 768 : index
      %110 = vector.load %arg11[%c1_65, %c0_66, %c768_67] : memref<2x2x4608xbf16, #tpu.memory_space<vmem>>, vector<1x2x256xbf16>
      %111 = vector.shape_cast %110 : vector<1x2x256xbf16> to vector<2x256xbf16>
      %112 = vector.shape_cast %109 : vector<2x256xbf16> to vector<1x2x256xbf16>
      tpu.vector_store %arg11[%c1_65, %c0_66, %c768_67], %112 {strides = array<i32>} : memref<2x2x4608xbf16, #tpu.memory_space<vmem>>, vector<1x2x256xbf16>,
      %113 = vector.extract_strided_slice %24 {offsets = [44, 0], sizes = [2, 256], strides = [1, 1]} : vector<72x256xbf16> to vector<2x256xbf16>
      %c1_68 = arith.constant 1 : index
      %c0_69 = arith.constant 0 : index
      %c1024_70 = arith.constant 1024 : index
      %114 = vector.load %arg11[%c1_68, %c0_69, %c1024_70] : memref<2x2x4608xbf16, #tpu.memory_space<vmem>>, vector<1x2x256xbf16>
      %115 = vector.shape_cast %114 : vector<1x2x256xbf16> to vector<2x256xbf16>
      %116 = vector.shape_cast %113 : vector<2x256xbf16> to vector<1x2x256xbf16>
      tpu.vector_store %arg11[%c1_68, %c0_69, %c1024_70], %116 {strides = array<i32>} : memref<2x2x4608xbf16, #tpu.memory_space<vmem>>, vector<1x2x256xbf16>,
      %117 = vector.extract_strided_slice %24 {offsets = [46, 0], sizes = [2, 256], strides = [1, 1]} : vector<72x256xbf16> to vector<2x256xbf16>
      %c1_71 = arith.constant 1 : index
      %c0_72 = arith.constant 0 : index
      %c1280_73 = arith.constant 1280 : index
      %118 = vector.load %arg11[%c1_71, %c0_72, %c1280_73] : memref<2x2x4608xbf16, #tpu.memory_space<vmem>>, vector<1x2x256xbf16>
      %119 = vector.shape_cast %118 : vector<1x2x256xbf16> to vector<2x256xbf16>
      %120 = vector.shape_cast %117 : vector<2x256xbf16> to vector<1x2x256xbf16>
      tpu.vector_store %arg11[%c1_71, %c0_72, %c1280_73], %120 {strides = array<i32>} : memref<2x2x4608xbf16, #tpu.memory_space<vmem>>, vector<1x2x256xbf16>,
      %121 = vector.extract_strided_slice %24 {offsets = [48, 0], sizes = [2, 256], strides = [1, 1]} : vector<72x256xbf16> to vector<2x256xbf16>
      %c1_74 = arith.constant 1 : index
      %c0_75 = arith.constant 0 : index
      %c1536_76 = arith.constant 1536 : index
      %122 = vector.load %arg11[%c1_74, %c0_75, %c1536_76] : memref<2x2x4608xbf16, #tpu.memory_space<vmem>>, vector<1x2x256xbf16>
      %123 = vector.shape_cast %122 : vector<1x2x256xbf16> to vector<2x256xbf16>
      %124 = vector.shape_cast %121 : vector<2x256xbf16> to vector<1x2x256xbf16>
      tpu.vector_store %arg11[%c1_74, %c0_75, %c1536_76], %124 {strides = array<i32>} : memref<2x2x4608xbf16, #tpu.memory_space<vmem>>, vector<1x2x256xbf16>,
      %125 = vector.extract_strided_slice %24 {offsets = [50, 0], sizes = [2, 256], strides = [1, 1]} : vector<72x256xbf16> to vector<2x256xbf16>
      %c1_77 = arith.constant 1 : index
      %c0_78 = arith.constant 0 : index
      %c1792_79 = arith.constant 1792 : index
      %126 = vector.load %arg11[%c1_77, %c0_78, %c1792_79] : memref<2x2x4608xbf16, #tpu.memory_space<vmem>>, vector<1x2x256xbf16>
      %127 = vector.shape_cast %126 : vector<1x2x256xbf16> to vector<2x256xbf16>
      %128 = vector.shape_cast %125 : vector<2x256xbf16> to vector<1x2x256xbf16>
      tpu.vector_store %arg11[%c1_77, %c0_78, %c1792_79], %128 {strides = array<i32>} : memref<2x2x4608xbf16, #tpu.memory_space<vmem>>, vector<1x2x256xbf16>,
      %129 = vector.extract_strided_slice %24 {offsets = [52, 0], sizes = [2, 256], strides = [1, 1]} : vector<72x256xbf16> to vector<2x256xbf16>
      %c1_80 = arith.constant 1 : index
      %c0_81 = arith.constant 0 : index
      %c2048_82 = arith.constant 2048 : index
      %130 = vector.load %arg11[%c1_80, %c0_81, %c2048_82] : memref<2x2x4608xbf16, #tpu.memory_space<vmem>>, vector<1x2x256xbf16>
      %131 = vector.shape_cast %130 : vector<1x2x256xbf16> to vector<2x256xbf16>
      %132 = vector.shape_cast %129 : vector<2x256xbf16> to vector<1x2x256xbf16>
      tpu.vector_store %arg11[%c1_80, %c0_81, %c2048_82], %132 {strides = array<i32>} : memref<2x2x4608xbf16, #tpu.memory_space<vmem>>, vector<1x2x256xbf16>,
      %133 = vector.extract_strided_slice %24 {offsets = [54, 0], sizes = [2, 256], strides = [1, 1]} : vector<72x256xbf16> to vector<2x256xbf16>
      %c1_83 = arith.constant 1 : index
      %c0_84 = arith.constant 0 : index
      %c2304_85 = arith.constant 2304 : index
      %134 = vector.load %arg11[%c1_83, %c0_84, %c2304_85] : memref<2x2x4608xbf16, #tpu.memory_space<vmem>>, vector<1x2x256xbf16>
      %135 = vector.shape_cast %134 : vector<1x2x256xbf16> to vector<2x256xbf16>
      %136 = vector.shape_cast %133 : vector<2x256xbf16> to vector<1x2x256xbf16>
      tpu.vector_store %arg11[%c1_83, %c0_84, %c2304_85], %136 {strides = array<i32>} : memref<2x2x4608xbf16, #tpu.memory_space<vmem>>, vector<1x2x256xbf16>,
      %137 = vector.extract_strided_slice %24 {offsets = [56, 0], sizes = [2, 256], strides = [1, 1]} : vector<72x256xbf16> to vector<2x256xbf16>
      %c1_86 = arith.constant 1 : index
      %c0_87 = arith.constant 0 : index
      %c2560_88 = arith.constant 2560 : index
      %138 = vector.load %arg11[%c1_86, %c0_87, %c2560_88] : memref<2x2x4608xbf16, #tpu.memory_space<vmem>>, vector<1x2x256xbf16>
      %139 = vector.shape_cast %138 : vector<1x2x256xbf16> to vector<2x256xbf16>
      %140 = vector.shape_cast %137 : vector<2x256xbf16> to vector<1x2x256xbf16>
      tpu.vector_store %arg11[%c1_86, %c0_87, %c2560_88], %140 {strides = array<i32>} : memref<2x2x4608xbf16, #tpu.memory_space<vmem>>, vector<1x2x256xbf16>,
      %141 = vector.extract_strided_slice %24 {offsets = [58, 0], sizes = [2, 256], strides = [1, 1]} : vector<72x256xbf16> to vector<2x256xbf16>
      %c1_89 = arith.constant 1 : index
      %c0_90 = arith.constant 0 : index
      %c2816_91 = arith.constant 2816 : index
      %142 = vector.load %arg11[%c1_89, %c0_90, %c2816_91] : memref<2x2x4608xbf16, #tpu.memory_space<vmem>>, vector<1x2x256xbf16>
      %143 = vector.shape_cast %142 : vector<1x2x256xbf16> to vector<2x256xbf16>
      %144 = vector.shape_cast %141 : vector<2x256xbf16> to vector<1x2x256xbf16>
      tpu.vector_store %arg11[%c1_89, %c0_90, %c2816_91], %144 {strides = array<i32>} : memref<2x2x4608xbf16, #tpu.memory_space<vmem>>, vector<1x2x256xbf16>,
      %145 = vector.extract_strided_slice %24 {offsets = [60, 0], sizes = [2, 256], strides = [1, 1]} : vector<72x256xbf16> to vector<2x256xbf16>
      %c1_92 = arith.constant 1 : index
      %c0_93 = arith.constant 0 : index
      %c3072_94 = arith.constant 3072 : index
      %146 = vector.load %arg11[%c1_92, %c0_93, %c3072_94] : memref<2x2x4608xbf16, #tpu.memory_space<vmem>>, vector<1x2x256xbf16>
      %147 = vector.shape_cast %146 : vector<1x2x256xbf16> to vector<2x256xbf16>
      %148 = vector.shape_cast %145 : vector<2x256xbf16> to vector<1x2x256xbf16>
      tpu.vector_store %arg11[%c1_92, %c0_93, %c3072_94], %148 {strides = array<i32>} : memref<2x2x4608xbf16, #tpu.memory_space<vmem>>, vector<1x2x256xbf16>,
      %149 = vector.extract_strided_slice %24 {offsets = [62, 0], sizes = [2, 256], strides = [1, 1]} : vector<72x256xbf16> to vector<2x256xbf16>
      %c1_95 = arith.constant 1 : index
      %c0_96 = arith.constant 0 : index
      %c3328_97 = arith.constant 3328 : index
      %150 = vector.load %arg11[%c1_95, %c0_96, %c3328_97] : memref<2x2x4608xbf16, #tpu.memory_space<vmem>>, vector<1x2x256xbf16>
      %151 = vector.shape_cast %150 : vector<1x2x256xbf16> to vector<2x256xbf16>
      %152 = vector.shape_cast %149 : vector<2x256xbf16> to vector<1x2x256xbf16>
      tpu.vector_store %arg11[%c1_95, %c0_96, %c3328_97], %152 {strides = array<i32>} : memref<2x2x4608xbf16, #tpu.memory_space<vmem>>, vector<1x2x256xbf16>,
      %153 = vector.extract_strided_slice %24 {offsets = [64, 0], sizes = [2, 256], strides = [1, 1]} : vector<72x256xbf16> to vector<2x256xbf16>
      %c1_98 = arith.constant 1 : index
      %c0_99 = arith.constant 0 : index
      %c3584_100 = arith.constant 3584 : index
      %154 = vector.load %arg11[%c1_98, %c0_99, %c3584_100] : memref<2x2x4608xbf16, #tpu.memory_space<vmem>>, vector<1x2x256xbf16>
      %155 = vector.shape_cast %154 : vector<1x2x256xbf16> to vector<2x256xbf16>
      %156 = vector.shape_cast %153 : vector<2x256xbf16> to vector<1x2x256xbf16>
      tpu.vector_store %arg11[%c1_98, %c0_99, %c3584_100], %156 {strides = array<i32>} : memref<2x2x4608xbf16, #tpu.memory_space<vmem>>, vector<1x2x256xbf16>,
      %157 = vector.extract_strided_slice %24 {offsets = [66, 0], sizes = [2, 256], strides = [1, 1]} : vector<72x256xbf16> to vector<2x256xbf16>
      %c1_101 = arith.constant 1 : index
      %c0_102 = arith.constant 0 : index
      %c3840_103 = arith.constant 3840 : index
      %158 = vector.load %arg11[%c1_101, %c0_102, %c3840_103] : memref<2x2x4608xbf16, #tpu.memory_space<vmem>>, vector<1x2x256xbf16>
      %159 = vector.shape_cast %158 : vector<1x2x256xbf16> to vector<2x256xbf16>
      %160 = vector.shape_cast %157 : vector<2x256xbf16> to vector<1x2x256xbf16>
      tpu.vector_store %arg11[%c1_101, %c0_102, %c3840_103], %160 {strides = array<i32>} : memref<2x2x4608xbf16, #tpu.memory_space<vmem>>, vector<1x2x256xbf16>,
      %161 = vector.extract_strided_slice %24 {offsets = [68, 0], sizes = [2, 256], strides = [1, 1]} : vector<72x256xbf16> to vector<2x256xbf16>
      %c1_104 = arith.constant 1 : index
      %c0_105 = arith.constant 0 : index
      %c4096_106 = arith.constant 4096 : index
      %162 = vector.load %arg11[%c1_104, %c0_105, %c4096_106] : memref<2x2x4608xbf16, #tpu.memory_space<vmem>>, vector<1x2x256xbf16>
      %163 = vector.shape_cast %162 : vector<1x2x256xbf16> to vector<2x256xbf16>
      %164 = vector.shape_cast %161 : vector<2x256xbf16> to vector<1x2x256xbf16>
      tpu.vector_store %arg11[%c1_104, %c0_105, %c4096_106], %164 {strides = array<i32>} : memref<2x2x4608xbf16, #tpu.memory_space<vmem>>, vector<1x2x256xbf16>,
      %165 = vector.extract_strided_slice %24 {offsets = [70, 0], sizes = [2, 256], strides = [1, 1]} : vector<72x256xbf16> to vector<2x256xbf16>
      %c1_107 = arith.constant 1 : index
      %c0_108 = arith.constant 0 : index
      %c4352_109 = arith.constant 4352 : index
      %166 = vector.load %arg11[%c1_107, %c0_108, %c4352_109] : memref<2x2x4608xbf16, #tpu.memory_space<vmem>>, vector<1x2x256xbf16>
      %167 = vector.shape_cast %166 : vector<1x2x256xbf16> to vector<2x256xbf16>
      %168 = vector.shape_cast %165 : vector<2x256xbf16> to vector<1x2x256xbf16>
      tpu.vector_store %arg11[%c1_107, %c0_108, %c4352_109], %168 {strides = array<i32>} : memref<2x2x4608xbf16, #tpu.memory_space<vmem>>, vector<1x2x256xbf16>,
    } else {
    }
    %c0 = arith.constant 0 : index
    %c0_1 = arith.constant 0 : index
    %3 = vector.load %arg12[%c0, %c0_1] : memref<2x512xf32, #tpu.memory_space<vmem>>, vector<2x512xf32>
    %4 = arith.index_cast %arg0 : i32 to index
    %c0_2 = arith.constant 0 : index
    %c0_3 = arith.constant 0 : index
    %5 = vector.load %arg11[%4, %c0_2, %c0_3] : memref<2x2x4608xbf16, #tpu.memory_space<vmem>>, vector<1x2x4608xbf16>
    %6 = vector.shape_cast %5 : vector<1x2x4608xbf16> to vector<2x4608xbf16>
    %c0_4 = arith.constant 0 : index
    %c0_5 = arith.constant 0 : index
    %7 = vector.load %arg4[%c0_4, %c0_5] : memref<4608x512xbf16, #tpu.memory_space<vmem>>, vector<4608x512xbf16>
    %cst = arith.constant dense<0.000000e+00> : vector<2x512xf32>
    %8 = tpu.matmul %6, %7, %cst {dimension_numbers = #tpu.dot_dimension_numbers<[1], [0], [0], [1], [0, 0, 1, 1], [], []>} : vector<2x4608xbf16>, vector<4608x512xbf16>, vector<2x512xf32> -> vector<2x512xf32>
    %9 = arith.addf %3, %8 : vector<2x512xf32>
    %c0_6 = arith.constant 0 : index
    %c0_7 = arith.constant 0 : index
    %10 = vector.load %arg12[%c0_6, %c0_7] : memref<2x512xf32, #tpu.memory_space<vmem>>, vector<2x512xf32>
    tpu.vector_store %arg12[%c0_6, %c0_7], %9 {strides = array<i32>} : memref<2x512xf32, #tpu.memory_space<vmem>>, vector<2x512xf32>,
    %c1_i32 = arith.constant 1 : i32
    %11 = arith.cmpi eq, %arg0, %c1_i32 : i32
    %12 = arith.extui %11 : i1 to i32
    %c0_i32_8 = arith.constant 0 : i32
    %13 = arith.cmpi ne, %12, %c0_i32_8 : i32
    scf.if %13 {
      %c0_9 = arith.constant 0 : index
      %c0_10 = arith.constant 0 : index
      %14 = vector.load %arg12[%c0_9, %c0_10] : memref<2x512xf32, #tpu.memory_space<vmem>>, vector<2x512xf32>
      %c0_11 = arith.constant 0 : index
      %c0_12 = arith.constant 0 : index
      %15 = vector.load %arg5[%c0_11, %c0_12] : memref<1x512xf32, #tpu.memory_space<vmem>>, vector<1x512xf32>
      %16 = vector.broadcast %15 : vector<1x512xf32> to vector<2x512xf32>
      %17 = arith.addf %14, %16 : vector<2x512xf32>
      %cst_13 = arith.constant 0.000000e+00 : f32
      %18 = vector.broadcast %cst_13 : f32 to vector<2x512xf32>
      %19 = arith.maximumf %17, %18 : vector<2x512xf32>
      %20 = arith.truncf %19 : vector<2x512xf32> to vector<2x512xbf16>
      %c0_14 = arith.constant 0 : index
      %c0_15 = arith.constant 0 : index
      %21 = vector.load %arg6[%c0_14, %c0_15] : memref<512x512xbf16, #tpu.memory_space<vmem>>, vector<512x512xbf16>
      %cst_16 = arith.constant dense<0.000000e+00> : vector<2x512xf32>
      %22 = tpu.matmul %20, %21, %cst_16 {dimension_numbers = #tpu.dot_dimension_numbers<[1], [0], [0], [1], [0, 0, 1, 1], [], []>} : vector<2x512xbf16>, vector<512x512xbf16>, vector<2x512xf32> -> vector<2x512xf32>
      %c0_17 = arith.constant 0 : index
      %c0_18 = arith.constant 0 : index
      %23 = vector.load %arg7[%c0_17, %c0_18] : memref<1x512xf32, #tpu.memory_space<vmem>>, vector<1x512xf32>
      %24 = vector.broadcast %23 : vector<1x512xf32> to vector<2x512xf32>
      %25 = arith.addf %22, %24 : vector<2x512xf32>
      %c0_19 = arith.constant 0 : index
      %c0_20 = arith.constant 0 : index
      %26 = vector.load %arg8[%c0_19, %c0_20] : memref<512x2xf32, #tpu.memory_space<vmem>>, vector<512x2xf32>
      %cst_21 = arith.constant dense<0.000000e+00> : vector<2x2xf32>
      %27 = tpu.matmul %25, %26, %cst_21 {dimension_numbers = #tpu.dot_dimension_numbers<[1], [0], [0], [1], [0, 0, 1, 1], [], []>} : vector<2x512xf32>, vector<512x2xf32>, vector<2x2xf32> -> vector<2x2xf32>
      %c0_22 = arith.constant 0 : index
      %c0_23 = arith.constant 0 : index
      %28 = vector.load %arg9[%c0_22, %c0_23] : memref<1x2xf32, #tpu.memory_space<vmem>>, vector<1x2xf32>
      %29 = vector.broadcast %28 : vector<1x2xf32> to vector<2x2xf32>
      %30 = arith.addf %27, %29 : vector<2x2xf32>
      %cst_24 = arith.constant dense<0xFF800000> : vector<2xf32>
      %31 = vector.multi_reduction <maximumf>, %30, %cst_24 [1] : vector<2x2xf32> to vector<2xf32>
      %32 = vector.shape_cast %31 : vector<2xf32> to vector<2x1xf32>
      %33 = vector.broadcast %32 : vector<2x1xf32> to vector<2x2xf32>
      %34 = arith.subf %30, %33 : vector<2x2xf32>
      %35 = math.exp %34 : vector<2x2xf32>
      %cst_25 = arith.constant dense<0.000000e+00> : vector<2xf32>
      %36 = vector.multi_reduction <add>, %35, %cst_25 [1] : vector<2x2xf32> to vector<2xf32>
      %37 = vector.shape_cast %36 : vector<2xf32> to vector<2x1xf32>
      %38 = math.log %37 : vector<2x1xf32>
      %39 = vector.broadcast %38 : vector<2x1xf32> to vector<2x2xf32>
      %40 = arith.subf %34, %39 : vector<2x2xf32>
      %c0_26 = arith.constant 0 : index
      %c0_27 = arith.constant 0 : index
      %41 = vector.load %arg10[%c0_26, %c0_27] : memref<2x2xf32, #tpu.memory_space<vmem>>, vector<2x2xf32>
      tpu.vector_store %arg10[%c0_26, %c0_27], %40 {strides = array<i32>} : memref<2x2xf32, #tpu.memory_space<vmem>>, vector<2x2xf32>,
    } else {
    }
    return
  }
  func.func @transform_0(%arg0: i32) -> (i32, i32) {
    %c0_i32 = arith.constant 0 : i32
    %c0_i32_0 = arith.constant 0 : i32
    %c0_i32_1 = arith.constant 0 : i32
    return %c0_i32, %c0_i32_0 : i32, i32
  }
  func.func @transform_1(%arg0: i32) -> (i32, i32) {
    %c0_i32 = arith.constant 0 : i32
    %c0_i32_0 = arith.constant 0 : i32
    %c0_i32_1 = arith.constant 0 : i32
    return %c0_i32, %c0_i32_0 : i32, i32
  }
  func.func @transform_2(%arg0: i32) -> (i32, i32) {
    %c0_i32 = arith.constant 0 : i32
    %c0_i32_0 = arith.constant 0 : i32
    %c0_i32_1 = arith.constant 0 : i32
    return %c0_i32, %c0_i32_0 : i32, i32
  }
  func.func @transform_3(%arg0: i32) -> (i32, i32) {
    %c0_i32 = arith.constant 0 : i32
    %c0_i32_0 = arith.constant 0 : i32
    return %arg0, %c0_i32 : i32, i32
  }
  func.func @transform_4(%arg0: i32) -> (i32, i32) {
    %c0_i32 = arith.constant 0 : i32
    %c0_i32_0 = arith.constant 0 : i32
    %c0_i32_1 = arith.constant 0 : i32
    return %c0_i32, %c0_i32_0 : i32, i32
  }
  func.func @transform_5(%arg0: i32) -> (i32, i32) {
    %c0_i32 = arith.constant 0 : i32
    %c0_i32_0 = arith.constant 0 : i32
    %c0_i32_1 = arith.constant 0 : i32
    return %c0_i32, %c0_i32_0 : i32, i32
  }
  func.func @transform_6(%arg0: i32) -> (i32, i32) {
    %c0_i32 = arith.constant 0 : i32
    %c0_i32_0 = arith.constant 0 : i32
    %c0_i32_1 = arith.constant 0 : i32
    return %c0_i32, %c0_i32_0 : i32, i32
  }
  func.func @transform_7(%arg0: i32) -> (i32, i32) {
    %c0_i32 = arith.constant 0 : i32
    %c0_i32_0 = arith.constant 0 : i32
    %c0_i32_1 = arith.constant 0 : i32
    return %c0_i32, %c0_i32_0 : i32, i32
  }
  func.func @transform_8(%arg0: i32) -> (i32, i32) {
    %c0_i32 = arith.constant 0 : i32
    %c0_i32_0 = arith.constant 0 : i32
    %c0_i32_1 = arith.constant 0 : i32
    return %c0_i32, %c0_i32_0 : i32, i32
  }
  func.func @transform_9(%arg0: i32) -> (i32, i32) {
    %c0_i32 = arith.constant 0 : i32
    %c0_i32_0 = arith.constant 0 : i32
    %c0_i32_1 = arith.constant 0 : i32
    return %c0_i32, %c0_i32_0 : i32, i32
  }
}

</mosaic_0001>

<llo_original>
// kernel: net_forward.1
$region0: #{net_forward.1}
  #allocation0 [shape = 'u32[]', space=smem, size = 0x4, offset = 0x4, fixed_abs, tag = 'smem constant byte address 0x4 - core index']
  #allocation1 [shape = 'u32[144,128]{1,0:T(1,128)}', space=vmem, size = 0x12000, scoped, tag = 'internal scratch']
  #allocation2 [shape = 'bf16[2,2,4608]{2,1,0:T(2,128)(2,1)}', space=vmem, size = 0x9000, scoped, tag = 'scratch operand']
  #allocation3 [shape = 'f32[2,512]{1,0:T(2,128)}', space=vmem, size = 0x1000, scoped, tag = 'scratch operand']
  %s0 = inlined_call_operand.vmem [shape: bf16[72,256], index: 0, kind: input, shape index: {}]
  %s1 = inlined_call_operand.vmem [shape: bf16[256,256], index: 1, kind: input, shape index: {}]
  %s2 = inlined_call_operand.vmem [shape: f32[1,256], index: 2, kind: input, shape index: {}]
  %s3 = inlined_call_operand.vmem [shape: bf16[9216,512], index: 3, kind: input, shape index: {}]
  %s4 = inlined_call_operand.vmem [shape: f32[1,512], index: 4, kind: input, shape index: {}]
  %s5 = inlined_call_operand.vmem [shape: bf16[512,512], index: 5, kind: input, shape index: {}]
  %s6 = inlined_call_operand.vmem [shape: f32[1,512], index: 6, kind: input, shape index: {}]
  %s7 = inlined_call_operand.vmem [shape: f32[512,2], index: 7, kind: input, shape index: {}]
  %s8 = inlined_call_operand.vmem [shape: f32[1,2], index: 8, kind: input, shape index: {}]
  %s9 = inlined_call_operand.hbm [shape: f32[2,2], index: 9, kind: output, shape index: {}]
  %s10 = sld [smem:[#allocation0]]
  $region77: #{net_forward.1} parent=0
    _
  %s12 = ssub.s32 1, %s10
  %s13 = scalar_select 0, %s12, %s10
  $region1: #{net_forward.1} parent=0
    #allocation4 [shape = 'u8[1024]{0}', space=vmem, size = 0x400, scoped, tag = 'output window, operand 0, single buffered']
    #allocation5 [shape = 's32[2]{0}', space=sflag, size = 0x8, scoped, tag = 'scoped memory for net_forward.1']
    %14 = vsyncpa [#allocation5], 0
    loop: start=0, step=1, limit=4
    $region2: #{net_forward.1} parent=1 // loop_pre_header
      _
    $region3: #{net_forward.1} parent=1 // loop_header
      %s16 = sphi 0, %s20
      %p17 = scmp.ge.s32.totalorder %s16, 4
      %s24 = sphi 0, %s24
      %s26 = sphi 0, %s24
      %s27 = sphi 0, %s26
      %s41 = sphi 0, %s27
      %s45 = sphi 0, %s45
      %s47 = sphi 0, %s45
      %s48 = sphi 0, %s47
      %s62 = sphi 0, %s48
      %s66 = sphi 0, %s66
      %s68 = sphi 0, %s66
      %s69 = sphi 0, %s68
      %s83 = sphi 0, %s69
      %s89 = sphi 0, %s91
      %s92 = sphi 0, %s89
      %s93 = sphi 0, %s92
      %s109 = sphi 0, %s93
      %s113 = sphi 0, %s113
      %s115 = sphi 0, %s113
      %s116 = sphi 0, %s115
      %s130 = sphi 0, %s116
      %s134 = sphi 0, %s134
      %s136 = sphi 0, %s134
      %s137 = sphi 0, %s136
      %s151 = sphi 0, %s137
      %s155 = sphi 0, %s155
      %s157 = sphi 0, %s155
      %s158 = sphi 0, %s157
      %s172 = sphi 0, %s158
      %s176 = sphi 0, %s176
      %s178 = sphi 0, %s176
      %s179 = sphi 0, %s178
      %s193 = sphi 0, %s179
      %s197 = sphi 0, %s197
      %s199 = sphi 0, %s197
      %s200 = sphi 0, %s199
      %s214 = sphi 0, %s200
      %s218 = sphi 0, %s218
      %s220 = sphi 0, %s218
      %s221 = sphi 0, %s220
      %s235 = sphi 0, %s221
    $region4: #{net_forward.1} parent=1 // loop_header_branch
      %19 = sbr.rel (%p17) target = $region8
    $region5: #{net_forward.1} parent=1 // loop_body
      %s21 = ssub.s32 %s16, 1
      %s22 = ssub.s32 %s16, 2
      %s23 = sadd.s32 %s16, 1
      %s25 = sadd.s32 %s24, 1
      %p28 = scmp.eq.s32.totalorder %s16, 1
      %p29 = scmp.ne.s32.totalorder %s24, %s26
      %p30 = scmp.eq.s32.totalorder %s16, 0
      %p31 = por %p29, %p30
      %p32 = scmp.ne.s32.totalorder %s24, %s26
      %p33 = scmp.eq.s32.totalorder %s21, 1
      %p34 = por %p32, %p33
      %p35 = scmp.ne.s32.totalorder %s26, %s27
      %p36 = scmp.eq.s32.totalorder %s21, 0
      %p37 = por %p35, %p36
      %p38 = scmp.ne.s32.totalorder %s26, %s27
      %p39 = scmp.eq.s32.totalorder %s22, 1
      %p40 = por %p38, %p39
      %p42 = scmp.ne.s32.totalorder %s27, %s41
      %p43 = scmp.eq.s32.totalorder %s22, 0
      %p44 = por %p42, %p43
      %s46 = sadd.s32 %s45, 1
      %p49 = scmp.eq.s32.totalorder %s16, 1
      %p50 = scmp.ne.s32.totalorder %s45, %s47
      %p51 = scmp.eq.s32.totalorder %s16, 0
      %p52 = por %p50, %p51
      %p53 = scmp.ne.s32.totalorder %s45, %s47
      %p54 = scmp.eq.s32.totalorder %s21, 1
      %p55 = por %p53, %p54
      %p56 = scmp.ne.s32.totalorder %s47, %s48
      %p57 = scmp.eq.s32.totalorder %s21, 0
      %p58 = por %p56, %p57
      %p59 = scmp.ne.s32.totalorder %s47, %s48
      %p60 = scmp.eq.s32.totalorder %s22, 1
      %p61 = por %p59, %p60
      %p63 = scmp.ne.s32.totalorder %s48, %s62
      %p64 = scmp.eq.s32.totalorder %s22, 0
      %p65 = por %p63, %p64
      %s67 = sadd.s32 %s66, 1
      %p70 = scmp.eq.s32.totalorder %s16, 1
      %p71 = scmp.ne.s32.totalorder %s66, %s68
      %p72 = scmp.eq.s32.totalorder %s16, 0
      %p73 = por %p71, %p72
      %p74 = scmp.ne.s32.totalorder %s66, %s68
      %p75 = scmp.eq.s32.totalorder %s21, 1
      %p76 = por %p74, %p75
      %p77 = scmp.ne.s32.totalorder %s68, %s69
      %p78 = scmp.eq.s32.totalorder %s21, 0
      %p79 = por %p77, %p78
      %p80 = scmp.ne.s32.totalorder %s68, %s69
      %p81 = scmp.eq.s32.totalorder %s22, 1
      %p82 = por %p80, %p81
      %p84 = scmp.ne.s32.totalorder %s69, %s83
      %p85 = scmp.eq.s32.totalorder %s22, 0
      %p86 = por %p84, %p85
      %s87 = ssub.s32 %s16, %s23
      %p88 = scmp.eq.s32.totalorder %s87, 0
      %s90 = sadd.s32 %s89, 1
      %s91 = scalar_select %p88, %s89, %s90
      %p94 = pneg %p88
      %p95 = scmp.eq.s32.totalorder %s16, 1
      %p96 = por %p94, %p95
      %p97 = scmp.ne.s32.totalorder %s89, %s92
      %p98 = scmp.eq.s32.totalorder %s16, 0
      %p99 = por %p97, %p98
      %p100 = scmp.ne.s32.totalorder %s89, %s92
      %p101 = scmp.eq.s32.totalorder %s21, 1
      %p102 = por %p100, %p101
      %p103 = scmp.ne.s32.totalorder %s92, %s93
      %p104 = scmp.eq.s32.totalorder %s21, 0
      %p105 = por %p103, %p104
      %p106 = scmp.ne.s32.totalorder %s92, %s93
      %p107 = scmp.eq.s32.totalorder %s22, 1
      %p108 = por %p106, %p107
      %p110 = scmp.ne.s32.totalorder %s93, %s109
      %p111 = scmp.eq.s32.totalorder %s22, 0
      %p112 = por %p110, %p111
      %s114 = sadd.s32 %s113, 1
      %p117 = scmp.eq.s32.totalorder %s16, 1
      %p118 = scmp.ne.s32.totalorder %s113, %s115
      %p119 = scmp.eq.s32.totalorder %s16, 0
      %p120 = por %p118, %p119
      %p121 = scmp.ne.s32.totalorder %s113, %s115
      %p122 = scmp.eq.s32.totalorder %s21, 1
      %p123 = por %p121, %p122
      %p124 = scmp.ne.s32.totalorder %s115, %s116
      %p125 = scmp.eq.s32.totalorder %s21, 0
      %p126 = por %p124, %p125
      %p127 = scmp.ne.s32.totalorder %s115, %s116
      %p128 = scmp.eq.s32.totalorder %s22, 1
      %p129 = por %p127, %p128
      %p131 = scmp.ne.s32.totalorder %s116, %s130
      %p132 = scmp.eq.s32.totalorder %s22, 0
      %p133 = por %p131, %p132
      %s135 = sadd.s32 %s134, 1
      %p138 = scmp.eq.s32.totalorder %s16, 1
      %p139 = scmp.ne.s32.totalorder %s134, %s136
      %p140 = scmp.eq.s32.totalorder %s16, 0
      %p141 = por %p139, %p140
      %p142 = scmp.ne.s32.totalorder %s134, %s136
      %p143 = scmp.eq.s32.totalorder %s21, 1
      %p144 = por %p142, %p143
      %p145 = scmp.ne.s32.totalorder %s136, %s137
      %p146 = scmp.eq.s32.totalorder %s21, 0
      %p147 = por %p145, %p146
      %p148 = scmp.ne.s32.totalorder %s136, %s137
      %p149 = scmp.eq.s32.totalorder %s22, 1
      %p150 = por %p148, %p149
      %p152 = scmp.ne.s32.totalorder %s137, %s151
      %p153 = scmp.eq.s32.totalorder %s22, 0
      %p154 = por %p152, %p153
      %s156 = sadd.s32 %s155, 1
      %p159 = scmp.eq.s32.totalorder %s16, 1
      %p160 = scmp.ne.s32.totalorder %s155, %s157
      %p161 = scmp.eq.s32.totalorder %s16, 0
      %p162 = por %p160, %p161
      %p163 = scmp.ne.s32.totalorder %s155, %s157
      %p164 = scmp.eq.s32.totalorder %s21, 1
      %p165 = por %p163, %p164
      %p166 = scmp.ne.s32.totalorder %s157, %s158
      %p167 = scmp.eq.s32.totalorder %s21, 0
      %p168 = por %p166, %p167
      %p169 = scmp.ne.s32.totalorder %s157, %s158
      %p170 = scmp.eq.s32.totalorder %s22, 1
      %p171 = por %p169, %p170
      %p173 = scmp.ne.s32.totalorder %s158, %s172
      %p174 = scmp.eq.s32.totalorder %s22, 0
      %p175 = por %p173, %p174
      %s177 = sadd.s32 %s176, 1
      %p180 = scmp.eq.s32.totalorder %s16, 1
      %p181 = scmp.ne.s32.totalorder %s176, %s178
      %p182 = scmp.eq.s32.totalorder %s16, 0
      %p183 = por %p181, %p182
      %p184 = scmp.ne.s32.totalorder %s176, %s178
      %p185 = scmp.eq.s32.totalorder %s21, 1
      %p186 = por %p184, %p185
      %p187 = scmp.ne.s32.totalorder %s178, %s179
      %p188 = scmp.eq.s32.totalorder %s21, 0
      %p189 = por %p187, %p188
      %p190 = scmp.ne.s32.totalorder %s178, %s179
      %p191 = scmp.eq.s32.totalorder %s22, 1
      %p192 = por %p190, %p191
      %p194 = scmp.ne.s32.totalorder %s179, %s193
      %p195 = scmp.eq.s32.totalorder %s22, 0
      %p196 = por %p194, %p195
      %s198 = sadd.s32 %s197, 1
      %p201 = scmp.eq.s32.totalorder %s16, 1
      %p202 = scmp.ne.s32.totalorder %s197, %s199
      %p203 = scmp.eq.s32.totalorder %s16, 0
      %p204 = por %p202, %p203
      %p205 = scmp.ne.s32.totalorder %s197, %s199
      %p206 = scmp.eq.s32.totalorder %s21, 1
      %p207 = por %p205, %p206
      %p208 = scmp.ne.s32.totalorder %s199, %s200
      %p209 = scmp.eq.s32.totalorder %s21, 0
      %p210 = por %p208, %p209
      %p211 = scmp.ne.s32.totalorder %s199, %s200
      %p212 = scmp.eq.s32.totalorder %s22, 1
      %p213 = por %p211, %p212
      %p215 = scmp.ne.s32.totalorder %s200, %s214
      %p216 = scmp.eq.s32.totalorder %s22, 0
      %p217 = por %p215, %p216
      %s219 = sadd.s32 %s218, 1
      %p222 = scmp.eq.s32.totalorder %s16, 1
      %p223 = scmp.ne.s32.totalorder %s218, %s220
      %p224 = scmp.eq.s32.totalorder %s16, 0
      %p225 = por %p223, %p224
      %p226 = scmp.ne.s32.totalorder %s218, %s220
      %p227 = scmp.eq.s32.totalorder %s21, 1
      %p228 = por %p226, %p227
      %p229 = scmp.ne.s32.totalorder %s220, %s221
      %p230 = scmp.eq.s32.totalorder %s21, 0
      %p231 = por %p229, %p230
      %p232 = scmp.ne.s32.totalorder %s220, %s221
      %p233 = scmp.eq.s32.totalorder %s22, 1
      %p234 = por %p232, %p233
      %p236 = scmp.ne.s32.totalorder %s221, %s235
      %p237 = scmp.eq.s32.totalorder %s22, 0
      %p238 = por %p236, %p237
      %p239 = scmp.le.s32.totalorder 1, %s16
      %p240 = scmp.lt.s32.totalorder %s16, 3
      %p241 = pnand %p239, %p240
      %p242 = pneg %p241
      // Predicated region
      $region9: #{net_forward.1} parent=5 // pred_check
        _
      $region10: #{net_forward.1} parent=5 // pred_check_branch
        %244 = sbr.rel (%p241) target = $region12
      $region11: #{net_forward.1} parent=5 // pred_region
        %s245 = ssub.s32 %s16, 1
        // Predicated region
        $region13: #{net_forward.1} parent=11 // pred_check
          %p246 = pneg %p37
        $region14: #{net_forward.1} parent=11 // pred_check_branch
          %248 = sbr.rel (%p246) target = $region16
        $region15: #{net_forward.1} parent=11 // pred_region
          _
        $region16: #{net_forward.1} parent=11 // pred_fallthru
          _
        // Predicated region
        $region17: #{net_forward.1} parent=11 // pred_check
          %p249 = pneg %p58
        $region18: #{net_forward.1} parent=11 // pred_check_branch
          %251 = sbr.rel (%p249) target = $region20
        $region19: #{net_forward.1} parent=11 // pred_region
          _
        $region20: #{net_forward.1} parent=11 // pred_fallthru
          _
        // Predicated region
        $region21: #{net_forward.1} parent=11 // pred_check
          %p252 = pneg %p79
        $region22: #{net_forward.1} parent=11 // pred_check_branch
          %254 = sbr.rel (%p252) target = $region24
        $region23: #{net_forward.1} parent=11 // pred_region
          _
        $region24: #{net_forward.1} parent=11 // pred_fallthru
          _
        // Predicated region
        $region25: #{net_forward.1} parent=11 // pred_check
          %p255 = pneg %p126
        $region26: #{net_forward.1} parent=11 // pred_check_branch
          %257 = sbr.rel (%p255) target = $region28
        $region27: #{net_forward.1} parent=11 // pred_region
          _
        $region28: #{net_forward.1} parent=11 // pred_fallthru
          _
        // Predicated region
        $region29: #{net_forward.1} parent=11 // pred_check
          %p258 = pneg %p147
        $region30: #{net_forward.1} parent=11 // pred_check_branch
          %260 = sbr.rel (%p258) target = $region32
        $region31: #{net_forward.1} parent=11 // pred_region
          _
        $region32: #{net_forward.1} parent=11 // pred_fallthru
          _
        // Predicated region
        $region33: #{net_forward.1} parent=11 // pred_check
          %p261 = pneg %p168
        $region34: #{net_forward.1} parent=11 // pred_check_branch
          %263 = sbr.rel (%p261) target = $region36
        $region35: #{net_forward.1} parent=11 // pred_region
          _
        $region36: #{net_forward.1} parent=11 // pred_fallthru
          _
        // Predicated region
        $region37: #{net_forward.1} parent=11 // pred_check
          %p264 = pneg %p189
        $region38: #{net_forward.1} parent=11 // pred_check_branch
          %266 = sbr.rel (%p264) target = $region40
        $region39: #{net_forward.1} parent=11 // pred_region
          _
        $region40: #{net_forward.1} parent=11 // pred_fallthru
          _
        // Predicated region
        $region41: #{net_forward.1} parent=11 // pred_check
          %p267 = pneg %p210
        $region42: #{net_forward.1} parent=11 // pred_check_branch
          %269 = sbr.rel (%p267) target = $region44
        $region43: #{net_forward.1} parent=11 // pred_region
          _
        $region44: #{net_forward.1} parent=11 // pred_fallthru
          _
      $region12: #{net_forward.1} parent=5 // pred_fallthru
        _
      %p270 = scmp.lt.s32.totalorder %s16, 2
      // Predicated region
      $region45: #{net_forward.1} parent=5 // pred_check
        %p271 = pneg %p270
      $region46: #{net_forward.1} parent=5 // pred_check_branch
        %273 = sbr.rel (%p271) target = $region48
      $region47: #{net_forward.1} parent=5 // pred_region
        // Predicated region
        $region49: #{net_forward.1} parent=47 // pred_check
          %p274 = pneg %p99
        $region50: #{net_forward.1} parent=47 // pred_check_branch
          %276 = sbr.rel (%p274) target = $region52
        $region51: #{net_forward.1} parent=47 // pred_region
          %s277 = smul.u32 576, %s16
          %p278 = scmp.lt.s32.totalorder %s277, 1151
          %s279 = scalar_select %p278, %s277, 1151
          %s280 = smul.addr %s279, 4
          %s281 = smul.addr %s280, 4
          %s282 = scalar_lea.vmem %s3, %s281
          %s283 = smul.u32 576, %s16
        $region52: #{net_forward.1} parent=47 // pred_fallthru
          _
      $region48: #{net_forward.1} parent=5 // pred_fallthru
        _
      %p284 = scmp.le.s32.totalorder 1, %s16
      %p285 = scmp.lt.s32.totalorder %s16, 3
      %p286 = pnand %p284, %p285
      %p287 = pneg %p286
      // Predicated region
      $region53: #{net_forward.1} parent=5 // pred_check
        _
      $region54: #{net_forward.1} parent=5 // pred_check_branch
        %289 = sbr.rel (%p286) target = $region56
      $region55: #{net_forward.1} parent=5 // pred_region
        %s290 = ssub.s32 %s16, 1
        %p291 = pneg %p37
        %p292 = pneg %p34
        %p293 = pneg %p58
        %p294 = pneg %p55
        %p295 = pneg %p79
        %p296 = pneg %p76
        %s297 = smul.u32 576, %s21
        %p298 = scmp.lt.s32.totalorder %s297, 1151
        %s299 = scalar_select %p298, %s297, 1151
        %s300 = smul.addr %s299, 4
        %s301 = smul.addr %s300, 4
        %s302 = scalar_lea.vmem %s3, %s301
        %p303 = pneg %p105
        %p304 = pneg %p102
        %p305 = pneg %p126
        %p306 = pneg %p123
        %p307 = pneg %p147
        %p308 = pneg %p144
        %p309 = pneg %p168
        %p310 = pneg %p165
        %p311 = pneg %p189
        %p312 = pneg %p186
        %p313 = pneg %p210
        %p314 = pneg %p207
        %p315 = pneg %p231
        %p316 = pneg %p228
        %s317 = smul.u32 576, %s21
        %p318 = scmp.lt.s32.totalorder %s317, 1151
        %s319 = scalar_select %p318, %s317, 1151
        %s320 = smul.addr %s319, 4
        %s321 = smul.addr %s320, 4
        %s322 = scalar_lea.vmem %s3, %s321
        %s323 = smul.u32 576, %s21
        %p324 = scmp.eq.s32.totalorder %s21, 0
        // Predicated region
        $region57: #{net_forward.1} parent=55 // pred_check
          %p325 = pneg %p324
        $region58: #{net_forward.1} parent=55 // pred_check_branch
          %327 = sbr.rel (%p325) target = $region60
        $region59: #{net_forward.1} parent=55 // pred_region
          %328 = vst [vmem:[#allocation3] sm:$0xff] 0.0
          %v329 = vld [vmem:[%s0] sm:$0xff]
          %v330 = vld [vmem:[%s0 + $0x8] sm:$0xff]
          %v331 = vld [vmem:[%s0 + $0x10] sm:$0xff]
          %v332 = vld [vmem:[%s0 + $0x18] sm:$0xff]
          %v333 = vld [vmem:[%s0 + $0x20] sm:$0xff]
          %v334 = vld [vmem:[%s0 + $0x28] sm:$0xff]
          %v335 = vld [vmem:[%s0 + $0x30] sm:$0xff]
          %v336 = vld [vmem:[%s0 + $0x38] sm:$0xff]
          %v337 = vld [vmem:[%s0 + $0x40] sm:$0xff]
          %v338 = vld [vmem:[%s1] sm:$0xff]
          %v339 = vld [vmem:[%s1 + $0x8] sm:$0xff]
          %v340 = vld [vmem:[%s1 + $0x10] sm:$0xff]
          %v341 = vld [vmem:[%s1 + $0x18] sm:$0xff]
          %v342 = vld [vmem:[%s1 + $0x20] sm:$0xff]
          %v343 = vld [vmem:[%s1 + $0x28] sm:$0xff]
          %v344 = vld [vmem:[%s1 + $0x30] sm:$0xff]
          %v345 = vld [vmem:[%s1 + $0x38] sm:$0xff]
          %v346 = vld [vmem:[%s1 + $0x40] sm:$0xff]
          %v347 = vld [vmem:[%s1 + $0x48] sm:$0xff]
          %v348 = vld [vmem:[%s1 + $0x50] sm:$0xff]
          %v349 = vld [vmem:[%s1 + $0x58] sm:$0xff]
          %v350 = vld [vmem:[%s1 + $0x60] sm:$0xff]
          %v351 = vld [vmem:[%s1 + $0x68] sm:$0xff]
          %v352 = vld [vmem:[%s1 + $0x70] sm:$0xff]
          %v353 = vld [vmem:[%s1 + $0x78] sm:$0xff]
          %v354 = vld [vmem:[%s1 + $0x80] sm:$0xff]
          %v355 = vld [vmem:[%s1 + $0x88] sm:$0xff]
          %v356 = vld [vmem:[%s1 + $0x90] sm:$0xff]
          %v357 = vld [vmem:[%s1 + $0x98] sm:$0xff]
          %v358 = vld [vmem:[%s1 + $0xa0] sm:$0xff]
          %v359 = vld [vmem:[%s1 + $0xa8] sm:$0xff]
          %v360 = vld [vmem:[%s1 + $0xb0] sm:$0xff]
          %v361 = vld [vmem:[%s1 + $0xb8] sm:$0xff]
          %v362 = vld [vmem:[%s1 + $0xc0] sm:$0xff]
          %v363 = vld [vmem:[%s1 + $0xc8] sm:$0xff]
          %v364 = vld [vmem:[%s1 + $0xd0] sm:$0xff]
          %v365 = vld [vmem:[%s1 + $0xd8] sm:$0xff]
          %v366 = vld [vmem:[%s1 + $0xe0] sm:$0xff]
          %v367 = vld [vmem:[%s1 + $0xe8] sm:$0xff]
          %v368 = vld [vmem:[%s1 + $0xf0] sm:$0xff]
          %v369 = vld [vmem:[%s1 + $0xf8] sm:$0xff]
          %v370 = vld [vmem:[%s2] sm:$0x3]
          %v372 = vlaneseq
          %v373 = vshrl.u32 %v372, 7
          %v374 = vsub.s32 0, %v373
          %v375 = vrot.slane %v370, %v374
          %v376 = vlaneseq
          %v377 = vshrl.u32 %v376, 7
          %v378 = vsub.s32 1, %v377
          %v379 = vrot.slane %v370, %v378
          %v391 = vunpack.c.l.b16 %v329
          %v392 = vunpack.c.h.b16 %v329
          %v393 = vunpack.c.l.b16 %v330
          %v394 = vunpack.c.h.b16 %v330
          %v395 = vunpack.c.l.b16 %v331
          %v396 = vunpack.c.h.b16 %v331
          %v397 = vunpack.c.l.b16 %v332
          %v398 = vunpack.c.h.b16 %v332
          %v399 = vunpack.c.l.b16 %v333
          %v400 = vunpack.c.h.b16 %v333
          %v401 = vunpack.c.l.b16 %v334
          %v402 = vunpack.c.h.b16 %v334
          %v403 = vunpack.c.l.b16 %v335
          %v404 = vunpack.c.h.b16 %v335
          %v405 = vunpack.c.l.b16 %v336
          %v406 = vunpack.c.h.b16 %v336
          %v407 = vunpack.c.l.b16 %v337
          %v408 = vunpack.c.h.b16 %v337
          %v409 = vpack.c.b16 %v393, %v391
          %v410 = vpack.c.b16 %v394, %v392
          %v411 = vpack.c.b16 %v397, %v395
          %v412 = vpack.c.b16 %v398, %v396
          %v413 = vpack.c.b16 %v401, %v399
          %v414 = vpack.c.b16 %v402, %v400
          %v415 = vpack.c.b16 %v405, %v403
          %v416 = vpack.c.b16 %v406, %v404
          %v417 = vpack.c.b16 %v407, %v407
          %v418 = vpack.c.b16 %v408, %v408
          %v461 = vunpack.c.l.b16 %v338
          %v462 = vunpack.c.h.b16 %v338
          %v463 = vunpack.c.l.b16 %v339
          %v464 = vunpack.c.h.b16 %v339
          %v465 = vunpack.c.l.b16 %v340
          %v466 = vunpack.c.h.b16 %v340
          %v467 = vunpack.c.l.b16 %v341
          %v468 = vunpack.c.h.b16 %v341
          %v469 = vunpack.c.l.b16 %v342
          %v470 = vunpack.c.h.b16 %v342
          %v471 = vunpack.c.l.b16 %v343
          %v472 = vunpack.c.h.b16 %v343
          %v473 = vunpack.c.l.b16 %v344
          %v474 = vunpack.c.h.b16 %v344
          %v475 = vunpack.c.l.b16 %v345
          %v476 = vunpack.c.h.b16 %v345
          %v477 = vunpack.c.l.b16 %v346
          %v478 = vunpack.c.h.b16 %v346
          %v479 = vunpack.c.l.b16 %v347
          %v480 = vunpack.c.h.b16 %v347
          %v481 = vunpack.c.l.b16 %v348
          %v482 = vunpack.c.h.b16 %v348
          %v483 = vunpack.c.l.b16 %v349
          %v484 = vunpack.c.h.b16 %v349
          %v485 = vunpack.c.l.b16 %v350
          %v486 = vunpack.c.h.b16 %v350
          %v487 = vunpack.c.l.b16 %v351
          %v488 = vunpack.c.h.b16 %v351
          %v489 = vunpack.c.l.b16 %v352
          %v490 = vunpack.c.h.b16 %v352
          %v491 = vunpack.c.l.b16 %v353
          %v492 = vunpack.c.h.b16 %v353
          %v493 = vunpack.c.l.b16 %v354
          %v494 = vunpack.c.h.b16 %v354
          %v495 = vunpack.c.l.b16 %v355
          %v496 = vunpack.c.h.b16 %v355
          %v497 = vunpack.c.l.b16 %v356
          %v498 = vunpack.c.h.b16 %v356
          %v499 = vunpack.c.l.b16 %v357
          %v500 = vunpack.c.h.b16 %v357
          %v501 = vunpack.c.l.b16 %v358
          %v502 = vunpack.c.h.b16 %v358
          %v503 = vunpack.c.l.b16 %v359
          %v504 = vunpack.c.h.b16 %v359
          %v505 = vunpack.c.l.b16 %v360
          %v506 = vunpack.c.h.b16 %v360
          %v507 = vunpack.c.l.b16 %v361
          %v508 = vunpack.c.h.b16 %v361
          %v509 = vunpack.c.l.b16 %v362
          %v510 = vunpack.c.h.b16 %v362
          %v511 = vunpack.c.l.b16 %v363
          %v512 = vunpack.c.h.b16 %v363
          %v513 = vunpack.c.l.b16 %v364
          %v514 = vunpack.c.h.b16 %v364
          %v515 = vunpack.c.l.b16 %v365
          %v516 = vunpack.c.h.b16 %v365
          %v517 = vunpack.c.l.b16 %v366
          %v518 = vunpack.c.h.b16 %v366
          %v519 = vunpack.c.l.b16 %v367
          %v520 = vunpack.c.h.b16 %v367
          %v521 = vunpack.c.l.b16 %v368
          %v522 = vunpack.c.h.b16 %v368
          %v523 = vunpack.c.l.b16 %v369
          %v524 = vunpack.c.h.b16 %v369
          %v525 = vpack.c.b16 %v463, %v461
          %v526 = vpack.c.b16 %v464, %v462
          %v527 = vpack.c.b16 %v467, %v465
          %v528 = vpack.c.b16 %v468, %v466
          %v529 = vpack.c.b16 %v471, %v469
          %v530 = vpack.c.b16 %v472, %v470
          %v531 = vpack.c.b16 %v475, %v473
          %v532 = vpack.c.b16 %v476, %v474
          %v533 = vpack.c.b16 %v479, %v477
          %v534 = vpack.c.b16 %v480, %v478
          %v535 = vpack.c.b16 %v483, %v481
          %v536 = vpack.c.b16 %v484, %v482
          %v537 = vpack.c.b16 %v487, %v485
          %v538 = vpack.c.b16 %v488, %v486
          %v539 = vpack.c.b16 %v491, %v489
          %v540 = vpack.c.b16 %v492, %v490
          %v541 = vpack.c.b16 %v495, %v493
          %v542 = vpack.c.b16 %v496, %v494
          %v543 = vpack.c.b16 %v499, %v497
          %v544 = vpack.c.b16 %v500, %v498
          %v545 = vpack.c.b16 %v503, %v501
          %v546 = vpack.c.b16 %v504, %v502
          %v547 = vpack.c.b16 %v507, %v505
          %v548 = vpack.c.b16 %v508, %v506
          %v549 = vpack.c.b16 %v511, %v509
          %v550 = vpack.c.b16 %v512, %v510
          %v551 = vpack.c.b16 %v515, %v513
          %v552 = vpack.c.b16 %v516, %v514
          %v553 = vpack.c.b16 %v519, %v517
          %v554 = vpack.c.b16 %v520, %v518
          %v555 = vpack.c.b16 %v523, %v521
          %v556 = vpack.c.b16 %v524, %v522
          %589 = vmatprep.subr.bf16.mxu0 %v526
          %590 = vmatpush1.bf16.msra.mxu0 %v525
          %591 = vmatprep.subr.bf16.mxu0 %v528
          %592 = vmatpush1.bf16.msra.mxu0 %v527
          %593 = vmatprep.subr.bf16.mxu0 %v530
          %594 = vmatpush1.bf16.msra.mxu0 %v529
          %595 = vmatprep.subr.bf16.mxu0 %v532
          %596 = vmatpush1.bf16.msra.mxu0 %v531
          %597 = vmatprep.subr.bf16.mxu0 %v534
          %598 = vmatpush1.bf16.msra.mxu0 %v533
          %599 = vmatprep.subr.bf16.mxu0 %v536
          %600 = vmatpush1.bf16.msra.mxu0 %v535
          %601 = vmatprep.subr.bf16.mxu0 %v538
          %602 = vmatpush1.bf16.msra.mxu0 %v537
          %603 = vmatprep.subr.bf16.mxu0 %v540
          %604 = vmatpush1.bf16.msra.mxu0 %v539
          %605 = vmatprep.subr.bf16.mxu0 %v542
          %606 = vmatpush1.bf16.msra.mxu0 %v541
          %607 = vmatprep.subr.bf16.mxu0 %v544
          %608 = vmatpush1.bf16.msra.mxu0 %v543
          %609 = vmatprep.subr.bf16.mxu0 %v546
          %610 = vmatpush1.bf16.msra.mxu0 %v545
          %611 = vmatprep.subr.bf16.mxu0 %v548
          %612 = vmatpush1.bf16.msra.mxu0 %v547
          %613 = vmatprep.subr.bf16.mxu0 %v550
          %614 = vmatpush1.bf16.msra.mxu0 %v549
          %615 = vmatprep.subr.bf16.mxu0 %v552
          %616 = vmatpush1.bf16.msra.mxu0 %v551
          %617 = vmatprep.subr.bf16.mxu0 %v554
          %618 = vmatpush1.bf16.msra.mxu0 %v553
          %619 = vmatprep.subr.bf16.mxu0 %v556
          %620 = vmatpush1.bf16.msra.mxu0 %v555
          %621 = vmatprep.mubr.bf16.mxu0 %v410
          %622 = vmatmul.mubr.bf16.gmra.mrb[0].mxu0 %v409
          %v623 = vpop.f32.mrb[0].mxu0
          %v624 = vadd.f32 %v375, %v623
          %v625 = vpop.f32.mrb[0].mxu0
          %v626 = vadd.f32 %v379, %v625
          %v627 = vpop.f32.mrb[0].mxu0
          %v628 = vadd.f32 %v375, %v627
          %v629 = vpop.f32.mrb[0].mxu0
          %v630 = vadd.f32 %v379, %v629
          %631 = vmatprep.mubr.bf16.mxu0 %v412
          %632 = vmatmul.mubr.bf16.gmra.mrb[0].mxu0 %v411
          %v633 = vpop.f32.mrb[0].mxu0
          %v634 = vadd.f32 %v375, %v633
          %v635 = vpop.f32.mrb[0].mxu0
          %v636 = vadd.f32 %v379, %v635
          %v637 = vpop.f32.mrb[0].mxu0
          %v638 = vadd.f32 %v375, %v637
          %v639 = vpop.f32.mrb[0].mxu0
          %v640 = vadd.f32 %v379, %v639
          %641 = vmatprep.mubr.bf16.mxu0 %v414
          %642 = vmatmul.mubr.bf16.gmra.mrb[0].mxu0 %v413
          %v643 = vpop.f32.mrb[0].mxu0
          %v644 = vadd.f32 %v375, %v643
          %v645 = vpop.f32.mrb[0].mxu0
          %v646 = vadd.f32 %v379, %v645
          %v647 = vpop.f32.mrb[0].mxu0
          %v648 = vadd.f32 %v375, %v647
          %v649 = vpop.f32.mrb[0].mxu0
          %v650 = vadd.f32 %v379, %v649
          %651 = vmatprep.mubr.bf16.mxu0 %v416
          %652 = vmatmul.mubr.bf16.gmra.mrb[0].mxu0 %v415
          %v653 = vpop.f32.mrb[0].mxu0
          %v654 = vadd.f32 %v375, %v653
          %v655 = vpop.f32.mrb[0].mxu0
          %v656 = vadd.f32 %v379, %v655
          %v657 = vpop.f32.mrb[0].mxu0
          %v658 = vadd.f32 %v375, %v657
          %v659 = vpop.f32.mrb[0].mxu0
          %v660 = vadd.f32 %v379, %v659
          %661 = vmatprep.mubr.bf16.mxu0 %v418
          %662 = vmatmul.mubr.bf16.gmra.mrb[0].mxu0 %v417
          %v663 = vpop.f32.mrb[0].mxu0
          %v664 = vadd.f32 %v375, %v663
          %v665 = vpop.f32.mrb[0].mxu0
          %v666 = vadd.f32 %v379, %v665
          %v667 = vpop.f32.mrb[0].mxu0
          %v668 = vpop.f32.mrb[0].mxu0
          %669 = vdwg.mxu0
          %v670 = vmax.f32 %v624, 0.0
          %v671 = vmax.f32 %v626, 0.0
          %v672 = vmax.f32 %v628, 0.0
          %v673 = vmax.f32 %v630, 0.0
          %v674 = vmax.f32 %v634, 0.0
          %v675 = vmax.f32 %v636, 0.0
          %v676 = vmax.f32 %v638, 0.0
          %v677 = vmax.f32 %v640, 0.0
          %v678 = vmax.f32 %v644, 0.0
          %v679 = vmax.f32 %v646, 0.0
          %v680 = vmax.f32 %v648, 0.0
          %v681 = vmax.f32 %v650, 0.0
          %v682 = vmax.f32 %v654, 0.0
          %v683 = vmax.f32 %v656, 0.0
          %v684 = vmax.f32 %v658, 0.0
          %v685 = vmax.f32 %v660, 0.0
          %v686 = vmax.f32 %v664, 0.0
          %v687 = vmax.f32 %v666, 0.0
          %v688 = vpack.c.bf16 %v672, %v670
          %v689 = vpack.c.bf16 %v673, %v671
          %v690 = vpack.c.bf16 %v676, %v674
          %v691 = vpack.c.bf16 %v677, %v675
          %v692 = vpack.c.bf16 %v680, %v678
          %v693 = vpack.c.bf16 %v681, %v679
          %v694 = vpack.c.bf16 %v684, %v682
          %v695 = vpack.c.bf16 %v685, %v683
          %v696 = vpack.c.bf16 %v686, %v686
          %v697 = vpack.c.bf16 %v687, %v687
          %v700 = vcombine.low %v688, %v689
          %v702 = vunpack.c.l.s4 1966171168
          %v703 = vunpack.c.0.s8 %v702
          %v704 = vlaneseq
          %v705 = vshrl.u32 %v704, 7
          %v706 = vsub.s32 %v703, %v705
          %v707 = vrot.slane %v700, %v706
          %v709 = vunpack.c.l.s4 1966171168
          %v710 = vunpack.c.0.s8 %v709
          %v711 = vlaneseq
          %v712 = vshrl.u32 %v711, 7
          %v713 = vsub.s32 %v710, %v712
          %v714 = vrot.slane %v707, %v713
          %716 = vst [vmem:[#allocation2] sm:$0x3] %v714
          %v717 = vcombine.high %v707, %v707
          %v719 = vunpack.c.l.s4 1966171168
          %v720 = vunpack.c.0.s8 %v719
          %v721 = vlaneseq
          %v722 = vshrl.u32 %v721, 7
          %v723 = vsub.s32 %v720, %v722
          %v724 = vrot.slane %v717, %v723
          %726 = vst [vmem:[#allocation2 + $0x2] sm:$0x3] %v724
          %v727 = vcombine.high %v714, %v714
          %729 = vst [vmem:[#allocation2 + $0x4] sm:$0x3] %v727
          %v730 = vcombine.high %v724, %v724
          %732 = vst [vmem:[#allocation2 + $0x6] sm:$0x3] %v730
          %v733 = vcombine.high %v688, %v689
          %v735 = vunpack.c.l.s4 1966171168
          %v736 = vunpack.c.0.s8 %v735
          %v737 = vlaneseq
          %v738 = vshrl.u32 %v737, 7
          %v739 = vsub.s32 %v736, %v738
          %v740 = vrot.slane %v733, %v739
          %v742 = vunpack.c.l.s4 1966171168
          %v743 = vunpack.c.0.s8 %v742
          %v744 = vlaneseq
          %v745 = vshrl.u32 %v744, 7
          %v746 = vsub.s32 %v743, %v745
          %v747 = vrot.slane %v740, %v746
          %749 = vst [vmem:[#allocation2 + $0x8] sm:$0x3] %v747
          %v750 = vcombine.high %v740, %v740
          %v752 = vunpack.c.l.s4 1966171168
          %v753 = vunpack.c.0.s8 %v752
          %v754 = vlaneseq
          %v755 = vshrl.u32 %v754, 7
          %v756 = vsub.s32 %v753, %v755
          %v757 = vrot.slane %v750, %v756
          %759 = vst [vmem:[#allocation2 + $0xa] sm:$0x3] %v757
          %v760 = vcombine.high %v747, %v747
          %762 = vst [vmem:[#allocation2 + $0xc] sm:$0x3] %v760
          %v763 = vcombine.high %v757, %v757
          %765 = vst [vmem:[#allocation2 + $0xe] sm:$0x3] %v763
          %v768 = vcombine.low %v690, %v691
          %v770 = vunpack.c.l.s4 1966171168
          %v771 = vunpack.c.0.s8 %v770
          %v772 = vlaneseq
          %v773 = vshrl.u32 %v772, 7
          %v774 = vsub.s32 %v771, %v773
          %v775 = vrot.slane %v768, %v774
          %v777 = vunpack.c.l.s4 1966171168
          %v778 = vunpack.c.0.s8 %v777
          %v779 = vlaneseq
          %v780 = vshrl.u32 %v779, 7
          %v781 = vsub.s32 %v778, %v780
          %v782 = vrot.slane %v775, %v781
          %784 = vst [vmem:[#allocation2 + $0x10] sm:$0x3] %v782
          %v785 = vcombine.high %v775, %v775
          %v787 = vunpack.c.l.s4 1966171168
          %v788 = vunpack.c.0.s8 %v787
          %v789 = vlaneseq
          %v790 = vshrl.u32 %v789, 7
          %v791 = vsub.s32 %v788, %v790
          %v792 = vrot.slane %v785, %v791
          %794 = vst [vmem:[#allocation2 + $0x12] sm:$0x3] %v792
          %v795 = vcombine.high %v782, %v782
          %797 = vst [vmem:[#allocation2 + $0x14] sm:$0x3] %v795
          %v798 = vcombine.high %v792, %v792
          %800 = vst [vmem:[#allocation2 + $0x16] sm:$0x3] %v798
          %v801 = vcombine.high %v690, %v691
          %v803 = vunpack.c.l.s4 1966171168
          %v804 = vunpack.c.0.s8 %v803
          %v805 = vlaneseq
          %v806 = vshrl.u32 %v805, 7
          %v807 = vsub.s32 %v804, %v806
          %v808 = vrot.slane %v801, %v807
          %v810 = vunpack.c.l.s4 1966171168
          %v811 = vunpack.c.0.s8 %v810
          %v812 = vlaneseq
          %v813 = vshrl.u32 %v812, 7
          %v814 = vsub.s32 %v811, %v813
          %v815 = vrot.slane %v808, %v814
          %817 = vst [vmem:[#allocation2 + $0x18] sm:$0x3] %v815
          %v818 = vcombine.high %v808, %v808
          %v820 = vunpack.c.l.s4 1966171168
          %v821 = vunpack.c.0.s8 %v820
          %v822 = vlaneseq
          %v823 = vshrl.u32 %v822, 7
          %v824 = vsub.s32 %v821, %v823
          %v825 = vrot.slane %v818, %v824
          %827 = vst [vmem:[#allocation2 + $0x1a] sm:$0x3] %v825
          %v828 = vcombine.high %v815, %v815
          %830 = vst [vmem:[#allocation2 + $0x1c] sm:$0x3] %v828
          %v831 = vcombine.high %v825, %v825
          %833 = vst [vmem:[#allocation2 + $0x1e] sm:$0x3] %v831
          %v836 = vcombine.low %v692, %v693
          %v838 = vunpack.c.l.s4 1966171168
          %v839 = vunpack.c.0.s8 %v838
          %v840 = vlaneseq
          %v841 = vshrl.u32 %v840, 7
          %v842 = vsub.s32 %v839, %v841
          %v843 = vrot.slane %v836, %v842
          %v845 = vunpack.c.l.s4 1966171168
          %v846 = vunpack.c.0.s8 %v845
          %v847 = vlaneseq
          %v848 = vshrl.u32 %v847, 7
          %v849 = vsub.s32 %v846, %v848
          %v850 = vrot.slane %v843, %v849
          %852 = vst [vmem:[#allocation2 + $0x20] sm:$0x3] %v850
          %v853 = vcombine.high %v843, %v843
          %v855 = vunpack.c.l.s4 1966171168
          %v856 = vunpack.c.0.s8 %v855
          %v857 = vlaneseq
          %v858 = vshrl.u32 %v857, 7
          %v859 = vsub.s32 %v856, %v858
          %v860 = vrot.slane %v853, %v859
          %862 = vst [vmem:[#allocation2 + $0x22] sm:$0x3] %v860
          %v863 = vcombine.high %v850, %v850
          %s865 = scalar_lea.vmem [#allocation2], 36
          %866 = vst [vmem:[%s865] sm:$0x3] %v863
          %v867 = vcombine.high %v860, %v860
          %869 = vst [vmem:[%s865 + $0x2] sm:$0x3] %v867
          %v870 = vcombine.high %v692, %v693
          %v872 = vunpack.c.l.s4 1966171168
          %v873 = vunpack.c.0.s8 %v872
          %v874 = vlaneseq
          %v875 = vshrl.u32 %v874, 7
          %v876 = vsub.s32 %v873, %v875
          %v877 = vrot.slane %v870, %v876
          %v879 = vunpack.c.l.s4 1966171168
          %v880 = vunpack.c.0.s8 %v879
          %v881 = vlaneseq
          %v882 = vshrl.u32 %v881, 7
          %v883 = vsub.s32 %v880, %v882
          %v884 = vrot.slane %v877, %v883
          %886 = vst [vmem:[%s865 + $0x4] sm:$0x3] %v884
          %v887 = vcombine.high %v877, %v877
          %v889 = vunpack.c.l.s4 1966171168
          %v890 = vunpack.c.0.s8 %v889
          %v891 = vlaneseq
          %v892 = vshrl.u32 %v891, 7
          %v893 = vsub.s32 %v890, %v892
          %v894 = vrot.slane %v887, %v893
          %896 = vst [vmem:[%s865 + $0x6] sm:$0x3] %v894
          %v897 = vcombine.high %v884, %v884
          %899 = vst [vmem:[%s865 + $0x8] sm:$0x3] %v897
          %v900 = vcombine.high %v894, %v894
          %902 = vst [vmem:[%s865 + $0xa] sm:$0x3] %v900
          %v905 = vcombine.low %v694, %v695
          %v907 = vunpack.c.l.s4 1966171168
          %v908 = vunpack.c.0.s8 %v907
          %v909 = vlaneseq
          %v910 = vshrl.u32 %v909, 7
          %v911 = vsub.s32 %v908, %v910
          %v912 = vrot.slane %v905, %v911
          %v914 = vunpack.c.l.s4 1966171168
          %v915 = vunpack.c.0.s8 %v914
          %v916 = vlaneseq
          %v917 = vshrl.u32 %v916, 7
          %v918 = vsub.s32 %v915, %v917
          %v919 = vrot.slane %v912, %v918
          %921 = vst [vmem:[%s865 + $0xc] sm:$0x3] %v919
          %v922 = vcombine.high %v912, %v912
          %v924 = vunpack.c.l.s4 1966171168
          %v925 = vunpack.c.0.s8 %v924
          %v926 = vlaneseq
          %v927 = vshrl.u32 %v926, 7
          %v928 = vsub.s32 %v925, %v927
          %v929 = vrot.slane %v922, %v928
          %931 = vst [vmem:[%s865 + $0xe] sm:$0x3] %v929
          %v932 = vcombine.high %v919, %v919
          %934 = vst [vmem:[%s865 + $0x10] sm:$0x3] %v932
          %v935 = vcombine.high %v929, %v929
          %937 = vst [vmem:[%s865 + $0x12] sm:$0x3] %v935
          %v938 = vcombine.high %v694, %v695
          %v940 = vunpack.c.l.s4 1966171168
          %v941 = vunpack.c.0.s8 %v940
          %v942 = vlaneseq
          %v943 = vshrl.u32 %v942, 7
          %v944 = vsub.s32 %v941, %v943
          %v945 = vrot.slane %v938, %v944
          %v947 = vunpack.c.l.s4 1966171168
          %v948 = vunpack.c.0.s8 %v947
          %v949 = vlaneseq
          %v950 = vshrl.u32 %v949, 7
          %v951 = vsub.s32 %v948, %v950
          %v952 = vrot.slane %v945, %v951
          %954 = vst [vmem:[%s865 + $0x14] sm:$0x3] %v952
          %v955 = vcombine.high %v945, %v945
          %v957 = vunpack.c.l.s4 1966171168
          %v958 = vunpack.c.0.s8 %v957
          %v959 = vlaneseq
          %v960 = vshrl.u32 %v959, 7
          %v961 = vsub.s32 %v958, %v960
          %v962 = vrot.slane %v955, %v961
          %964 = vst [vmem:[%s865 + $0x16] sm:$0x3] %v962
          %v965 = vcombine.high %v952, %v952
          %967 = vst [vmem:[%s865 + $0x18] sm:$0x3] %v965
          %v968 = vcombine.high %v962, %v962
          %970 = vst [vmem:[%s865 + $0x1a] sm:$0x3] %v968
          %v973 = vcombine.low %v696, %v697
          %v975 = vunpack.c.l.s4 1966171168
          %v976 = vunpack.c.0.s8 %v975
          %v977 = vlaneseq
          %v978 = vshrl.u32 %v977, 7
          %v979 = vsub.s32 %v976, %v978
          %v980 = vrot.slane %v973, %v979
          %v982 = vunpack.c.l.s4 1966171168
          %v983 = vunpack.c.0.s8 %v982
          %v984 = vlaneseq
          %v985 = vshrl.u32 %v984, 7
          %v986 = vsub.s32 %v983, %v985
          %v987 = vrot.slane %v980, %v986
          %989 = vst [vmem:[%s865 + $0x1c] sm:$0x3] %v987
          %v990 = vcombine.high %v980, %v980
          %v992 = vunpack.c.l.s4 1966171168
          %v993 = vunpack.c.0.s8 %v992
          %v994 = vlaneseq
          %v995 = vshrl.u32 %v994, 7
          %v996 = vsub.s32 %v993, %v995
          %v997 = vrot.slane %v990, %v996
          %999 = vst [vmem:[%s865 + $0x1e] sm:$0x3] %v997
          %v1000 = vcombine.high %v987, %v987
          %1002 = vst [vmem:[%s865 + $0x20] sm:$0x3] %v1000
          %v1003 = vcombine.high %v997, %v997
          %1005 = vst [vmem:[%s865 + $0x22] sm:$0x3] %v1003
        $region60: #{net_forward.1} parent=55 // pred_fallthru
          _
        %v1006 = vld [vmem:[#allocation3] sm:$0xff]
        %s1007 = smul.u32 %s21, 36
        %s1008 = scalar_lea.vmem [#allocation2], %s1007
        %v1009 = vld [vmem:[%s1008] sm:$0xff]
        %v1010 = vld [vmem:[%s1008 + $0x8] sm:$0xff]
        %v1011 = vld [vmem:[%s1008 + $0x10] sm:$0xff]
        %v1012 = vld [vmem:[%s1008 + $0x18] sm:$0xff]
        %v1013 = vld [vmem:[%s1008 + $0x20] sm:$0xf]
        %v1014 = vld [vmem:[%s322] sm:$0xff]
        %v1015 = vld [vmem:[%s322 + $0x8] sm:$0xff]
        %v1016 = vld [vmem:[%s322 + $0x10] sm:$0xff]
        %v1017 = vld [vmem:[%s322 + $0x18] sm:$0xff]
        %v1018 = vld [vmem:[%s322 + $0x20] sm:$0xff]
        %v1019 = vld [vmem:[%s322 + $0x28] sm:$0xff]
        %v1020 = vld [vmem:[%s322 + $0x30] sm:$0xff]
        %v1021 = vld [vmem:[%s322 + $0x38] sm:$0xff]
        %v1022 = vld [vmem:[%s322 + $0x40] sm:$0xff]
        %v1023 = vld [vmem:[%s322 + $0x48] sm:$0xff]
        %v1024 = vld [vmem:[%s322 + $0x50] sm:$0xff]
        %v1025 = vld [vmem:[%s322 + $0x58] sm:$0xff]
        %v1026 = vld [vmem:[%s322 + $0x60] sm:$0xff]
        %v1027 = vld [vmem:[%s322 + $0x68] sm:$0xff]
        %v1028 = vld [vmem:[%s322 + $0x70] sm:$0xff]
        %v1029 = vld [vmem:[%s322 + $0x78] sm:$0xff]
        %v1030 = vld [vmem:[%s322 + $0x80] sm:$0xff]
        %v1031 = vld [vmem:[%s322 + $0x88] sm:$0xff]
        %v1032 = vld [vmem:[%s322 + $0x90] sm:$0xff]
        %v1033 = vld [vmem:[%s322 + $0x98] sm:$0xff]
        %v1034 = vld [vmem:[%s322 + $0xa0] sm:$0xff]
        %v1035 = vld [vmem:[%s322 + $0xa8] sm:$0xff]
        %v1036 = vld [vmem:[%s322 + $0xb0] sm:$0xff]
        %v1037 = vld [vmem:[%s322 + $0xb8] sm:$0xff]
        %v1038 = vld [vmem:[%s322 + $0xc0] sm:$0xff]
        %v1039 = vld [vmem:[%s322 + $0xc8] sm:$0xff]
        %v1040 = vld [vmem:[%s322 + $0xd0] sm:$0xff]
        %v1041 = vld [vmem:[%s322 + $0xd8] sm:$0xff]
        %v1042 = vld [vmem:[%s322 + $0xe0] sm:$0xff]
        %v1043 = vld [vmem:[%s322 + $0xe8] sm:$0xff]
        %v1044 = vld [vmem:[%s322 + $0xf0] sm:$0xff]
        %v1045 = vld [vmem:[%s322 + $0xf8] sm:$0xff]
        %v1046 = vld [vmem:[%s322 + $0x100] sm:$0xff]
        %v1047 = vld [vmem:[%s322 + $0x108] sm:$0xff]
        %v1048 = vld [vmem:[%s322 + $0x110] sm:$0xff]
        %v1049 = vld [vmem:[%s322 + $0x118] sm:$0xff]
        %v1050 = vld [vmem:[%s322 + $0x120] sm:$0xff]
        %v1051 = vld [vmem:[%s322 + $0x128] sm:$0xff]
        %v1052 = vld [vmem:[%s322 + $0x130] sm:$0xff]
        %v1053 = vld [vmem:[%s322 + $0x138] sm:$0xff]
        %v1054 = vld [vmem:[%s322 + $0x140] sm:$0xff]
        %v1055 = vld [vmem:[%s322 + $0x148] sm:$0xff]
        %v1056 = vld [vmem:[%s322 + $0x150] sm:$0xff]
        %v1057 = vld [vmem:[%s322 + $0x158] sm:$0xff]
        %v1058 = vld [vmem:[%s322 + $0x160] sm:$0xff]
        %v1059 = vld [vmem:[%s322 + $0x168] sm:$0xff]
        %v1060 = vld [vmem:[%s322 + $0x170] sm:$0xff]
        %v1061 = vld [vmem:[%s322 + $0x178] sm:$0xff]
        %v1062 = vld [vmem:[%s322 + $0x180] sm:$0xff]
        %v1063 = vld [vmem:[%s322 + $0x188] sm:$0xff]
        %v1064 = vld [vmem:[%s322 + $0x190] sm:$0xff]
        %v1065 = vld [vmem:[%s322 + $0x198] sm:$0xff]
        %v1066 = vld [vmem:[%s322 + $0x1a0] sm:$0xff]
        %v1067 = vld [vmem:[%s322 + $0x1a8] sm:$0xff]
        %v1068 = vld [vmem:[%s322 + $0x1b0] sm:$0xff]
        %v1069 = vld [vmem:[%s322 + $0x1b8] sm:$0xff]
        %v1070 = vld [vmem:[%s322 + $0x1c0] sm:$0xff]
        %v1071 = vld [vmem:[%s322 + $0x1c8] sm:$0xff]
        %v1072 = vld [vmem:[%s322 + $0x1d0] sm:$0xff]
        %v1073 = vld [vmem:[%s322 + $0x1d8] sm:$0xff]
        %v1074 = vld [vmem:[%s322 + $0x1e0] sm:$0xff]
        %v1075 = vld [vmem:[%s322 + $0x1e8] sm:$0xff]
        %v1076 = vld [vmem:[%s322 + $0x1f0] sm:$0xff]
        %v1077 = vld [vmem:[%s322 + $0x1f8] sm:$0xff]
        %v1078 = vld [vmem:[%s322 + $0x200] sm:$0xff]
        %v1079 = vld [vmem:[%s322 + $0x208] sm:$0xff]
        %v1080 = vld [vmem:[%s322 + $0x210] sm:$0xff]
        %v1081 = vld [vmem:[%s322 + $0x218] sm:$0xff]
        %v1082 = vld [vmem:[%s322 + $0x220] sm:$0xff]
        %v1083 = vld [vmem:[%s322 + $0x228] sm:$0xff]
        %v1084 = vld [vmem:[%s322 + $0x230] sm:$0xff]
        %v1085 = vld [vmem:[%s322 + $0x238] sm:$0xff]
        %v1086 = vld [vmem:[%s322 + $0x240] sm:$0xff]
        %v1087 = vld [vmem:[%s322 + $0x248] sm:$0xff]
        %v1088 = vld [vmem:[%s322 + $0x250] sm:$0xff]
        %v1089 = vld [vmem:[%s322 + $0x258] sm:$0xff]
        %v1090 = vld [vmem:[%s322 + $0x260] sm:$0xff]
        %v1091 = vld [vmem:[%s322 + $0x268] sm:$0xff]
        %v1092 = vld [vmem:[%s322 + $0x270] sm:$0xff]
        %v1093 = vld [vmem:[%s322 + $0x278] sm:$0xff]
        %v1094 = vld [vmem:[%s322 + $0x280] sm:$0xff]
        %v1095 = vld [vmem:[%s322 + $0x288] sm:$0xff]
        %v1096 = vld [vmem:[%s322 + $0x290] sm:$0xff]
        %v1097 = vld [vmem:[%s322 + $0x298] sm:$0xff]
        %v1098 = vld [vmem:[%s322 + $0x2a0] sm:$0xff]
        %v1099 = vld [vmem:[%s322 + $0x2a8] sm:$0xff]
        %v1100 = vld [vmem:[%s322 + $0x2b0] sm:$0xff]
        %v1101 = vld [vmem:[%s322 + $0x2b8] sm:$0xff]
        %v1102 = vld [vmem:[%s322 + $0x2c0] sm:$0xff]
        %v1103 = vld [vmem:[%s322 + $0x2c8] sm:$0xff]
        %v1104 = vld [vmem:[%s322 + $0x2d0] sm:$0xff]
        %v1105 = vld [vmem:[%s322 + $0x2d8] sm:$0xff]
        %v1106 = vld [vmem:[%s322 + $0x2e0] sm:$0xff]
        %v1107 = vld [vmem:[%s322 + $0x2e8] sm:$0xff]
        %v1108 = vld [vmem:[%s322 + $0x2f0] sm:$0xff]
        %v1109 = vld [vmem:[%s322 + $0x2f8] sm:$0xff]
        %v1110 = vld [vmem:[%s322 + $0x300] sm:$0xff]
        %v1111 = vld [vmem:[%s322 + $0x308] sm:$0xff]
        %v1112 = vld [vmem:[%s322 + $0x310] sm:$0xff]
        %v1113 = vld [vmem:[%s322 + $0x318] sm:$0xff]
        %v1114 = vld [vmem:[%s322 + $0x320] sm:$0xff]
        %v1115 = vld [vmem:[%s322 + $0x328] sm:$0xff]
        %v1116 = vld [vmem:[%s322 + $0x330] sm:$0xff]
        %v1117 = vld [vmem:[%s322 + $0x338] sm:$0xff]
        %v1118 = vld [vmem:[%s322 + $0x340] sm:$0xff]
        %v1119 = vld [vmem:[%s322 + $0x348] sm:$0xff]
        %v1120 = vld [vmem:[%s322 + $0x350] sm:$0xff]
        %v1121 = vld [vmem:[%s322 + $0x358] sm:$0xff]
        %v1122 = vld [vmem:[%s322 + $0x360] sm:$0xff]
        %v1123 = vld [vmem:[%s322 + $0x368] sm:$0xff]
        %v1124 = vld [vmem:[%s322 + $0x370] sm:$0xff]
        %v1125 = vld [vmem:[%s322 + $0x378] sm:$0xff]
        %v1126 = vld [vmem:[%s322 + $0x380] sm:$0xff]
        %v1127 = vld [vmem:[%s322 + $0x388] sm:$0xff]
        %v1128 = vld [vmem:[%s322 + $0x390] sm:$0xff]
        %v1129 = vld [vmem:[%s322 + $0x398] sm:$0xff]
        %v1130 = vld [vmem:[%s322 + $0x3a0] sm:$0xff]
        %v1131 = vld [vmem:[%s322 + $0x3a8] sm:$0xff]
        %v1132 = vld [vmem:[%s322 + $0x3b0] sm:$0xff]
        %v1133 = vld [vmem:[%s322 + $0x3b8] sm:$0xff]
        %v1134 = vld [vmem:[%s322 + $0x3c0] sm:$0xff]
        %v1135 = vld [vmem:[%s322 + $0x3c8] sm:$0xff]
        %v1136 = vld [vmem:[%s322 + $0x3d0] sm:$0xff]
        %v1137 = vld [vmem:[%s322 + $0x3d8] sm:$0xff]
        %v1138 = vld [vmem:[%s322 + $0x3e0] sm:$0xff]
        %v1139 = vld [vmem:[%s322 + $0x3e8] sm:$0xff]
        %v1140 = vld [vmem:[%s322 + $0x3f0] sm:$0xff]
        %v1141 = vld [vmem:[%s322 + $0x3f8] sm:$0xff]
        %v1142 = vld [vmem:[%s322 + $0x400] sm:$0xff]
        %v1143 = vld [vmem:[%s322 + $0x408] sm:$0xff]
        %v1144 = vld [vmem:[%s322 + $0x410] sm:$0xff]
        %v1145 = vld [vmem:[%s322 + $0x418] sm:$0xff]
        %v1146 = vld [vmem:[%s322 + $0x420] sm:$0xff]
        %v1147 = vld [vmem:[%s322 + $0x428] sm:$0xff]
        %v1148 = vld [vmem:[%s322 + $0x430] sm:$0xff]
        %v1149 = vld [vmem:[%s322 + $0x438] sm:$0xff]
        %v1150 = vld [vmem:[%s322 + $0x440] sm:$0xff]
        %v1151 = vld [vmem:[%s322 + $0x448] sm:$0xff]
        %v1152 = vld [vmem:[%s322 + $0x450] sm:$0xff]
        %v1153 = vld [vmem:[%s322 + $0x458] sm:$0xff]
        %v1154 = vld [vmem:[%s322 + $0x460] sm:$0xff]
        %v1155 = vld [vmem:[%s322 + $0x468] sm:$0xff]
        %v1156 = vld [vmem:[%s322 + $0x470] sm:$0xff]
        %v1157 = vld [vmem:[%s322 + $0x478] sm:$0xff]
        %v1158 = vld [vmem:[%s322 + $0x480] sm:$0xff]
        %v1159 = vld [vmem:[%s322 + $0x488] sm:$0xff]
        %v1160 = vld [vmem:[%s322 + $0x490] sm:$0xff]
        %v1161 = vld [vmem:[%s322 + $0x498] sm:$0xff]
        %v1162 = vld [vmem:[%s322 + $0x4a0] sm:$0xff]
        %v1163 = vld [vmem:[%s322 + $0x4a8] sm:$0xff]
        %v1164 = vld [vmem:[%s322 + $0x4b0] sm:$0xff]
        %v1165 = vld [vmem:[%s322 + $0x4b8] sm:$0xff]
        %v1166 = vld [vmem:[%s322 + $0x4c0] sm:$0xff]
        %v1167 = vld [vmem:[%s322 + $0x4c8] sm:$0xff]
        %v1168 = vld [vmem:[%s322 + $0x4d0] sm:$0xff]
        %v1169 = vld [vmem:[%s322 + $0x4d8] sm:$0xff]
        %v1170 = vld [vmem:[%s322 + $0x4e0] sm:$0xff]
        %v1171 = vld [vmem:[%s322 + $0x4e8] sm:$0xff]
        %v1172 = vld [vmem:[%s322 + $0x4f0] sm:$0xff]
        %v1173 = vld [vmem:[%s322 + $0x4f8] sm:$0xff]
        %v1174 = vld [vmem:[%s322 + $0x500] sm:$0xff]
        %v1175 = vld [vmem:[%s322 + $0x508] sm:$0xff]
        %v1176 = vld [vmem:[%s322 + $0x510] sm:$0xff]
        %v1177 = vld [vmem:[%s322 + $0x518] sm:$0xff]
        %v1178 = vld [vmem:[%s322 + $0x520] sm:$0xff]
        %v1179 = vld [vmem:[%s322 + $0x528] sm:$0xff]
        %v1180 = vld [vmem:[%s322 + $0x530] sm:$0xff]
        %v1181 = vld [vmem:[%s322 + $0x538] sm:$0xff]
        %v1182 = vld [vmem:[%s322 + $0x540] sm:$0xff]
        %v1183 = vld [vmem:[%s322 + $0x548] sm:$0xff]
        %v1184 = vld [vmem:[%s322 + $0x550] sm:$0xff]
        %v1185 = vld [vmem:[%s322 + $0x558] sm:$0xff]
        %v1186 = vld [vmem:[%s322 + $0x560] sm:$0xff]
        %v1187 = vld [vmem:[%s322 + $0x568] sm:$0xff]
        %v1188 = vld [vmem:[%s322 + $0x570] sm:$0xff]
        %v1189 = vld [vmem:[%s322 + $0x578] sm:$0xff]
        %v1190 = vld [vmem:[%s322 + $0x580] sm:$0xff]
        %v1191 = vld [vmem:[%s322 + $0x588] sm:$0xff]
        %v1192 = vld [vmem:[%s322 + $0x590] sm:$0xff]
        %v1193 = vld [vmem:[%s322 + $0x598] sm:$0xff]
        %v1194 = vld [vmem:[%s322 + $0x5a0] sm:$0xff]
        %v1195 = vld [vmem:[%s322 + $0x5a8] sm:$0xff]
        %v1196 = vld [vmem:[%s322 + $0x5b0] sm:$0xff]
        %v1197 = vld [vmem:[%s322 + $0x5b8] sm:$0xff]
        %v1198 = vld [vmem:[%s322 + $0x5c0] sm:$0xff]
        %v1199 = vld [vmem:[%s322 + $0x5c8] sm:$0xff]
        %v1200 = vld [vmem:[%s322 + $0x5d0] sm:$0xff]
        %v1201 = vld [vmem:[%s322 + $0x5d8] sm:$0xff]
        %v1202 = vld [vmem:[%s322 + $0x5e0] sm:$0xff]
        %v1203 = vld [vmem:[%s322 + $0x5e8] sm:$0xff]
        %v1204 = vld [vmem:[%s322 + $0x5f0] sm:$0xff]
        %v1205 = vld [vmem:[%s322 + $0x5f8] sm:$0xff]
        %v1206 = vld [vmem:[%s322 + $0x600] sm:$0xff]
        %v1207 = vld [vmem:[%s322 + $0x608] sm:$0xff]
        %v1208 = vld [vmem:[%s322 + $0x610] sm:$0xff]
        %v1209 = vld [vmem:[%s322 + $0x618] sm:$0xff]
        %v1210 = vld [vmem:[%s322 + $0x620] sm:$0xff]
        %v1211 = vld [vmem:[%s322 + $0x628] sm:$0xff]
        %v1212 = vld [vmem:[%s322 + $0x630] sm:$0xff]
        %v1213 = vld [vmem:[%s322 + $0x638] sm:$0xff]
        %v1214 = vld [vmem:[%s322 + $0x640] sm:$0xff]
        %v1215 = vld [vmem:[%s322 + $0x648] sm:$0xff]
        %v1216 = vld [vmem:[%s322 + $0x650] sm:$0xff]
        %v1217 = vld [vmem:[%s322 + $0x658] sm:$0xff]
        %v1218 = vld [vmem:[%s322 + $0x660] sm:$0xff]
        %v1219 = vld [vmem:[%s322 + $0x668] sm:$0xff]
        %v1220 = vld [vmem:[%s322 + $0x670] sm:$0xff]
        %v1221 = vld [vmem:[%s322 + $0x678] sm:$0xff]
        %v1222 = vld [vmem:[%s322 + $0x680] sm:$0xff]
        %v1223 = vld [vmem:[%s322 + $0x688] sm:$0xff]
        %v1224 = vld [vmem:[%s322 + $0x690] sm:$0xff]
        %v1225 = vld [vmem:[%s322 + $0x698] sm:$0xff]
        %v1226 = vld [vmem:[%s322 + $0x6a0] sm:$0xff]
        %v1227 = vld [vmem:[%s322 + $0x6a8] sm:$0xff]
        %v1228 = vld [vmem:[%s322 + $0x6b0] sm:$0xff]
        %v1229 = vld [vmem:[%s322 + $0x6b8] sm:$0xff]
        %v1230 = vld [vmem:[%s322 + $0x6c0] sm:$0xff]
        %v1231 = vld [vmem:[%s322 + $0x6c8] sm:$0xff]
        %v1232 = vld [vmem:[%s322 + $0x6d0] sm:$0xff]
        %v1233 = vld [vmem:[%s322 + $0x6d8] sm:$0xff]
        %v1234 = vld [vmem:[%s322 + $0x6e0] sm:$0xff]
        %v1235 = vld [vmem:[%s322 + $0x6e8] sm:$0xff]
        %v1236 = vld [vmem:[%s322 + $0x6f0] sm:$0xff]
        %v1237 = vld [vmem:[%s322 + $0x6f8] sm:$0xff]
        %v1238 = vld [vmem:[%s322 + $0x700] sm:$0xff]
        %v1239 = vld [vmem:[%s322 + $0x708] sm:$0xff]
        %v1240 = vld [vmem:[%s322 + $0x710] sm:$0xff]
        %v1241 = vld [vmem:[%s322 + $0x718] sm:$0xff]
        %v1242 = vld [vmem:[%s322 + $0x720] sm:$0xff]
        %v1243 = vld [vmem:[%s322 + $0x728] sm:$0xff]
        %v1244 = vld [vmem:[%s322 + $0x730] sm:$0xff]
        %v1245 = vld [vmem:[%s322 + $0x738] sm:$0xff]
        %v1246 = vld [vmem:[%s322 + $0x740] sm:$0xff]
        %v1247 = vld [vmem:[%s322 + $0x748] sm:$0xff]
        %v1248 = vld [vmem:[%s322 + $0x750] sm:$0xff]
        %v1249 = vld [vmem:[%s322 + $0x758] sm:$0xff]
        %v1250 = vld [vmem:[%s322 + $0x760] sm:$0xff]
        %v1251 = vld [vmem:[%s322 + $0x768] sm:$0xff]
        %v1252 = vld [vmem:[%s322 + $0x770] sm:$0xff]
        %v1253 = vld [vmem:[%s322 + $0x778] sm:$0xff]
        %v1254 = vld [vmem:[%s322 + $0x780] sm:$0xff]
        %v1255 = vld [vmem:[%s322 + $0x788] sm:$0xff]
        %v1256 = vld [vmem:[%s322 + $0x790] sm:$0xff]
        %v1257 = vld [vmem:[%s322 + $0x798] sm:$0xff]
        %v1258 = vld [vmem:[%s322 + $0x7a0] sm:$0xff]
        %v1259 = vld [vmem:[%s322 + $0x7a8] sm:$0xff]
        %v1260 = vld [vmem:[%s322 + $0x7b0] sm:$0xff]
        %v1261 = vld [vmem:[%s322 + $0x7b8] sm:$0xff]
        %v1262 = vld [vmem:[%s322 + $0x7c0] sm:$0xff]
        %v1263 = vld [vmem:[%s322 + $0x7c8] sm:$0xff]
        %v1264 = vld [vmem:[%s322 + $0x7d0] sm:$0xff]
        %v1265 = vld [vmem:[%s322 + $0x7d8] sm:$0xff]
        %v1266 = vld [vmem:[%s322 + $0x7e0] sm:$0xff]
        %v1267 = vld [vmem:[%s322 + $0x7e8] sm:$0xff]
        %v1268 = vld [vmem:[%s322 + $0x7f0] sm:$0xff]
        %v1269 = vld [vmem:[%s322 + $0x7f8] sm:$0xff]
        %v1270 = vld [vmem:[%s322 + $0x800] sm:$0xff]
        %v1271 = vld [vmem:[%s322 + $0x808] sm:$0xff]
        %v1272 = vld [vmem:[%s322 + $0x810] sm:$0xff]
        %v1273 = vld [vmem:[%s322 + $0x818] sm:$0xff]
        %v1274 = vld [vmem:[%s322 + $0x820] sm:$0xff]
        %v1275 = vld [vmem:[%s322 + $0x828] sm:$0xff]
        %v1276 = vld [vmem:[%s322 + $0x830] sm:$0xff]
        %v1277 = vld [vmem:[%s322 + $0x838] sm:$0xff]
        %v1278 = vld [vmem:[%s322 + $0x840] sm:$0xff]
        %v1279 = vld [vmem:[%s322 + $0x848] sm:$0xff]
        %v1280 = vld [vmem:[%s322 + $0x850] sm:$0xff]
        %v1281 = vld [vmem:[%s322 + $0x858] sm:$0xff]
        %v1282 = vld [vmem:[%s322 + $0x860] sm:$0xff]
        %v1283 = vld [vmem:[%s322 + $0x868] sm:$0xff]
        %v1284 = vld [vmem:[%s322 + $0x870] sm:$0xff]
        %v1285 = vld [vmem:[%s322 + $0x878] sm:$0xff]
        %v1286 = vld [vmem:[%s322 + $0x880] sm:$0xff]
        %v1287 = vld [vmem:[%s322 + $0x888] sm:$0xff]
        %v1288 = vld [vmem:[%s322 + $0x890] sm:$0xff]
        %v1289 = vld [vmem:[%s322 + $0x898] sm:$0xff]
        %v1290 = vld [vmem:[%s322 + $0x8a0] sm:$0xff]
        %v1291 = vld [vmem:[%s322 + $0x8a8] sm:$0xff]
        %v1292 = vld [vmem:[%s322 + $0x8b0] sm:$0xff]
        %v1293 = vld [vmem:[%s322 + $0x8b8] sm:$0xff]
        %v1294 = vld [vmem:[%s322 + $0x8c0] sm:$0xff]
        %v1295 = vld [vmem:[%s322 + $0x8c8] sm:$0xff]
        %v1296 = vld [vmem:[%s322 + $0x8d0] sm:$0xff]
        %v1297 = vld [vmem:[%s322 + $0x8d8] sm:$0xff]
        %v1298 = vld [vmem:[%s322 + $0x8e0] sm:$0xff]
        %v1299 = vld [vmem:[%s322 + $0x8e8] sm:$0xff]
        %v1300 = vld [vmem:[%s322 + $0x8f0] sm:$0xff]
        %v1301 = vld [vmem:[%s322 + $0x8f8] sm:$0xff]
        %v1302 = vld [vmem:[%s322 + $0x900] sm:$0xff]
        %v1303 = vld [vmem:[%s322 + $0x908] sm:$0xff]
        %v1304 = vld [vmem:[%s322 + $0x910] sm:$0xff]
        %v1305 = vld [vmem:[%s322 + $0x918] sm:$0xff]
        %v1306 = vld [vmem:[%s322 + $0x920] sm:$0xff]
        %v1307 = vld [vmem:[%s322 + $0x928] sm:$0xff]
        %v1308 = vld [vmem:[%s322 + $0x930] sm:$0xff]
        %v1309 = vld [vmem:[%s322 + $0x938] sm:$0xff]
        %v1310 = vld [vmem:[%s322 + $0x940] sm:$0xff]
        %v1311 = vld [vmem:[%s322 + $0x948] sm:$0xff]
        %v1312 = vld [vmem:[%s322 + $0x950] sm:$0xff]
        %v1313 = vld [vmem:[%s322 + $0x958] sm:$0xff]
        %v1314 = vld [vmem:[%s322 + $0x960] sm:$0xff]
        %v1315 = vld [vmem:[%s322 + $0x968] sm:$0xff]
        %v1316 = vld [vmem:[%s322 + $0x970] sm:$0xff]
        %v1317 = vld [vmem:[%s322 + $0x978] sm:$0xff]
        %v1318 = vld [vmem:[%s322 + $0x980] sm:$0xff]
        %v1319 = vld [vmem:[%s322 + $0x988] sm:$0xff]
        %v1320 = vld [vmem:[%s322 + $0x990] sm:$0xff]
        %v1321 = vld [vmem:[%s322 + $0x998] sm:$0xff]
        %v1322 = vld [vmem:[%s322 + $0x9a0] sm:$0xff]
        %v1323 = vld [vmem:[%s322 + $0x9a8] sm:$0xff]
        %v1324 = vld [vmem:[%s322 + $0x9b0] sm:$0xff]
        %v1325 = vld [vmem:[%s322 + $0x9b8] sm:$0xff]
        %v1326 = vld [vmem:[%s322 + $0x9c0] sm:$0xff]
        %v1327 = vld [vmem:[%s322 + $0x9c8] sm:$0xff]
        %v1328 = vld [vmem:[%s322 + $0x9d0] sm:$0xff]
        %v1329 = vld [vmem:[%s322 + $0x9d8] sm:$0xff]
        %v1330 = vld [vmem:[%s322 + $0x9e0] sm:$0xff]
        %v1331 = vld [vmem:[%s322 + $0x9e8] sm:$0xff]
        %v1332 = vld [vmem:[%s322 + $0x9f0] sm:$0xff]
        %v1333 = vld [vmem:[%s322 + $0x9f8] sm:$0xff]
        %v1334 = vld [vmem:[%s322 + $0xa00] sm:$0xff]
        %v1335 = vld [vmem:[%s322 + $0xa08] sm:$0xff]
        %v1336 = vld [vmem:[%s322 + $0xa10] sm:$0xff]
        %v1337 = vld [vmem:[%s322 + $0xa18] sm:$0xff]
        %v1338 = vld [vmem:[%s322 + $0xa20] sm:$0xff]
        %v1339 = vld [vmem:[%s322 + $0xa28] sm:$0xff]
        %v1340 = vld [vmem:[%s322 + $0xa30] sm:$0xff]
        %v1341 = vld [vmem:[%s322 + $0xa38] sm:$0xff]
        %v1342 = vld [vmem:[%s322 + $0xa40] sm:$0xff]
        %v1343 = vld [vmem:[%s322 + $0xa48] sm:$0xff]
        %v1344 = vld [vmem:[%s322 + $0xa50] sm:$0xff]
        %v1345 = vld [vmem:[%s322 + $0xa58] sm:$0xff]
        %v1346 = vld [vmem:[%s322 + $0xa60] sm:$0xff]
        %v1347 = vld [vmem:[%s322 + $0xa68] sm:$0xff]
        %v1348 = vld [vmem:[%s322 + $0xa70] sm:$0xff]
        %v1349 = vld [vmem:[%s322 + $0xa78] sm:$0xff]
        %v1350 = vld [vmem:[%s322 + $0xa80] sm:$0xff]
        %v1351 = vld [vmem:[%s322 + $0xa88] sm:$0xff]
        %v1352 = vld [vmem:[%s322 + $0xa90] sm:$0xff]
        %v1353 = vld [vmem:[%s322 + $0xa98] sm:$0xff]
        %v1354 = vld [vmem:[%s322 + $0xaa0] sm:$0xff]
        %v1355 = vld [vmem:[%s322 + $0xaa8] sm:$0xff]
        %v1356 = vld [vmem:[%s322 + $0xab0] sm:$0xff]
        %v1357 = vld [vmem:[%s322 + $0xab8] sm:$0xff]
        %v1358 = vld [vmem:[%s322 + $0xac0] sm:$0xff]
        %v1359 = vld [vmem:[%s322 + $0xac8] sm:$0xff]
        %v1360 = vld [vmem:[%s322 + $0xad0] sm:$0xff]
        %v1361 = vld [vmem:[%s322 + $0xad8] sm:$0xff]
        %v1362 = vld [vmem:[%s322 + $0xae0] sm:$0xff]
        %v1363 = vld [vmem:[%s322 + $0xae8] sm:$0xff]
        %v1364 = vld [vmem:[%s322 + $0xaf0] sm:$0xff]
        %v1365 = vld [vmem:[%s322 + $0xaf8] sm:$0xff]
        %v1366 = vld [vmem:[%s322 + $0xb00] sm:$0xff]
        %v1367 = vld [vmem:[%s322 + $0xb08] sm:$0xff]
        %v1368 = vld [vmem:[%s322 + $0xb10] sm:$0xff]
        %v1369 = vld [vmem:[%s322 + $0xb18] sm:$0xff]
        %v1370 = vld [vmem:[%s322 + $0xb20] sm:$0xff]
        %v1371 = vld [vmem:[%s322 + $0xb28] sm:$0xff]
        %v1372 = vld [vmem:[%s322 + $0xb30] sm:$0xff]
        %v1373 = vld [vmem:[%s322 + $0xb38] sm:$0xff]
        %v1374 = vld [vmem:[%s322 + $0xb40] sm:$0xff]
        %v1375 = vld [vmem:[%s322 + $0xb48] sm:$0xff]
        %v1376 = vld [vmem:[%s322 + $0xb50] sm:$0xff]
        %v1377 = vld [vmem:[%s322 + $0xb58] sm:$0xff]
        %v1378 = vld [vmem:[%s322 + $0xb60] sm:$0xff]
        %v1379 = vld [vmem:[%s322 + $0xb68] sm:$0xff]
        %v1380 = vld [vmem:[%s322 + $0xb70] sm:$0xff]
        %v1381 = vld [vmem:[%s322 + $0xb78] sm:$0xff]
        %v1382 = vld [vmem:[%s322 + $0xb80] sm:$0xff]
        %v1383 = vld [vmem:[%s322 + $0xb88] sm:$0xff]
        %v1384 = vld [vmem:[%s322 + $0xb90] sm:$0xff]
        %v1385 = vld [vmem:[%s322 + $0xb98] sm:$0xff]
        %v1386 = vld [vmem:[%s322 + $0xba0] sm:$0xff]
        %v1387 = vld [vmem:[%s322 + $0xba8] sm:$0xff]
        %v1388 = vld [vmem:[%s322 + $0xbb0] sm:$0xff]
        %v1389 = vld [vmem:[%s322 + $0xbb8] sm:$0xff]
        %v1390 = vld [vmem:[%s322 + $0xbc0] sm:$0xff]
        %v1391 = vld [vmem:[%s322 + $0xbc8] sm:$0xff]
        %v1392 = vld [vmem:[%s322 + $0xbd0] sm:$0xff]
        %v1393 = vld [vmem:[%s322 + $0xbd8] sm:$0xff]
        %v1394 = vld [vmem:[%s322 + $0xbe0] sm:$0xff]
        %v1395 = vld [vmem:[%s322 + $0xbe8] sm:$0xff]
        %v1396 = vld [vmem:[%s322 + $0xbf0] sm:$0xff]
        %v1397 = vld [vmem:[%s322 + $0xbf8] sm:$0xff]
        %v1398 = vld [vmem:[%s322 + $0xc00] sm:$0xff]
        %v1399 = vld [vmem:[%s322 + $0xc08] sm:$0xff]
        %v1400 = vld [vmem:[%s322 + $0xc10] sm:$0xff]
        %v1401 = vld [vmem:[%s322 + $0xc18] sm:$0xff]
        %v1402 = vld [vmem:[%s322 + $0xc20] sm:$0xff]
        %v1403 = vld [vmem:[%s322 + $0xc28] sm:$0xff]
        %v1404 = vld [vmem:[%s322 + $0xc30] sm:$0xff]
        %v1405 = vld [vmem:[%s322 + $0xc38] sm:$0xff]
        %v1406 = vld [vmem:[%s322 + $0xc40] sm:$0xff]
        %v1407 = vld [vmem:[%s322 + $0xc48] sm:$0xff]
        %v1408 = vld [vmem:[%s322 + $0xc50] sm:$0xff]
        %v1409 = vld [vmem:[%s322 + $0xc58] sm:$0xff]
        %v1410 = vld [vmem:[%s322 + $0xc60] sm:$0xff]
        %v1411 = vld [vmem:[%s322 + $0xc68] sm:$0xff]
        %v1412 = vld [vmem:[%s322 + $0xc70] sm:$0xff]
        %v1413 = vld [vmem:[%s322 + $0xc78] sm:$0xff]
        %v1414 = vld [vmem:[%s322 + $0xc80] sm:$0xff]
        %v1415 = vld [vmem:[%s322 + $0xc88] sm:$0xff]
        %v1416 = vld [vmem:[%s322 + $0xc90] sm:$0xff]
        %v1417 = vld [vmem:[%s322 + $0xc98] sm:$0xff]
        %v1418 = vld [vmem:[%s322 + $0xca0] sm:$0xff]
        %v1419 = vld [vmem:[%s322 + $0xca8] sm:$0xff]
        %v1420 = vld [vmem:[%s322 + $0xcb0] sm:$0xff]
        %v1421 = vld [vmem:[%s322 + $0xcb8] sm:$0xff]
        %v1422 = vld [vmem:[%s322 + $0xcc0] sm:$0xff]
        %v1423 = vld [vmem:[%s322 + $0xcc8] sm:$0xff]
        %v1424 = vld [vmem:[%s322 + $0xcd0] sm:$0xff]
        %v1425 = vld [vmem:[%s322 + $0xcd8] sm:$0xff]
        %v1426 = vld [vmem:[%s322 + $0xce0] sm:$0xff]
        %v1427 = vld [vmem:[%s322 + $0xce8] sm:$0xff]
        %v1428 = vld [vmem:[%s322 + $0xcf0] sm:$0xff]
        %v1429 = vld [vmem:[%s322 + $0xcf8] sm:$0xff]
        %v1430 = vld [vmem:[%s322 + $0xd00] sm:$0xff]
        %v1431 = vld [vmem:[%s322 + $0xd08] sm:$0xff]
        %v1432 = vld [vmem:[%s322 + $0xd10] sm:$0xff]
        %v1433 = vld [vmem:[%s322 + $0xd18] sm:$0xff]
        %v1434 = vld [vmem:[%s322 + $0xd20] sm:$0xff]
        %v1435 = vld [vmem:[%s322 + $0xd28] sm:$0xff]
        %v1436 = vld [vmem:[%s322 + $0xd30] sm:$0xff]
        %v1437 = vld [vmem:[%s322 + $0xd38] sm:$0xff]
        %v1438 = vld [vmem:[%s322 + $0xd40] sm:$0xff]
        %v1439 = vld [vmem:[%s322 + $0xd48] sm:$0xff]
        %v1440 = vld [vmem:[%s322 + $0xd50] sm:$0xff]
        %v1441 = vld [vmem:[%s322 + $0xd58] sm:$0xff]
        %v1442 = vld [vmem:[%s322 + $0xd60] sm:$0xff]
        %v1443 = vld [vmem:[%s322 + $0xd68] sm:$0xff]
        %v1444 = vld [vmem:[%s322 + $0xd70] sm:$0xff]
        %v1445 = vld [vmem:[%s322 + $0xd78] sm:$0xff]
        %v1446 = vld [vmem:[%s322 + $0xd80] sm:$0xff]
        %v1447 = vld [vmem:[%s322 + $0xd88] sm:$0xff]
        %v1448 = vld [vmem:[%s322 + $0xd90] sm:$0xff]
        %v1449 = vld [vmem:[%s322 + $0xd98] sm:$0xff]
        %v1450 = vld [vmem:[%s322 + $0xda0] sm:$0xff]
        %v1451 = vld [vmem:[%s322 + $0xda8] sm:$0xff]
        %v1452 = vld [vmem:[%s322 + $0xdb0] sm:$0xff]
        %v1453 = vld [vmem:[%s322 + $0xdb8] sm:$0xff]
        %v1454 = vld [vmem:[%s322 + $0xdc0] sm:$0xff]
        %v1455 = vld [vmem:[%s322 + $0xdc8] sm:$0xff]
        %v1456 = vld [vmem:[%s322 + $0xdd0] sm:$0xff]
        %v1457 = vld [vmem:[%s322 + $0xdd8] sm:$0xff]
        %v1458 = vld [vmem:[%s322 + $0xde0] sm:$0xff]
        %v1459 = vld [vmem:[%s322 + $0xde8] sm:$0xff]
        %v1460 = vld [vmem:[%s322 + $0xdf0] sm:$0xff]
        %v1461 = vld [vmem:[%s322 + $0xdf8] sm:$0xff]
        %v1462 = vld [vmem:[%s322 + $0xe00] sm:$0xff]
        %v1463 = vld [vmem:[%s322 + $0xe08] sm:$0xff]
        %v1464 = vld [vmem:[%s322 + $0xe10] sm:$0xff]
        %v1465 = vld [vmem:[%s322 + $0xe18] sm:$0xff]
        %v1466 = vld [vmem:[%s322 + $0xe20] sm:$0xff]
        %v1467 = vld [vmem:[%s322 + $0xe28] sm:$0xff]
        %v1468 = vld [vmem:[%s322 + $0xe30] sm:$0xff]
        %v1469 = vld [vmem:[%s322 + $0xe38] sm:$0xff]
        %v1470 = vld [vmem:[%s322 + $0xe40] sm:$0xff]
        %v1471 = vld [vmem:[%s322 + $0xe48] sm:$0xff]
        %v1472 = vld [vmem:[%s322 + $0xe50] sm:$0xff]
        %v1473 = vld [vmem:[%s322 + $0xe58] sm:$0xff]
        %v1474 = vld [vmem:[%s322 + $0xe60] sm:$0xff]
        %v1475 = vld [vmem:[%s322 + $0xe68] sm:$0xff]
        %v1476 = vld [vmem:[%s322 + $0xe70] sm:$0xff]
        %v1477 = vld [vmem:[%s322 + $0xe78] sm:$0xff]
        %v1478 = vld [vmem:[%s322 + $0xe80] sm:$0xff]
        %v1479 = vld [vmem:[%s322 + $0xe88] sm:$0xff]
        %v1480 = vld [vmem:[%s322 + $0xe90] sm:$0xff]
        %v1481 = vld [vmem:[%s322 + $0xe98] sm:$0xff]
        %v1482 = vld [vmem:[%s322 + $0xea0] sm:$0xff]
        %v1483 = vld [vmem:[%s322 + $0xea8] sm:$0xff]
        %v1484 = vld [vmem:[%s322 + $0xeb0] sm:$0xff]
        %v1485 = vld [vmem:[%s322 + $0xeb8] sm:$0xff]
        %v1486 = vld [vmem:[%s322 + $0xec0] sm:$0xff]
        %v1487 = vld [vmem:[%s322 + $0xec8] sm:$0xff]
        %v1488 = vld [vmem:[%s322 + $0xed0] sm:$0xff]
        %v1489 = vld [vmem:[%s322 + $0xed8] sm:$0xff]
        %v1490 = vld [vmem:[%s322 + $0xee0] sm:$0xff]
        %v1491 = vld [vmem:[%s322 + $0xee8] sm:$0xff]
        %v1492 = vld [vmem:[%s322 + $0xef0] sm:$0xff]
        %v1493 = vld [vmem:[%s322 + $0xef8] sm:$0xff]
        %v1494 = vld [vmem:[%s322 + $0xf00] sm:$0xff]
        %v1495 = vld [vmem:[%s322 + $0xf08] sm:$0xff]
        %v1496 = vld [vmem:[%s322 + $0xf10] sm:$0xff]
        %v1497 = vld [vmem:[%s322 + $0xf18] sm:$0xff]
        %v1498 = vld [vmem:[%s322 + $0xf20] sm:$0xff]
        %v1499 = vld [vmem:[%s322 + $0xf28] sm:$0xff]
        %v1500 = vld [vmem:[%s322 + $0xf30] sm:$0xff]
        %v1501 = vld [vmem:[%s322 + $0xf38] sm:$0xff]
        %v1502 = vld [vmem:[%s322 + $0xf40] sm:$0xff]
        %v1503 = vld [vmem:[%s322 + $0xf48] sm:$0xff]
        %v1504 = vld [vmem:[%s322 + $0xf50] sm:$0xff]
        %v1505 = vld [vmem:[%s322 + $0xf58] sm:$0xff]
        %v1506 = vld [vmem:[%s322 + $0xf60] sm:$0xff]
        %v1507 = vld [vmem:[%s322 + $0xf68] sm:$0xff]
        %v1508 = vld [vmem:[%s322 + $0xf70] sm:$0xff]
        %v1509 = vld [vmem:[%s322 + $0xf78] sm:$0xff]
        %v1510 = vld [vmem:[%s322 + $0xf80] sm:$0xff]
        %v1511 = vld [vmem:[%s322 + $0xf88] sm:$0xff]
        %v1512 = vld [vmem:[%s322 + $0xf90] sm:$0xff]
        %v1513 = vld [vmem:[%s322 + $0xf98] sm:$0xff]
        %v1514 = vld [vmem:[%s322 + $0xfa0] sm:$0xff]
        %v1515 = vld [vmem:[%s322 + $0xfa8] sm:$0xff]
        %v1516 = vld [vmem:[%s322 + $0xfb0] sm:$0xff]
        %v1517 = vld [vmem:[%s322 + $0xfb8] sm:$0xff]
        %v1518 = vld [vmem:[%s322 + $0xfc0] sm:$0xff]
        %v1519 = vld [vmem:[%s322 + $0xfc8] sm:$0xff]
        %v1520 = vld [vmem:[%s322 + $0xfd0] sm:$0xff]
        %v1521 = vld [vmem:[%s322 + $0xfd8] sm:$0xff]
        %v1522 = vld [vmem:[%s322 + $0xfe0] sm:$0xff]
        %v1523 = vld [vmem:[%s322 + $0xfe8] sm:$0xff]
        %v1524 = vld [vmem:[%s322 + $0xff0] sm:$0xff]
        %v1525 = vld [vmem:[%s322 + $0xff8] sm:$0xff]
        %v1526 = vld [vmem:[%s322 + $0x1000] sm:$0xff]
        %v1527 = vld [vmem:[%s322 + $0x1008] sm:$0xff]
        %v1528 = vld [vmem:[%s322 + $0x1010] sm:$0xff]
        %v1529 = vld [vmem:[%s322 + $0x1018] sm:$0xff]
        %v1530 = vld [vmem:[%s322 + $0x1020] sm:$0xff]
        %v1531 = vld [vmem:[%s322 + $0x1028] sm:$0xff]
        %v1532 = vld [vmem:[%s322 + $0x1030] sm:$0xff]
        %v1533 = vld [vmem:[%s322 + $0x1038] sm:$0xff]
        %v1534 = vld [vmem:[%s322 + $0x1040] sm:$0xff]
        %v1535 = vld [vmem:[%s322 + $0x1048] sm:$0xff]
        %v1536 = vld [vmem:[%s322 + $0x1050] sm:$0xff]
        %v1537 = vld [vmem:[%s322 + $0x1058] sm:$0xff]
        %v1538 = vld [vmem:[%s322 + $0x1060] sm:$0xff]
        %v1539 = vld [vmem:[%s322 + $0x1068] sm:$0xff]
        %v1540 = vld [vmem:[%s322 + $0x1070] sm:$0xff]
        %v1541 = vld [vmem:[%s322 + $0x1078] sm:$0xff]
        %v1542 = vld [vmem:[%s322 + $0x1080] sm:$0xff]
        %v1543 = vld [vmem:[%s322 + $0x1088] sm:$0xff]
        %v1544 = vld [vmem:[%s322 + $0x1090] sm:$0xff]
        %v1545 = vld [vmem:[%s322 + $0x1098] sm:$0xff]
        %v1546 = vld [vmem:[%s322 + $0x10a0] sm:$0xff]
        %v1547 = vld [vmem:[%s322 + $0x10a8] sm:$0xff]
        %v1548 = vld [vmem:[%s322 + $0x10b0] sm:$0xff]
        %v1549 = vld [vmem:[%s322 + $0x10b8] sm:$0xff]
        %v1550 = vld [vmem:[%s322 + $0x10c0] sm:$0xff]
        %v1551 = vld [vmem:[%s322 + $0x10c8] sm:$0xff]
        %v1552 = vld [vmem:[%s322 + $0x10d0] sm:$0xff]
        %v1553 = vld [vmem:[%s322 + $0x10d8] sm:$0xff]
        %v1554 = vld [vmem:[%s322 + $0x10e0] sm:$0xff]
        %v1555 = vld [vmem:[%s322 + $0x10e8] sm:$0xff]
        %v1556 = vld [vmem:[%s322 + $0x10f0] sm:$0xff]
        %v1557 = vld [vmem:[%s322 + $0x10f8] sm:$0xff]
        %v1558 = vld [vmem:[%s322 + $0x1100] sm:$0xff]
        %v1559 = vld [vmem:[%s322 + $0x1108] sm:$0xff]
        %v1560 = vld [vmem:[%s322 + $0x1110] sm:$0xff]
        %v1561 = vld [vmem:[%s322 + $0x1118] sm:$0xff]
        %v1562 = vld [vmem:[%s322 + $0x1120] sm:$0xff]
        %v1563 = vld [vmem:[%s322 + $0x1128] sm:$0xff]
        %v1564 = vld [vmem:[%s322 + $0x1130] sm:$0xff]
        %v1565 = vld [vmem:[%s322 + $0x1138] sm:$0xff]
        %v1566 = vld [vmem:[%s322 + $0x1140] sm:$0xff]
        %v1567 = vld [vmem:[%s322 + $0x1148] sm:$0xff]
        %v1568 = vld [vmem:[%s322 + $0x1150] sm:$0xff]
        %v1569 = vld [vmem:[%s322 + $0x1158] sm:$0xff]
        %v1570 = vld [vmem:[%s322 + $0x1160] sm:$0xff]
        %v1571 = vld [vmem:[%s322 + $0x1168] sm:$0xff]
        %v1572 = vld [vmem:[%s322 + $0x1170] sm:$0xff]
        %v1573 = vld [vmem:[%s322 + $0x1178] sm:$0xff]
        %v1574 = vld [vmem:[%s322 + $0x1180] sm:$0xff]
        %v1575 = vld [vmem:[%s322 + $0x1188] sm:$0xff]
        %v1576 = vld [vmem:[%s322 + $0x1190] sm:$0xff]
        %v1577 = vld [vmem:[%s322 + $0x1198] sm:$0xff]
        %v1578 = vld [vmem:[%s322 + $0x11a0] sm:$0xff]
        %v1579 = vld [vmem:[%s322 + $0x11a8] sm:$0xff]
        %v1580 = vld [vmem:[%s322 + $0x11b0] sm:$0xff]
        %v1581 = vld [vmem:[%s322 + $0x11b8] sm:$0xff]
        %v1582 = vld [vmem:[%s322 + $0x11c0] sm:$0xff]
        %v1583 = vld [vmem:[%s322 + $0x11c8] sm:$0xff]
        %v1584 = vld [vmem:[%s322 + $0x11d0] sm:$0xff]
        %v1585 = vld [vmem:[%s322 + $0x11d8] sm:$0xff]
        %v1586 = vld [vmem:[%s322 + $0x11e0] sm:$0xff]
        %v1587 = vld [vmem:[%s322 + $0x11e8] sm:$0xff]
        %v1588 = vld [vmem:[%s322 + $0x11f0] sm:$0xff]
        %v1589 = vld [vmem:[%s322 + $0x11f8] sm:$0xff]
        %v1590 = vld [vmem:[%s322 + $0x1200] sm:$0xff]
        %v1591 = vld [vmem:[%s322 + $0x1208] sm:$0xff]
        %v1592 = vld [vmem:[%s322 + $0x1210] sm:$0xff]
        %v1593 = vld [vmem:[%s322 + $0x1218] sm:$0xff]
        %v1594 = vld [vmem:[%s322 + $0x1220] sm:$0xff]
        %v1595 = vld [vmem:[%s322 + $0x1228] sm:$0xff]
        %v1596 = vld [vmem:[%s322 + $0x1230] sm:$0xff]
        %v1597 = vld [vmem:[%s322 + $0x1238] sm:$0xff]
        %v1598 = vld [vmem:[%s322 + $0x1240] sm:$0xff]
        %v1599 = vld [vmem:[%s322 + $0x1248] sm:$0xff]
        %v1600 = vld [vmem:[%s322 + $0x1250] sm:$0xff]
        %v1601 = vld [vmem:[%s322 + $0x1258] sm:$0xff]
        %v1602 = vld [vmem:[%s322 + $0x1260] sm:$0xff]
        %v1603 = vld [vmem:[%s322 + $0x1268] sm:$0xff]
        %v1604 = vld [vmem:[%s322 + $0x1270] sm:$0xff]
        %v1605 = vld [vmem:[%s322 + $0x1278] sm:$0xff]
        %v1606 = vld [vmem:[%s322 + $0x1280] sm:$0xff]
        %v1607 = vld [vmem:[%s322 + $0x1288] sm:$0xff]
        %v1608 = vld [vmem:[%s322 + $0x1290] sm:$0xff]
        %v1609 = vld [vmem:[%s322 + $0x1298] sm:$0xff]
        %v1610 = vld [vmem:[%s322 + $0x12a0] sm:$0xff]
        %v1611 = vld [vmem:[%s322 + $0x12a8] sm:$0xff]
        %v1612 = vld [vmem:[%s322 + $0x12b0] sm:$0xff]
        %v1613 = vld [vmem:[%s322 + $0x12b8] sm:$0xff]
        %v1614 = vld [vmem:[%s322 + $0x12c0] sm:$0xff]
        %v1615 = vld [vmem:[%s322 + $0x12c8] sm:$0xff]
        %v1616 = vld [vmem:[%s322 + $0x12d0] sm:$0xff]
        %v1617 = vld [vmem:[%s322 + $0x12d8] sm:$0xff]
        %v1618 = vld [vmem:[%s322 + $0x12e0] sm:$0xff]
        %v1619 = vld [vmem:[%s322 + $0x12e8] sm:$0xff]
        %v1620 = vld [vmem:[%s322 + $0x12f0] sm:$0xff]
        %v1621 = vld [vmem:[%s322 + $0x12f8] sm:$0xff]
        %v1622 = vld [vmem:[%s322 + $0x1300] sm:$0xff]
        %v1623 = vld [vmem:[%s322 + $0x1308] sm:$0xff]
        %v1624 = vld [vmem:[%s322 + $0x1310] sm:$0xff]
        %v1625 = vld [vmem:[%s322 + $0x1318] sm:$0xff]
        %v1626 = vld [vmem:[%s322 + $0x1320] sm:$0xff]
        %v1627 = vld [vmem:[%s322 + $0x1328] sm:$0xff]
        %v1628 = vld [vmem:[%s322 + $0x1330] sm:$0xff]
        %v1629 = vld [vmem:[%s322 + $0x1338] sm:$0xff]
        %v1630 = vld [vmem:[%s322 + $0x1340] sm:$0xff]
        %v1631 = vld [vmem:[%s322 + $0x1348] sm:$0xff]
        %v1632 = vld [vmem:[%s322 + $0x1350] sm:$0xff]
        %v1633 = vld [vmem:[%s322 + $0x1358] sm:$0xff]
        %v1634 = vld [vmem:[%s322 + $0x1360] sm:$0xff]
        %v1635 = vld [vmem:[%s322 + $0x1368] sm:$0xff]
        %v1636 = vld [vmem:[%s322 + $0x1370] sm:$0xff]
        %v1637 = vld [vmem:[%s322 + $0x1378] sm:$0xff]
        %v1638 = vld [vmem:[%s322 + $0x1380] sm:$0xff]
        %v1639 = vld [vmem:[%s322 + $0x1388] sm:$0xff]
        %v1640 = vld [vmem:[%s322 + $0x1390] sm:$0xff]
        %v1641 = vld [vmem:[%s322 + $0x1398] sm:$0xff]
        %v1642 = vld [vmem:[%s322 + $0x13a0] sm:$0xff]
        %v1643 = vld [vmem:[%s322 + $0x13a8] sm:$0xff]
        %v1644 = vld [vmem:[%s322 + $0x13b0] sm:$0xff]
        %v1645 = vld [vmem:[%s322 + $0x13b8] sm:$0xff]
        %v1646 = vld [vmem:[%s322 + $0x13c0] sm:$0xff]
        %v1647 = vld [vmem:[%s322 + $0x13c8] sm:$0xff]
        %v1648 = vld [vmem:[%s322 + $0x13d0] sm:$0xff]
        %v1649 = vld [vmem:[%s322 + $0x13d8] sm:$0xff]
        %v1650 = vld [vmem:[%s322 + $0x13e0] sm:$0xff]
        %v1651 = vld [vmem:[%s322 + $0x13e8] sm:$0xff]
        %v1652 = vld [vmem:[%s322 + $0x13f0] sm:$0xff]
        %v1653 = vld [vmem:[%s322 + $0x13f8] sm:$0xff]
        %v1654 = vld [vmem:[%s322 + $0x1400] sm:$0xff]
        %v1655 = vld [vmem:[%s322 + $0x1408] sm:$0xff]
        %v1656 = vld [vmem:[%s322 + $0x1410] sm:$0xff]
        %v1657 = vld [vmem:[%s322 + $0x1418] sm:$0xff]
        %v1658 = vld [vmem:[%s322 + $0x1420] sm:$0xff]
        %v1659 = vld [vmem:[%s322 + $0x1428] sm:$0xff]
        %v1660 = vld [vmem:[%s322 + $0x1430] sm:$0xff]
        %v1661 = vld [vmem:[%s322 + $0x1438] sm:$0xff]
        %v1662 = vld [vmem:[%s322 + $0x1440] sm:$0xff]
        %v1663 = vld [vmem:[%s322 + $0x1448] sm:$0xff]
        %v1664 = vld [vmem:[%s322 + $0x1450] sm:$0xff]
        %v1665 = vld [vmem:[%s322 + $0x1458] sm:$0xff]
        %v1666 = vld [vmem:[%s322 + $0x1460] sm:$0xff]
        %v1667 = vld [vmem:[%s322 + $0x1468] sm:$0xff]
        %v1668 = vld [vmem:[%s322 + $0x1470] sm:$0xff]
        %v1669 = vld [vmem:[%s322 + $0x1478] sm:$0xff]
        %v1670 = vld [vmem:[%s322 + $0x1480] sm:$0xff]
        %v1671 = vld [vmem:[%s322 + $0x1488] sm:$0xff]
        %v1672 = vld [vmem:[%s322 + $0x1490] sm:$0xff]
        %v1673 = vld [vmem:[%s322 + $0x1498] sm:$0xff]
        %v1674 = vld [vmem:[%s322 + $0x14a0] sm:$0xff]
        %v1675 = vld [vmem:[%s322 + $0x14a8] sm:$0xff]
        %v1676 = vld [vmem:[%s322 + $0x14b0] sm:$0xff]
        %v1677 = vld [vmem:[%s322 + $0x14b8] sm:$0xff]
        %v1678 = vld [vmem:[%s322 + $0x14c0] sm:$0xff]
        %v1679 = vld [vmem:[%s322 + $0x14c8] sm:$0xff]
        %v1680 = vld [vmem:[%s322 + $0x14d0] sm:$0xff]
        %v1681 = vld [vmem:[%s322 + $0x14d8] sm:$0xff]
        %v1682 = vld [vmem:[%s322 + $0x14e0] sm:$0xff]
        %v1683 = vld [vmem:[%s322 + $0x14e8] sm:$0xff]
        %v1684 = vld [vmem:[%s322 + $0x14f0] sm:$0xff]
        %v1685 = vld [vmem:[%s322 + $0x14f8] sm:$0xff]
        %v1686 = vld [vmem:[%s322 + $0x1500] sm:$0xff]
        %v1687 = vld [vmem:[%s322 + $0x1508] sm:$0xff]
        %v1688 = vld [vmem:[%s322 + $0x1510] sm:$0xff]
        %v1689 = vld [vmem:[%s322 + $0x1518] sm:$0xff]
        %v1690 = vld [vmem:[%s322 + $0x1520] sm:$0xff]
        %v1691 = vld [vmem:[%s322 + $0x1528] sm:$0xff]
        %v1692 = vld [vmem:[%s322 + $0x1530] sm:$0xff]
        %v1693 = vld [vmem:[%s322 + $0x1538] sm:$0xff]
        %v1694 = vld [vmem:[%s322 + $0x1540] sm:$0xff]
        %v1695 = vld [vmem:[%s322 + $0x1548] sm:$0xff]
        %v1696 = vld [vmem:[%s322 + $0x1550] sm:$0xff]
        %v1697 = vld [vmem:[%s322 + $0x1558] sm:$0xff]
        %v1698 = vld [vmem:[%s322 + $0x1560] sm:$0xff]
        %v1699 = vld [vmem:[%s322 + $0x1568] sm:$0xff]
        %v1700 = vld [vmem:[%s322 + $0x1570] sm:$0xff]
        %v1701 = vld [vmem:[%s322 + $0x1578] sm:$0xff]
        %v1702 = vld [vmem:[%s322 + $0x1580] sm:$0xff]
        %v1703 = vld [vmem:[%s322 + $0x1588] sm:$0xff]
        %v1704 = vld [vmem:[%s322 + $0x1590] sm:$0xff]
        %v1705 = vld [vmem:[%s322 + $0x1598] sm:$0xff]
        %v1706 = vld [vmem:[%s322 + $0x15a0] sm:$0xff]
        %v1707 = vld [vmem:[%s322 + $0x15a8] sm:$0xff]
        %v1708 = vld [vmem:[%s322 + $0x15b0] sm:$0xff]
        %v1709 = vld [vmem:[%s322 + $0x15b8] sm:$0xff]
        %v1710 = vld [vmem:[%s322 + $0x15c0] sm:$0xff]
        %v1711 = vld [vmem:[%s322 + $0x15c8] sm:$0xff]
        %v1712 = vld [vmem:[%s322 + $0x15d0] sm:$0xff]
        %v1713 = vld [vmem:[%s322 + $0x15d8] sm:$0xff]
        %v1714 = vld [vmem:[%s322 + $0x15e0] sm:$0xff]
        %v1715 = vld [vmem:[%s322 + $0x15e8] sm:$0xff]
        %v1716 = vld [vmem:[%s322 + $0x15f0] sm:$0xff]
        %v1717 = vld [vmem:[%s322 + $0x15f8] sm:$0xff]
        %v1718 = vld [vmem:[%s322 + $0x1600] sm:$0xff]
        %v1719 = vld [vmem:[%s322 + $0x1608] sm:$0xff]
        %v1720 = vld [vmem:[%s322 + $0x1610] sm:$0xff]
        %v1721 = vld [vmem:[%s322 + $0x1618] sm:$0xff]
        %v1722 = vld [vmem:[%s322 + $0x1620] sm:$0xff]
        %v1723 = vld [vmem:[%s322 + $0x1628] sm:$0xff]
        %v1724 = vld [vmem:[%s322 + $0x1630] sm:$0xff]
        %v1725 = vld [vmem:[%s322 + $0x1638] sm:$0xff]
        %v1726 = vld [vmem:[%s322 + $0x1640] sm:$0xff]
        %v1727 = vld [vmem:[%s322 + $0x1648] sm:$0xff]
        %v1728 = vld [vmem:[%s322 + $0x1650] sm:$0xff]
        %v1729 = vld [vmem:[%s322 + $0x1658] sm:$0xff]
        %v1730 = vld [vmem:[%s322 + $0x1660] sm:$0xff]
        %v1731 = vld [vmem:[%s322 + $0x1668] sm:$0xff]
        %v1732 = vld [vmem:[%s322 + $0x1670] sm:$0xff]
        %v1733 = vld [vmem:[%s322 + $0x1678] sm:$0xff]
        %v1734 = vld [vmem:[%s322 + $0x1680] sm:$0xff]
        %v1735 = vld [vmem:[%s322 + $0x1688] sm:$0xff]
        %v1736 = vld [vmem:[%s322 + $0x1690] sm:$0xff]
        %v1737 = vld [vmem:[%s322 + $0x1698] sm:$0xff]
        %v1738 = vld [vmem:[%s322 + $0x16a0] sm:$0xff]
        %v1739 = vld [vmem:[%s322 + $0x16a8] sm:$0xff]
        %v1740 = vld [vmem:[%s322 + $0x16b0] sm:$0xff]
        %v1741 = vld [vmem:[%s322 + $0x16b8] sm:$0xff]
        %v1742 = vld [vmem:[%s322 + $0x16c0] sm:$0xff]
        %v1743 = vld [vmem:[%s322 + $0x16c8] sm:$0xff]
        %v1744 = vld [vmem:[%s322 + $0x16d0] sm:$0xff]
        %v1745 = vld [vmem:[%s322 + $0x16d8] sm:$0xff]
        %v1746 = vld [vmem:[%s322 + $0x16e0] sm:$0xff]
        %v1747 = vld [vmem:[%s322 + $0x16e8] sm:$0xff]
        %v1748 = vld [vmem:[%s322 + $0x16f0] sm:$0xff]
        %v1749 = vld [vmem:[%s322 + $0x16f8] sm:$0xff]
        %v1750 = vld [vmem:[%s322 + $0x1700] sm:$0xff]
        %v1751 = vld [vmem:[%s322 + $0x1708] sm:$0xff]
        %v1752 = vld [vmem:[%s322 + $0x1710] sm:$0xff]
        %v1753 = vld [vmem:[%s322 + $0x1718] sm:$0xff]
        %v1754 = vld [vmem:[%s322 + $0x1720] sm:$0xff]
        %v1755 = vld [vmem:[%s322 + $0x1728] sm:$0xff]
        %v1756 = vld [vmem:[%s322 + $0x1730] sm:$0xff]
        %v1757 = vld [vmem:[%s322 + $0x1738] sm:$0xff]
        %v1758 = vld [vmem:[%s322 + $0x1740] sm:$0xff]
        %v1759 = vld [vmem:[%s322 + $0x1748] sm:$0xff]
        %v1760 = vld [vmem:[%s322 + $0x1750] sm:$0xff]
        %v1761 = vld [vmem:[%s322 + $0x1758] sm:$0xff]
        %v1762 = vld [vmem:[%s322 + $0x1760] sm:$0xff]
        %v1763 = vld [vmem:[%s322 + $0x1768] sm:$0xff]
        %v1764 = vld [vmem:[%s322 + $0x1770] sm:$0xff]
        %v1765 = vld [vmem:[%s322 + $0x1778] sm:$0xff]
        %v1766 = vld [vmem:[%s322 + $0x1780] sm:$0xff]
        %v1767 = vld [vmem:[%s322 + $0x1788] sm:$0xff]
        %v1768 = vld [vmem:[%s322 + $0x1790] sm:$0xff]
        %v1769 = vld [vmem:[%s322 + $0x1798] sm:$0xff]
        %v1770 = vld [vmem:[%s322 + $0x17a0] sm:$0xff]
        %v1771 = vld [vmem:[%s322 + $0x17a8] sm:$0xff]
        %v1772 = vld [vmem:[%s322 + $0x17b0] sm:$0xff]
        %v1773 = vld [vmem:[%s322 + $0x17b8] sm:$0xff]
        %v1774 = vld [vmem:[%s322 + $0x17c0] sm:$0xff]
        %v1775 = vld [vmem:[%s322 + $0x17c8] sm:$0xff]
        %v1776 = vld [vmem:[%s322 + $0x17d0] sm:$0xff]
        %v1777 = vld [vmem:[%s322 + $0x17d8] sm:$0xff]
        %v1778 = vld [vmem:[%s322 + $0x17e0] sm:$0xff]
        %v1779 = vld [vmem:[%s322 + $0x17e8] sm:$0xff]
        %v1780 = vld [vmem:[%s322 + $0x17f0] sm:$0xff]
        %v1781 = vld [vmem:[%s322 + $0x17f8] sm:$0xff]
        %v1782 = vld [vmem:[%s322 + $0x1800] sm:$0xff]
        %v1783 = vld [vmem:[%s322 + $0x1808] sm:$0xff]
        %v1784 = vld [vmem:[%s322 + $0x1810] sm:$0xff]
        %v1785 = vld [vmem:[%s322 + $0x1818] sm:$0xff]
        %v1786 = vld [vmem:[%s322 + $0x1820] sm:$0xff]
        %v1787 = vld [vmem:[%s322 + $0x1828] sm:$0xff]
        %v1788 = vld [vmem:[%s322 + $0x1830] sm:$0xff]
        %v1789 = vld [vmem:[%s322 + $0x1838] sm:$0xff]
        %v1790 = vld [vmem:[%s322 + $0x1840] sm:$0xff]
        %v1791 = vld [vmem:[%s322 + $0x1848] sm:$0xff]
        %v1792 = vld [vmem:[%s322 + $0x1850] sm:$0xff]
        %v1793 = vld [vmem:[%s322 + $0x1858] sm:$0xff]
        %v1794 = vld [vmem:[%s322 + $0x1860] sm:$0xff]
        %v1795 = vld [vmem:[%s322 + $0x1868] sm:$0xff]
        %v1796 = vld [vmem:[%s322 + $0x1870] sm:$0xff]
        %v1797 = vld [vmem:[%s322 + $0x1878] sm:$0xff]
        %v1798 = vld [vmem:[%s322 + $0x1880] sm:$0xff]
        %v1799 = vld [vmem:[%s322 + $0x1888] sm:$0xff]
        %v1800 = vld [vmem:[%s322 + $0x1890] sm:$0xff]
        %v1801 = vld [vmem:[%s322 + $0x1898] sm:$0xff]
        %v1802 = vld [vmem:[%s322 + $0x18a0] sm:$0xff]
        %v1803 = vld [vmem:[%s322 + $0x18a8] sm:$0xff]
        %v1804 = vld [vmem:[%s322 + $0x18b0] sm:$0xff]
        %v1805 = vld [vmem:[%s322 + $0x18b8] sm:$0xff]
        %v1806 = vld [vmem:[%s322 + $0x18c0] sm:$0xff]
        %v1807 = vld [vmem:[%s322 + $0x18c8] sm:$0xff]
        %v1808 = vld [vmem:[%s322 + $0x18d0] sm:$0xff]
        %v1809 = vld [vmem:[%s322 + $0x18d8] sm:$0xff]
        %v1810 = vld [vmem:[%s322 + $0x18e0] sm:$0xff]
        %v1811 = vld [vmem:[%s322 + $0x18e8] sm:$0xff]
        %v1812 = vld [vmem:[%s322 + $0x18f0] sm:$0xff]
        %v1813 = vld [vmem:[%s322 + $0x18f8] sm:$0xff]
        %v1814 = vld [vmem:[%s322 + $0x1900] sm:$0xff]
        %v1815 = vld [vmem:[%s322 + $0x1908] sm:$0xff]
        %v1816 = vld [vmem:[%s322 + $0x1910] sm:$0xff]
        %v1817 = vld [vmem:[%s322 + $0x1918] sm:$0xff]
        %v1818 = vld [vmem:[%s322 + $0x1920] sm:$0xff]
        %v1819 = vld [vmem:[%s322 + $0x1928] sm:$0xff]
        %v1820 = vld [vmem:[%s322 + $0x1930] sm:$0xff]
        %v1821 = vld [vmem:[%s322 + $0x1938] sm:$0xff]
        %v1822 = vld [vmem:[%s322 + $0x1940] sm:$0xff]
        %v1823 = vld [vmem:[%s322 + $0x1948] sm:$0xff]
        %v1824 = vld [vmem:[%s322 + $0x1950] sm:$0xff]
        %v1825 = vld [vmem:[%s322 + $0x1958] sm:$0xff]
        %v1826 = vld [vmem:[%s322 + $0x1960] sm:$0xff]
        %v1827 = vld [vmem:[%s322 + $0x1968] sm:$0xff]
        %v1828 = vld [vmem:[%s322 + $0x1970] sm:$0xff]
        %v1829 = vld [vmem:[%s322 + $0x1978] sm:$0xff]
        %v1830 = vld [vmem:[%s322 + $0x1980] sm:$0xff]
        %v1831 = vld [vmem:[%s322 + $0x1988] sm:$0xff]
        %v1832 = vld [vmem:[%s322 + $0x1990] sm:$0xff]
        %v1833 = vld [vmem:[%s322 + $0x1998] sm:$0xff]
        %v1834 = vld [vmem:[%s322 + $0x19a0] sm:$0xff]
        %v1835 = vld [vmem:[%s322 + $0x19a8] sm:$0xff]
        %v1836 = vld [vmem:[%s322 + $0x19b0] sm:$0xff]
        %v1837 = vld [vmem:[%s322 + $0x19b8] sm:$0xff]
        %v1838 = vld [vmem:[%s322 + $0x19c0] sm:$0xff]
        %v1839 = vld [vmem:[%s322 + $0x19c8] sm:$0xff]
        %v1840 = vld [vmem:[%s322 + $0x19d0] sm:$0xff]
        %v1841 = vld [vmem:[%s322 + $0x19d8] sm:$0xff]
        %v1842 = vld [vmem:[%s322 + $0x19e0] sm:$0xff]
        %v1843 = vld [vmem:[%s322 + $0x19e8] sm:$0xff]
        %v1844 = vld [vmem:[%s322 + $0x19f0] sm:$0xff]
        %v1845 = vld [vmem:[%s322 + $0x19f8] sm:$0xff]
        %v1846 = vld [vmem:[%s322 + $0x1a00] sm:$0xff]
        %v1847 = vld [vmem:[%s322 + $0x1a08] sm:$0xff]
        %v1848 = vld [vmem:[%s322 + $0x1a10] sm:$0xff]
        %v1849 = vld [vmem:[%s322 + $0x1a18] sm:$0xff]
        %v1850 = vld [vmem:[%s322 + $0x1a20] sm:$0xff]
        %v1851 = vld [vmem:[%s322 + $0x1a28] sm:$0xff]
        %v1852 = vld [vmem:[%s322 + $0x1a30] sm:$0xff]
        %v1853 = vld [vmem:[%s322 + $0x1a38] sm:$0xff]
        %v1854 = vld [vmem:[%s322 + $0x1a40] sm:$0xff]
        %v1855 = vld [vmem:[%s322 + $0x1a48] sm:$0xff]
        %v1856 = vld [vmem:[%s322 + $0x1a50] sm:$0xff]
        %v1857 = vld [vmem:[%s322 + $0x1a58] sm:$0xff]
        %v1858 = vld [vmem:[%s322 + $0x1a60] sm:$0xff]
        %v1859 = vld [vmem:[%s322 + $0x1a68] sm:$0xff]
        %v1860 = vld [vmem:[%s322 + $0x1a70] sm:$0xff]
        %v1861 = vld [vmem:[%s322 + $0x1a78] sm:$0xff]
        %v1862 = vld [vmem:[%s322 + $0x1a80] sm:$0xff]
        %v1863 = vld [vmem:[%s322 + $0x1a88] sm:$0xff]
        %v1864 = vld [vmem:[%s322 + $0x1a90] sm:$0xff]
        %v1865 = vld [vmem:[%s322 + $0x1a98] sm:$0xff]
        %v1866 = vld [vmem:[%s322 + $0x1aa0] sm:$0xff]
        %v1867 = vld [vmem:[%s322 + $0x1aa8] sm:$0xff]
        %v1868 = vld [vmem:[%s322 + $0x1ab0] sm:$0xff]
        %v1869 = vld [vmem:[%s322 + $0x1ab8] sm:$0xff]
        %v1870 = vld [vmem:[%s322 + $0x1ac0] sm:$0xff]
        %v1871 = vld [vmem:[%s322 + $0x1ac8] sm:$0xff]
        %v1872 = vld [vmem:[%s322 + $0x1ad0] sm:$0xff]
        %v1873 = vld [vmem:[%s322 + $0x1ad8] sm:$0xff]
        %v1874 = vld [vmem:[%s322 + $0x1ae0] sm:$0xff]
        %v1875 = vld [vmem:[%s322 + $0x1ae8] sm:$0xff]
        %v1876 = vld [vmem:[%s322 + $0x1af0] sm:$0xff]
        %v1877 = vld [vmem:[%s322 + $0x1af8] sm:$0xff]
        %v1878 = vld [vmem:[%s322 + $0x1b00] sm:$0xff]
        %v1879 = vld [vmem:[%s322 + $0x1b08] sm:$0xff]
        %v1880 = vld [vmem:[%s322 + $0x1b10] sm:$0xff]
        %v1881 = vld [vmem:[%s322 + $0x1b18] sm:$0xff]
        %v1882 = vld [vmem:[%s322 + $0x1b20] sm:$0xff]
        %v1883 = vld [vmem:[%s322 + $0x1b28] sm:$0xff]
        %v1884 = vld [vmem:[%s322 + $0x1b30] sm:$0xff]
        %v1885 = vld [vmem:[%s322 + $0x1b38] sm:$0xff]
        %v1886 = vld [vmem:[%s322 + $0x1b40] sm:$0xff]
        %v1887 = vld [vmem:[%s322 + $0x1b48] sm:$0xff]
        %v1888 = vld [vmem:[%s322 + $0x1b50] sm:$0xff]
        %v1889 = vld [vmem:[%s322 + $0x1b58] sm:$0xff]
        %v1890 = vld [vmem:[%s322 + $0x1b60] sm:$0xff]
        %v1891 = vld [vmem:[%s322 + $0x1b68] sm:$0xff]
        %v1892 = vld [vmem:[%s322 + $0x1b70] sm:$0xff]
        %v1893 = vld [vmem:[%s322 + $0x1b78] sm:$0xff]
        %v1894 = vld [vmem:[%s322 + $0x1b80] sm:$0xff]
        %v1895 = vld [vmem:[%s322 + $0x1b88] sm:$0xff]
        %v1896 = vld [vmem:[%s322 + $0x1b90] sm:$0xff]
        %v1897 = vld [vmem:[%s322 + $0x1b98] sm:$0xff]
        %v1898 = vld [vmem:[%s322 + $0x1ba0] sm:$0xff]
        %v1899 = vld [vmem:[%s322 + $0x1ba8] sm:$0xff]
        %v1900 = vld [vmem:[%s322 + $0x1bb0] sm:$0xff]
        %v1901 = vld [vmem:[%s322 + $0x1bb8] sm:$0xff]
        %v1902 = vld [vmem:[%s322 + $0x1bc0] sm:$0xff]
        %v1903 = vld [vmem:[%s322 + $0x1bc8] sm:$0xff]
        %v1904 = vld [vmem:[%s322 + $0x1bd0] sm:$0xff]
        %v1905 = vld [vmem:[%s322 + $0x1bd8] sm:$0xff]
        %v1906 = vld [vmem:[%s322 + $0x1be0] sm:$0xff]
        %v1907 = vld [vmem:[%s322 + $0x1be8] sm:$0xff]
        %v1908 = vld [vmem:[%s322 + $0x1bf0] sm:$0xff]
        %v1909 = vld [vmem:[%s322 + $0x1bf8] sm:$0xff]
        %v1910 = vld [vmem:[%s322 + $0x1c00] sm:$0xff]
        %v1911 = vld [vmem:[%s322 + $0x1c08] sm:$0xff]
        %v1912 = vld [vmem:[%s322 + $0x1c10] sm:$0xff]
        %v1913 = vld [vmem:[%s322 + $0x1c18] sm:$0xff]
        %v1914 = vld [vmem:[%s322 + $0x1c20] sm:$0xff]
        %v1915 = vld [vmem:[%s322 + $0x1c28] sm:$0xff]
        %v1916 = vld [vmem:[%s322 + $0x1c30] sm:$0xff]
        %v1917 = vld [vmem:[%s322 + $0x1c38] sm:$0xff]
        %v1918 = vld [vmem:[%s322 + $0x1c40] sm:$0xff]
        %v1919 = vld [vmem:[%s322 + $0x1c48] sm:$0xff]
        %v1920 = vld [vmem:[%s322 + $0x1c50] sm:$0xff]
        %v1921 = vld [vmem:[%s322 + $0x1c58] sm:$0xff]
        %v1922 = vld [vmem:[%s322 + $0x1c60] sm:$0xff]
        %v1923 = vld [vmem:[%s322 + $0x1c68] sm:$0xff]
        %v1924 = vld [vmem:[%s322 + $0x1c70] sm:$0xff]
        %v1925 = vld [vmem:[%s322 + $0x1c78] sm:$0xff]
        %v1926 = vld [vmem:[%s322 + $0x1c80] sm:$0xff]
        %v1927 = vld [vmem:[%s322 + $0x1c88] sm:$0xff]
        %v1928 = vld [vmem:[%s322 + $0x1c90] sm:$0xff]
        %v1929 = vld [vmem:[%s322 + $0x1c98] sm:$0xff]
        %v1930 = vld [vmem:[%s322 + $0x1ca0] sm:$0xff]
        %v1931 = vld [vmem:[%s322 + $0x1ca8] sm:$0xff]
        %v1932 = vld [vmem:[%s322 + $0x1cb0] sm:$0xff]
        %v1933 = vld [vmem:[%s322 + $0x1cb8] sm:$0xff]
        %v1934 = vld [vmem:[%s322 + $0x1cc0] sm:$0xff]
        %v1935 = vld [vmem:[%s322 + $0x1cc8] sm:$0xff]
        %v1936 = vld [vmem:[%s322 + $0x1cd0] sm:$0xff]
        %v1937 = vld [vmem:[%s322 + $0x1cd8] sm:$0xff]
        %v1938 = vld [vmem:[%s322 + $0x1ce0] sm:$0xff]
        %v1939 = vld [vmem:[%s322 + $0x1ce8] sm:$0xff]
        %v1940 = vld [vmem:[%s322 + $0x1cf0] sm:$0xff]
        %v1941 = vld [vmem:[%s322 + $0x1cf8] sm:$0xff]
        %v1942 = vld [vmem:[%s322 + $0x1d00] sm:$0xff]
        %v1943 = vld [vmem:[%s322 + $0x1d08] sm:$0xff]
        %v1944 = vld [vmem:[%s322 + $0x1d10] sm:$0xff]
        %v1945 = vld [vmem:[%s322 + $0x1d18] sm:$0xff]
        %v1946 = vld [vmem:[%s322 + $0x1d20] sm:$0xff]
        %v1947 = vld [vmem:[%s322 + $0x1d28] sm:$0xff]
        %v1948 = vld [vmem:[%s322 + $0x1d30] sm:$0xff]
        %v1949 = vld [vmem:[%s322 + $0x1d38] sm:$0xff]
        %v1950 = vld [vmem:[%s322 + $0x1d40] sm:$0xff]
        %v1951 = vld [vmem:[%s322 + $0x1d48] sm:$0xff]
        %v1952 = vld [vmem:[%s322 + $0x1d50] sm:$0xff]
        %v1953 = vld [vmem:[%s322 + $0x1d58] sm:$0xff]
        %v1954 = vld [vmem:[%s322 + $0x1d60] sm:$0xff]
        %v1955 = vld [vmem:[%s322 + $0x1d68] sm:$0xff]
        %v1956 = vld [vmem:[%s322 + $0x1d70] sm:$0xff]
        %v1957 = vld [vmem:[%s322 + $0x1d78] sm:$0xff]
        %v1958 = vld [vmem:[%s322 + $0x1d80] sm:$0xff]
        %v1959 = vld [vmem:[%s322 + $0x1d88] sm:$0xff]
        %v1960 = vld [vmem:[%s322 + $0x1d90] sm:$0xff]
        %v1961 = vld [vmem:[%s322 + $0x1d98] sm:$0xff]
        %v1962 = vld [vmem:[%s322 + $0x1da0] sm:$0xff]
        %v1963 = vld [vmem:[%s322 + $0x1da8] sm:$0xff]
        %v1964 = vld [vmem:[%s322 + $0x1db0] sm:$0xff]
        %v1965 = vld [vmem:[%s322 + $0x1db8] sm:$0xff]
        %v1966 = vld [vmem:[%s322 + $0x1dc0] sm:$0xff]
        %v1967 = vld [vmem:[%s322 + $0x1dc8] sm:$0xff]
        %v1968 = vld [vmem:[%s322 + $0x1dd0] sm:$0xff]
        %v1969 = vld [vmem:[%s322 + $0x1dd8] sm:$0xff]
        %v1970 = vld [vmem:[%s322 + $0x1de0] sm:$0xff]
        %v1971 = vld [vmem:[%s322 + $0x1de8] sm:$0xff]
        %v1972 = vld [vmem:[%s322 + $0x1df0] sm:$0xff]
        %v1973 = vld [vmem:[%s322 + $0x1df8] sm:$0xff]
        %v1974 = vld [vmem:[%s322 + $0x1e00] sm:$0xff]
        %v1975 = vld [vmem:[%s322 + $0x1e08] sm:$0xff]
        %v1976 = vld [vmem:[%s322 + $0x1e10] sm:$0xff]
        %v1977 = vld [vmem:[%s322 + $0x1e18] sm:$0xff]
        %v1978 = vld [vmem:[%s322 + $0x1e20] sm:$0xff]
        %v1979 = vld [vmem:[%s322 + $0x1e28] sm:$0xff]
        %v1980 = vld [vmem:[%s322 + $0x1e30] sm:$0xff]
        %v1981 = vld [vmem:[%s322 + $0x1e38] sm:$0xff]
        %v1982 = vld [vmem:[%s322 + $0x1e40] sm:$0xff]
        %v1983 = vld [vmem:[%s322 + $0x1e48] sm:$0xff]
        %v1984 = vld [vmem:[%s322 + $0x1e50] sm:$0xff]
        %v1985 = vld [vmem:[%s322 + $0x1e58] sm:$0xff]
        %v1986 = vld [vmem:[%s322 + $0x1e60] sm:$0xff]
        %v1987 = vld [vmem:[%s322 + $0x1e68] sm:$0xff]
        %v1988 = vld [vmem:[%s322 + $0x1e70] sm:$0xff]
        %v1989 = vld [vmem:[%s322 + $0x1e78] sm:$0xff]
        %v1990 = vld [vmem:[%s322 + $0x1e80] sm:$0xff]
        %v1991 = vld [vmem:[%s322 + $0x1e88] sm:$0xff]
        %v1992 = vld [vmem:[%s322 + $0x1e90] sm:$0xff]
        %v1993 = vld [vmem:[%s322 + $0x1e98] sm:$0xff]
        %v1994 = vld [vmem:[%s322 + $0x1ea0] sm:$0xff]
        %v1995 = vld [vmem:[%s322 + $0x1ea8] sm:$0xff]
        %v1996 = vld [vmem:[%s322 + $0x1eb0] sm:$0xff]
        %v1997 = vld [vmem:[%s322 + $0x1eb8] sm:$0xff]
        %v1998 = vld [vmem:[%s322 + $0x1ec0] sm:$0xff]
        %v1999 = vld [vmem:[%s322 + $0x1ec8] sm:$0xff]
        %v2000 = vld [vmem:[%s322 + $0x1ed0] sm:$0xff]
        %v2001 = vld [vmem:[%s322 + $0x1ed8] sm:$0xff]
        %v2002 = vld [vmem:[%s322 + $0x1ee0] sm:$0xff]
        %v2003 = vld [vmem:[%s322 + $0x1ee8] sm:$0xff]
        %v2004 = vld [vmem:[%s322 + $0x1ef0] sm:$0xff]
        %v2005 = vld [vmem:[%s322 + $0x1ef8] sm:$0xff]
        %v2006 = vld [vmem:[%s322 + $0x1f00] sm:$0xff]
        %v2007 = vld [vmem:[%s322 + $0x1f08] sm:$0xff]
        %v2008 = vld [vmem:[%s322 + $0x1f10] sm:$0xff]
        %v2009 = vld [vmem:[%s322 + $0x1f18] sm:$0xff]
        %v2010 = vld [vmem:[%s322 + $0x1f20] sm:$0xff]
        %v2011 = vld [vmem:[%s322 + $0x1f28] sm:$0xff]
        %v2012 = vld [vmem:[%s322 + $0x1f30] sm:$0xff]
        %v2013 = vld [vmem:[%s322 + $0x1f38] sm:$0xff]
        %v2014 = vld [vmem:[%s322 + $0x1f40] sm:$0xff]
        %v2015 = vld [vmem:[%s322 + $0x1f48] sm:$0xff]
        %v2016 = vld [vmem:[%s322 + $0x1f50] sm:$0xff]
        %v2017 = vld [vmem:[%s322 + $0x1f58] sm:$0xff]
        %v2018 = vld [vmem:[%s322 + $0x1f60] sm:$0xff]
        %v2019 = vld [vmem:[%s322 + $0x1f68] sm:$0xff]
        %v2020 = vld [vmem:[%s322 + $0x1f70] sm:$0xff]
        %v2021 = vld [vmem:[%s322 + $0x1f78] sm:$0xff]
        %v2022 = vld [vmem:[%s322 + $0x1f80] sm:$0xff]
        %v2023 = vld [vmem:[%s322 + $0x1f88] sm:$0xff]
        %v2024 = vld [vmem:[%s322 + $0x1f90] sm:$0xff]
        %v2025 = vld [vmem:[%s322 + $0x1f98] sm:$0xff]
        %v2026 = vld [vmem:[%s322 + $0x1fa0] sm:$0xff]
        %v2027 = vld [vmem:[%s322 + $0x1fa8] sm:$0xff]
        %v2028 = vld [vmem:[%s322 + $0x1fb0] sm:$0xff]
        %v2029 = vld [vmem:[%s322 + $0x1fb8] sm:$0xff]
        %v2030 = vld [vmem:[%s322 + $0x1fc0] sm:$0xff]
        %v2031 = vld [vmem:[%s322 + $0x1fc8] sm:$0xff]
        %v2032 = vld [vmem:[%s322 + $0x1fd0] sm:$0xff]
        %v2033 = vld [vmem:[%s322 + $0x1fd8] sm:$0xff]
        %v2034 = vld [vmem:[%s322 + $0x1fe0] sm:$0xff]
        %v2035 = vld [vmem:[%s322 + $0x1fe8] sm:$0xff]
        %v2036 = vld [vmem:[%s322 + $0x1ff0] sm:$0xff]
        %v2037 = vld [vmem:[%s322 + $0x1ff8] sm:$0xff]
        %v2038 = vld [vmem:[%s322 + $0x2000] sm:$0xff]
        %v2039 = vld [vmem:[%s322 + $0x2008] sm:$0xff]
        %v2040 = vld [vmem:[%s322 + $0x2010] sm:$0xff]
        %v2041 = vld [vmem:[%s322 + $0x2018] sm:$0xff]
        %v2042 = vld [vmem:[%s322 + $0x2020] sm:$0xff]
        %v2043 = vld [vmem:[%s322 + $0x2028] sm:$0xff]
        %v2044 = vld [vmem:[%s322 + $0x2030] sm:$0xff]
        %v2045 = vld [vmem:[%s322 + $0x2038] sm:$0xff]
        %v2046 = vld [vmem:[%s322 + $0x2040] sm:$0xff]
        %v2047 = vld [vmem:[%s322 + $0x2048] sm:$0xff]
        %v2048 = vld [vmem:[%s322 + $0x2050] sm:$0xff]
        %v2049 = vld [vmem:[%s322 + $0x2058] sm:$0xff]
        %v2050 = vld [vmem:[%s322 + $0x2060] sm:$0xff]
        %v2051 = vld [vmem:[%s322 + $0x2068] sm:$0xff]
        %v2052 = vld [vmem:[%s322 + $0x2070] sm:$0xff]
        %v2053 = vld [vmem:[%s322 + $0x2078] sm:$0xff]
        %v2054 = vld [vmem:[%s322 + $0x2080] sm:$0xff]
        %v2055 = vld [vmem:[%s322 + $0x2088] sm:$0xff]
        %v2056 = vld [vmem:[%s322 + $0x2090] sm:$0xff]
        %v2057 = vld [vmem:[%s322 + $0x2098] sm:$0xff]
        %v2058 = vld [vmem:[%s322 + $0x20a0] sm:$0xff]
        %v2059 = vld [vmem:[%s322 + $0x20a8] sm:$0xff]
        %v2060 = vld [vmem:[%s322 + $0x20b0] sm:$0xff]
        %v2061 = vld [vmem:[%s322 + $0x20b8] sm:$0xff]
        %v2062 = vld [vmem:[%s322 + $0x20c0] sm:$0xff]
        %v2063 = vld [vmem:[%s322 + $0x20c8] sm:$0xff]
        %v2064 = vld [vmem:[%s322 + $0x20d0] sm:$0xff]
        %v2065 = vld [vmem:[%s322 + $0x20d8] sm:$0xff]
        %v2066 = vld [vmem:[%s322 + $0x20e0] sm:$0xff]
        %v2067 = vld [vmem:[%s322 + $0x20e8] sm:$0xff]
        %v2068 = vld [vmem:[%s322 + $0x20f0] sm:$0xff]
        %v2069 = vld [vmem:[%s322 + $0x20f8] sm:$0xff]
        %v2070 = vld [vmem:[%s322 + $0x2100] sm:$0xff]
        %v2071 = vld [vmem:[%s322 + $0x2108] sm:$0xff]
        %v2072 = vld [vmem:[%s322 + $0x2110] sm:$0xff]
        %v2073 = vld [vmem:[%s322 + $0x2118] sm:$0xff]
        %v2074 = vld [vmem:[%s322 + $0x2120] sm:$0xff]
        %v2075 = vld [vmem:[%s322 + $0x2128] sm:$0xff]
        %v2076 = vld [vmem:[%s322 + $0x2130] sm:$0xff]
        %v2077 = vld [vmem:[%s322 + $0x2138] sm:$0xff]
        %v2078 = vld [vmem:[%s322 + $0x2140] sm:$0xff]
        %v2079 = vld [vmem:[%s322 + $0x2148] sm:$0xff]
        %v2080 = vld [vmem:[%s322 + $0x2150] sm:$0xff]
        %v2081 = vld [vmem:[%s322 + $0x2158] sm:$0xff]
        %v2082 = vld [vmem:[%s322 + $0x2160] sm:$0xff]
        %v2083 = vld [vmem:[%s322 + $0x2168] sm:$0xff]
        %v2084 = vld [vmem:[%s322 + $0x2170] sm:$0xff]
        %v2085 = vld [vmem:[%s322 + $0x2178] sm:$0xff]
        %v2086 = vld [vmem:[%s322 + $0x2180] sm:$0xff]
        %v2087 = vld [vmem:[%s322 + $0x2188] sm:$0xff]
        %v2088 = vld [vmem:[%s322 + $0x2190] sm:$0xff]
        %v2089 = vld [vmem:[%s322 + $0x2198] sm:$0xff]
        %v2090 = vld [vmem:[%s322 + $0x21a0] sm:$0xff]
        %v2091 = vld [vmem:[%s322 + $0x21a8] sm:$0xff]
        %v2092 = vld [vmem:[%s322 + $0x21b0] sm:$0xff]
        %v2093 = vld [vmem:[%s322 + $0x21b8] sm:$0xff]
        %v2094 = vld [vmem:[%s322 + $0x21c0] sm:$0xff]
        %v2095 = vld [vmem:[%s322 + $0x21c8] sm:$0xff]
        %v2096 = vld [vmem:[%s322 + $0x21d0] sm:$0xff]
        %v2097 = vld [vmem:[%s322 + $0x21d8] sm:$0xff]
        %v2098 = vld [vmem:[%s322 + $0x21e0] sm:$0xff]
        %v2099 = vld [vmem:[%s322 + $0x21e8] sm:$0xff]
        %v2100 = vld [vmem:[%s322 + $0x21f0] sm:$0xff]
        %v2101 = vld [vmem:[%s322 + $0x21f8] sm:$0xff]
        %v2102 = vld [vmem:[%s322 + $0x2200] sm:$0xff]
        %v2103 = vld [vmem:[%s322 + $0x2208] sm:$0xff]
        %v2104 = vld [vmem:[%s322 + $0x2210] sm:$0xff]
        %v2105 = vld [vmem:[%s322 + $0x2218] sm:$0xff]
        %v2106 = vld [vmem:[%s322 + $0x2220] sm:$0xff]
        %v2107 = vld [vmem:[%s322 + $0x2228] sm:$0xff]
        %v2108 = vld [vmem:[%s322 + $0x2230] sm:$0xff]
        %v2109 = vld [vmem:[%s322 + $0x2238] sm:$0xff]
        %v2110 = vld [vmem:[%s322 + $0x2240] sm:$0xff]
        %v2111 = vld [vmem:[%s322 + $0x2248] sm:$0xff]
        %v2112 = vld [vmem:[%s322 + $0x2250] sm:$0xff]
        %v2113 = vld [vmem:[%s322 + $0x2258] sm:$0xff]
        %v2114 = vld [vmem:[%s322 + $0x2260] sm:$0xff]
        %v2115 = vld [vmem:[%s322 + $0x2268] sm:$0xff]
        %v2116 = vld [vmem:[%s322 + $0x2270] sm:$0xff]
        %v2117 = vld [vmem:[%s322 + $0x2278] sm:$0xff]
        %v2118 = vld [vmem:[%s322 + $0x2280] sm:$0xff]
        %v2119 = vld [vmem:[%s322 + $0x2288] sm:$0xff]
        %v2120 = vld [vmem:[%s322 + $0x2290] sm:$0xff]
        %v2121 = vld [vmem:[%s322 + $0x2298] sm:$0xff]
        %v2122 = vld [vmem:[%s322 + $0x22a0] sm:$0xff]
        %v2123 = vld [vmem:[%s322 + $0x22a8] sm:$0xff]
        %v2124 = vld [vmem:[%s322 + $0x22b0] sm:$0xff]
        %v2125 = vld [vmem:[%s322 + $0x22b8] sm:$0xff]
        %v2126 = vld [vmem:[%s322 + $0x22c0] sm:$0xff]
        %v2127 = vld [vmem:[%s322 + $0x22c8] sm:$0xff]
        %v2128 = vld [vmem:[%s322 + $0x22d0] sm:$0xff]
        %v2129 = vld [vmem:[%s322 + $0x22d8] sm:$0xff]
        %v2130 = vld [vmem:[%s322 + $0x22e0] sm:$0xff]
        %v2131 = vld [vmem:[%s322 + $0x22e8] sm:$0xff]
        %v2132 = vld [vmem:[%s322 + $0x22f0] sm:$0xff]
        %v2133 = vld [vmem:[%s322 + $0x22f8] sm:$0xff]
        %v2134 = vld [vmem:[%s322 + $0x2300] sm:$0xff]
        %v2135 = vld [vmem:[%s322 + $0x2308] sm:$0xff]
        %v2136 = vld [vmem:[%s322 + $0x2310] sm:$0xff]
        %v2137 = vld [vmem:[%s322 + $0x2318] sm:$0xff]
        %v2138 = vld [vmem:[%s322 + $0x2320] sm:$0xff]
        %v2139 = vld [vmem:[%s322 + $0x2328] sm:$0xff]
        %v2140 = vld [vmem:[%s322 + $0x2330] sm:$0xff]
        %v2141 = vld [vmem:[%s322 + $0x2338] sm:$0xff]
        %v2142 = vld [vmem:[%s322 + $0x2340] sm:$0xff]
        %v2143 = vld [vmem:[%s322 + $0x2348] sm:$0xff]
        %v2144 = vld [vmem:[%s322 + $0x2350] sm:$0xff]
        %v2145 = vld [vmem:[%s322 + $0x2358] sm:$0xff]
        %v2146 = vld [vmem:[%s322 + $0x2360] sm:$0xff]
        %v2147 = vld [vmem:[%s322 + $0x2368] sm:$0xff]
        %v2148 = vld [vmem:[%s322 + $0x2370] sm:$0xff]
        %v2149 = vld [vmem:[%s322 + $0x2378] sm:$0xff]
        %v2150 = vld [vmem:[%s322 + $0x2380] sm:$0xff]
        %v2151 = vld [vmem:[%s322 + $0x2388] sm:$0xff]
        %v2152 = vld [vmem:[%s322 + $0x2390] sm:$0xff]
        %v2153 = vld [vmem:[%s322 + $0x2398] sm:$0xff]
        %v2154 = vld [vmem:[%s322 + $0x23a0] sm:$0xff]
        %v2155 = vld [vmem:[%s322 + $0x23a8] sm:$0xff]
        %v2156 = vld [vmem:[%s322 + $0x23b0] sm:$0xff]
        %v2157 = vld [vmem:[%s322 + $0x23b8] sm:$0xff]
        %v2158 = vld [vmem:[%s322 + $0x23c0] sm:$0xff]
        %v2159 = vld [vmem:[%s322 + $0x23c8] sm:$0xff]
        %v2160 = vld [vmem:[%s322 + $0x23d0] sm:$0xff]
        %v2161 = vld [vmem:[%s322 + $0x23d8] sm:$0xff]
        %v2162 = vld [vmem:[%s322 + $0x23e0] sm:$0xff]
        %v2163 = vld [vmem:[%s322 + $0x23e8] sm:$0xff]
        %v2164 = vld [vmem:[%s322 + $0x23f0] sm:$0xff]
        %v2165 = vld [vmem:[%s322 + $0x23f8] sm:$0xff]
        %v2171 = vcombine.high %v1009, %v1009
        %v2173 = vunpack.c.l.s4 1966171168
        %v2174 = vunpack.c.0.s8 %v2173
        %v2175 = vlaneseq
        %v2176 = vshrl.u32 %v2175, 7
        %v2177 = vsub.s32 %v2174, %v2176
        %v2178 = vrot.slane %v1009, %v2177
        %v2180 = vunpack.c.l.s4 1966171168
        %v2181 = vunpack.c.0.s8 %v2180
        %v2182 = vlaneseq
        %v2183 = vshrl.u32 %v2182, 7
        %v2184 = vsub.s32 %v2181, %v2183
        %v2185 = vrot.slane %v2171, %v2184
        %v2186 = vcombine.high %v2178, %v2178
        %v2187 = vcombine.high %v2185, %v2185
        %v2189 = vunpack.c.l.s4 1966171168
        %v2190 = vunpack.c.0.s8 %v2189
        %v2191 = vlaneseq
        %v2192 = vshrl.u32 %v2191, 7
        %v2193 = vsub.s32 %v2190, %v2192
        %v2194 = vrot.slane %v2178, %v2193
        %v2196 = vunpack.c.l.s4 1966171168
        %v2197 = vunpack.c.0.s8 %v2196
        %v2198 = vlaneseq
        %v2199 = vshrl.u32 %v2198, 7
        %v2200 = vsub.s32 %v2197, %v2199
        %v2201 = vrot.slane %v2185, %v2200
        %v2203 = vunpack.c.l.s4 1966171168
        %v2204 = vunpack.c.0.s8 %v2203
        %v2205 = vlaneseq
        %v2206 = vshrl.u32 %v2205, 7
        %v2207 = vsub.s32 %v2204, %v2206
        %v2208 = vrot.slane %v2186, %v2207
        %v2210 = vunpack.c.l.s4 1966171168
        %v2211 = vunpack.c.0.s8 %v2210
        %v2212 = vlaneseq
        %v2213 = vshrl.u32 %v2212, 7
        %v2214 = vsub.s32 %v2211, %v2213
        %v2215 = vrot.slane %v2187, %v2214
        %v2216 = vcombine.high %v2194, %v2194
        %v2217 = vcombine.high %v2201, %v2201
        %v2218 = vcombine.high %v2208, %v2208
        %v2219 = vcombine.high %v2215, %v2215
        %v2220 = vcombine.high %v1010, %v1010
        %v2222 = vunpack.c.l.s4 1966171168
        %v2223 = vunpack.c.0.s8 %v2222
        %v2224 = vlaneseq
        %v2225 = vshrl.u32 %v2224, 7
        %v2226 = vsub.s32 %v2223, %v2225
        %v2227 = vrot.slane %v1010, %v2226
        %v2229 = vunpack.c.l.s4 1966171168
        %v2230 = vunpack.c.0.s8 %v2229
        %v2231 = vlaneseq
        %v2232 = vshrl.u32 %v2231, 7
        %v2233 = vsub.s32 %v2230, %v2232
        %v2234 = vrot.slane %v2220, %v2233
        %v2235 = vcombine.high %v2227, %v2227
        %v2236 = vcombine.high %v2234, %v2234
        %v2238 = vunpack.c.l.s4 1966171168
        %v2239 = vunpack.c.0.s8 %v2238
        %v2240 = vlaneseq
        %v2241 = vshrl.u32 %v2240, 7
        %v2242 = vsub.s32 %v2239, %v2241
        %v2243 = vrot.slane %v2227, %v2242
        %v2245 = vunpack.c.l.s4 1966171168
        %v2246 = vunpack.c.0.s8 %v2245
        %v2247 = vlaneseq
        %v2248 = vshrl.u32 %v2247, 7
        %v2249 = vsub.s32 %v2246, %v2248
        %v2250 = vrot.slane %v2234, %v2249
        %v2252 = vunpack.c.l.s4 1966171168
        %v2253 = vunpack.c.0.s8 %v2252
        %v2254 = vlaneseq
        %v2255 = vshrl.u32 %v2254, 7
        %v2256 = vsub.s32 %v2253, %v2255
        %v2257 = vrot.slane %v2235, %v2256
        %v2259 = vunpack.c.l.s4 1966171168
        %v2260 = vunpack.c.0.s8 %v2259
        %v2261 = vlaneseq
        %v2262 = vshrl.u32 %v2261, 7
        %v2263 = vsub.s32 %v2260, %v2262
        %v2264 = vrot.slane %v2236, %v2263
        %v2265 = vcombine.high %v2243, %v2243
        %v2266 = vcombine.high %v2250, %v2250
        %v2267 = vcombine.high %v2257, %v2257
        %v2268 = vcombine.high %v2264, %v2264
        %v2269 = vcombine.high %v1011, %v1011
        %v2271 = vunpack.c.l.s4 1966171168
        %v2272 = vunpack.c.0.s8 %v2271
        %v2273 = vlaneseq
        %v2274 = vshrl.u32 %v2273, 7
        %v2275 = vsub.s32 %v2272, %v2274
        %v2276 = vrot.slane %v1011, %v2275
        %v2278 = vunpack.c.l.s4 1966171168
        %v2279 = vunpack.c.0.s8 %v2278
        %v2280 = vlaneseq
        %v2281 = vshrl.u32 %v2280, 7
        %v2282 = vsub.s32 %v2279, %v2281
        %v2283 = vrot.slane %v2269, %v2282
        %v2284 = vcombine.high %v2276, %v2276
        %v2285 = vcombine.high %v2283, %v2283
        %v2287 = vunpack.c.l.s4 1966171168
        %v2288 = vunpack.c.0.s8 %v2287
        %v2289 = vlaneseq
        %v2290 = vshrl.u32 %v2289, 7
        %v2291 = vsub.s32 %v2288, %v2290
        %v2292 = vrot.slane %v2276, %v2291
        %v2294 = vunpack.c.l.s4 1966171168
        %v2295 = vunpack.c.0.s8 %v2294
        %v2296 = vlaneseq
        %v2297 = vshrl.u32 %v2296, 7
        %v2298 = vsub.s32 %v2295, %v2297
        %v2299 = vrot.slane %v2283, %v2298
        %v2301 = vunpack.c.l.s4 1966171168
        %v2302 = vunpack.c.0.s8 %v2301
        %v2303 = vlaneseq
        %v2304 = vshrl.u32 %v2303, 7
        %v2305 = vsub.s32 %v2302, %v2304
        %v2306 = vrot.slane %v2284, %v2305
        %v2308 = vunpack.c.l.s4 1966171168
        %v2309 = vunpack.c.0.s8 %v2308
        %v2310 = vlaneseq
        %v2311 = vshrl.u32 %v2310, 7
        %v2312 = vsub.s32 %v2309, %v2311
        %v2313 = vrot.slane %v2285, %v2312
        %v2314 = vcombine.high %v2292, %v2292
        %v2315 = vcombine.high %v2299, %v2299
        %v2316 = vcombine.high %v2306, %v2306
        %v2317 = vcombine.high %v2313, %v2313
        %v2318 = vcombine.high %v1012, %v1012
        %v2320 = vunpack.c.l.s4 1966171168
        %v2321 = vunpack.c.0.s8 %v2320
        %v2322 = vlaneseq
        %v2323 = vshrl.u32 %v2322, 7
        %v2324 = vsub.s32 %v2321, %v2323
        %v2325 = vrot.slane %v1012, %v2324
        %v2327 = vunpack.c.l.s4 1966171168
        %v2328 = vunpack.c.0.s8 %v2327
        %v2329 = vlaneseq
        %v2330 = vshrl.u32 %v2329, 7
        %v2331 = vsub.s32 %v2328, %v2330
        %v2332 = vrot.slane %v2318, %v2331
        %v2333 = vcombine.high %v2325, %v2325
        %v2334 = vcombine.high %v2332, %v2332
        %v2336 = vunpack.c.l.s4 1966171168
        %v2337 = vunpack.c.0.s8 %v2336
        %v2338 = vlaneseq
        %v2339 = vshrl.u32 %v2338, 7
        %v2340 = vsub.s32 %v2337, %v2339
        %v2341 = vrot.slane %v2325, %v2340
        %v2343 = vunpack.c.l.s4 1966171168
        %v2344 = vunpack.c.0.s8 %v2343
        %v2345 = vlaneseq
        %v2346 = vshrl.u32 %v2345, 7
        %v2347 = vsub.s32 %v2344, %v2346
        %v2348 = vrot.slane %v2332, %v2347
        %v2350 = vunpack.c.l.s4 1966171168
        %v2351 = vunpack.c.0.s8 %v2350
        %v2352 = vlaneseq
        %v2353 = vshrl.u32 %v2352, 7
        %v2354 = vsub.s32 %v2351, %v2353
        %v2355 = vrot.slane %v2333, %v2354
        %v2357 = vunpack.c.l.s4 1966171168
        %v2358 = vunpack.c.0.s8 %v2357
        %v2359 = vlaneseq
        %v2360 = vshrl.u32 %v2359, 7
        %v2361 = vsub.s32 %v2358, %v2360
        %v2362 = vrot.slane %v2334, %v2361
        %v2363 = vcombine.high %v2341, %v2341
        %v2364 = vcombine.high %v2348, %v2348
        %v2365 = vcombine.high %v2355, %v2355
        %v2366 = vcombine.high %v2362, %v2362
        %v2368 = vunpack.c.l.s4 1966171168
        %v2369 = vunpack.c.0.s8 %v2368
        %v2370 = vlaneseq
        %v2371 = vshrl.u32 %v2370, 7
        %v2372 = vsub.s32 %v2369, %v2371
        %v2373 = vrot.slane %v1013, %v2372
        %v2374 = vcombine.high %v2373, %v2373
        %v2376 = vunpack.c.l.s4 1966171168
        %v2377 = vunpack.c.0.s8 %v2376
        %v2378 = vlaneseq
        %v2379 = vshrl.u32 %v2378, 7
        %v2380 = vsub.s32 %v2377, %v2379
        %v2381 = vrot.slane %v2373, %v2380
        %v2383 = vunpack.c.l.s4 1966171168
        %v2384 = vunpack.c.0.s8 %v2383
        %v2385 = vlaneseq
        %v2386 = vshrl.u32 %v2385, 7
        %v2387 = vsub.s32 %v2384, %v2386
        %v2388 = vrot.slane %v2374, %v2387
        %v2389 = vcombine.high %v2381, %v2381
        %v2390 = vcombine.high %v2388, %v2388
        %v3579 = vunpack.c.l.b16 %v1014
        %v3580 = vunpack.c.h.b16 %v1014
        %v3581 = vunpack.c.l.b16 %v1015
        %v3582 = vunpack.c.h.b16 %v1015
        %v3583 = vunpack.c.l.b16 %v1016
        %v3584 = vunpack.c.h.b16 %v1016
        %v3585 = vunpack.c.l.b16 %v1017
        %v3586 = vunpack.c.h.b16 %v1017
        %v3587 = vunpack.c.l.b16 %v1018
        %v3588 = vunpack.c.h.b16 %v1018
        %v3589 = vunpack.c.l.b16 %v1019
        %v3590 = vunpack.c.h.b16 %v1019
        %v3591 = vunpack.c.l.b16 %v1020
        %v3592 = vunpack.c.h.b16 %v1020
        %v3593 = vunpack.c.l.b16 %v1021
        %v3594 = vunpack.c.h.b16 %v1021
        %v3595 = vunpack.c.l.b16 %v1022
        %v3596 = vunpack.c.h.b16 %v1022
        %v3597 = vunpack.c.l.b16 %v1023
        %v3598 = vunpack.c.h.b16 %v1023
        %v3599 = vunpack.c.l.b16 %v1024
        %v3600 = vunpack.c.h.b16 %v1024
        %v3601 = vunpack.c.l.b16 %v1025
        %v3602 = vunpack.c.h.b16 %v1025
        %v3603 = vunpack.c.l.b16 %v1026
        %v3604 = vunpack.c.h.b16 %v1026
        %v3605 = vunpack.c.l.b16 %v1027
        %v3606 = vunpack.c.h.b16 %v1027
        %v3607 = vunpack.c.l.b16 %v1028
        %v3608 = vunpack.c.h.b16 %v1028
        %v3609 = vunpack.c.l.b16 %v1029
        %v3610 = vunpack.c.h.b16 %v1029
        %v3611 = vunpack.c.l.b16 %v1030
        %v3612 = vunpack.c.h.b16 %v1030
        %v3613 = vunpack.c.l.b16 %v1031
        %v3614 = vunpack.c.h.b16 %v1031
        %v3615 = vunpack.c.l.b16 %v1032
        %v3616 = vunpack.c.h.b16 %v1032
        %v3617 = vunpack.c.l.b16 %v1033
        %v3618 = vunpack.c.h.b16 %v1033
        %v3619 = vunpack.c.l.b16 %v1034
        %v3620 = vunpack.c.h.b16 %v1034
        %v3621 = vunpack.c.l.b16 %v1035
        %v3622 = vunpack.c.h.b16 %v1035
        %v3623 = vunpack.c.l.b16 %v1036
        %v3624 = vunpack.c.h.b16 %v1036
        %v3625 = vunpack.c.l.b16 %v1037
        %v3626 = vunpack.c.h.b16 %v1037
        %v3627 = vunpack.c.l.b16 %v1038
        %v3628 = vunpack.c.h.b16 %v1038
        %v3629 = vunpack.c.l.b16 %v1039
        %v3630 = vunpack.c.h.b16 %v1039
        %v3631 = vunpack.c.l.b16 %v1040
        %v3632 = vunpack.c.h.b16 %v1040
        %v3633 = vunpack.c.l.b16 %v1041
        %v3634 = vunpack.c.h.b16 %v1041
        %v3635 = vunpack.c.l.b16 %v1042
        %v3636 = vunpack.c.h.b16 %v1042
        %v3637 = vunpack.c.l.b16 %v1043
        %v3638 = vunpack.c.h.b16 %v1043
        %v3639 = vunpack.c.l.b16 %v1044
        %v3640 = vunpack.c.h.b16 %v1044
        %v3641 = vunpack.c.l.b16 %v1045
        %v3642 = vunpack.c.h.b16 %v1045
        %v3643 = vunpack.c.l.b16 %v1046
        %v3644 = vunpack.c.h.b16 %v1046
        %v3645 = vunpack.c.l.b16 %v1047
        %v3646 = vunpack.c.h.b16 %v1047
        %v3647 = vunpack.c.l.b16 %v1048
        %v3648 = vunpack.c.h.b16 %v1048
        %v3649 = vunpack.c.l.b16 %v1049
        %v3650 = vunpack.c.h.b16 %v1049
        %v3651 = vunpack.c.l.b16 %v1050
        %v3652 = vunpack.c.h.b16 %v1050
        %v3653 = vunpack.c.l.b16 %v1051
        %v3654 = vunpack.c.h.b16 %v1051
        %v3655 = vunpack.c.l.b16 %v1052
        %v3656 = vunpack.c.h.b16 %v1052
        %v3657 = vunpack.c.l.b16 %v1053
        %v3658 = vunpack.c.h.b16 %v1053
        %v3659 = vunpack.c.l.b16 %v1054
        %v3660 = vunpack.c.h.b16 %v1054
        %v3661 = vunpack.c.l.b16 %v1055
        %v3662 = vunpack.c.h.b16 %v1055
        %v3663 = vunpack.c.l.b16 %v1056
        %v3664 = vunpack.c.h.b16 %v1056
        %v3665 = vunpack.c.l.b16 %v1057
        %v3666 = vunpack.c.h.b16 %v1057
        %v3667 = vunpack.c.l.b16 %v1058
        %v3668 = vunpack.c.h.b16 %v1058
        %v3669 = vunpack.c.l.b16 %v1059
        %v3670 = vunpack.c.h.b16 %v1059
        %v3671 = vunpack.c.l.b16 %v1060
        %v3672 = vunpack.c.h.b16 %v1060
        %v3673 = vunpack.c.l.b16 %v1061
        %v3674 = vunpack.c.h.b16 %v1061
        %v3675 = vunpack.c.l.b16 %v1062
        %v3676 = vunpack.c.h.b16 %v1062
        %v3677 = vunpack.c.l.b16 %v1063
        %v3678 = vunpack.c.h.b16 %v1063
        %v3679 = vunpack.c.l.b16 %v1064
        %v3680 = vunpack.c.h.b16 %v1064
        %v3681 = vunpack.c.l.b16 %v1065
        %v3682 = vunpack.c.h.b16 %v1065
        %v3683 = vunpack.c.l.b16 %v1066
        %v3684 = vunpack.c.h.b16 %v1066
        %v3685 = vunpack.c.l.b16 %v1067
        %v3686 = vunpack.c.h.b16 %v1067
        %v3687 = vunpack.c.l.b16 %v1068
        %v3688 = vunpack.c.h.b16 %v1068
        %v3689 = vunpack.c.l.b16 %v1069
        %v3690 = vunpack.c.h.b16 %v1069
        %v3691 = vunpack.c.l.b16 %v1070
        %v3692 = vunpack.c.h.b16 %v1070
        %v3693 = vunpack.c.l.b16 %v1071
        %v3694 = vunpack.c.h.b16 %v1071
        %v3695 = vunpack.c.l.b16 %v1072
        %v3696 = vunpack.c.h.b16 %v1072
        %v3697 = vunpack.c.l.b16 %v1073
        %v3698 = vunpack.c.h.b16 %v1073
        %v3699 = vunpack.c.l.b16 %v1074
        %v3700 = vunpack.c.h.b16 %v1074
        %v3701 = vunpack.c.l.b16 %v1075
        %v3702 = vunpack.c.h.b16 %v1075
        %v3703 = vunpack.c.l.b16 %v1076
        %v3704 = vunpack.c.h.b16 %v1076
        %v3705 = vunpack.c.l.b16 %v1077
        %v3706 = vunpack.c.h.b16 %v1077
        %v3707 = vunpack.c.l.b16 %v1078
        %v3708 = vunpack.c.h.b16 %v1078
        %v3709 = vunpack.c.l.b16 %v1079
        %v3710 = vunpack.c.h.b16 %v1079
        %v3711 = vunpack.c.l.b16 %v1080
        %v3712 = vunpack.c.h.b16 %v1080
        %v3713 = vunpack.c.l.b16 %v1081
        %v3714 = vunpack.c.h.b16 %v1081
        %v3715 = vunpack.c.l.b16 %v1082
        %v3716 = vunpack.c.h.b16 %v1082
        %v3717 = vunpack.c.l.b16 %v1083
        %v3718 = vunpack.c.h.b16 %v1083
        %v3719 = vunpack.c.l.b16 %v1084
        %v3720 = vunpack.c.h.b16 %v1084
        %v3721 = vunpack.c.l.b16 %v1085
        %v3722 = vunpack.c.h.b16 %v1085
        %v3723 = vunpack.c.l.b16 %v1086
        %v3724 = vunpack.c.h.b16 %v1086
        %v3725 = vunpack.c.l.b16 %v1087
        %v3726 = vunpack.c.h.b16 %v1087
        %v3727 = vunpack.c.l.b16 %v1088
        %v3728 = vunpack.c.h.b16 %v1088
        %v3729 = vunpack.c.l.b16 %v1089
        %v3730 = vunpack.c.h.b16 %v1089
        %v3731 = vunpack.c.l.b16 %v1090
        %v3732 = vunpack.c.h.b16 %v1090
        %v3733 = vunpack.c.l.b16 %v1091
        %v3734 = vunpack.c.h.b16 %v1091
        %v3735 = vunpack.c.l.b16 %v1092
        %v3736 = vunpack.c.h.b16 %v1092
        %v3737 = vunpack.c.l.b16 %v1093
        %v3738 = vunpack.c.h.b16 %v1093
        %v3739 = vunpack.c.l.b16 %v1094
        %v3740 = vunpack.c.h.b16 %v1094
        %v3741 = vunpack.c.l.b16 %v1095
        %v3742 = vunpack.c.h.b16 %v1095
        %v3743 = vunpack.c.l.b16 %v1096
        %v3744 = vunpack.c.h.b16 %v1096
        %v3745 = vunpack.c.l.b16 %v1097
        %v3746 = vunpack.c.h.b16 %v1097
        %v3747 = vunpack.c.l.b16 %v1098
        %v3748 = vunpack.c.h.b16 %v1098
        %v3749 = vunpack.c.l.b16 %v1099
        %v3750 = vunpack.c.h.b16 %v1099
        %v3751 = vunpack.c.l.b16 %v1100
        %v3752 = vunpack.c.h.b16 %v1100
        %v3753 = vunpack.c.l.b16 %v1101
        %v3754 = vunpack.c.h.b16 %v1101
        %v3755 = vunpack.c.l.b16 %v1102
        %v3756 = vunpack.c.h.b16 %v1102
        %v3757 = vunpack.c.l.b16 %v1103
        %v3758 = vunpack.c.h.b16 %v1103
        %v3759 = vunpack.c.l.b16 %v1104
        %v3760 = vunpack.c.h.b16 %v1104
        %v3761 = vunpack.c.l.b16 %v1105
        %v3762 = vunpack.c.h.b16 %v1105
        %v3763 = vunpack.c.l.b16 %v1106
        %v3764 = vunpack.c.h.b16 %v1106
        %v3765 = vunpack.c.l.b16 %v1107
        %v3766 = vunpack.c.h.b16 %v1107
        %v3767 = vunpack.c.l.b16 %v1108
        %v3768 = vunpack.c.h.b16 %v1108
        %v3769 = vunpack.c.l.b16 %v1109
        %v3770 = vunpack.c.h.b16 %v1109
        %v3771 = vunpack.c.l.b16 %v1110
        %v3772 = vunpack.c.h.b16 %v1110
        %v3773 = vunpack.c.l.b16 %v1111
        %v3774 = vunpack.c.h.b16 %v1111
        %v3775 = vunpack.c.l.b16 %v1112
        %v3776 = vunpack.c.h.b16 %v1112
        %v3777 = vunpack.c.l.b16 %v1113
        %v3778 = vunpack.c.h.b16 %v1113
        %v3779 = vunpack.c.l.b16 %v1114
        %v3780 = vunpack.c.h.b16 %v1114
        %v3781 = vunpack.c.l.b16 %v1115
        %v3782 = vunpack.c.h.b16 %v1115
        %v3783 = vunpack.c.l.b16 %v1116
        %v3784 = vunpack.c.h.b16 %v1116
        %v3785 = vunpack.c.l.b16 %v1117
        %v3786 = vunpack.c.h.b16 %v1117
        %v3787 = vunpack.c.l.b16 %v1118
        %v3788 = vunpack.c.h.b16 %v1118
        %v3789 = vunpack.c.l.b16 %v1119
        %v3790 = vunpack.c.h.b16 %v1119
        %v3791 = vunpack.c.l.b16 %v1120
        %v3792 = vunpack.c.h.b16 %v1120
        %v3793 = vunpack.c.l.b16 %v1121
        %v3794 = vunpack.c.h.b16 %v1121
        %v3795 = vunpack.c.l.b16 %v1122
        %v3796 = vunpack.c.h.b16 %v1122
        %v3797 = vunpack.c.l.b16 %v1123
        %v3798 = vunpack.c.h.b16 %v1123
        %v3799 = vunpack.c.l.b16 %v1124
        %v3800 = vunpack.c.h.b16 %v1124
        %v3801 = vunpack.c.l.b16 %v1125
        %v3802 = vunpack.c.h.b16 %v1125
        %v3803 = vunpack.c.l.b16 %v1126
        %v3804 = vunpack.c.h.b16 %v1126
        %v3805 = vunpack.c.l.b16 %v1127
        %v3806 = vunpack.c.h.b16 %v1127
        %v3807 = vunpack.c.l.b16 %v1128
        %v3808 = vunpack.c.h.b16 %v1128
        %v3809 = vunpack.c.l.b16 %v1129
        %v3810 = vunpack.c.h.b16 %v1129
        %v3811 = vunpack.c.l.b16 %v1130
        %v3812 = vunpack.c.h.b16 %v1130
        %v3813 = vunpack.c.l.b16 %v1131
        %v3814 = vunpack.c.h.b16 %v1131
        %v3815 = vunpack.c.l.b16 %v1132
        %v3816 = vunpack.c.h.b16 %v1132
        %v3817 = vunpack.c.l.b16 %v1133
        %v3818 = vunpack.c.h.b16 %v1133
        %v3819 = vunpack.c.l.b16 %v1134
        %v3820 = vunpack.c.h.b16 %v1134
        %v3821 = vunpack.c.l.b16 %v1135
        %v3822 = vunpack.c.h.b16 %v1135
        %v3823 = vunpack.c.l.b16 %v1136
        %v3824 = vunpack.c.h.b16 %v1136
        %v3825 = vunpack.c.l.b16 %v1137
        %v3826 = vunpack.c.h.b16 %v1137
        %v3827 = vunpack.c.l.b16 %v1138
        %v3828 = vunpack.c.h.b16 %v1138
        %v3829 = vunpack.c.l.b16 %v1139
        %v3830 = vunpack.c.h.b16 %v1139
        %v3831 = vunpack.c.l.b16 %v1140
        %v3832 = vunpack.c.h.b16 %v1140
        %v3833 = vunpack.c.l.b16 %v1141
        %v3834 = vunpack.c.h.b16 %v1141
        %v3835 = vunpack.c.l.b16 %v1142
        %v3836 = vunpack.c.h.b16 %v1142
        %v3837 = vunpack.c.l.b16 %v1143
        %v3838 = vunpack.c.h.b16 %v1143
        %v3839 = vunpack.c.l.b16 %v1144
        %v3840 = vunpack.c.h.b16 %v1144
        %v3841 = vunpack.c.l.b16 %v1145
        %v3842 = vunpack.c.h.b16 %v1145
        %v3843 = vunpack.c.l.b16 %v1146
        %v3844 = vunpack.c.h.b16 %v1146
        %v3845 = vunpack.c.l.b16 %v1147
        %v3846 = vunpack.c.h.b16 %v1147
        %v3847 = vunpack.c.l.b16 %v1148
        %v3848 = vunpack.c.h.b16 %v1148
        %v3849 = vunpack.c.l.b16 %v1149
        %v3850 = vunpack.c.h.b16 %v1149
        %v3851 = vunpack.c.l.b16 %v1150
        %v3852 = vunpack.c.h.b16 %v1150
        %v3853 = vunpack.c.l.b16 %v1151
        %v3854 = vunpack.c.h.b16 %v1151
        %v3855 = vunpack.c.l.b16 %v1152
        %v3856 = vunpack.c.h.b16 %v1152
        %v3857 = vunpack.c.l.b16 %v1153
        %v3858 = vunpack.c.h.b16 %v1153
        %v3859 = vunpack.c.l.b16 %v1154
        %v3860 = vunpack.c.h.b16 %v1154
        %v3861 = vunpack.c.l.b16 %v1155
        %v3862 = vunpack.c.h.b16 %v1155
        %v3863 = vunpack.c.l.b16 %v1156
        %v3864 = vunpack.c.h.b16 %v1156
        %v3865 = vunpack.c.l.b16 %v1157
        %v3866 = vunpack.c.h.b16 %v1157
        %v3867 = vunpack.c.l.b16 %v1158
        %v3868 = vunpack.c.h.b16 %v1158
        %v3869 = vunpack.c.l.b16 %v1159
        %v3870 = vunpack.c.h.b16 %v1159
        %v3871 = vunpack.c.l.b16 %v1160
        %v3872 = vunpack.c.h.b16 %v1160
        %v3873 = vunpack.c.l.b16 %v1161
        %v3874 = vunpack.c.h.b16 %v1161
        %v3875 = vunpack.c.l.b16 %v1162
        %v3876 = vunpack.c.h.b16 %v1162
        %v3877 = vunpack.c.l.b16 %v1163
        %v3878 = vunpack.c.h.b16 %v1163
        %v3879 = vunpack.c.l.b16 %v1164
        %v3880 = vunpack.c.h.b16 %v1164
        %v3881 = vunpack.c.l.b16 %v1165
        %v3882 = vunpack.c.h.b16 %v1165
        %v3883 = vunpack.c.l.b16 %v1166
        %v3884 = vunpack.c.h.b16 %v1166
        %v3885 = vunpack.c.l.b16 %v1167
        %v3886 = vunpack.c.h.b16 %v1167
        %v3887 = vunpack.c.l.b16 %v1168
        %v3888 = vunpack.c.h.b16 %v1168
        %v3889 = vunpack.c.l.b16 %v1169
        %v3890 = vunpack.c.h.b16 %v1169
        %v3891 = vunpack.c.l.b16 %v1170
        %v3892 = vunpack.c.h.b16 %v1170
        %v3893 = vunpack.c.l.b16 %v1171
        %v3894 = vunpack.c.h.b16 %v1171
        %v3895 = vunpack.c.l.b16 %v1172
        %v3896 = vunpack.c.h.b16 %v1172
        %v3897 = vunpack.c.l.b16 %v1173
        %v3898 = vunpack.c.h.b16 %v1173
        %v3899 = vunpack.c.l.b16 %v1174
        %v3900 = vunpack.c.h.b16 %v1174
        %v3901 = vunpack.c.l.b16 %v1175
        %v3902 = vunpack.c.h.b16 %v1175
        %v3903 = vunpack.c.l.b16 %v1176
        %v3904 = vunpack.c.h.b16 %v1176
        %v3905 = vunpack.c.l.b16 %v1177
        %v3906 = vunpack.c.h.b16 %v1177
        %v3907 = vunpack.c.l.b16 %v1178
        %v3908 = vunpack.c.h.b16 %v1178
        %v3909 = vunpack.c.l.b16 %v1179
        %v3910 = vunpack.c.h.b16 %v1179
        %v3911 = vunpack.c.l.b16 %v1180
        %v3912 = vunpack.c.h.b16 %v1180
        %v3913 = vunpack.c.l.b16 %v1181
        %v3914 = vunpack.c.h.b16 %v1181
        %v3915 = vunpack.c.l.b16 %v1182
        %v3916 = vunpack.c.h.b16 %v1182
        %v3917 = vunpack.c.l.b16 %v1183
        %v3918 = vunpack.c.h.b16 %v1183
        %v3919 = vunpack.c.l.b16 %v1184
        %v3920 = vunpack.c.h.b16 %v1184
        %v3921 = vunpack.c.l.b16 %v1185
        %v3922 = vunpack.c.h.b16 %v1185
        %v3923 = vunpack.c.l.b16 %v1186
        %v3924 = vunpack.c.h.b16 %v1186
        %v3925 = vunpack.c.l.b16 %v1187
        %v3926 = vunpack.c.h.b16 %v1187
        %v3927 = vunpack.c.l.b16 %v1188
        %v3928 = vunpack.c.h.b16 %v1188
        %v3929 = vunpack.c.l.b16 %v1189
        %v3930 = vunpack.c.h.b16 %v1189
        %v3931 = vunpack.c.l.b16 %v1190
        %v3932 = vunpack.c.h.b16 %v1190
        %v3933 = vunpack.c.l.b16 %v1191
        %v3934 = vunpack.c.h.b16 %v1191
        %v3935 = vunpack.c.l.b16 %v1192
        %v3936 = vunpack.c.h.b16 %v1192
        %v3937 = vunpack.c.l.b16 %v1193
        %v3938 = vunpack.c.h.b16 %v1193
        %v3939 = vunpack.c.l.b16 %v1194
        %v3940 = vunpack.c.h.b16 %v1194
        %v3941 = vunpack.c.l.b16 %v1195
        %v3942 = vunpack.c.h.b16 %v1195
        %v3943 = vunpack.c.l.b16 %v1196
        %v3944 = vunpack.c.h.b16 %v1196
        %v3945 = vunpack.c.l.b16 %v1197
        %v3946 = vunpack.c.h.b16 %v1197
        %v3947 = vunpack.c.l.b16 %v1198
        %v3948 = vunpack.c.h.b16 %v1198
        %v3949 = vunpack.c.l.b16 %v1199
        %v3950 = vunpack.c.h.b16 %v1199
        %v3951 = vunpack.c.l.b16 %v1200
        %v3952 = vunpack.c.h.b16 %v1200
        %v3953 = vunpack.c.l.b16 %v1201
        %v3954 = vunpack.c.h.b16 %v1201
        %v3955 = vunpack.c.l.b16 %v1202
        %v3956 = vunpack.c.h.b16 %v1202
        %v3957 = vunpack.c.l.b16 %v1203
        %v3958 = vunpack.c.h.b16 %v1203
        %v3959 = vunpack.c.l.b16 %v1204
        %v3960 = vunpack.c.h.b16 %v1204
        %v3961 = vunpack.c.l.b16 %v1205
        %v3962 = vunpack.c.h.b16 %v1205
        %v3963 = vunpack.c.l.b16 %v1206
        %v3964 = vunpack.c.h.b16 %v1206
        %v3965 = vunpack.c.l.b16 %v1207
        %v3966 = vunpack.c.h.b16 %v1207
        %v3967 = vunpack.c.l.b16 %v1208
        %v3968 = vunpack.c.h.b16 %v1208
        %v3969 = vunpack.c.l.b16 %v1209
        %v3970 = vunpack.c.h.b16 %v1209
        %v3971 = vunpack.c.l.b16 %v1210
        %v3972 = vunpack.c.h.b16 %v1210
        %v3973 = vunpack.c.l.b16 %v1211
        %v3974 = vunpack.c.h.b16 %v1211
        %v3975 = vunpack.c.l.b16 %v1212
        %v3976 = vunpack.c.h.b16 %v1212
        %v3977 = vunpack.c.l.b16 %v1213
        %v3978 = vunpack.c.h.b16 %v1213
        %v3979 = vunpack.c.l.b16 %v1214
        %v3980 = vunpack.c.h.b16 %v1214
        %v3981 = vunpack.c.l.b16 %v1215
        %v3982 = vunpack.c.h.b16 %v1215
        %v3983 = vunpack.c.l.b16 %v1216
        %v3984 = vunpack.c.h.b16 %v1216
        %v3985 = vunpack.c.l.b16 %v1217
        %v3986 = vunpack.c.h.b16 %v1217
        %v3987 = vunpack.c.l.b16 %v1218
        %v3988 = vunpack.c.h.b16 %v1218
        %v3989 = vunpack.c.l.b16 %v1219
        %v3990 = vunpack.c.h.b16 %v1219
        %v3991 = vunpack.c.l.b16 %v1220
        %v3992 = vunpack.c.h.b16 %v1220
        %v3993 = vunpack.c.l.b16 %v1221
        %v3994 = vunpack.c.h.b16 %v1221
        %v3995 = vunpack.c.l.b16 %v1222
        %v3996 = vunpack.c.h.b16 %v1222
        %v3997 = vunpack.c.l.b16 %v1223
        %v3998 = vunpack.c.h.b16 %v1223
        %v3999 = vunpack.c.l.b16 %v1224
        %v4000 = vunpack.c.h.b16 %v1224
        %v4001 = vunpack.c.l.b16 %v1225
        %v4002 = vunpack.c.h.b16 %v1225
        %v4003 = vunpack.c.l.b16 %v1226
        %v4004 = vunpack.c.h.b16 %v1226
        %v4005 = vunpack.c.l.b16 %v1227
        %v4006 = vunpack.c.h.b16 %v1227
        %v4007 = vunpack.c.l.b16 %v1228
        %v4008 = vunpack.c.h.b16 %v1228
        %v4009 = vunpack.c.l.b16 %v1229
        %v4010 = vunpack.c.h.b16 %v1229
        %v4011 = vunpack.c.l.b16 %v1230
        %v4012 = vunpack.c.h.b16 %v1230
        %v4013 = vunpack.c.l.b16 %v1231
        %v4014 = vunpack.c.h.b16 %v1231
        %v4015 = vunpack.c.l.b16 %v1232
        %v4016 = vunpack.c.h.b16 %v1232
        %v4017 = vunpack.c.l.b16 %v1233
        %v4018 = vunpack.c.h.b16 %v1233
        %v4019 = vunpack.c.l.b16 %v1234
        %v4020 = vunpack.c.h.b16 %v1234
        %v4021 = vunpack.c.l.b16 %v1235
        %v4022 = vunpack.c.h.b16 %v1235
        %v4023 = vunpack.c.l.b16 %v1236
        %v4024 = vunpack.c.h.b16 %v1236
        %v4025 = vunpack.c.l.b16 %v1237
        %v4026 = vunpack.c.h.b16 %v1237
        %v4027 = vunpack.c.l.b16 %v1238
        %v4028 = vunpack.c.h.b16 %v1238
        %v4029 = vunpack.c.l.b16 %v1239
        %v4030 = vunpack.c.h.b16 %v1239
        %v4031 = vunpack.c.l.b16 %v1240
        %v4032 = vunpack.c.h.b16 %v1240
        %v4033 = vunpack.c.l.b16 %v1241
        %v4034 = vunpack.c.h.b16 %v1241
        %v4035 = vunpack.c.l.b16 %v1242
        %v4036 = vunpack.c.h.b16 %v1242
        %v4037 = vunpack.c.l.b16 %v1243
        %v4038 = vunpack.c.h.b16 %v1243
        %v4039 = vunpack.c.l.b16 %v1244
        %v4040 = vunpack.c.h.b16 %v1244
        %v4041 = vunpack.c.l.b16 %v1245
        %v4042 = vunpack.c.h.b16 %v1245
        %v4043 = vunpack.c.l.b16 %v1246
        %v4044 = vunpack.c.h.b16 %v1246
        %v4045 = vunpack.c.l.b16 %v1247
        %v4046 = vunpack.c.h.b16 %v1247
        %v4047 = vunpack.c.l.b16 %v1248
        %v4048 = vunpack.c.h.b16 %v1248
        %v4049 = vunpack.c.l.b16 %v1249
        %v4050 = vunpack.c.h.b16 %v1249
        %v4051 = vunpack.c.l.b16 %v1250
        %v4052 = vunpack.c.h.b16 %v1250
        %v4053 = vunpack.c.l.b16 %v1251
        %v4054 = vunpack.c.h.b16 %v1251
        %v4055 = vunpack.c.l.b16 %v1252
        %v4056 = vunpack.c.h.b16 %v1252
        %v4057 = vunpack.c.l.b16 %v1253
        %v4058 = vunpack.c.h.b16 %v1253
        %v4059 = vunpack.c.l.b16 %v1254
        %v4060 = vunpack.c.h.b16 %v1254
        %v4061 = vunpack.c.l.b16 %v1255
        %v4062 = vunpack.c.h.b16 %v1255
        %v4063 = vunpack.c.l.b16 %v1256
        %v4064 = vunpack.c.h.b16 %v1256
        %v4065 = vunpack.c.l.b16 %v1257
        %v4066 = vunpack.c.h.b16 %v1257
        %v4067 = vunpack.c.l.b16 %v1258
        %v4068 = vunpack.c.h.b16 %v1258
        %v4069 = vunpack.c.l.b16 %v1259
        %v4070 = vunpack.c.h.b16 %v1259
        %v4071 = vunpack.c.l.b16 %v1260
        %v4072 = vunpack.c.h.b16 %v1260
        %v4073 = vunpack.c.l.b16 %v1261
        %v4074 = vunpack.c.h.b16 %v1261
        %v4075 = vunpack.c.l.b16 %v1262
        %v4076 = vunpack.c.h.b16 %v1262
        %v4077 = vunpack.c.l.b16 %v1263
        %v4078 = vunpack.c.h.b16 %v1263
        %v4079 = vunpack.c.l.b16 %v1264
        %v4080 = vunpack.c.h.b16 %v1264
        %v4081 = vunpack.c.l.b16 %v1265
        %v4082 = vunpack.c.h.b16 %v1265
        %v4083 = vunpack.c.l.b16 %v1266
        %v4084 = vunpack.c.h.b16 %v1266
        %v4085 = vunpack.c.l.b16 %v1267
        %v4086 = vunpack.c.h.b16 %v1267
        %v4087 = vunpack.c.l.b16 %v1268
        %v4088 = vunpack.c.h.b16 %v1268
        %v4089 = vunpack.c.l.b16 %v1269
        %v4090 = vunpack.c.h.b16 %v1269
        %v4091 = vunpack.c.l.b16 %v1270
        %v4092 = vunpack.c.h.b16 %v1270
        %v4093 = vunpack.c.l.b16 %v1271
        %v4094 = vunpack.c.h.b16 %v1271
        %v4095 = vunpack.c.l.b16 %v1272
        %v4096 = vunpack.c.h.b16 %v1272
        %v4097 = vunpack.c.l.b16 %v1273
        %v4098 = vunpack.c.h.b16 %v1273
        %v4099 = vunpack.c.l.b16 %v1274
        %v4100 = vunpack.c.h.b16 %v1274
        %v4101 = vunpack.c.l.b16 %v1275
        %v4102 = vunpack.c.h.b16 %v1275
        %v4103 = vunpack.c.l.b16 %v1276
        %v4104 = vunpack.c.h.b16 %v1276
        %v4105 = vunpack.c.l.b16 %v1277
        %v4106 = vunpack.c.h.b16 %v1277
        %v4107 = vunpack.c.l.b16 %v1278
        %v4108 = vunpack.c.h.b16 %v1278
        %v4109 = vunpack.c.l.b16 %v1279
        %v4110 = vunpack.c.h.b16 %v1279
        %v4111 = vunpack.c.l.b16 %v1280
        %v4112 = vunpack.c.h.b16 %v1280
        %v4113 = vunpack.c.l.b16 %v1281
        %v4114 = vunpack.c.h.b16 %v1281
        %v4115 = vunpack.c.l.b16 %v1282
        %v4116 = vunpack.c.h.b16 %v1282
        %v4117 = vunpack.c.l.b16 %v1283
        %v4118 = vunpack.c.h.b16 %v1283
        %v4119 = vunpack.c.l.b16 %v1284
        %v4120 = vunpack.c.h.b16 %v1284
        %v4121 = vunpack.c.l.b16 %v1285
        %v4122 = vunpack.c.h.b16 %v1285
        %v4123 = vunpack.c.l.b16 %v1286
        %v4124 = vunpack.c.h.b16 %v1286
        %v4125 = vunpack.c.l.b16 %v1287
        %v4126 = vunpack.c.h.b16 %v1287
        %v4127 = vunpack.c.l.b16 %v1288
        %v4128 = vunpack.c.h.b16 %v1288
        %v4129 = vunpack.c.l.b16 %v1289
        %v4130 = vunpack.c.h.b16 %v1289
        %v4131 = vunpack.c.l.b16 %v1290
        %v4132 = vunpack.c.h.b16 %v1290
        %v4133 = vunpack.c.l.b16 %v1291
        %v4134 = vunpack.c.h.b16 %v1291
        %v4135 = vunpack.c.l.b16 %v1292
        %v4136 = vunpack.c.h.b16 %v1292
        %v4137 = vunpack.c.l.b16 %v1293
        %v4138 = vunpack.c.h.b16 %v1293
        %v4139 = vunpack.c.l.b16 %v1294
        %v4140 = vunpack.c.h.b16 %v1294
        %v4141 = vunpack.c.l.b16 %v1295
        %v4142 = vunpack.c.h.b16 %v1295
        %v4143 = vunpack.c.l.b16 %v1296
        %v4144 = vunpack.c.h.b16 %v1296
        %v4145 = vunpack.c.l.b16 %v1297
        %v4146 = vunpack.c.h.b16 %v1297
        %v4147 = vunpack.c.l.b16 %v1298
        %v4148 = vunpack.c.h.b16 %v1298
        %v4149 = vunpack.c.l.b16 %v1299
        %v4150 = vunpack.c.h.b16 %v1299
        %v4151 = vunpack.c.l.b16 %v1300
        %v4152 = vunpack.c.h.b16 %v1300
        %v4153 = vunpack.c.l.b16 %v1301
        %v4154 = vunpack.c.h.b16 %v1301
        %v4155 = vunpack.c.l.b16 %v1302
        %v4156 = vunpack.c.h.b16 %v1302
        %v4157 = vunpack.c.l.b16 %v1303
        %v4158 = vunpack.c.h.b16 %v1303
        %v4159 = vunpack.c.l.b16 %v1304
        %v4160 = vunpack.c.h.b16 %v1304
        %v4161 = vunpack.c.l.b16 %v1305
        %v4162 = vunpack.c.h.b16 %v1305
        %v4163 = vunpack.c.l.b16 %v1306
        %v4164 = vunpack.c.h.b16 %v1306
        %v4165 = vunpack.c.l.b16 %v1307
        %v4166 = vunpack.c.h.b16 %v1307
        %v4167 = vunpack.c.l.b16 %v1308
        %v4168 = vunpack.c.h.b16 %v1308
        %v4169 = vunpack.c.l.b16 %v1309
        %v4170 = vunpack.c.h.b16 %v1309
        %v4171 = vunpack.c.l.b16 %v1310
        %v4172 = vunpack.c.h.b16 %v1310
        %v4173 = vunpack.c.l.b16 %v1311
        %v4174 = vunpack.c.h.b16 %v1311
        %v4175 = vunpack.c.l.b16 %v1312
        %v4176 = vunpack.c.h.b16 %v1312
        %v4177 = vunpack.c.l.b16 %v1313
        %v4178 = vunpack.c.h.b16 %v1313
        %v4179 = vunpack.c.l.b16 %v1314
        %v4180 = vunpack.c.h.b16 %v1314
        %v4181 = vunpack.c.l.b16 %v1315
        %v4182 = vunpack.c.h.b16 %v1315
        %v4183 = vunpack.c.l.b16 %v1316
        %v4184 = vunpack.c.h.b16 %v1316
        %v4185 = vunpack.c.l.b16 %v1317
        %v4186 = vunpack.c.h.b16 %v1317
        %v4187 = vunpack.c.l.b16 %v1318
        %v4188 = vunpack.c.h.b16 %v1318
        %v4189 = vunpack.c.l.b16 %v1319
        %v4190 = vunpack.c.h.b16 %v1319
        %v4191 = vunpack.c.l.b16 %v1320
        %v4192 = vunpack.c.h.b16 %v1320
        %v4193 = vunpack.c.l.b16 %v1321
        %v4194 = vunpack.c.h.b16 %v1321
        %v4195 = vunpack.c.l.b16 %v1322
        %v4196 = vunpack.c.h.b16 %v1322
        %v4197 = vunpack.c.l.b16 %v1323
        %v4198 = vunpack.c.h.b16 %v1323
        %v4199 = vunpack.c.l.b16 %v1324
        %v4200 = vunpack.c.h.b16 %v1324
        %v4201 = vunpack.c.l.b16 %v1325
        %v4202 = vunpack.c.h.b16 %v1325
        %v4203 = vunpack.c.l.b16 %v1326
        %v4204 = vunpack.c.h.b16 %v1326
        %v4205 = vunpack.c.l.b16 %v1327
        %v4206 = vunpack.c.h.b16 %v1327
        %v4207 = vunpack.c.l.b16 %v1328
        %v4208 = vunpack.c.h.b16 %v1328
        %v4209 = vunpack.c.l.b16 %v1329
        %v4210 = vunpack.c.h.b16 %v1329
        %v4211 = vunpack.c.l.b16 %v1330
        %v4212 = vunpack.c.h.b16 %v1330
        %v4213 = vunpack.c.l.b16 %v1331
        %v4214 = vunpack.c.h.b16 %v1331
        %v4215 = vunpack.c.l.b16 %v1332
        %v4216 = vunpack.c.h.b16 %v1332
        %v4217 = vunpack.c.l.b16 %v1333
        %v4218 = vunpack.c.h.b16 %v1333
        %v4219 = vunpack.c.l.b16 %v1334
        %v4220 = vunpack.c.h.b16 %v1334
        %v4221 = vunpack.c.l.b16 %v1335
        %v4222 = vunpack.c.h.b16 %v1335
        %v4223 = vunpack.c.l.b16 %v1336
        %v4224 = vunpack.c.h.b16 %v1336
        %v4225 = vunpack.c.l.b16 %v1337
        %v4226 = vunpack.c.h.b16 %v1337
        %v4227 = vunpack.c.l.b16 %v1338
        %v4228 = vunpack.c.h.b16 %v1338
        %v4229 = vunpack.c.l.b16 %v1339
        %v4230 = vunpack.c.h.b16 %v1339
        %v4231 = vunpack.c.l.b16 %v1340
        %v4232 = vunpack.c.h.b16 %v1340
        %v4233 = vunpack.c.l.b16 %v1341
        %v4234 = vunpack.c.h.b16 %v1341
        %v4235 = vunpack.c.l.b16 %v1342
        %v4236 = vunpack.c.h.b16 %v1342
        %v4237 = vunpack.c.l.b16 %v1343
        %v4238 = vunpack.c.h.b16 %v1343
        %v4239 = vunpack.c.l.b16 %v1344
        %v4240 = vunpack.c.h.b16 %v1344
        %v4241 = vunpack.c.l.b16 %v1345
        %v4242 = vunpack.c.h.b16 %v1345
        %v4243 = vunpack.c.l.b16 %v1346
        %v4244 = vunpack.c.h.b16 %v1346
        %v4245 = vunpack.c.l.b16 %v1347
        %v4246 = vunpack.c.h.b16 %v1347
        %v4247 = vunpack.c.l.b16 %v1348
        %v4248 = vunpack.c.h.b16 %v1348
        %v4249 = vunpack.c.l.b16 %v1349
        %v4250 = vunpack.c.h.b16 %v1349
        %v4251 = vunpack.c.l.b16 %v1350
        %v4252 = vunpack.c.h.b16 %v1350
        %v4253 = vunpack.c.l.b16 %v1351
        %v4254 = vunpack.c.h.b16 %v1351
        %v4255 = vunpack.c.l.b16 %v1352
        %v4256 = vunpack.c.h.b16 %v1352
        %v4257 = vunpack.c.l.b16 %v1353
        %v4258 = vunpack.c.h.b16 %v1353
        %v4259 = vunpack.c.l.b16 %v1354
        %v4260 = vunpack.c.h.b16 %v1354
        %v4261 = vunpack.c.l.b16 %v1355
        %v4262 = vunpack.c.h.b16 %v1355
        %v4263 = vunpack.c.l.b16 %v1356
        %v4264 = vunpack.c.h.b16 %v1356
        %v4265 = vunpack.c.l.b16 %v1357
        %v4266 = vunpack.c.h.b16 %v1357
        %v4267 = vunpack.c.l.b16 %v1358
        %v4268 = vunpack.c.h.b16 %v1358
        %v4269 = vunpack.c.l.b16 %v1359
        %v4270 = vunpack.c.h.b16 %v1359
        %v4271 = vunpack.c.l.b16 %v1360
        %v4272 = vunpack.c.h.b16 %v1360
        %v4273 = vunpack.c.l.b16 %v1361
        %v4274 = vunpack.c.h.b16 %v1361
        %v4275 = vunpack.c.l.b16 %v1362
        %v4276 = vunpack.c.h.b16 %v1362
        %v4277 = vunpack.c.l.b16 %v1363
        %v4278 = vunpack.c.h.b16 %v1363
        %v4279 = vunpack.c.l.b16 %v1364
        %v4280 = vunpack.c.h.b16 %v1364
        %v4281 = vunpack.c.l.b16 %v1365
        %v4282 = vunpack.c.h.b16 %v1365
        %v4283 = vunpack.c.l.b16 %v1366
        %v4284 = vunpack.c.h.b16 %v1366
        %v4285 = vunpack.c.l.b16 %v1367
        %v4286 = vunpack.c.h.b16 %v1367
        %v4287 = vunpack.c.l.b16 %v1368
        %v4288 = vunpack.c.h.b16 %v1368
        %v4289 = vunpack.c.l.b16 %v1369
        %v4290 = vunpack.c.h.b16 %v1369
        %v4291 = vunpack.c.l.b16 %v1370
        %v4292 = vunpack.c.h.b16 %v1370
        %v4293 = vunpack.c.l.b16 %v1371
        %v4294 = vunpack.c.h.b16 %v1371
        %v4295 = vunpack.c.l.b16 %v1372
        %v4296 = vunpack.c.h.b16 %v1372
        %v4297 = vunpack.c.l.b16 %v1373
        %v4298 = vunpack.c.h.b16 %v1373
        %v4299 = vunpack.c.l.b16 %v1374
        %v4300 = vunpack.c.h.b16 %v1374
        %v4301 = vunpack.c.l.b16 %v1375
        %v4302 = vunpack.c.h.b16 %v1375
        %v4303 = vunpack.c.l.b16 %v1376
        %v4304 = vunpack.c.h.b16 %v1376
        %v4305 = vunpack.c.l.b16 %v1377
        %v4306 = vunpack.c.h.b16 %v1377
        %v4307 = vunpack.c.l.b16 %v1378
        %v4308 = vunpack.c.h.b16 %v1378
        %v4309 = vunpack.c.l.b16 %v1379
        %v4310 = vunpack.c.h.b16 %v1379
        %v4311 = vunpack.c.l.b16 %v1380
        %v4312 = vunpack.c.h.b16 %v1380
        %v4313 = vunpack.c.l.b16 %v1381
        %v4314 = vunpack.c.h.b16 %v1381
        %v4315 = vunpack.c.l.b16 %v1382
        %v4316 = vunpack.c.h.b16 %v1382
        %v4317 = vunpack.c.l.b16 %v1383
        %v4318 = vunpack.c.h.b16 %v1383
        %v4319 = vunpack.c.l.b16 %v1384
        %v4320 = vunpack.c.h.b16 %v1384
        %v4321 = vunpack.c.l.b16 %v1385
        %v4322 = vunpack.c.h.b16 %v1385
        %v4323 = vunpack.c.l.b16 %v1386
        %v4324 = vunpack.c.h.b16 %v1386
        %v4325 = vunpack.c.l.b16 %v1387
        %v4326 = vunpack.c.h.b16 %v1387
        %v4327 = vunpack.c.l.b16 %v1388
        %v4328 = vunpack.c.h.b16 %v1388
        %v4329 = vunpack.c.l.b16 %v1389
        %v4330 = vunpack.c.h.b16 %v1389
        %v4331 = vunpack.c.l.b16 %v1390
        %v4332 = vunpack.c.h.b16 %v1390
        %v4333 = vunpack.c.l.b16 %v1391
        %v4334 = vunpack.c.h.b16 %v1391
        %v4335 = vunpack.c.l.b16 %v1392
        %v4336 = vunpack.c.h.b16 %v1392
        %v4337 = vunpack.c.l.b16 %v1393
        %v4338 = vunpack.c.h.b16 %v1393
        %v4339 = vunpack.c.l.b16 %v1394
        %v4340 = vunpack.c.h.b16 %v1394
        %v4341 = vunpack.c.l.b16 %v1395
        %v4342 = vunpack.c.h.b16 %v1395
        %v4343 = vunpack.c.l.b16 %v1396
        %v4344 = vunpack.c.h.b16 %v1396
        %v4345 = vunpack.c.l.b16 %v1397
        %v4346 = vunpack.c.h.b16 %v1397
        %v4347 = vunpack.c.l.b16 %v1398
        %v4348 = vunpack.c.h.b16 %v1398
        %v4349 = vunpack.c.l.b16 %v1399
        %v4350 = vunpack.c.h.b16 %v1399
        %v4351 = vunpack.c.l.b16 %v1400
        %v4352 = vunpack.c.h.b16 %v1400
        %v4353 = vunpack.c.l.b16 %v1401
        %v4354 = vunpack.c.h.b16 %v1401
        %v4355 = vunpack.c.l.b16 %v1402
        %v4356 = vunpack.c.h.b16 %v1402
        %v4357 = vunpack.c.l.b16 %v1403
        %v4358 = vunpack.c.h.b16 %v1403
        %v4359 = vunpack.c.l.b16 %v1404
        %v4360 = vunpack.c.h.b16 %v1404
        %v4361 = vunpack.c.l.b16 %v1405
        %v4362 = vunpack.c.h.b16 %v1405
        %v4363 = vunpack.c.l.b16 %v1406
        %v4364 = vunpack.c.h.b16 %v1406
        %v4365 = vunpack.c.l.b16 %v1407
        %v4366 = vunpack.c.h.b16 %v1407
        %v4367 = vunpack.c.l.b16 %v1408
        %v4368 = vunpack.c.h.b16 %v1408
        %v4369 = vunpack.c.l.b16 %v1409
        %v4370 = vunpack.c.h.b16 %v1409
        %v4371 = vunpack.c.l.b16 %v1410
        %v4372 = vunpack.c.h.b16 %v1410
        %v4373 = vunpack.c.l.b16 %v1411
        %v4374 = vunpack.c.h.b16 %v1411
        %v4375 = vunpack.c.l.b16 %v1412
        %v4376 = vunpack.c.h.b16 %v1412
        %v4377 = vunpack.c.l.b16 %v1413
        %v4378 = vunpack.c.h.b16 %v1413
        %v4379 = vunpack.c.l.b16 %v1414
        %v4380 = vunpack.c.h.b16 %v1414
        %v4381 = vunpack.c.l.b16 %v1415
        %v4382 = vunpack.c.h.b16 %v1415
        %v4383 = vunpack.c.l.b16 %v1416
        %v4384 = vunpack.c.h.b16 %v1416
        %v4385 = vunpack.c.l.b16 %v1417
        %v4386 = vunpack.c.h.b16 %v1417
        %v4387 = vunpack.c.l.b16 %v1418
        %v4388 = vunpack.c.h.b16 %v1418
        %v4389 = vunpack.c.l.b16 %v1419
        %v4390 = vunpack.c.h.b16 %v1419
        %v4391 = vunpack.c.l.b16 %v1420
        %v4392 = vunpack.c.h.b16 %v1420
        %v4393 = vunpack.c.l.b16 %v1421
        %v4394 = vunpack.c.h.b16 %v1421
        %v4395 = vunpack.c.l.b16 %v1422
        %v4396 = vunpack.c.h.b16 %v1422
        %v4397 = vunpack.c.l.b16 %v1423
        %v4398 = vunpack.c.h.b16 %v1423
        %v4399 = vunpack.c.l.b16 %v1424
        %v4400 = vunpack.c.h.b16 %v1424
        %v4401 = vunpack.c.l.b16 %v1425
        %v4402 = vunpack.c.h.b16 %v1425
        %v4403 = vunpack.c.l.b16 %v1426
        %v4404 = vunpack.c.h.b16 %v1426
        %v4405 = vunpack.c.l.b16 %v1427
        %v4406 = vunpack.c.h.b16 %v1427
        %v4407 = vunpack.c.l.b16 %v1428
        %v4408 = vunpack.c.h.b16 %v1428
        %v4409 = vunpack.c.l.b16 %v1429
        %v4410 = vunpack.c.h.b16 %v1429
        %v4411 = vunpack.c.l.b16 %v1430
        %v4412 = vunpack.c.h.b16 %v1430
        %v4413 = vunpack.c.l.b16 %v1431
        %v4414 = vunpack.c.h.b16 %v1431
        %v4415 = vunpack.c.l.b16 %v1432
        %v4416 = vunpack.c.h.b16 %v1432
        %v4417 = vunpack.c.l.b16 %v1433
        %v4418 = vunpack.c.h.b16 %v1433
        %v4419 = vunpack.c.l.b16 %v1434
        %v4420 = vunpack.c.h.b16 %v1434
        %v4421 = vunpack.c.l.b16 %v1435
        %v4422 = vunpack.c.h.b16 %v1435
        %v4423 = vunpack.c.l.b16 %v1436
        %v4424 = vunpack.c.h.b16 %v1436
        %v4425 = vunpack.c.l.b16 %v1437
        %v4426 = vunpack.c.h.b16 %v1437
        %v4427 = vunpack.c.l.b16 %v1438
        %v4428 = vunpack.c.h.b16 %v1438
        %v4429 = vunpack.c.l.b16 %v1439
        %v4430 = vunpack.c.h.b16 %v1439
        %v4431 = vunpack.c.l.b16 %v1440
        %v4432 = vunpack.c.h.b16 %v1440
        %v4433 = vunpack.c.l.b16 %v1441
        %v4434 = vunpack.c.h.b16 %v1441
        %v4435 = vunpack.c.l.b16 %v1442
        %v4436 = vunpack.c.h.b16 %v1442
        %v4437 = vunpack.c.l.b16 %v1443
        %v4438 = vunpack.c.h.b16 %v1443
        %v4439 = vunpack.c.l.b16 %v1444
        %v4440 = vunpack.c.h.b16 %v1444
        %v4441 = vunpack.c.l.b16 %v1445
        %v4442 = vunpack.c.h.b16 %v1445
        %v4443 = vunpack.c.l.b16 %v1446
        %v4444 = vunpack.c.h.b16 %v1446
        %v4445 = vunpack.c.l.b16 %v1447
        %v4446 = vunpack.c.h.b16 %v1447
        %v4447 = vunpack.c.l.b16 %v1448
        %v4448 = vunpack.c.h.b16 %v1448
        %v4449 = vunpack.c.l.b16 %v1449
        %v4450 = vunpack.c.h.b16 %v1449
        %v4451 = vunpack.c.l.b16 %v1450
        %v4452 = vunpack.c.h.b16 %v1450
        %v4453 = vunpack.c.l.b16 %v1451
        %v4454 = vunpack.c.h.b16 %v1451
        %v4455 = vunpack.c.l.b16 %v1452
        %v4456 = vunpack.c.h.b16 %v1452
        %v4457 = vunpack.c.l.b16 %v1453
        %v4458 = vunpack.c.h.b16 %v1453
        %v4459 = vunpack.c.l.b16 %v1454
        %v4460 = vunpack.c.h.b16 %v1454
        %v4461 = vunpack.c.l.b16 %v1455
        %v4462 = vunpack.c.h.b16 %v1455
        %v4463 = vunpack.c.l.b16 %v1456
        %v4464 = vunpack.c.h.b16 %v1456
        %v4465 = vunpack.c.l.b16 %v1457
        %v4466 = vunpack.c.h.b16 %v1457
        %v4467 = vunpack.c.l.b16 %v1458
        %v4468 = vunpack.c.h.b16 %v1458
        %v4469 = vunpack.c.l.b16 %v1459
        %v4470 = vunpack.c.h.b16 %v1459
        %v4471 = vunpack.c.l.b16 %v1460
        %v4472 = vunpack.c.h.b16 %v1460
        %v4473 = vunpack.c.l.b16 %v1461
        %v4474 = vunpack.c.h.b16 %v1461
        %v4475 = vunpack.c.l.b16 %v1462
        %v4476 = vunpack.c.h.b16 %v1462
        %v4477 = vunpack.c.l.b16 %v1463
        %v4478 = vunpack.c.h.b16 %v1463
        %v4479 = vunpack.c.l.b16 %v1464
        %v4480 = vunpack.c.h.b16 %v1464
        %v4481 = vunpack.c.l.b16 %v1465
        %v4482 = vunpack.c.h.b16 %v1465
        %v4483 = vunpack.c.l.b16 %v1466
        %v4484 = vunpack.c.h.b16 %v1466
        %v4485 = vunpack.c.l.b16 %v1467
        %v4486 = vunpack.c.h.b16 %v1467
        %v4487 = vunpack.c.l.b16 %v1468
        %v4488 = vunpack.c.h.b16 %v1468
        %v4489 = vunpack.c.l.b16 %v1469
        %v4490 = vunpack.c.h.b16 %v1469
        %v4491 = vunpack.c.l.b16 %v1470
        %v4492 = vunpack.c.h.b16 %v1470
        %v4493 = vunpack.c.l.b16 %v1471
        %v4494 = vunpack.c.h.b16 %v1471
        %v4495 = vunpack.c.l.b16 %v1472
        %v4496 = vunpack.c.h.b16 %v1472
        %v4497 = vunpack.c.l.b16 %v1473
        %v4498 = vunpack.c.h.b16 %v1473
        %v4499 = vunpack.c.l.b16 %v1474
        %v4500 = vunpack.c.h.b16 %v1474
        %v4501 = vunpack.c.l.b16 %v1475
        %v4502 = vunpack.c.h.b16 %v1475
        %v4503 = vunpack.c.l.b16 %v1476
        %v4504 = vunpack.c.h.b16 %v1476
        %v4505 = vunpack.c.l.b16 %v1477
        %v4506 = vunpack.c.h.b16 %v1477
        %v4507 = vunpack.c.l.b16 %v1478
        %v4508 = vunpack.c.h.b16 %v1478
        %v4509 = vunpack.c.l.b16 %v1479
        %v4510 = vunpack.c.h.b16 %v1479
        %v4511 = vunpack.c.l.b16 %v1480
        %v4512 = vunpack.c.h.b16 %v1480
        %v4513 = vunpack.c.l.b16 %v1481
        %v4514 = vunpack.c.h.b16 %v1481
        %v4515 = vunpack.c.l.b16 %v1482
        %v4516 = vunpack.c.h.b16 %v1482
        %v4517 = vunpack.c.l.b16 %v1483
        %v4518 = vunpack.c.h.b16 %v1483
        %v4519 = vunpack.c.l.b16 %v1484
        %v4520 = vunpack.c.h.b16 %v1484
        %v4521 = vunpack.c.l.b16 %v1485
        %v4522 = vunpack.c.h.b16 %v1485
        %v4523 = vunpack.c.l.b16 %v1486
        %v4524 = vunpack.c.h.b16 %v1486
        %v4525 = vunpack.c.l.b16 %v1487
        %v4526 = vunpack.c.h.b16 %v1487
        %v4527 = vunpack.c.l.b16 %v1488
        %v4528 = vunpack.c.h.b16 %v1488
        %v4529 = vunpack.c.l.b16 %v1489
        %v4530 = vunpack.c.h.b16 %v1489
        %v4531 = vunpack.c.l.b16 %v1490
        %v4532 = vunpack.c.h.b16 %v1490
        %v4533 = vunpack.c.l.b16 %v1491
        %v4534 = vunpack.c.h.b16 %v1491
        %v4535 = vunpack.c.l.b16 %v1492
        %v4536 = vunpack.c.h.b16 %v1492
        %v4537 = vunpack.c.l.b16 %v1493
        %v4538 = vunpack.c.h.b16 %v1493
        %v4539 = vunpack.c.l.b16 %v1494
        %v4540 = vunpack.c.h.b16 %v1494
        %v4541 = vunpack.c.l.b16 %v1495
        %v4542 = vunpack.c.h.b16 %v1495
        %v4543 = vunpack.c.l.b16 %v1496
        %v4544 = vunpack.c.h.b16 %v1496
        %v4545 = vunpack.c.l.b16 %v1497
        %v4546 = vunpack.c.h.b16 %v1497
        %v4547 = vunpack.c.l.b16 %v1498
        %v4548 = vunpack.c.h.b16 %v1498
        %v4549 = vunpack.c.l.b16 %v1499
        %v4550 = vunpack.c.h.b16 %v1499
        %v4551 = vunpack.c.l.b16 %v1500
        %v4552 = vunpack.c.h.b16 %v1500
        %v4553 = vunpack.c.l.b16 %v1501
        %v4554 = vunpack.c.h.b16 %v1501
        %v4555 = vunpack.c.l.b16 %v1502
        %v4556 = vunpack.c.h.b16 %v1502
        %v4557 = vunpack.c.l.b16 %v1503
        %v4558 = vunpack.c.h.b16 %v1503
        %v4559 = vunpack.c.l.b16 %v1504
        %v4560 = vunpack.c.h.b16 %v1504
        %v4561 = vunpack.c.l.b16 %v1505
        %v4562 = vunpack.c.h.b16 %v1505
        %v4563 = vunpack.c.l.b16 %v1506
        %v4564 = vunpack.c.h.b16 %v1506
        %v4565 = vunpack.c.l.b16 %v1507
        %v4566 = vunpack.c.h.b16 %v1507
        %v4567 = vunpack.c.l.b16 %v1508
        %v4568 = vunpack.c.h.b16 %v1508
        %v4569 = vunpack.c.l.b16 %v1509
        %v4570 = vunpack.c.h.b16 %v1509
        %v4571 = vunpack.c.l.b16 %v1510
        %v4572 = vunpack.c.h.b16 %v1510
        %v4573 = vunpack.c.l.b16 %v1511
        %v4574 = vunpack.c.h.b16 %v1511
        %v4575 = vunpack.c.l.b16 %v1512
        %v4576 = vunpack.c.h.b16 %v1512
        %v4577 = vunpack.c.l.b16 %v1513
        %v4578 = vunpack.c.h.b16 %v1513
        %v4579 = vunpack.c.l.b16 %v1514
        %v4580 = vunpack.c.h.b16 %v1514
        %v4581 = vunpack.c.l.b16 %v1515
        %v4582 = vunpack.c.h.b16 %v1515
        %v4583 = vunpack.c.l.b16 %v1516
        %v4584 = vunpack.c.h.b16 %v1516
        %v4585 = vunpack.c.l.b16 %v1517
        %v4586 = vunpack.c.h.b16 %v1517
        %v4587 = vunpack.c.l.b16 %v1518
        %v4588 = vunpack.c.h.b16 %v1518
        %v4589 = vunpack.c.l.b16 %v1519
        %v4590 = vunpack.c.h.b16 %v1519
        %v4591 = vunpack.c.l.b16 %v1520
        %v4592 = vunpack.c.h.b16 %v1520
        %v4593 = vunpack.c.l.b16 %v1521
        %v4594 = vunpack.c.h.b16 %v1521
        %v4595 = vunpack.c.l.b16 %v1522
        %v4596 = vunpack.c.h.b16 %v1522
        %v4597 = vunpack.c.l.b16 %v1523
        %v4598 = vunpack.c.h.b16 %v1523
        %v4599 = vunpack.c.l.b16 %v1524
        %v4600 = vunpack.c.h.b16 %v1524
        %v4601 = vunpack.c.l.b16 %v1525
        %v4602 = vunpack.c.h.b16 %v1525
        %v4603 = vunpack.c.l.b16 %v1526
        %v4604 = vunpack.c.h.b16 %v1526
        %v4605 = vunpack.c.l.b16 %v1527
        %v4606 = vunpack.c.h.b16 %v1527
        %v4607 = vunpack.c.l.b16 %v1528
        %v4608 = vunpack.c.h.b16 %v1528
        %v4609 = vunpack.c.l.b16 %v1529
        %v4610 = vunpack.c.h.b16 %v1529
        %v4611 = vunpack.c.l.b16 %v1530
        %v4612 = vunpack.c.h.b16 %v1530
        %v4613 = vunpack.c.l.b16 %v1531
        %v4614 = vunpack.c.h.b16 %v1531
        %v4615 = vunpack.c.l.b16 %v1532
        %v4616 = vunpack.c.h.b16 %v1532
        %v4617 = vunpack.c.l.b16 %v1533
        %v4618 = vunpack.c.h.b16 %v1533
        %v4619 = vunpack.c.l.b16 %v1534
        %v4620 = vunpack.c.h.b16 %v1534
        %v4621 = vunpack.c.l.b16 %v1535
        %v4622 = vunpack.c.h.b16 %v1535
        %v4623 = vunpack.c.l.b16 %v1536
        %v4624 = vunpack.c.h.b16 %v1536
        %v4625 = vunpack.c.l.b16 %v1537
        %v4626 = vunpack.c.h.b16 %v1537
        %v4627 = vunpack.c.l.b16 %v1538
        %v4628 = vunpack.c.h.b16 %v1538
        %v4629 = vunpack.c.l.b16 %v1539
        %v4630 = vunpack.c.h.b16 %v1539
        %v4631 = vunpack.c.l.b16 %v1540
        %v4632 = vunpack.c.h.b16 %v1540
        %v4633 = vunpack.c.l.b16 %v1541
        %v4634 = vunpack.c.h.b16 %v1541
        %v4635 = vunpack.c.l.b16 %v1542
        %v4636 = vunpack.c.h.b16 %v1542
        %v4637 = vunpack.c.l.b16 %v1543
        %v4638 = vunpack.c.h.b16 %v1543
        %v4639 = vunpack.c.l.b16 %v1544
        %v4640 = vunpack.c.h.b16 %v1544
        %v4641 = vunpack.c.l.b16 %v1545
        %v4642 = vunpack.c.h.b16 %v1545
        %v4643 = vunpack.c.l.b16 %v1546
        %v4644 = vunpack.c.h.b16 %v1546
        %v4645 = vunpack.c.l.b16 %v1547
        %v4646 = vunpack.c.h.b16 %v1547
        %v4647 = vunpack.c.l.b16 %v1548
        %v4648 = vunpack.c.h.b16 %v1548
        %v4649 = vunpack.c.l.b16 %v1549
        %v4650 = vunpack.c.h.b16 %v1549
        %v4651 = vunpack.c.l.b16 %v1550
        %v4652 = vunpack.c.h.b16 %v1550
        %v4653 = vunpack.c.l.b16 %v1551
        %v4654 = vunpack.c.h.b16 %v1551
        %v4655 = vunpack.c.l.b16 %v1552
        %v4656 = vunpack.c.h.b16 %v1552
        %v4657 = vunpack.c.l.b16 %v1553
        %v4658 = vunpack.c.h.b16 %v1553
        %v4659 = vunpack.c.l.b16 %v1554
        %v4660 = vunpack.c.h.b16 %v1554
        %v4661 = vunpack.c.l.b16 %v1555
        %v4662 = vunpack.c.h.b16 %v1555
        %v4663 = vunpack.c.l.b16 %v1556
        %v4664 = vunpack.c.h.b16 %v1556
        %v4665 = vunpack.c.l.b16 %v1557
        %v4666 = vunpack.c.h.b16 %v1557
        %v4667 = vunpack.c.l.b16 %v1558
        %v4668 = vunpack.c.h.b16 %v1558
        %v4669 = vunpack.c.l.b16 %v1559
        %v4670 = vunpack.c.h.b16 %v1559
        %v4671 = vunpack.c.l.b16 %v1560
        %v4672 = vunpack.c.h.b16 %v1560
        %v4673 = vunpack.c.l.b16 %v1561
        %v4674 = vunpack.c.h.b16 %v1561
        %v4675 = vunpack.c.l.b16 %v1562
        %v4676 = vunpack.c.h.b16 %v1562
        %v4677 = vunpack.c.l.b16 %v1563
        %v4678 = vunpack.c.h.b16 %v1563
        %v4679 = vunpack.c.l.b16 %v1564
        %v4680 = vunpack.c.h.b16 %v1564
        %v4681 = vunpack.c.l.b16 %v1565
        %v4682 = vunpack.c.h.b16 %v1565
        %v4683 = vunpack.c.l.b16 %v1566
        %v4684 = vunpack.c.h.b16 %v1566
        %v4685 = vunpack.c.l.b16 %v1567
        %v4686 = vunpack.c.h.b16 %v1567
        %v4687 = vunpack.c.l.b16 %v1568
        %v4688 = vunpack.c.h.b16 %v1568
        %v4689 = vunpack.c.l.b16 %v1569
        %v4690 = vunpack.c.h.b16 %v1569
        %v4691 = vunpack.c.l.b16 %v1570
        %v4692 = vunpack.c.h.b16 %v1570
        %v4693 = vunpack.c.l.b16 %v1571
        %v4694 = vunpack.c.h.b16 %v1571
        %v4695 = vunpack.c.l.b16 %v1572
        %v4696 = vunpack.c.h.b16 %v1572
        %v4697 = vunpack.c.l.b16 %v1573
        %v4698 = vunpack.c.h.b16 %v1573
        %v4699 = vunpack.c.l.b16 %v1574
        %v4700 = vunpack.c.h.b16 %v1574
        %v4701 = vunpack.c.l.b16 %v1575
        %v4702 = vunpack.c.h.b16 %v1575
        %v4703 = vunpack.c.l.b16 %v1576
        %v4704 = vunpack.c.h.b16 %v1576
        %v4705 = vunpack.c.l.b16 %v1577
        %v4706 = vunpack.c.h.b16 %v1577
        %v4707 = vunpack.c.l.b16 %v1578
        %v4708 = vunpack.c.h.b16 %v1578
        %v4709 = vunpack.c.l.b16 %v1579
        %v4710 = vunpack.c.h.b16 %v1579
        %v4711 = vunpack.c.l.b16 %v1580
        %v4712 = vunpack.c.h.b16 %v1580
        %v4713 = vunpack.c.l.b16 %v1581
        %v4714 = vunpack.c.h.b16 %v1581
        %v4715 = vunpack.c.l.b16 %v1582
        %v4716 = vunpack.c.h.b16 %v1582
        %v4717 = vunpack.c.l.b16 %v1583
        %v4718 = vunpack.c.h.b16 %v1583
        %v4719 = vunpack.c.l.b16 %v1584
        %v4720 = vunpack.c.h.b16 %v1584
        %v4721 = vunpack.c.l.b16 %v1585
        %v4722 = vunpack.c.h.b16 %v1585
        %v4723 = vunpack.c.l.b16 %v1586
        %v4724 = vunpack.c.h.b16 %v1586
        %v4725 = vunpack.c.l.b16 %v1587
        %v4726 = vunpack.c.h.b16 %v1587
        %v4727 = vunpack.c.l.b16 %v1588
        %v4728 = vunpack.c.h.b16 %v1588
        %v4729 = vunpack.c.l.b16 %v1589
        %v4730 = vunpack.c.h.b16 %v1589
        %v4731 = vunpack.c.l.b16 %v1590
        %v4732 = vunpack.c.h.b16 %v1590
        %v4733 = vunpack.c.l.b16 %v1591
        %v4734 = vunpack.c.h.b16 %v1591
        %v4735 = vunpack.c.l.b16 %v1592
        %v4736 = vunpack.c.h.b16 %v1592
        %v4737 = vunpack.c.l.b16 %v1593
        %v4738 = vunpack.c.h.b16 %v1593
        %v4739 = vunpack.c.l.b16 %v1594
        %v4740 = vunpack.c.h.b16 %v1594
        %v4741 = vunpack.c.l.b16 %v1595
        %v4742 = vunpack.c.h.b16 %v1595
        %v4743 = vunpack.c.l.b16 %v1596
        %v4744 = vunpack.c.h.b16 %v1596
        %v4745 = vunpack.c.l.b16 %v1597
        %v4746 = vunpack.c.h.b16 %v1597
        %v4747 = vunpack.c.l.b16 %v1598
        %v4748 = vunpack.c.h.b16 %v1598
        %v4749 = vunpack.c.l.b16 %v1599
        %v4750 = vunpack.c.h.b16 %v1599
        %v4751 = vunpack.c.l.b16 %v1600
        %v4752 = vunpack.c.h.b16 %v1600
        %v4753 = vunpack.c.l.b16 %v1601
        %v4754 = vunpack.c.h.b16 %v1601
        %v4755 = vunpack.c.l.b16 %v1602
        %v4756 = vunpack.c.h.b16 %v1602
        %v4757 = vunpack.c.l.b16 %v1603
        %v4758 = vunpack.c.h.b16 %v1603
        %v4759 = vunpack.c.l.b16 %v1604
        %v4760 = vunpack.c.h.b16 %v1604
        %v4761 = vunpack.c.l.b16 %v1605
        %v4762 = vunpack.c.h.b16 %v1605
        %v4763 = vunpack.c.l.b16 %v1606
        %v4764 = vunpack.c.h.b16 %v1606
        %v4765 = vunpack.c.l.b16 %v1607
        %v4766 = vunpack.c.h.b16 %v1607
        %v4767 = vunpack.c.l.b16 %v1608
        %v4768 = vunpack.c.h.b16 %v1608
        %v4769 = vunpack.c.l.b16 %v1609
        %v4770 = vunpack.c.h.b16 %v1609
        %v4771 = vunpack.c.l.b16 %v1610
        %v4772 = vunpack.c.h.b16 %v1610
        %v4773 = vunpack.c.l.b16 %v1611
        %v4774 = vunpack.c.h.b16 %v1611
        %v4775 = vunpack.c.l.b16 %v1612
        %v4776 = vunpack.c.h.b16 %v1612
        %v4777 = vunpack.c.l.b16 %v1613
        %v4778 = vunpack.c.h.b16 %v1613
        %v4779 = vunpack.c.l.b16 %v1614
        %v4780 = vunpack.c.h.b16 %v1614
        %v4781 = vunpack.c.l.b16 %v1615
        %v4782 = vunpack.c.h.b16 %v1615
        %v4783 = vunpack.c.l.b16 %v1616
        %v4784 = vunpack.c.h.b16 %v1616
        %v4785 = vunpack.c.l.b16 %v1617
        %v4786 = vunpack.c.h.b16 %v1617
        %v4787 = vunpack.c.l.b16 %v1618
        %v4788 = vunpack.c.h.b16 %v1618
        %v4789 = vunpack.c.l.b16 %v1619
        %v4790 = vunpack.c.h.b16 %v1619
        %v4791 = vunpack.c.l.b16 %v1620
        %v4792 = vunpack.c.h.b16 %v1620
        %v4793 = vunpack.c.l.b16 %v1621
        %v4794 = vunpack.c.h.b16 %v1621
        %v4795 = vunpack.c.l.b16 %v1622
        %v4796 = vunpack.c.h.b16 %v1622
        %v4797 = vunpack.c.l.b16 %v1623
        %v4798 = vunpack.c.h.b16 %v1623
        %v4799 = vunpack.c.l.b16 %v1624
        %v4800 = vunpack.c.h.b16 %v1624
        %v4801 = vunpack.c.l.b16 %v1625
        %v4802 = vunpack.c.h.b16 %v1625
        %v4803 = vunpack.c.l.b16 %v1626
        %v4804 = vunpack.c.h.b16 %v1626
        %v4805 = vunpack.c.l.b16 %v1627
        %v4806 = vunpack.c.h.b16 %v1627
        %v4807 = vunpack.c.l.b16 %v1628
        %v4808 = vunpack.c.h.b16 %v1628
        %v4809 = vunpack.c.l.b16 %v1629
        %v4810 = vunpack.c.h.b16 %v1629
        %v4811 = vunpack.c.l.b16 %v1630
        %v4812 = vunpack.c.h.b16 %v1630
        %v4813 = vunpack.c.l.b16 %v1631
        %v4814 = vunpack.c.h.b16 %v1631
        %v4815 = vunpack.c.l.b16 %v1632
        %v4816 = vunpack.c.h.b16 %v1632
        %v4817 = vunpack.c.l.b16 %v1633
        %v4818 = vunpack.c.h.b16 %v1633
        %v4819 = vunpack.c.l.b16 %v1634
        %v4820 = vunpack.c.h.b16 %v1634
        %v4821 = vunpack.c.l.b16 %v1635
        %v4822 = vunpack.c.h.b16 %v1635
        %v4823 = vunpack.c.l.b16 %v1636
        %v4824 = vunpack.c.h.b16 %v1636
        %v4825 = vunpack.c.l.b16 %v1637
        %v4826 = vunpack.c.h.b16 %v1637
        %v4827 = vunpack.c.l.b16 %v1638
        %v4828 = vunpack.c.h.b16 %v1638
        %v4829 = vunpack.c.l.b16 %v1639
        %v4830 = vunpack.c.h.b16 %v1639
        %v4831 = vunpack.c.l.b16 %v1640
        %v4832 = vunpack.c.h.b16 %v1640
        %v4833 = vunpack.c.l.b16 %v1641
        %v4834 = vunpack.c.h.b16 %v1641
        %v4835 = vunpack.c.l.b16 %v1642
        %v4836 = vunpack.c.h.b16 %v1642
        %v4837 = vunpack.c.l.b16 %v1643
        %v4838 = vunpack.c.h.b16 %v1643
        %v4839 = vunpack.c.l.b16 %v1644
        %v4840 = vunpack.c.h.b16 %v1644
        %v4841 = vunpack.c.l.b16 %v1645
        %v4842 = vunpack.c.h.b16 %v1645
        %v4843 = vunpack.c.l.b16 %v1646
        %v4844 = vunpack.c.h.b16 %v1646
        %v4845 = vunpack.c.l.b16 %v1647
        %v4846 = vunpack.c.h.b16 %v1647
        %v4847 = vunpack.c.l.b16 %v1648
        %v4848 = vunpack.c.h.b16 %v1648
        %v4849 = vunpack.c.l.b16 %v1649
        %v4850 = vunpack.c.h.b16 %v1649
        %v4851 = vunpack.c.l.b16 %v1650
        %v4852 = vunpack.c.h.b16 %v1650
        %v4853 = vunpack.c.l.b16 %v1651
        %v4854 = vunpack.c.h.b16 %v1651
        %v4855 = vunpack.c.l.b16 %v1652
        %v4856 = vunpack.c.h.b16 %v1652
        %v4857 = vunpack.c.l.b16 %v1653
        %v4858 = vunpack.c.h.b16 %v1653
        %v4859 = vunpack.c.l.b16 %v1654
        %v4860 = vunpack.c.h.b16 %v1654
        %v4861 = vunpack.c.l.b16 %v1655
        %v4862 = vunpack.c.h.b16 %v1655
        %v4863 = vunpack.c.l.b16 %v1656
        %v4864 = vunpack.c.h.b16 %v1656
        %v4865 = vunpack.c.l.b16 %v1657
        %v4866 = vunpack.c.h.b16 %v1657
        %v4867 = vunpack.c.l.b16 %v1658
        %v4868 = vunpack.c.h.b16 %v1658
        %v4869 = vunpack.c.l.b16 %v1659
        %v4870 = vunpack.c.h.b16 %v1659
        %v4871 = vunpack.c.l.b16 %v1660
        %v4872 = vunpack.c.h.b16 %v1660
        %v4873 = vunpack.c.l.b16 %v1661
        %v4874 = vunpack.c.h.b16 %v1661
        %v4875 = vunpack.c.l.b16 %v1662
        %v4876 = vunpack.c.h.b16 %v1662
        %v4877 = vunpack.c.l.b16 %v1663
        %v4878 = vunpack.c.h.b16 %v1663
        %v4879 = vunpack.c.l.b16 %v1664
        %v4880 = vunpack.c.h.b16 %v1664
        %v4881 = vunpack.c.l.b16 %v1665
        %v4882 = vunpack.c.h.b16 %v1665
        %v4883 = vunpack.c.l.b16 %v1666
        %v4884 = vunpack.c.h.b16 %v1666
        %v4885 = vunpack.c.l.b16 %v1667
        %v4886 = vunpack.c.h.b16 %v1667
        %v4887 = vunpack.c.l.b16 %v1668
        %v4888 = vunpack.c.h.b16 %v1668
        %v4889 = vunpack.c.l.b16 %v1669
        %v4890 = vunpack.c.h.b16 %v1669
        %v4891 = vunpack.c.l.b16 %v1670
        %v4892 = vunpack.c.h.b16 %v1670
        %v4893 = vunpack.c.l.b16 %v1671
        %v4894 = vunpack.c.h.b16 %v1671
        %v4895 = vunpack.c.l.b16 %v1672
        %v4896 = vunpack.c.h.b16 %v1672
        %v4897 = vunpack.c.l.b16 %v1673
        %v4898 = vunpack.c.h.b16 %v1673
        %v4899 = vunpack.c.l.b16 %v1674
        %v4900 = vunpack.c.h.b16 %v1674
        %v4901 = vunpack.c.l.b16 %v1675
        %v4902 = vunpack.c.h.b16 %v1675
        %v4903 = vunpack.c.l.b16 %v1676
        %v4904 = vunpack.c.h.b16 %v1676
        %v4905 = vunpack.c.l.b16 %v1677
        %v4906 = vunpack.c.h.b16 %v1677
        %v4907 = vunpack.c.l.b16 %v1678
        %v4908 = vunpack.c.h.b16 %v1678
        %v4909 = vunpack.c.l.b16 %v1679
        %v4910 = vunpack.c.h.b16 %v1679
        %v4911 = vunpack.c.l.b16 %v1680
        %v4912 = vunpack.c.h.b16 %v1680
        %v4913 = vunpack.c.l.b16 %v1681
        %v4914 = vunpack.c.h.b16 %v1681
        %v4915 = vunpack.c.l.b16 %v1682
        %v4916 = vunpack.c.h.b16 %v1682
        %v4917 = vunpack.c.l.b16 %v1683
        %v4918 = vunpack.c.h.b16 %v1683
        %v4919 = vunpack.c.l.b16 %v1684
        %v4920 = vunpack.c.h.b16 %v1684
        %v4921 = vunpack.c.l.b16 %v1685
        %v4922 = vunpack.c.h.b16 %v1685
        %v4923 = vunpack.c.l.b16 %v1686
        %v4924 = vunpack.c.h.b16 %v1686
        %v4925 = vunpack.c.l.b16 %v1687
        %v4926 = vunpack.c.h.b16 %v1687
        %v4927 = vunpack.c.l.b16 %v1688
        %v4928 = vunpack.c.h.b16 %v1688
        %v4929 = vunpack.c.l.b16 %v1689
        %v4930 = vunpack.c.h.b16 %v1689
        %v4931 = vunpack.c.l.b16 %v1690
        %v4932 = vunpack.c.h.b16 %v1690
        %v4933 = vunpack.c.l.b16 %v1691
        %v4934 = vunpack.c.h.b16 %v1691
        %v4935 = vunpack.c.l.b16 %v1692
        %v4936 = vunpack.c.h.b16 %v1692
        %v4937 = vunpack.c.l.b16 %v1693
        %v4938 = vunpack.c.h.b16 %v1693
        %v4939 = vunpack.c.l.b16 %v1694
        %v4940 = vunpack.c.h.b16 %v1694
        %v4941 = vunpack.c.l.b16 %v1695
        %v4942 = vunpack.c.h.b16 %v1695
        %v4943 = vunpack.c.l.b16 %v1696
        %v4944 = vunpack.c.h.b16 %v1696
        %v4945 = vunpack.c.l.b16 %v1697
        %v4946 = vunpack.c.h.b16 %v1697
        %v4947 = vunpack.c.l.b16 %v1698
        %v4948 = vunpack.c.h.b16 %v1698
        %v4949 = vunpack.c.l.b16 %v1699
        %v4950 = vunpack.c.h.b16 %v1699
        %v4951 = vunpack.c.l.b16 %v1700
        %v4952 = vunpack.c.h.b16 %v1700
        %v4953 = vunpack.c.l.b16 %v1701
        %v4954 = vunpack.c.h.b16 %v1701
        %v4955 = vunpack.c.l.b16 %v1702
        %v4956 = vunpack.c.h.b16 %v1702
        %v4957 = vunpack.c.l.b16 %v1703
        %v4958 = vunpack.c.h.b16 %v1703
        %v4959 = vunpack.c.l.b16 %v1704
        %v4960 = vunpack.c.h.b16 %v1704
        %v4961 = vunpack.c.l.b16 %v1705
        %v4962 = vunpack.c.h.b16 %v1705
        %v4963 = vunpack.c.l.b16 %v1706
        %v4964 = vunpack.c.h.b16 %v1706
        %v4965 = vunpack.c.l.b16 %v1707
        %v4966 = vunpack.c.h.b16 %v1707
        %v4967 = vunpack.c.l.b16 %v1708
        %v4968 = vunpack.c.h.b16 %v1708
        %v4969 = vunpack.c.l.b16 %v1709
        %v4970 = vunpack.c.h.b16 %v1709
        %v4971 = vunpack.c.l.b16 %v1710
        %v4972 = vunpack.c.h.b16 %v1710
        %v4973 = vunpack.c.l.b16 %v1711
        %v4974 = vunpack.c.h.b16 %v1711
        %v4975 = vunpack.c.l.b16 %v1712
        %v4976 = vunpack.c.h.b16 %v1712
        %v4977 = vunpack.c.l.b16 %v1713
        %v4978 = vunpack.c.h.b16 %v1713
        %v4979 = vunpack.c.l.b16 %v1714
        %v4980 = vunpack.c.h.b16 %v1714
        %v4981 = vunpack.c.l.b16 %v1715
        %v4982 = vunpack.c.h.b16 %v1715
        %v4983 = vunpack.c.l.b16 %v1716
        %v4984 = vunpack.c.h.b16 %v1716
        %v4985 = vunpack.c.l.b16 %v1717
        %v4986 = vunpack.c.h.b16 %v1717
        %v4987 = vunpack.c.l.b16 %v1718
        %v4988 = vunpack.c.h.b16 %v1718
        %v4989 = vunpack.c.l.b16 %v1719
        %v4990 = vunpack.c.h.b16 %v1719
        %v4991 = vunpack.c.l.b16 %v1720
        %v4992 = vunpack.c.h.b16 %v1720
        %v4993 = vunpack.c.l.b16 %v1721
        %v4994 = vunpack.c.h.b16 %v1721
        %v4995 = vunpack.c.l.b16 %v1722
        %v4996 = vunpack.c.h.b16 %v1722
        %v4997 = vunpack.c.l.b16 %v1723
        %v4998 = vunpack.c.h.b16 %v1723
        %v4999 = vunpack.c.l.b16 %v1724
        %v5000 = vunpack.c.h.b16 %v1724
        %v5001 = vunpack.c.l.b16 %v1725
        %v5002 = vunpack.c.h.b16 %v1725
        %v5003 = vunpack.c.l.b16 %v1726
        %v5004 = vunpack.c.h.b16 %v1726
        %v5005 = vunpack.c.l.b16 %v1727
        %v5006 = vunpack.c.h.b16 %v1727
        %v5007 = vunpack.c.l.b16 %v1728
        %v5008 = vunpack.c.h.b16 %v1728
        %v5009 = vunpack.c.l.b16 %v1729
        %v5010 = vunpack.c.h.b16 %v1729
        %v5011 = vunpack.c.l.b16 %v1730
        %v5012 = vunpack.c.h.b16 %v1730
        %v5013 = vunpack.c.l.b16 %v1731
        %v5014 = vunpack.c.h.b16 %v1731
        %v5015 = vunpack.c.l.b16 %v1732
        %v5016 = vunpack.c.h.b16 %v1732
        %v5017 = vunpack.c.l.b16 %v1733
        %v5018 = vunpack.c.h.b16 %v1733
        %v5019 = vunpack.c.l.b16 %v1734
        %v5020 = vunpack.c.h.b16 %v1734
        %v5021 = vunpack.c.l.b16 %v1735
        %v5022 = vunpack.c.h.b16 %v1735
        %v5023 = vunpack.c.l.b16 %v1736
        %v5024 = vunpack.c.h.b16 %v1736
        %v5025 = vunpack.c.l.b16 %v1737
        %v5026 = vunpack.c.h.b16 %v1737
        %v5027 = vunpack.c.l.b16 %v1738
        %v5028 = vunpack.c.h.b16 %v1738
        %v5029 = vunpack.c.l.b16 %v1739
        %v5030 = vunpack.c.h.b16 %v1739
        %v5031 = vunpack.c.l.b16 %v1740
        %v5032 = vunpack.c.h.b16 %v1740
        %v5033 = vunpack.c.l.b16 %v1741
        %v5034 = vunpack.c.h.b16 %v1741
        %v5035 = vunpack.c.l.b16 %v1742
        %v5036 = vunpack.c.h.b16 %v1742
        %v5037 = vunpack.c.l.b16 %v1743
        %v5038 = vunpack.c.h.b16 %v1743
        %v5039 = vunpack.c.l.b16 %v1744
        %v5040 = vunpack.c.h.b16 %v1744
        %v5041 = vunpack.c.l.b16 %v1745
        %v5042 = vunpack.c.h.b16 %v1745
        %v5043 = vunpack.c.l.b16 %v1746
        %v5044 = vunpack.c.h.b16 %v1746
        %v5045 = vunpack.c.l.b16 %v1747
        %v5046 = vunpack.c.h.b16 %v1747
        %v5047 = vunpack.c.l.b16 %v1748
        %v5048 = vunpack.c.h.b16 %v1748
        %v5049 = vunpack.c.l.b16 %v1749
        %v5050 = vunpack.c.h.b16 %v1749
        %v5051 = vunpack.c.l.b16 %v1750
        %v5052 = vunpack.c.h.b16 %v1750
        %v5053 = vunpack.c.l.b16 %v1751
        %v5054 = vunpack.c.h.b16 %v1751
        %v5055 = vunpack.c.l.b16 %v1752
        %v5056 = vunpack.c.h.b16 %v1752
        %v5057 = vunpack.c.l.b16 %v1753
        %v5058 = vunpack.c.h.b16 %v1753
        %v5059 = vunpack.c.l.b16 %v1754
        %v5060 = vunpack.c.h.b16 %v1754
        %v5061 = vunpack.c.l.b16 %v1755
        %v5062 = vunpack.c.h.b16 %v1755
        %v5063 = vunpack.c.l.b16 %v1756
        %v5064 = vunpack.c.h.b16 %v1756
        %v5065 = vunpack.c.l.b16 %v1757
        %v5066 = vunpack.c.h.b16 %v1757
        %v5067 = vunpack.c.l.b16 %v1758
        %v5068 = vunpack.c.h.b16 %v1758
        %v5069 = vunpack.c.l.b16 %v1759
        %v5070 = vunpack.c.h.b16 %v1759
        %v5071 = vunpack.c.l.b16 %v1760
        %v5072 = vunpack.c.h.b16 %v1760
        %v5073 = vunpack.c.l.b16 %v1761
        %v5074 = vunpack.c.h.b16 %v1761
        %v5075 = vunpack.c.l.b16 %v1762
        %v5076 = vunpack.c.h.b16 %v1762
        %v5077 = vunpack.c.l.b16 %v1763
        %v5078 = vunpack.c.h.b16 %v1763
        %v5079 = vunpack.c.l.b16 %v1764
        %v5080 = vunpack.c.h.b16 %v1764
        %v5081 = vunpack.c.l.b16 %v1765
        %v5082 = vunpack.c.h.b16 %v1765
        %v5083 = vunpack.c.l.b16 %v1766
        %v5084 = vunpack.c.h.b16 %v1766
        %v5085 = vunpack.c.l.b16 %v1767
        %v5086 = vunpack.c.h.b16 %v1767
        %v5087 = vunpack.c.l.b16 %v1768
        %v5088 = vunpack.c.h.b16 %v1768
        %v5089 = vunpack.c.l.b16 %v1769
        %v5090 = vunpack.c.h.b16 %v1769
        %v5091 = vunpack.c.l.b16 %v1770
        %v5092 = vunpack.c.h.b16 %v1770
        %v5093 = vunpack.c.l.b16 %v1771
        %v5094 = vunpack.c.h.b16 %v1771
        %v5095 = vunpack.c.l.b16 %v1772
        %v5096 = vunpack.c.h.b16 %v1772
        %v5097 = vunpack.c.l.b16 %v1773
        %v5098 = vunpack.c.h.b16 %v1773
        %v5099 = vunpack.c.l.b16 %v1774
        %v5100 = vunpack.c.h.b16 %v1774
        %v5101 = vunpack.c.l.b16 %v1775
        %v5102 = vunpack.c.h.b16 %v1775
        %v5103 = vunpack.c.l.b16 %v1776
        %v5104 = vunpack.c.h.b16 %v1776
        %v5105 = vunpack.c.l.b16 %v1777
        %v5106 = vunpack.c.h.b16 %v1777
        %v5107 = vunpack.c.l.b16 %v1778
        %v5108 = vunpack.c.h.b16 %v1778
        %v5109 = vunpack.c.l.b16 %v1779
        %v5110 = vunpack.c.h.b16 %v1779
        %v5111 = vunpack.c.l.b16 %v1780
        %v5112 = vunpack.c.h.b16 %v1780
        %v5113 = vunpack.c.l.b16 %v1781
        %v5114 = vunpack.c.h.b16 %v1781
        %v5115 = vunpack.c.l.b16 %v1782
        %v5116 = vunpack.c.h.b16 %v1782
        %v5117 = vunpack.c.l.b16 %v1783
        %v5118 = vunpack.c.h.b16 %v1783
        %v5119 = vunpack.c.l.b16 %v1784
        %v5120 = vunpack.c.h.b16 %v1784
        %v5121 = vunpack.c.l.b16 %v1785
        %v5122 = vunpack.c.h.b16 %v1785
        %v5123 = vunpack.c.l.b16 %v1786
        %v5124 = vunpack.c.h.b16 %v1786
        %v5125 = vunpack.c.l.b16 %v1787
        %v5126 = vunpack.c.h.b16 %v1787
        %v5127 = vunpack.c.l.b16 %v1788
        %v5128 = vunpack.c.h.b16 %v1788
        %v5129 = vunpack.c.l.b16 %v1789
        %v5130 = vunpack.c.h.b16 %v1789
        %v5131 = vunpack.c.l.b16 %v1790
        %v5132 = vunpack.c.h.b16 %v1790
        %v5133 = vunpack.c.l.b16 %v1791
        %v5134 = vunpack.c.h.b16 %v1791
        %v5135 = vunpack.c.l.b16 %v1792
        %v5136 = vunpack.c.h.b16 %v1792
        %v5137 = vunpack.c.l.b16 %v1793
        %v5138 = vunpack.c.h.b16 %v1793
        %v5139 = vunpack.c.l.b16 %v1794
        %v5140 = vunpack.c.h.b16 %v1794
        %v5141 = vunpack.c.l.b16 %v1795
        %v5142 = vunpack.c.h.b16 %v1795
        %v5143 = vunpack.c.l.b16 %v1796
        %v5144 = vunpack.c.h.b16 %v1796
        %v5145 = vunpack.c.l.b16 %v1797
        %v5146 = vunpack.c.h.b16 %v1797
        %v5147 = vunpack.c.l.b16 %v1798
        %v5148 = vunpack.c.h.b16 %v1798
        %v5149 = vunpack.c.l.b16 %v1799
        %v5150 = vunpack.c.h.b16 %v1799
        %v5151 = vunpack.c.l.b16 %v1800
        %v5152 = vunpack.c.h.b16 %v1800
        %v5153 = vunpack.c.l.b16 %v1801
        %v5154 = vunpack.c.h.b16 %v1801
        %v5155 = vunpack.c.l.b16 %v1802
        %v5156 = vunpack.c.h.b16 %v1802
        %v5157 = vunpack.c.l.b16 %v1803
        %v5158 = vunpack.c.h.b16 %v1803
        %v5159 = vunpack.c.l.b16 %v1804
        %v5160 = vunpack.c.h.b16 %v1804
        %v5161 = vunpack.c.l.b16 %v1805
        %v5162 = vunpack.c.h.b16 %v1805
        %v5163 = vunpack.c.l.b16 %v1806
        %v5164 = vunpack.c.h.b16 %v1806
        %v5165 = vunpack.c.l.b16 %v1807
        %v5166 = vunpack.c.h.b16 %v1807
        %v5167 = vunpack.c.l.b16 %v1808
        %v5168 = vunpack.c.h.b16 %v1808
        %v5169 = vunpack.c.l.b16 %v1809
        %v5170 = vunpack.c.h.b16 %v1809
        %v5171 = vunpack.c.l.b16 %v1810
        %v5172 = vunpack.c.h.b16 %v1810
        %v5173 = vunpack.c.l.b16 %v1811
        %v5174 = vunpack.c.h.b16 %v1811
        %v5175 = vunpack.c.l.b16 %v1812
        %v5176 = vunpack.c.h.b16 %v1812
        %v5177 = vunpack.c.l.b16 %v1813
        %v5178 = vunpack.c.h.b16 %v1813
        %v5179 = vunpack.c.l.b16 %v1814
        %v5180 = vunpack.c.h.b16 %v1814
        %v5181 = vunpack.c.l.b16 %v1815
        %v5182 = vunpack.c.h.b16 %v1815
        %v5183 = vunpack.c.l.b16 %v1816
        %v5184 = vunpack.c.h.b16 %v1816
        %v5185 = vunpack.c.l.b16 %v1817
        %v5186 = vunpack.c.h.b16 %v1817
        %v5187 = vunpack.c.l.b16 %v1818
        %v5188 = vunpack.c.h.b16 %v1818
        %v5189 = vunpack.c.l.b16 %v1819
        %v5190 = vunpack.c.h.b16 %v1819
        %v5191 = vunpack.c.l.b16 %v1820
        %v5192 = vunpack.c.h.b16 %v1820
        %v5193 = vunpack.c.l.b16 %v1821
        %v5194 = vunpack.c.h.b16 %v1821
        %v5195 = vunpack.c.l.b16 %v1822
        %v5196 = vunpack.c.h.b16 %v1822
        %v5197 = vunpack.c.l.b16 %v1823
        %v5198 = vunpack.c.h.b16 %v1823
        %v5199 = vunpack.c.l.b16 %v1824
        %v5200 = vunpack.c.h.b16 %v1824
        %v5201 = vunpack.c.l.b16 %v1825
        %v5202 = vunpack.c.h.b16 %v1825
        %v5203 = vunpack.c.l.b16 %v1826
        %v5204 = vunpack.c.h.b16 %v1826
        %v5205 = vunpack.c.l.b16 %v1827
        %v5206 = vunpack.c.h.b16 %v1827
        %v5207 = vunpack.c.l.b16 %v1828
        %v5208 = vunpack.c.h.b16 %v1828
        %v5209 = vunpack.c.l.b16 %v1829
        %v5210 = vunpack.c.h.b16 %v1829
        %v5211 = vunpack.c.l.b16 %v1830
        %v5212 = vunpack.c.h.b16 %v1830
        %v5213 = vunpack.c.l.b16 %v1831
        %v5214 = vunpack.c.h.b16 %v1831
        %v5215 = vunpack.c.l.b16 %v1832
        %v5216 = vunpack.c.h.b16 %v1832
        %v5217 = vunpack.c.l.b16 %v1833
        %v5218 = vunpack.c.h.b16 %v1833
        %v5219 = vunpack.c.l.b16 %v1834
        %v5220 = vunpack.c.h.b16 %v1834
        %v5221 = vunpack.c.l.b16 %v1835
        %v5222 = vunpack.c.h.b16 %v1835
        %v5223 = vunpack.c.l.b16 %v1836
        %v5224 = vunpack.c.h.b16 %v1836
        %v5225 = vunpack.c.l.b16 %v1837
        %v5226 = vunpack.c.h.b16 %v1837
        %v5227 = vunpack.c.l.b16 %v1838
        %v5228 = vunpack.c.h.b16 %v1838
        %v5229 = vunpack.c.l.b16 %v1839
        %v5230 = vunpack.c.h.b16 %v1839
        %v5231 = vunpack.c.l.b16 %v1840
        %v5232 = vunpack.c.h.b16 %v1840
        %v5233 = vunpack.c.l.b16 %v1841
        %v5234 = vunpack.c.h.b16 %v1841
        %v5235 = vunpack.c.l.b16 %v1842
        %v5236 = vunpack.c.h.b16 %v1842
        %v5237 = vunpack.c.l.b16 %v1843
        %v5238 = vunpack.c.h.b16 %v1843
        %v5239 = vunpack.c.l.b16 %v1844
        %v5240 = vunpack.c.h.b16 %v1844
        %v5241 = vunpack.c.l.b16 %v1845
        %v5242 = vunpack.c.h.b16 %v1845
        %v5243 = vunpack.c.l.b16 %v1846
        %v5244 = vunpack.c.h.b16 %v1846
        %v5245 = vunpack.c.l.b16 %v1847
        %v5246 = vunpack.c.h.b16 %v1847
        %v5247 = vunpack.c.l.b16 %v1848
        %v5248 = vunpack.c.h.b16 %v1848
        %v5249 = vunpack.c.l.b16 %v1849
        %v5250 = vunpack.c.h.b16 %v1849
        %v5251 = vunpack.c.l.b16 %v1850
        %v5252 = vunpack.c.h.b16 %v1850
        %v5253 = vunpack.c.l.b16 %v1851
        %v5254 = vunpack.c.h.b16 %v1851
        %v5255 = vunpack.c.l.b16 %v1852
        %v5256 = vunpack.c.h.b16 %v1852
        %v5257 = vunpack.c.l.b16 %v1853
        %v5258 = vunpack.c.h.b16 %v1853
        %v5259 = vunpack.c.l.b16 %v1854
        %v5260 = vunpack.c.h.b16 %v1854
        %v5261 = vunpack.c.l.b16 %v1855
        %v5262 = vunpack.c.h.b16 %v1855
        %v5263 = vunpack.c.l.b16 %v1856
        %v5264 = vunpack.c.h.b16 %v1856
        %v5265 = vunpack.c.l.b16 %v1857
        %v5266 = vunpack.c.h.b16 %v1857
        %v5267 = vunpack.c.l.b16 %v1858
        %v5268 = vunpack.c.h.b16 %v1858
        %v5269 = vunpack.c.l.b16 %v1859
        %v5270 = vunpack.c.h.b16 %v1859
        %v5271 = vunpack.c.l.b16 %v1860
        %v5272 = vunpack.c.h.b16 %v1860
        %v5273 = vunpack.c.l.b16 %v1861
        %v5274 = vunpack.c.h.b16 %v1861
        %v5275 = vunpack.c.l.b16 %v1862
        %v5276 = vunpack.c.h.b16 %v1862
        %v5277 = vunpack.c.l.b16 %v1863
        %v5278 = vunpack.c.h.b16 %v1863
        %v5279 = vunpack.c.l.b16 %v1864
        %v5280 = vunpack.c.h.b16 %v1864
        %v5281 = vunpack.c.l.b16 %v1865
        %v5282 = vunpack.c.h.b16 %v1865
        %v5283 = vunpack.c.l.b16 %v1866
        %v5284 = vunpack.c.h.b16 %v1866
        %v5285 = vunpack.c.l.b16 %v1867
        %v5286 = vunpack.c.h.b16 %v1867
        %v5287 = vunpack.c.l.b16 %v1868
        %v5288 = vunpack.c.h.b16 %v1868
        %v5289 = vunpack.c.l.b16 %v1869
        %v5290 = vunpack.c.h.b16 %v1869
        %v5291 = vunpack.c.l.b16 %v1870
        %v5292 = vunpack.c.h.b16 %v1870
        %v5293 = vunpack.c.l.b16 %v1871
        %v5294 = vunpack.c.h.b16 %v1871
        %v5295 = vunpack.c.l.b16 %v1872
        %v5296 = vunpack.c.h.b16 %v1872
        %v5297 = vunpack.c.l.b16 %v1873
        %v5298 = vunpack.c.h.b16 %v1873
        %v5299 = vunpack.c.l.b16 %v1874
        %v5300 = vunpack.c.h.b16 %v1874
        %v5301 = vunpack.c.l.b16 %v1875
        %v5302 = vunpack.c.h.b16 %v1875
        %v5303 = vunpack.c.l.b16 %v1876
        %v5304 = vunpack.c.h.b16 %v1876
        %v5305 = vunpack.c.l.b16 %v1877
        %v5306 = vunpack.c.h.b16 %v1877
        %v5307 = vunpack.c.l.b16 %v1878
        %v5308 = vunpack.c.h.b16 %v1878
        %v5309 = vunpack.c.l.b16 %v1879
        %v5310 = vunpack.c.h.b16 %v1879
        %v5311 = vunpack.c.l.b16 %v1880
        %v5312 = vunpack.c.h.b16 %v1880
        %v5313 = vunpack.c.l.b16 %v1881
        %v5314 = vunpack.c.h.b16 %v1881
        %v5315 = vunpack.c.l.b16 %v1882
        %v5316 = vunpack.c.h.b16 %v1882
        %v5317 = vunpack.c.l.b16 %v1883
        %v5318 = vunpack.c.h.b16 %v1883
        %v5319 = vunpack.c.l.b16 %v1884
        %v5320 = vunpack.c.h.b16 %v1884
        %v5321 = vunpack.c.l.b16 %v1885
        %v5322 = vunpack.c.h.b16 %v1885
        %v5323 = vunpack.c.l.b16 %v1886
        %v5324 = vunpack.c.h.b16 %v1886
        %v5325 = vunpack.c.l.b16 %v1887
        %v5326 = vunpack.c.h.b16 %v1887
        %v5327 = vunpack.c.l.b16 %v1888
        %v5328 = vunpack.c.h.b16 %v1888
        %v5329 = vunpack.c.l.b16 %v1889
        %v5330 = vunpack.c.h.b16 %v1889
        %v5331 = vunpack.c.l.b16 %v1890
        %v5332 = vunpack.c.h.b16 %v1890
        %v5333 = vunpack.c.l.b16 %v1891
        %v5334 = vunpack.c.h.b16 %v1891
        %v5335 = vunpack.c.l.b16 %v1892
        %v5336 = vunpack.c.h.b16 %v1892
        %v5337 = vunpack.c.l.b16 %v1893
        %v5338 = vunpack.c.h.b16 %v1893
        %v5339 = vunpack.c.l.b16 %v1894
        %v5340 = vunpack.c.h.b16 %v1894
        %v5341 = vunpack.c.l.b16 %v1895
        %v5342 = vunpack.c.h.b16 %v1895
        %v5343 = vunpack.c.l.b16 %v1896
        %v5344 = vunpack.c.h.b16 %v1896
        %v5345 = vunpack.c.l.b16 %v1897
        %v5346 = vunpack.c.h.b16 %v1897
        %v5347 = vunpack.c.l.b16 %v1898
        %v5348 = vunpack.c.h.b16 %v1898
        %v5349 = vunpack.c.l.b16 %v1899
        %v5350 = vunpack.c.h.b16 %v1899
        %v5351 = vunpack.c.l.b16 %v1900
        %v5352 = vunpack.c.h.b16 %v1900
        %v5353 = vunpack.c.l.b16 %v1901
        %v5354 = vunpack.c.h.b16 %v1901
        %v5355 = vunpack.c.l.b16 %v1902
        %v5356 = vunpack.c.h.b16 %v1902
        %v5357 = vunpack.c.l.b16 %v1903
        %v5358 = vunpack.c.h.b16 %v1903
        %v5359 = vunpack.c.l.b16 %v1904
        %v5360 = vunpack.c.h.b16 %v1904
        %v5361 = vunpack.c.l.b16 %v1905
        %v5362 = vunpack.c.h.b16 %v1905
        %v5363 = vunpack.c.l.b16 %v1906
        %v5364 = vunpack.c.h.b16 %v1906
        %v5365 = vunpack.c.l.b16 %v1907
        %v5366 = vunpack.c.h.b16 %v1907
        %v5367 = vunpack.c.l.b16 %v1908
        %v5368 = vunpack.c.h.b16 %v1908
        %v5369 = vunpack.c.l.b16 %v1909
        %v5370 = vunpack.c.h.b16 %v1909
        %v5371 = vunpack.c.l.b16 %v1910
        %v5372 = vunpack.c.h.b16 %v1910
        %v5373 = vunpack.c.l.b16 %v1911
        %v5374 = vunpack.c.h.b16 %v1911
        %v5375 = vunpack.c.l.b16 %v1912
        %v5376 = vunpack.c.h.b16 %v1912
        %v5377 = vunpack.c.l.b16 %v1913
        %v5378 = vunpack.c.h.b16 %v1913
        %v5379 = vunpack.c.l.b16 %v1914
        %v5380 = vunpack.c.h.b16 %v1914
        %v5381 = vunpack.c.l.b16 %v1915
        %v5382 = vunpack.c.h.b16 %v1915
        %v5383 = vunpack.c.l.b16 %v1916
        %v5384 = vunpack.c.h.b16 %v1916
        %v5385 = vunpack.c.l.b16 %v1917
        %v5386 = vunpack.c.h.b16 %v1917
        %v5387 = vunpack.c.l.b16 %v1918
        %v5388 = vunpack.c.h.b16 %v1918
        %v5389 = vunpack.c.l.b16 %v1919
        %v5390 = vunpack.c.h.b16 %v1919
        %v5391 = vunpack.c.l.b16 %v1920
        %v5392 = vunpack.c.h.b16 %v1920
        %v5393 = vunpack.c.l.b16 %v1921
        %v5394 = vunpack.c.h.b16 %v1921
        %v5395 = vunpack.c.l.b16 %v1922
        %v5396 = vunpack.c.h.b16 %v1922
        %v5397 = vunpack.c.l.b16 %v1923
        %v5398 = vunpack.c.h.b16 %v1923
        %v5399 = vunpack.c.l.b16 %v1924
        %v5400 = vunpack.c.h.b16 %v1924
        %v5401 = vunpack.c.l.b16 %v1925
        %v5402 = vunpack.c.h.b16 %v1925
        %v5403 = vunpack.c.l.b16 %v1926
        %v5404 = vunpack.c.h.b16 %v1926
        %v5405 = vunpack.c.l.b16 %v1927
        %v5406 = vunpack.c.h.b16 %v1927
        %v5407 = vunpack.c.l.b16 %v1928
        %v5408 = vunpack.c.h.b16 %v1928
        %v5409 = vunpack.c.l.b16 %v1929
        %v5410 = vunpack.c.h.b16 %v1929
        %v5411 = vunpack.c.l.b16 %v1930
        %v5412 = vunpack.c.h.b16 %v1930
        %v5413 = vunpack.c.l.b16 %v1931
        %v5414 = vunpack.c.h.b16 %v1931
        %v5415 = vunpack.c.l.b16 %v1932
        %v5416 = vunpack.c.h.b16 %v1932
        %v5417 = vunpack.c.l.b16 %v1933
        %v5418 = vunpack.c.h.b16 %v1933
        %v5419 = vunpack.c.l.b16 %v1934
        %v5420 = vunpack.c.h.b16 %v1934
        %v5421 = vunpack.c.l.b16 %v1935
        %v5422 = vunpack.c.h.b16 %v1935
        %v5423 = vunpack.c.l.b16 %v1936
        %v5424 = vunpack.c.h.b16 %v1936
        %v5425 = vunpack.c.l.b16 %v1937
        %v5426 = vunpack.c.h.b16 %v1937
        %v5427 = vunpack.c.l.b16 %v1938
        %v5428 = vunpack.c.h.b16 %v1938
        %v5429 = vunpack.c.l.b16 %v1939
        %v5430 = vunpack.c.h.b16 %v1939
        %v5431 = vunpack.c.l.b16 %v1940
        %v5432 = vunpack.c.h.b16 %v1940
        %v5433 = vunpack.c.l.b16 %v1941
        %v5434 = vunpack.c.h.b16 %v1941
        %v5435 = vunpack.c.l.b16 %v1942
        %v5436 = vunpack.c.h.b16 %v1942
        %v5437 = vunpack.c.l.b16 %v1943
        %v5438 = vunpack.c.h.b16 %v1943
        %v5439 = vunpack.c.l.b16 %v1944
        %v5440 = vunpack.c.h.b16 %v1944
        %v5441 = vunpack.c.l.b16 %v1945
        %v5442 = vunpack.c.h.b16 %v1945
        %v5443 = vunpack.c.l.b16 %v1946
        %v5444 = vunpack.c.h.b16 %v1946
        %v5445 = vunpack.c.l.b16 %v1947
        %v5446 = vunpack.c.h.b16 %v1947
        %v5447 = vunpack.c.l.b16 %v1948
        %v5448 = vunpack.c.h.b16 %v1948
        %v5449 = vunpack.c.l.b16 %v1949
        %v5450 = vunpack.c.h.b16 %v1949
        %v5451 = vunpack.c.l.b16 %v1950
        %v5452 = vunpack.c.h.b16 %v1950
        %v5453 = vunpack.c.l.b16 %v1951
        %v5454 = vunpack.c.h.b16 %v1951
        %v5455 = vunpack.c.l.b16 %v1952
        %v5456 = vunpack.c.h.b16 %v1952
        %v5457 = vunpack.c.l.b16 %v1953
        %v5458 = vunpack.c.h.b16 %v1953
        %v5459 = vunpack.c.l.b16 %v1954
        %v5460 = vunpack.c.h.b16 %v1954
        %v5461 = vunpack.c.l.b16 %v1955
        %v5462 = vunpack.c.h.b16 %v1955
        %v5463 = vunpack.c.l.b16 %v1956
        %v5464 = vunpack.c.h.b16 %v1956
        %v5465 = vunpack.c.l.b16 %v1957
        %v5466 = vunpack.c.h.b16 %v1957
        %v5467 = vunpack.c.l.b16 %v1958
        %v5468 = vunpack.c.h.b16 %v1958
        %v5469 = vunpack.c.l.b16 %v1959
        %v5470 = vunpack.c.h.b16 %v1959
        %v5471 = vunpack.c.l.b16 %v1960
        %v5472 = vunpack.c.h.b16 %v1960
        %v5473 = vunpack.c.l.b16 %v1961
        %v5474 = vunpack.c.h.b16 %v1961
        %v5475 = vunpack.c.l.b16 %v1962
        %v5476 = vunpack.c.h.b16 %v1962
        %v5477 = vunpack.c.l.b16 %v1963
        %v5478 = vunpack.c.h.b16 %v1963
        %v5479 = vunpack.c.l.b16 %v1964
        %v5480 = vunpack.c.h.b16 %v1964
        %v5481 = vunpack.c.l.b16 %v1965
        %v5482 = vunpack.c.h.b16 %v1965
        %v5483 = vunpack.c.l.b16 %v1966
        %v5484 = vunpack.c.h.b16 %v1966
        %v5485 = vunpack.c.l.b16 %v1967
        %v5486 = vunpack.c.h.b16 %v1967
        %v5487 = vunpack.c.l.b16 %v1968
        %v5488 = vunpack.c.h.b16 %v1968
        %v5489 = vunpack.c.l.b16 %v1969
        %v5490 = vunpack.c.h.b16 %v1969
        %v5491 = vunpack.c.l.b16 %v1970
        %v5492 = vunpack.c.h.b16 %v1970
        %v5493 = vunpack.c.l.b16 %v1971
        %v5494 = vunpack.c.h.b16 %v1971
        %v5495 = vunpack.c.l.b16 %v1972
        %v5496 = vunpack.c.h.b16 %v1972
        %v5497 = vunpack.c.l.b16 %v1973
        %v5498 = vunpack.c.h.b16 %v1973
        %v5499 = vunpack.c.l.b16 %v1974
        %v5500 = vunpack.c.h.b16 %v1974
        %v5501 = vunpack.c.l.b16 %v1975
        %v5502 = vunpack.c.h.b16 %v1975
        %v5503 = vunpack.c.l.b16 %v1976
        %v5504 = vunpack.c.h.b16 %v1976
        %v5505 = vunpack.c.l.b16 %v1977
        %v5506 = vunpack.c.h.b16 %v1977
        %v5507 = vunpack.c.l.b16 %v1978
        %v5508 = vunpack.c.h.b16 %v1978
        %v5509 = vunpack.c.l.b16 %v1979
        %v5510 = vunpack.c.h.b16 %v1979
        %v5511 = vunpack.c.l.b16 %v1980
        %v5512 = vunpack.c.h.b16 %v1980
        %v5513 = vunpack.c.l.b16 %v1981
        %v5514 = vunpack.c.h.b16 %v1981
        %v5515 = vunpack.c.l.b16 %v1982
        %v5516 = vunpack.c.h.b16 %v1982
        %v5517 = vunpack.c.l.b16 %v1983
        %v5518 = vunpack.c.h.b16 %v1983
        %v5519 = vunpack.c.l.b16 %v1984
        %v5520 = vunpack.c.h.b16 %v1984
        %v5521 = vunpack.c.l.b16 %v1985
        %v5522 = vunpack.c.h.b16 %v1985
        %v5523 = vunpack.c.l.b16 %v1986
        %v5524 = vunpack.c.h.b16 %v1986
        %v5525 = vunpack.c.l.b16 %v1987
        %v5526 = vunpack.c.h.b16 %v1987
        %v5527 = vunpack.c.l.b16 %v1988
        %v5528 = vunpack.c.h.b16 %v1988
        %v5529 = vunpack.c.l.b16 %v1989
        %v5530 = vunpack.c.h.b16 %v1989
        %v5531 = vunpack.c.l.b16 %v1990
        %v5532 = vunpack.c.h.b16 %v1990
        %v5533 = vunpack.c.l.b16 %v1991
        %v5534 = vunpack.c.h.b16 %v1991
        %v5535 = vunpack.c.l.b16 %v1992
        %v5536 = vunpack.c.h.b16 %v1992
        %v5537 = vunpack.c.l.b16 %v1993
        %v5538 = vunpack.c.h.b16 %v1993
        %v5539 = vunpack.c.l.b16 %v1994
        %v5540 = vunpack.c.h.b16 %v1994
        %v5541 = vunpack.c.l.b16 %v1995
        %v5542 = vunpack.c.h.b16 %v1995
        %v5543 = vunpack.c.l.b16 %v1996
        %v5544 = vunpack.c.h.b16 %v1996
        %v5545 = vunpack.c.l.b16 %v1997
        %v5546 = vunpack.c.h.b16 %v1997
        %v5547 = vunpack.c.l.b16 %v1998
        %v5548 = vunpack.c.h.b16 %v1998
        %v5549 = vunpack.c.l.b16 %v1999
        %v5550 = vunpack.c.h.b16 %v1999
        %v5551 = vunpack.c.l.b16 %v2000
        %v5552 = vunpack.c.h.b16 %v2000
        %v5553 = vunpack.c.l.b16 %v2001
        %v5554 = vunpack.c.h.b16 %v2001
        %v5555 = vunpack.c.l.b16 %v2002
        %v5556 = vunpack.c.h.b16 %v2002
        %v5557 = vunpack.c.l.b16 %v2003
        %v5558 = vunpack.c.h.b16 %v2003
        %v5559 = vunpack.c.l.b16 %v2004
        %v5560 = vunpack.c.h.b16 %v2004
        %v5561 = vunpack.c.l.b16 %v2005
        %v5562 = vunpack.c.h.b16 %v2005
        %v5563 = vunpack.c.l.b16 %v2006
        %v5564 = vunpack.c.h.b16 %v2006
        %v5565 = vunpack.c.l.b16 %v2007
        %v5566 = vunpack.c.h.b16 %v2007
        %v5567 = vunpack.c.l.b16 %v2008
        %v5568 = vunpack.c.h.b16 %v2008
        %v5569 = vunpack.c.l.b16 %v2009
        %v5570 = vunpack.c.h.b16 %v2009
        %v5571 = vunpack.c.l.b16 %v2010
        %v5572 = vunpack.c.h.b16 %v2010
        %v5573 = vunpack.c.l.b16 %v2011
        %v5574 = vunpack.c.h.b16 %v2011
        %v5575 = vunpack.c.l.b16 %v2012
        %v5576 = vunpack.c.h.b16 %v2012
        %v5577 = vunpack.c.l.b16 %v2013
        %v5578 = vunpack.c.h.b16 %v2013
        %v5579 = vunpack.c.l.b16 %v2014
        %v5580 = vunpack.c.h.b16 %v2014
        %v5581 = vunpack.c.l.b16 %v2015
        %v5582 = vunpack.c.h.b16 %v2015
        %v5583 = vunpack.c.l.b16 %v2016
        %v5584 = vunpack.c.h.b16 %v2016
        %v5585 = vunpack.c.l.b16 %v2017
        %v5586 = vunpack.c.h.b16 %v2017
        %v5587 = vunpack.c.l.b16 %v2018
        %v5588 = vunpack.c.h.b16 %v2018
        %v5589 = vunpack.c.l.b16 %v2019
        %v5590 = vunpack.c.h.b16 %v2019
        %v5591 = vunpack.c.l.b16 %v2020
        %v5592 = vunpack.c.h.b16 %v2020
        %v5593 = vunpack.c.l.b16 %v2021
        %v5594 = vunpack.c.h.b16 %v2021
        %v5595 = vunpack.c.l.b16 %v2022
        %v5596 = vunpack.c.h.b16 %v2022
        %v5597 = vunpack.c.l.b16 %v2023
        %v5598 = vunpack.c.h.b16 %v2023
        %v5599 = vunpack.c.l.b16 %v2024
        %v5600 = vunpack.c.h.b16 %v2024
        %v5601 = vunpack.c.l.b16 %v2025
        %v5602 = vunpack.c.h.b16 %v2025
        %v5603 = vunpack.c.l.b16 %v2026
        %v5604 = vunpack.c.h.b16 %v2026
        %v5605 = vunpack.c.l.b16 %v2027
        %v5606 = vunpack.c.h.b16 %v2027
        %v5607 = vunpack.c.l.b16 %v2028
        %v5608 = vunpack.c.h.b16 %v2028
        %v5609 = vunpack.c.l.b16 %v2029
        %v5610 = vunpack.c.h.b16 %v2029
        %v5611 = vunpack.c.l.b16 %v2030
        %v5612 = vunpack.c.h.b16 %v2030
        %v5613 = vunpack.c.l.b16 %v2031
        %v5614 = vunpack.c.h.b16 %v2031
        %v5615 = vunpack.c.l.b16 %v2032
        %v5616 = vunpack.c.h.b16 %v2032
        %v5617 = vunpack.c.l.b16 %v2033
        %v5618 = vunpack.c.h.b16 %v2033
        %v5619 = vunpack.c.l.b16 %v2034
        %v5620 = vunpack.c.h.b16 %v2034
        %v5621 = vunpack.c.l.b16 %v2035
        %v5622 = vunpack.c.h.b16 %v2035
        %v5623 = vunpack.c.l.b16 %v2036
        %v5624 = vunpack.c.h.b16 %v2036
        %v5625 = vunpack.c.l.b16 %v2037
        %v5626 = vunpack.c.h.b16 %v2037
        %v5627 = vunpack.c.l.b16 %v2038
        %v5628 = vunpack.c.h.b16 %v2038
        %v5629 = vunpack.c.l.b16 %v2039
        %v5630 = vunpack.c.h.b16 %v2039
        %v5631 = vunpack.c.l.b16 %v2040
        %v5632 = vunpack.c.h.b16 %v2040
        %v5633 = vunpack.c.l.b16 %v2041
        %v5634 = vunpack.c.h.b16 %v2041
        %v5635 = vunpack.c.l.b16 %v2042
        %v5636 = vunpack.c.h.b16 %v2042
        %v5637 = vunpack.c.l.b16 %v2043
        %v5638 = vunpack.c.h.b16 %v2043
        %v5639 = vunpack.c.l.b16 %v2044
        %v5640 = vunpack.c.h.b16 %v2044
        %v5641 = vunpack.c.l.b16 %v2045
        %v5642 = vunpack.c.h.b16 %v2045
        %v5643 = vunpack.c.l.b16 %v2046
        %v5644 = vunpack.c.h.b16 %v2046
        %v5645 = vunpack.c.l.b16 %v2047
        %v5646 = vunpack.c.h.b16 %v2047
        %v5647 = vunpack.c.l.b16 %v2048
        %v5648 = vunpack.c.h.b16 %v2048
        %v5649 = vunpack.c.l.b16 %v2049
        %v5650 = vunpack.c.h.b16 %v2049
        %v5651 = vunpack.c.l.b16 %v2050
        %v5652 = vunpack.c.h.b16 %v2050
        %v5653 = vunpack.c.l.b16 %v2051
        %v5654 = vunpack.c.h.b16 %v2051
        %v5655 = vunpack.c.l.b16 %v2052
        %v5656 = vunpack.c.h.b16 %v2052
        %v5657 = vunpack.c.l.b16 %v2053
        %v5658 = vunpack.c.h.b16 %v2053
        %v5659 = vunpack.c.l.b16 %v2054
        %v5660 = vunpack.c.h.b16 %v2054
        %v5661 = vunpack.c.l.b16 %v2055
        %v5662 = vunpack.c.h.b16 %v2055
        %v5663 = vunpack.c.l.b16 %v2056
        %v5664 = vunpack.c.h.b16 %v2056
        %v5665 = vunpack.c.l.b16 %v2057
        %v5666 = vunpack.c.h.b16 %v2057
        %v5667 = vunpack.c.l.b16 %v2058
        %v5668 = vunpack.c.h.b16 %v2058
        %v5669 = vunpack.c.l.b16 %v2059
        %v5670 = vunpack.c.h.b16 %v2059
        %v5671 = vunpack.c.l.b16 %v2060
        %v5672 = vunpack.c.h.b16 %v2060
        %v5673 = vunpack.c.l.b16 %v2061
        %v5674 = vunpack.c.h.b16 %v2061
        %v5675 = vunpack.c.l.b16 %v2062
        %v5676 = vunpack.c.h.b16 %v2062
        %v5677 = vunpack.c.l.b16 %v2063
        %v5678 = vunpack.c.h.b16 %v2063
        %v5679 = vunpack.c.l.b16 %v2064
        %v5680 = vunpack.c.h.b16 %v2064
        %v5681 = vunpack.c.l.b16 %v2065
        %v5682 = vunpack.c.h.b16 %v2065
        %v5683 = vunpack.c.l.b16 %v2066
        %v5684 = vunpack.c.h.b16 %v2066
        %v5685 = vunpack.c.l.b16 %v2067
        %v5686 = vunpack.c.h.b16 %v2067
        %v5687 = vunpack.c.l.b16 %v2068
        %v5688 = vunpack.c.h.b16 %v2068
        %v5689 = vunpack.c.l.b16 %v2069
        %v5690 = vunpack.c.h.b16 %v2069
        %v5691 = vunpack.c.l.b16 %v2070
        %v5692 = vunpack.c.h.b16 %v2070
        %v5693 = vunpack.c.l.b16 %v2071
        %v5694 = vunpack.c.h.b16 %v2071
        %v5695 = vunpack.c.l.b16 %v2072
        %v5696 = vunpack.c.h.b16 %v2072
        %v5697 = vunpack.c.l.b16 %v2073
        %v5698 = vunpack.c.h.b16 %v2073
        %v5699 = vunpack.c.l.b16 %v2074
        %v5700 = vunpack.c.h.b16 %v2074
        %v5701 = vunpack.c.l.b16 %v2075
        %v5702 = vunpack.c.h.b16 %v2075
        %v5703 = vunpack.c.l.b16 %v2076
        %v5704 = vunpack.c.h.b16 %v2076
        %v5705 = vunpack.c.l.b16 %v2077
        %v5706 = vunpack.c.h.b16 %v2077
        %v5707 = vunpack.c.l.b16 %v2078
        %v5708 = vunpack.c.h.b16 %v2078
        %v5709 = vunpack.c.l.b16 %v2079
        %v5710 = vunpack.c.h.b16 %v2079
        %v5711 = vunpack.c.l.b16 %v2080
        %v5712 = vunpack.c.h.b16 %v2080
        %v5713 = vunpack.c.l.b16 %v2081
        %v5714 = vunpack.c.h.b16 %v2081
        %v5715 = vunpack.c.l.b16 %v2082
        %v5716 = vunpack.c.h.b16 %v2082
        %v5717 = vunpack.c.l.b16 %v2083
        %v5718 = vunpack.c.h.b16 %v2083
        %v5719 = vunpack.c.l.b16 %v2084
        %v5720 = vunpack.c.h.b16 %v2084
        %v5721 = vunpack.c.l.b16 %v2085
        %v5722 = vunpack.c.h.b16 %v2085
        %v5723 = vunpack.c.l.b16 %v2086
        %v5724 = vunpack.c.h.b16 %v2086
        %v5725 = vunpack.c.l.b16 %v2087
        %v5726 = vunpack.c.h.b16 %v2087
        %v5727 = vunpack.c.l.b16 %v2088
        %v5728 = vunpack.c.h.b16 %v2088
        %v5729 = vunpack.c.l.b16 %v2089
        %v5730 = vunpack.c.h.b16 %v2089
        %v5731 = vunpack.c.l.b16 %v2090
        %v5732 = vunpack.c.h.b16 %v2090
        %v5733 = vunpack.c.l.b16 %v2091
        %v5734 = vunpack.c.h.b16 %v2091
        %v5735 = vunpack.c.l.b16 %v2092
        %v5736 = vunpack.c.h.b16 %v2092
        %v5737 = vunpack.c.l.b16 %v2093
        %v5738 = vunpack.c.h.b16 %v2093
        %v5739 = vunpack.c.l.b16 %v2094
        %v5740 = vunpack.c.h.b16 %v2094
        %v5741 = vunpack.c.l.b16 %v2095
        %v5742 = vunpack.c.h.b16 %v2095
        %v5743 = vunpack.c.l.b16 %v2096
        %v5744 = vunpack.c.h.b16 %v2096
        %v5745 = vunpack.c.l.b16 %v2097
        %v5746 = vunpack.c.h.b16 %v2097
        %v5747 = vunpack.c.l.b16 %v2098
        %v5748 = vunpack.c.h.b16 %v2098
        %v5749 = vunpack.c.l.b16 %v2099
        %v5750 = vunpack.c.h.b16 %v2099
        %v5751 = vunpack.c.l.b16 %v2100
        %v5752 = vunpack.c.h.b16 %v2100
        %v5753 = vunpack.c.l.b16 %v2101
        %v5754 = vunpack.c.h.b16 %v2101
        %v5755 = vunpack.c.l.b16 %v2102
        %v5756 = vunpack.c.h.b16 %v2102
        %v5757 = vunpack.c.l.b16 %v2103
        %v5758 = vunpack.c.h.b16 %v2103
        %v5759 = vunpack.c.l.b16 %v2104
        %v5760 = vunpack.c.h.b16 %v2104
        %v5761 = vunpack.c.l.b16 %v2105
        %v5762 = vunpack.c.h.b16 %v2105
        %v5763 = vunpack.c.l.b16 %v2106
        %v5764 = vunpack.c.h.b16 %v2106
        %v5765 = vunpack.c.l.b16 %v2107
        %v5766 = vunpack.c.h.b16 %v2107
        %v5767 = vunpack.c.l.b16 %v2108
        %v5768 = vunpack.c.h.b16 %v2108
        %v5769 = vunpack.c.l.b16 %v2109
        %v5770 = vunpack.c.h.b16 %v2109
        %v5771 = vunpack.c.l.b16 %v2110
        %v5772 = vunpack.c.h.b16 %v2110
        %v5773 = vunpack.c.l.b16 %v2111
        %v5774 = vunpack.c.h.b16 %v2111
        %v5775 = vunpack.c.l.b16 %v2112
        %v5776 = vunpack.c.h.b16 %v2112
        %v5777 = vunpack.c.l.b16 %v2113
        %v5778 = vunpack.c.h.b16 %v2113
        %v5779 = vunpack.c.l.b16 %v2114
        %v5780 = vunpack.c.h.b16 %v2114
        %v5781 = vunpack.c.l.b16 %v2115
        %v5782 = vunpack.c.h.b16 %v2115
        %v5783 = vunpack.c.l.b16 %v2116
        %v5784 = vunpack.c.h.b16 %v2116
        %v5785 = vunpack.c.l.b16 %v2117
        %v5786 = vunpack.c.h.b16 %v2117
        %v5787 = vunpack.c.l.b16 %v2118
        %v5788 = vunpack.c.h.b16 %v2118
        %v5789 = vunpack.c.l.b16 %v2119
        %v5790 = vunpack.c.h.b16 %v2119
        %v5791 = vunpack.c.l.b16 %v2120
        %v5792 = vunpack.c.h.b16 %v2120
        %v5793 = vunpack.c.l.b16 %v2121
        %v5794 = vunpack.c.h.b16 %v2121
        %v5795 = vunpack.c.l.b16 %v2122
        %v5796 = vunpack.c.h.b16 %v2122
        %v5797 = vunpack.c.l.b16 %v2123
        %v5798 = vunpack.c.h.b16 %v2123
        %v5799 = vunpack.c.l.b16 %v2124
        %v5800 = vunpack.c.h.b16 %v2124
        %v5801 = vunpack.c.l.b16 %v2125
        %v5802 = vunpack.c.h.b16 %v2125
        %v5803 = vunpack.c.l.b16 %v2126
        %v5804 = vunpack.c.h.b16 %v2126
        %v5805 = vunpack.c.l.b16 %v2127
        %v5806 = vunpack.c.h.b16 %v2127
        %v5807 = vunpack.c.l.b16 %v2128
        %v5808 = vunpack.c.h.b16 %v2128
        %v5809 = vunpack.c.l.b16 %v2129
        %v5810 = vunpack.c.h.b16 %v2129
        %v5811 = vunpack.c.l.b16 %v2130
        %v5812 = vunpack.c.h.b16 %v2130
        %v5813 = vunpack.c.l.b16 %v2131
        %v5814 = vunpack.c.h.b16 %v2131
        %v5815 = vunpack.c.l.b16 %v2132
        %v5816 = vunpack.c.h.b16 %v2132
        %v5817 = vunpack.c.l.b16 %v2133
        %v5818 = vunpack.c.h.b16 %v2133
        %v5819 = vunpack.c.l.b16 %v2134
        %v5820 = vunpack.c.h.b16 %v2134
        %v5821 = vunpack.c.l.b16 %v2135
        %v5822 = vunpack.c.h.b16 %v2135
        %v5823 = vunpack.c.l.b16 %v2136
        %v5824 = vunpack.c.h.b16 %v2136
        %v5825 = vunpack.c.l.b16 %v2137
        %v5826 = vunpack.c.h.b16 %v2137
        %v5827 = vunpack.c.l.b16 %v2138
        %v5828 = vunpack.c.h.b16 %v2138
        %v5829 = vunpack.c.l.b16 %v2139
        %v5830 = vunpack.c.h.b16 %v2139
        %v5831 = vunpack.c.l.b16 %v2140
        %v5832 = vunpack.c.h.b16 %v2140
        %v5833 = vunpack.c.l.b16 %v2141
        %v5834 = vunpack.c.h.b16 %v2141
        %v5835 = vunpack.c.l.b16 %v2142
        %v5836 = vunpack.c.h.b16 %v2142
        %v5837 = vunpack.c.l.b16 %v2143
        %v5838 = vunpack.c.h.b16 %v2143
        %v5839 = vunpack.c.l.b16 %v2144
        %v5840 = vunpack.c.h.b16 %v2144
        %v5841 = vunpack.c.l.b16 %v2145
        %v5842 = vunpack.c.h.b16 %v2145
        %v5843 = vunpack.c.l.b16 %v2146
        %v5844 = vunpack.c.h.b16 %v2146
        %v5845 = vunpack.c.l.b16 %v2147
        %v5846 = vunpack.c.h.b16 %v2147
        %v5847 = vunpack.c.l.b16 %v2148
        %v5848 = vunpack.c.h.b16 %v2148
        %v5849 = vunpack.c.l.b16 %v2149
        %v5850 = vunpack.c.h.b16 %v2149
        %v5851 = vunpack.c.l.b16 %v2150
        %v5852 = vunpack.c.h.b16 %v2150
        %v5853 = vunpack.c.l.b16 %v2151
        %v5854 = vunpack.c.h.b16 %v2151
        %v5855 = vunpack.c.l.b16 %v2152
        %v5856 = vunpack.c.h.b16 %v2152
        %v5857 = vunpack.c.l.b16 %v2153
        %v5858 = vunpack.c.h.b16 %v2153
        %v5859 = vunpack.c.l.b16 %v2154
        %v5860 = vunpack.c.h.b16 %v2154
        %v5861 = vunpack.c.l.b16 %v2155
        %v5862 = vunpack.c.h.b16 %v2155
        %v5863 = vunpack.c.l.b16 %v2156
        %v5864 = vunpack.c.h.b16 %v2156
        %v5865 = vunpack.c.l.b16 %v2157
        %v5866 = vunpack.c.h.b16 %v2157
        %v5867 = vunpack.c.l.b16 %v2158
        %v5868 = vunpack.c.h.b16 %v2158
        %v5869 = vunpack.c.l.b16 %v2159
        %v5870 = vunpack.c.h.b16 %v2159
        %v5871 = vunpack.c.l.b16 %v2160
        %v5872 = vunpack.c.h.b16 %v2160
        %v5873 = vunpack.c.l.b16 %v2161
        %v5874 = vunpack.c.h.b16 %v2161
        %v5875 = vunpack.c.l.b16 %v2162
        %v5876 = vunpack.c.h.b16 %v2162
        %v5877 = vunpack.c.l.b16 %v2163
        %v5878 = vunpack.c.h.b16 %v2163
        %v5879 = vunpack.c.l.b16 %v2164
        %v5880 = vunpack.c.h.b16 %v2164
        %v5881 = vunpack.c.l.b16 %v2165
        %v5882 = vunpack.c.h.b16 %v2165
        %v5883 = vpack.c.b16 %v3583, %v3579
        %v5884 = vpack.c.b16 %v3584, %v3580
        %v5885 = vpack.c.b16 %v3585, %v3581
        %v5886 = vpack.c.b16 %v3586, %v3582
        %v5887 = vpack.c.b16 %v3591, %v3587
        %v5888 = vpack.c.b16 %v3592, %v3588
        %v5889 = vpack.c.b16 %v3593, %v3589
        %v5890 = vpack.c.b16 %v3594, %v3590
        %v5891 = vpack.c.b16 %v3599, %v3595
        %v5892 = vpack.c.b16 %v3600, %v3596
        %v5893 = vpack.c.b16 %v3601, %v3597
        %v5894 = vpack.c.b16 %v3602, %v3598
        %v5895 = vpack.c.b16 %v3607, %v3603
        %v5896 = vpack.c.b16 %v3608, %v3604
        %v5897 = vpack.c.b16 %v3609, %v3605
        %v5898 = vpack.c.b16 %v3610, %v3606
        %v5899 = vpack.c.b16 %v3615, %v3611
        %v5900 = vpack.c.b16 %v3616, %v3612
        %v5901 = vpack.c.b16 %v3617, %v3613
        %v5902 = vpack.c.b16 %v3618, %v3614
        %v5903 = vpack.c.b16 %v3623, %v3619
        %v5904 = vpack.c.b16 %v3624, %v3620
        %v5905 = vpack.c.b16 %v3625, %v3621
        %v5906 = vpack.c.b16 %v3626, %v3622
        %v5907 = vpack.c.b16 %v3631, %v3627
        %v5908 = vpack.c.b16 %v3632, %v3628
        %v5909 = vpack.c.b16 %v3633, %v3629
        %v5910 = vpack.c.b16 %v3634, %v3630
        %v5911 = vpack.c.b16 %v3639, %v3635
        %v5912 = vpack.c.b16 %v3640, %v3636
        %v5913 = vpack.c.b16 %v3641, %v3637
        %v5914 = vpack.c.b16 %v3642, %v3638
        %v5915 = vpack.c.b16 %v3647, %v3643
        %v5916 = vpack.c.b16 %v3648, %v3644
        %v5917 = vpack.c.b16 %v3649, %v3645
        %v5918 = vpack.c.b16 %v3650, %v3646
        %v5919 = vpack.c.b16 %v3655, %v3651
        %v5920 = vpack.c.b16 %v3656, %v3652
        %v5921 = vpack.c.b16 %v3657, %v3653
        %v5922 = vpack.c.b16 %v3658, %v3654
        %v5923 = vpack.c.b16 %v3663, %v3659
        %v5924 = vpack.c.b16 %v3664, %v3660
        %v5925 = vpack.c.b16 %v3665, %v3661
        %v5926 = vpack.c.b16 %v3666, %v3662
        %v5927 = vpack.c.b16 %v3671, %v3667
        %v5928 = vpack.c.b16 %v3672, %v3668
        %v5929 = vpack.c.b16 %v3673, %v3669
        %v5930 = vpack.c.b16 %v3674, %v3670
        %v5931 = vpack.c.b16 %v3679, %v3675
        %v5932 = vpack.c.b16 %v3680, %v3676
        %v5933 = vpack.c.b16 %v3681, %v3677
        %v5934 = vpack.c.b16 %v3682, %v3678
        %v5935 = vpack.c.b16 %v3687, %v3683
        %v5936 = vpack.c.b16 %v3688, %v3684
        %v5937 = vpack.c.b16 %v3689, %v3685
        %v5938 = vpack.c.b16 %v3690, %v3686
        %v5939 = vpack.c.b16 %v3695, %v3691
        %v5940 = vpack.c.b16 %v3696, %v3692
        %v5941 = vpack.c.b16 %v3697, %v3693
        %v5942 = vpack.c.b16 %v3698, %v3694
        %v5943 = vpack.c.b16 %v3703, %v3699
        %v5944 = vpack.c.b16 %v3704, %v3700
        %v5945 = vpack.c.b16 %v3705, %v3701
        %v5946 = vpack.c.b16 %v3706, %v3702
        %v5947 = vpack.c.b16 %v3711, %v3707
        %v5948 = vpack.c.b16 %v3712, %v3708
        %v5949 = vpack.c.b16 %v3713, %v3709
        %v5950 = vpack.c.b16 %v3714, %v3710
        %v5951 = vpack.c.b16 %v3719, %v3715
        %v5952 = vpack.c.b16 %v3720, %v3716
        %v5953 = vpack.c.b16 %v3721, %v3717
        %v5954 = vpack.c.b16 %v3722, %v3718
        %v5955 = vpack.c.b16 %v3727, %v3723
        %v5956 = vpack.c.b16 %v3728, %v3724
        %v5957 = vpack.c.b16 %v3729, %v3725
        %v5958 = vpack.c.b16 %v3730, %v3726
        %v5959 = vpack.c.b16 %v3735, %v3731
        %v5960 = vpack.c.b16 %v3736, %v3732
        %v5961 = vpack.c.b16 %v3737, %v3733
        %v5962 = vpack.c.b16 %v3738, %v3734
        %v5963 = vpack.c.b16 %v3743, %v3739
        %v5964 = vpack.c.b16 %v3744, %v3740
        %v5965 = vpack.c.b16 %v3745, %v3741
        %v5966 = vpack.c.b16 %v3746, %v3742
        %v5967 = vpack.c.b16 %v3751, %v3747
        %v5968 = vpack.c.b16 %v3752, %v3748
        %v5969 = vpack.c.b16 %v3753, %v3749
        %v5970 = vpack.c.b16 %v3754, %v3750
        %v5971 = vpack.c.b16 %v3759, %v3755
        %v5972 = vpack.c.b16 %v3760, %v3756
        %v5973 = vpack.c.b16 %v3761, %v3757
        %v5974 = vpack.c.b16 %v3762, %v3758
        %v5975 = vpack.c.b16 %v3767, %v3763
        %v5976 = vpack.c.b16 %v3768, %v3764
        %v5977 = vpack.c.b16 %v3769, %v3765
        %v5978 = vpack.c.b16 %v3770, %v3766
        %v5979 = vpack.c.b16 %v3775, %v3771
        %v5980 = vpack.c.b16 %v3776, %v3772
        %v5981 = vpack.c.b16 %v3777, %v3773
        %v5982 = vpack.c.b16 %v3778, %v3774
        %v5983 = vpack.c.b16 %v3783, %v3779
        %v5984 = vpack.c.b16 %v3784, %v3780
        %v5985 = vpack.c.b16 %v3785, %v3781
        %v5986 = vpack.c.b16 %v3786, %v3782
        %v5987 = vpack.c.b16 %v3791, %v3787
        %v5988 = vpack.c.b16 %v3792, %v3788
        %v5989 = vpack.c.b16 %v3793, %v3789
        %v5990 = vpack.c.b16 %v3794, %v3790
        %v5991 = vpack.c.b16 %v3799, %v3795
        %v5992 = vpack.c.b16 %v3800, %v3796
        %v5993 = vpack.c.b16 %v3801, %v3797
        %v5994 = vpack.c.b16 %v3802, %v3798
        %v5995 = vpack.c.b16 %v3807, %v3803
        %v5996 = vpack.c.b16 %v3808, %v3804
        %v5997 = vpack.c.b16 %v3809, %v3805
        %v5998 = vpack.c.b16 %v3810, %v3806
        %v5999 = vpack.c.b16 %v3815, %v3811
        %v6000 = vpack.c.b16 %v3816, %v3812
        %v6001 = vpack.c.b16 %v3817, %v3813
        %v6002 = vpack.c.b16 %v3818, %v3814
        %v6003 = vpack.c.b16 %v3823, %v3819
        %v6004 = vpack.c.b16 %v3824, %v3820
        %v6005 = vpack.c.b16 %v3825, %v3821
        %v6006 = vpack.c.b16 %v3826, %v3822
        %v6007 = vpack.c.b16 %v3831, %v3827
        %v6008 = vpack.c.b16 %v3832, %v3828
        %v6009 = vpack.c.b16 %v3833, %v3829
        %v6010 = vpack.c.b16 %v3834, %v3830
        %v6011 = vpack.c.b16 %v3839, %v3835
        %v6012 = vpack.c.b16 %v3840, %v3836
        %v6013 = vpack.c.b16 %v3841, %v3837
        %v6014 = vpack.c.b16 %v3842, %v3838
        %v6015 = vpack.c.b16 %v3847, %v3843
        %v6016 = vpack.c.b16 %v3848, %v3844
        %v6017 = vpack.c.b16 %v3849, %v3845
        %v6018 = vpack.c.b16 %v3850, %v3846
        %v6019 = vpack.c.b16 %v3855, %v3851
        %v6020 = vpack.c.b16 %v3856, %v3852
        %v6021 = vpack.c.b16 %v3857, %v3853
        %v6022 = vpack.c.b16 %v3858, %v3854
        %v6023 = vpack.c.b16 %v3863, %v3859
        %v6024 = vpack.c.b16 %v3864, %v3860
        %v6025 = vpack.c.b16 %v3865, %v3861
        %v6026 = vpack.c.b16 %v3866, %v3862
        %v6027 = vpack.c.b16 %v3871, %v3867
        %v6028 = vpack.c.b16 %v3872, %v3868
        %v6029 = vpack.c.b16 %v3873, %v3869
        %v6030 = vpack.c.b16 %v3874, %v3870
        %v6031 = vpack.c.b16 %v3879, %v3875
        %v6032 = vpack.c.b16 %v3880, %v3876
        %v6033 = vpack.c.b16 %v3881, %v3877
        %v6034 = vpack.c.b16 %v3882, %v3878
        %v6035 = vpack.c.b16 %v3887, %v3883
        %v6036 = vpack.c.b16 %v3888, %v3884
        %v6037 = vpack.c.b16 %v3889, %v3885
        %v6038 = vpack.c.b16 %v3890, %v3886
        %v6039 = vpack.c.b16 %v3895, %v3891
        %v6040 = vpack.c.b16 %v3896, %v3892
        %v6041 = vpack.c.b16 %v3897, %v3893
        %v6042 = vpack.c.b16 %v3898, %v3894
        %v6043 = vpack.c.b16 %v3903, %v3899
        %v6044 = vpack.c.b16 %v3904, %v3900
        %v6045 = vpack.c.b16 %v3905, %v3901
        %v6046 = vpack.c.b16 %v3906, %v3902
        %v6047 = vpack.c.b16 %v3911, %v3907
        %v6048 = vpack.c.b16 %v3912, %v3908
        %v6049 = vpack.c.b16 %v3913, %v3909
        %v6050 = vpack.c.b16 %v3914, %v3910
        %v6051 = vpack.c.b16 %v3919, %v3915
        %v6052 = vpack.c.b16 %v3920, %v3916
        %v6053 = vpack.c.b16 %v3921, %v3917
        %v6054 = vpack.c.b16 %v3922, %v3918
        %v6055 = vpack.c.b16 %v3927, %v3923
        %v6056 = vpack.c.b16 %v3928, %v3924
        %v6057 = vpack.c.b16 %v3929, %v3925
        %v6058 = vpack.c.b16 %v3930, %v3926
        %v6059 = vpack.c.b16 %v3935, %v3931
        %v6060 = vpack.c.b16 %v3936, %v3932
        %v6061 = vpack.c.b16 %v3937, %v3933
        %v6062 = vpack.c.b16 %v3938, %v3934
        %v6063 = vpack.c.b16 %v3943, %v3939
        %v6064 = vpack.c.b16 %v3944, %v3940
        %v6065 = vpack.c.b16 %v3945, %v3941
        %v6066 = vpack.c.b16 %v3946, %v3942
        %v6067 = vpack.c.b16 %v3951, %v3947
        %v6068 = vpack.c.b16 %v3952, %v3948
        %v6069 = vpack.c.b16 %v3953, %v3949
        %v6070 = vpack.c.b16 %v3954, %v3950
        %v6071 = vpack.c.b16 %v3959, %v3955
        %v6072 = vpack.c.b16 %v3960, %v3956
        %v6073 = vpack.c.b16 %v3961, %v3957
        %v6074 = vpack.c.b16 %v3962, %v3958
        %v6075 = vpack.c.b16 %v3967, %v3963
        %v6076 = vpack.c.b16 %v3968, %v3964
        %v6077 = vpack.c.b16 %v3969, %v3965
        %v6078 = vpack.c.b16 %v3970, %v3966
        %v6079 = vpack.c.b16 %v3975, %v3971
        %v6080 = vpack.c.b16 %v3976, %v3972
        %v6081 = vpack.c.b16 %v3977, %v3973
        %v6082 = vpack.c.b16 %v3978, %v3974
        %v6083 = vpack.c.b16 %v3983, %v3979
        %v6084 = vpack.c.b16 %v3984, %v3980
        %v6085 = vpack.c.b16 %v3985, %v3981
        %v6086 = vpack.c.b16 %v3986, %v3982
        %v6087 = vpack.c.b16 %v3991, %v3987
        %v6088 = vpack.c.b16 %v3992, %v3988
        %v6089 = vpack.c.b16 %v3993, %v3989
        %v6090 = vpack.c.b16 %v3994, %v3990
        %v6091 = vpack.c.b16 %v3999, %v3995
        %v6092 = vpack.c.b16 %v4000, %v3996
        %v6093 = vpack.c.b16 %v4001, %v3997
        %v6094 = vpack.c.b16 %v4002, %v3998
        %v6095 = vpack.c.b16 %v4007, %v4003
        %v6096 = vpack.c.b16 %v4008, %v4004
        %v6097 = vpack.c.b16 %v4009, %v4005
        %v6098 = vpack.c.b16 %v4010, %v4006
        %v6099 = vpack.c.b16 %v4015, %v4011
        %v6100 = vpack.c.b16 %v4016, %v4012
        %v6101 = vpack.c.b16 %v4017, %v4013
        %v6102 = vpack.c.b16 %v4018, %v4014
        %v6103 = vpack.c.b16 %v4023, %v4019
        %v6104 = vpack.c.b16 %v4024, %v4020
        %v6105 = vpack.c.b16 %v4025, %v4021
        %v6106 = vpack.c.b16 %v4026, %v4022
        %v6107 = vpack.c.b16 %v4031, %v4027
        %v6108 = vpack.c.b16 %v4032, %v4028
        %v6109 = vpack.c.b16 %v4033, %v4029
        %v6110 = vpack.c.b16 %v4034, %v4030
        %v6111 = vpack.c.b16 %v4039, %v4035
        %v6112 = vpack.c.b16 %v4040, %v4036
        %v6113 = vpack.c.b16 %v4041, %v4037
        %v6114 = vpack.c.b16 %v4042, %v4038
        %v6115 = vpack.c.b16 %v4047, %v4043
        %v6116 = vpack.c.b16 %v4048, %v4044
        %v6117 = vpack.c.b16 %v4049, %v4045
        %v6118 = vpack.c.b16 %v4050, %v4046
        %v6119 = vpack.c.b16 %v4055, %v4051
        %v6120 = vpack.c.b16 %v4056, %v4052
        %v6121 = vpack.c.b16 %v4057, %v4053
        %v6122 = vpack.c.b16 %v4058, %v4054
        %v6123 = vpack.c.b16 %v4063, %v4059
        %v6124 = vpack.c.b16 %v4064, %v4060
        %v6125 = vpack.c.b16 %v4065, %v4061
        %v6126 = vpack.c.b16 %v4066, %v4062
        %v6127 = vpack.c.b16 %v4071, %v4067
        %v6128 = vpack.c.b16 %v4072, %v4068
        %v6129 = vpack.c.b16 %v4073, %v4069
        %v6130 = vpack.c.b16 %v4074, %v4070
        %v6131 = vpack.c.b16 %v4079, %v4075
        %v6132 = vpack.c.b16 %v4080, %v4076
        %v6133 = vpack.c.b16 %v4081, %v4077
        %v6134 = vpack.c.b16 %v4082, %v4078
        %v6135 = vpack.c.b16 %v4087, %v4083
        %v6136 = vpack.c.b16 %v4088, %v4084
        %v6137 = vpack.c.b16 %v4089, %v4085
        %v6138 = vpack.c.b16 %v4090, %v4086
        %v6139 = vpack.c.b16 %v4095, %v4091
        %v6140 = vpack.c.b16 %v4096, %v4092
        %v6141 = vpack.c.b16 %v4097, %v4093
        %v6142 = vpack.c.b16 %v4098, %v4094
        %v6143 = vpack.c.b16 %v4103, %v4099
        %v6144 = vpack.c.b16 %v4104, %v4100
        %v6145 = vpack.c.b16 %v4105, %v4101
        %v6146 = vpack.c.b16 %v4106, %v4102
        %v6147 = vpack.c.b16 %v4111, %v4107
        %v6148 = vpack.c.b16 %v4112, %v4108
        %v6149 = vpack.c.b16 %v4113, %v4109
        %v6150 = vpack.c.b16 %v4114, %v4110
        %v6151 = vpack.c.b16 %v4119, %v4115
        %v6152 = vpack.c.b16 %v4120, %v4116
        %v6153 = vpack.c.b16 %v4121, %v4117
        %v6154 = vpack.c.b16 %v4122, %v4118
        %v6155 = vpack.c.b16 %v4127, %v4123
        %v6156 = vpack.c.b16 %v4128, %v4124
        %v6157 = vpack.c.b16 %v4129, %v4125
        %v6158 = vpack.c.b16 %v4130, %v4126
        %v6159 = vpack.c.b16 %v4135, %v4131
        %v6160 = vpack.c.b16 %v4136, %v4132
        %v6161 = vpack.c.b16 %v4137, %v4133
        %v6162 = vpack.c.b16 %v4138, %v4134
        %v6163 = vpack.c.b16 %v4143, %v4139
        %v6164 = vpack.c.b16 %v4144, %v4140
        %v6165 = vpack.c.b16 %v4145, %v4141
        %v6166 = vpack.c.b16 %v4146, %v4142
        %v6167 = vpack.c.b16 %v4151, %v4147
        %v6168 = vpack.c.b16 %v4152, %v4148
        %v6169 = vpack.c.b16 %v4153, %v4149
        %v6170 = vpack.c.b16 %v4154, %v4150
        %v6171 = vpack.c.b16 %v4159, %v4155
        %v6172 = vpack.c.b16 %v4160, %v4156
        %v6173 = vpack.c.b16 %v4161, %v4157
        %v6174 = vpack.c.b16 %v4162, %v4158
        %v6175 = vpack.c.b16 %v4167, %v4163
        %v6176 = vpack.c.b16 %v4168, %v4164
        %v6177 = vpack.c.b16 %v4169, %v4165
        %v6178 = vpack.c.b16 %v4170, %v4166
        %v6179 = vpack.c.b16 %v4175, %v4171
        %v6180 = vpack.c.b16 %v4176, %v4172
        %v6181 = vpack.c.b16 %v4177, %v4173
        %v6182 = vpack.c.b16 %v4178, %v4174
        %v6183 = vpack.c.b16 %v4183, %v4179
        %v6184 = vpack.c.b16 %v4184, %v4180
        %v6185 = vpack.c.b16 %v4185, %v4181
        %v6186 = vpack.c.b16 %v4186, %v4182
        %v6187 = vpack.c.b16 %v4191, %v4187
        %v6188 = vpack.c.b16 %v4192, %v4188
        %v6189 = vpack.c.b16 %v4193, %v4189
        %v6190 = vpack.c.b16 %v4194, %v4190
        %v6191 = vpack.c.b16 %v4199, %v4195
        %v6192 = vpack.c.b16 %v4200, %v4196
        %v6193 = vpack.c.b16 %v4201, %v4197
        %v6194 = vpack.c.b16 %v4202, %v4198
        %v6195 = vpack.c.b16 %v4207, %v4203
        %v6196 = vpack.c.b16 %v4208, %v4204
        %v6197 = vpack.c.b16 %v4209, %v4205
        %v6198 = vpack.c.b16 %v4210, %v4206
        %v6199 = vpack.c.b16 %v4215, %v4211
        %v6200 = vpack.c.b16 %v4216, %v4212
        %v6201 = vpack.c.b16 %v4217, %v4213
        %v6202 = vpack.c.b16 %v4218, %v4214
        %v6203 = vpack.c.b16 %v4223, %v4219
        %v6204 = vpack.c.b16 %v4224, %v4220
        %v6205 = vpack.c.b16 %v4225, %v4221
        %v6206 = vpack.c.b16 %v4226, %v4222
        %v6207 = vpack.c.b16 %v4231, %v4227
        %v6208 = vpack.c.b16 %v4232, %v4228
        %v6209 = vpack.c.b16 %v4233, %v4229
        %v6210 = vpack.c.b16 %v4234, %v4230
        %v6211 = vpack.c.b16 %v4239, %v4235
        %v6212 = vpack.c.b16 %v4240, %v4236
        %v6213 = vpack.c.b16 %v4241, %v4237
        %v6214 = vpack.c.b16 %v4242, %v4238
        %v6215 = vpack.c.b16 %v4247, %v4243
        %v6216 = vpack.c.b16 %v4248, %v4244
        %v6217 = vpack.c.b16 %v4249, %v4245
        %v6218 = vpack.c.b16 %v4250, %v4246
        %v6219 = vpack.c.b16 %v4255, %v4251
        %v6220 = vpack.c.b16 %v4256, %v4252
        %v6221 = vpack.c.b16 %v4257, %v4253
        %v6222 = vpack.c.b16 %v4258, %v4254
        %v6223 = vpack.c.b16 %v4263, %v4259
        %v6224 = vpack.c.b16 %v4264, %v4260
        %v6225 = vpack.c.b16 %v4265, %v4261
        %v6226 = vpack.c.b16 %v4266, %v4262
        %v6227 = vpack.c.b16 %v4271, %v4267
        %v6228 = vpack.c.b16 %v4272, %v4268
        %v6229 = vpack.c.b16 %v4273, %v4269
        %v6230 = vpack.c.b16 %v4274, %v4270
        %v6231 = vpack.c.b16 %v4279, %v4275
        %v6232 = vpack.c.b16 %v4280, %v4276
        %v6233 = vpack.c.b16 %v4281, %v4277
        %v6234 = vpack.c.b16 %v4282, %v4278
        %v6235 = vpack.c.b16 %v4287, %v4283
        %v6236 = vpack.c.b16 %v4288, %v4284
        %v6237 = vpack.c.b16 %v4289, %v4285
        %v6238 = vpack.c.b16 %v4290, %v4286
        %v6239 = vpack.c.b16 %v4295, %v4291
        %v6240 = vpack.c.b16 %v4296, %v4292
        %v6241 = vpack.c.b16 %v4297, %v4293
        %v6242 = vpack.c.b16 %v4298, %v4294
        %v6243 = vpack.c.b16 %v4303, %v4299
        %v6244 = vpack.c.b16 %v4304, %v4300
        %v6245 = vpack.c.b16 %v4305, %v4301
        %v6246 = vpack.c.b16 %v4306, %v4302
        %v6247 = vpack.c.b16 %v4311, %v4307
        %v6248 = vpack.c.b16 %v4312, %v4308
        %v6249 = vpack.c.b16 %v4313, %v4309
        %v6250 = vpack.c.b16 %v4314, %v4310
        %v6251 = vpack.c.b16 %v4319, %v4315
        %v6252 = vpack.c.b16 %v4320, %v4316
        %v6253 = vpack.c.b16 %v4321, %v4317
        %v6254 = vpack.c.b16 %v4322, %v4318
        %v6255 = vpack.c.b16 %v4327, %v4323
        %v6256 = vpack.c.b16 %v4328, %v4324
        %v6257 = vpack.c.b16 %v4329, %v4325
        %v6258 = vpack.c.b16 %v4330, %v4326
        %v6259 = vpack.c.b16 %v4335, %v4331
        %v6260 = vpack.c.b16 %v4336, %v4332
        %v6261 = vpack.c.b16 %v4337, %v4333
        %v6262 = vpack.c.b16 %v4338, %v4334
        %v6263 = vpack.c.b16 %v4343, %v4339
        %v6264 = vpack.c.b16 %v4344, %v4340
        %v6265 = vpack.c.b16 %v4345, %v4341
        %v6266 = vpack.c.b16 %v4346, %v4342
        %v6267 = vpack.c.b16 %v4351, %v4347
        %v6268 = vpack.c.b16 %v4352, %v4348
        %v6269 = vpack.c.b16 %v4353, %v4349
        %v6270 = vpack.c.b16 %v4354, %v4350
        %v6271 = vpack.c.b16 %v4359, %v4355
        %v6272 = vpack.c.b16 %v4360, %v4356
        %v6273 = vpack.c.b16 %v4361, %v4357
        %v6274 = vpack.c.b16 %v4362, %v4358
        %v6275 = vpack.c.b16 %v4367, %v4363
        %v6276 = vpack.c.b16 %v4368, %v4364
        %v6277 = vpack.c.b16 %v4369, %v4365
        %v6278 = vpack.c.b16 %v4370, %v4366
        %v6279 = vpack.c.b16 %v4375, %v4371
        %v6280 = vpack.c.b16 %v4376, %v4372
        %v6281 = vpack.c.b16 %v4377, %v4373
        %v6282 = vpack.c.b16 %v4378, %v4374
        %v6283 = vpack.c.b16 %v4383, %v4379
        %v6284 = vpack.c.b16 %v4384, %v4380
        %v6285 = vpack.c.b16 %v4385, %v4381
        %v6286 = vpack.c.b16 %v4386, %v4382
        %v6287 = vpack.c.b16 %v4391, %v4387
        %v6288 = vpack.c.b16 %v4392, %v4388
        %v6289 = vpack.c.b16 %v4393, %v4389
        %v6290 = vpack.c.b16 %v4394, %v4390
        %v6291 = vpack.c.b16 %v4399, %v4395
        %v6292 = vpack.c.b16 %v4400, %v4396
        %v6293 = vpack.c.b16 %v4401, %v4397
        %v6294 = vpack.c.b16 %v4402, %v4398
        %v6295 = vpack.c.b16 %v4407, %v4403
        %v6296 = vpack.c.b16 %v4408, %v4404
        %v6297 = vpack.c.b16 %v4409, %v4405
        %v6298 = vpack.c.b16 %v4410, %v4406
        %v6299 = vpack.c.b16 %v4415, %v4411
        %v6300 = vpack.c.b16 %v4416, %v4412
        %v6301 = vpack.c.b16 %v4417, %v4413
        %v6302 = vpack.c.b16 %v4418, %v4414
        %v6303 = vpack.c.b16 %v4423, %v4419
        %v6304 = vpack.c.b16 %v4424, %v4420
        %v6305 = vpack.c.b16 %v4425, %v4421
        %v6306 = vpack.c.b16 %v4426, %v4422
        %v6307 = vpack.c.b16 %v4431, %v4427
        %v6308 = vpack.c.b16 %v4432, %v4428
        %v6309 = vpack.c.b16 %v4433, %v4429
        %v6310 = vpack.c.b16 %v4434, %v4430
        %v6311 = vpack.c.b16 %v4439, %v4435
        %v6312 = vpack.c.b16 %v4440, %v4436
        %v6313 = vpack.c.b16 %v4441, %v4437
        %v6314 = vpack.c.b16 %v4442, %v4438
        %v6315 = vpack.c.b16 %v4447, %v4443
        %v6316 = vpack.c.b16 %v4448, %v4444
        %v6317 = vpack.c.b16 %v4449, %v4445
        %v6318 = vpack.c.b16 %v4450, %v4446
        %v6319 = vpack.c.b16 %v4455, %v4451
        %v6320 = vpack.c.b16 %v4456, %v4452
        %v6321 = vpack.c.b16 %v4457, %v4453
        %v6322 = vpack.c.b16 %v4458, %v4454
        %v6323 = vpack.c.b16 %v4463, %v4459
        %v6324 = vpack.c.b16 %v4464, %v4460
        %v6325 = vpack.c.b16 %v4465, %v4461
        %v6326 = vpack.c.b16 %v4466, %v4462
        %v6327 = vpack.c.b16 %v4471, %v4467
        %v6328 = vpack.c.b16 %v4472, %v4468
        %v6329 = vpack.c.b16 %v4473, %v4469
        %v6330 = vpack.c.b16 %v4474, %v4470
        %v6331 = vpack.c.b16 %v4479, %v4475
        %v6332 = vpack.c.b16 %v4480, %v4476
        %v6333 = vpack.c.b16 %v4481, %v4477
        %v6334 = vpack.c.b16 %v4482, %v4478
        %v6335 = vpack.c.b16 %v4487, %v4483
        %v6336 = vpack.c.b16 %v4488, %v4484
        %v6337 = vpack.c.b16 %v4489, %v4485
        %v6338 = vpack.c.b16 %v4490, %v4486
        %v6339 = vpack.c.b16 %v4495, %v4491
        %v6340 = vpack.c.b16 %v4496, %v4492
        %v6341 = vpack.c.b16 %v4497, %v4493
        %v6342 = vpack.c.b16 %v4498, %v4494
        %v6343 = vpack.c.b16 %v4503, %v4499
        %v6344 = vpack.c.b16 %v4504, %v4500
        %v6345 = vpack.c.b16 %v4505, %v4501
        %v6346 = vpack.c.b16 %v4506, %v4502
        %v6347 = vpack.c.b16 %v4511, %v4507
        %v6348 = vpack.c.b16 %v4512, %v4508
        %v6349 = vpack.c.b16 %v4513, %v4509
        %v6350 = vpack.c.b16 %v4514, %v4510
        %v6351 = vpack.c.b16 %v4519, %v4515
        %v6352 = vpack.c.b16 %v4520, %v4516
        %v6353 = vpack.c.b16 %v4521, %v4517
        %v6354 = vpack.c.b16 %v4522, %v4518
        %v6355 = vpack.c.b16 %v4527, %v4523
        %v6356 = vpack.c.b16 %v4528, %v4524
        %v6357 = vpack.c.b16 %v4529, %v4525
        %v6358 = vpack.c.b16 %v4530, %v4526
        %v6359 = vpack.c.b16 %v4535, %v4531
        %v6360 = vpack.c.b16 %v4536, %v4532
        %v6361 = vpack.c.b16 %v4537, %v4533
        %v6362 = vpack.c.b16 %v4538, %v4534
        %v6363 = vpack.c.b16 %v4543, %v4539
        %v6364 = vpack.c.b16 %v4544, %v4540
        %v6365 = vpack.c.b16 %v4545, %v4541
        %v6366 = vpack.c.b16 %v4546, %v4542
        %v6367 = vpack.c.b16 %v4551, %v4547
        %v6368 = vpack.c.b16 %v4552, %v4548
        %v6369 = vpack.c.b16 %v4553, %v4549
        %v6370 = vpack.c.b16 %v4554, %v4550
        %v6371 = vpack.c.b16 %v4559, %v4555
        %v6372 = vpack.c.b16 %v4560, %v4556
        %v6373 = vpack.c.b16 %v4561, %v4557
        %v6374 = vpack.c.b16 %v4562, %v4558
        %v6375 = vpack.c.b16 %v4567, %v4563
        %v6376 = vpack.c.b16 %v4568, %v4564
        %v6377 = vpack.c.b16 %v4569, %v4565
        %v6378 = vpack.c.b16 %v4570, %v4566
        %v6379 = vpack.c.b16 %v4575, %v4571
        %v6380 = vpack.c.b16 %v4576, %v4572
        %v6381 = vpack.c.b16 %v4577, %v4573
        %v6382 = vpack.c.b16 %v4578, %v4574
        %v6383 = vpack.c.b16 %v4583, %v4579
        %v6384 = vpack.c.b16 %v4584, %v4580
        %v6385 = vpack.c.b16 %v4585, %v4581
        %v6386 = vpack.c.b16 %v4586, %v4582
        %v6387 = vpack.c.b16 %v4591, %v4587
        %v6388 = vpack.c.b16 %v4592, %v4588
        %v6389 = vpack.c.b16 %v4593, %v4589
        %v6390 = vpack.c.b16 %v4594, %v4590
        %v6391 = vpack.c.b16 %v4599, %v4595
        %v6392 = vpack.c.b16 %v4600, %v4596
        %v6393 = vpack.c.b16 %v4601, %v4597
        %v6394 = vpack.c.b16 %v4602, %v4598
        %v6395 = vpack.c.b16 %v4607, %v4603
        %v6396 = vpack.c.b16 %v4608, %v4604
        %v6397 = vpack.c.b16 %v4609, %v4605
        %v6398 = vpack.c.b16 %v4610, %v4606
        %v6399 = vpack.c.b16 %v4615, %v4611
        %v6400 = vpack.c.b16 %v4616, %v4612
        %v6401 = vpack.c.b16 %v4617, %v4613
        %v6402 = vpack.c.b16 %v4618, %v4614
        %v6403 = vpack.c.b16 %v4623, %v4619
        %v6404 = vpack.c.b16 %v4624, %v4620
        %v6405 = vpack.c.b16 %v4625, %v4621
        %v6406 = vpack.c.b16 %v4626, %v4622
        %v6407 = vpack.c.b16 %v4631, %v4627
        %v6408 = vpack.c.b16 %v4632, %v4628
        %v6409 = vpack.c.b16 %v4633, %v4629
        %v6410 = vpack.c.b16 %v4634, %v4630
        %v6411 = vpack.c.b16 %v4639, %v4635
        %v6412 = vpack.c.b16 %v4640, %v4636
        %v6413 = vpack.c.b16 %v4641, %v4637
        %v6414 = vpack.c.b16 %v4642, %v4638
        %v6415 = vpack.c.b16 %v4647, %v4643
        %v6416 = vpack.c.b16 %v4648, %v4644
        %v6417 = vpack.c.b16 %v4649, %v4645
        %v6418 = vpack.c.b16 %v4650, %v4646
        %v6419 = vpack.c.b16 %v4655, %v4651
        %v6420 = vpack.c.b16 %v4656, %v4652
        %v6421 = vpack.c.b16 %v4657, %v4653
        %v6422 = vpack.c.b16 %v4658, %v4654
        %v6423 = vpack.c.b16 %v4663, %v4659
        %v6424 = vpack.c.b16 %v4664, %v4660
        %v6425 = vpack.c.b16 %v4665, %v4661
        %v6426 = vpack.c.b16 %v4666, %v4662
        %v6427 = vpack.c.b16 %v4671, %v4667
        %v6428 = vpack.c.b16 %v4672, %v4668
        %v6429 = vpack.c.b16 %v4673, %v4669
        %v6430 = vpack.c.b16 %v4674, %v4670
        %v6431 = vpack.c.b16 %v4679, %v4675
        %v6432 = vpack.c.b16 %v4680, %v4676
        %v6433 = vpack.c.b16 %v4681, %v4677
        %v6434 = vpack.c.b16 %v4682, %v4678
        %v6435 = vpack.c.b16 %v4687, %v4683
        %v6436 = vpack.c.b16 %v4688, %v4684
        %v6437 = vpack.c.b16 %v4689, %v4685
        %v6438 = vpack.c.b16 %v4690, %v4686
        %v6439 = vpack.c.b16 %v4695, %v4691
        %v6440 = vpack.c.b16 %v4696, %v4692
        %v6441 = vpack.c.b16 %v4697, %v4693
        %v6442 = vpack.c.b16 %v4698, %v4694
        %v6443 = vpack.c.b16 %v4703, %v4699
        %v6444 = vpack.c.b16 %v4704, %v4700
        %v6445 = vpack.c.b16 %v4705, %v4701
        %v6446 = vpack.c.b16 %v4706, %v4702
        %v6447 = vpack.c.b16 %v4711, %v4707
        %v6448 = vpack.c.b16 %v4712, %v4708
        %v6449 = vpack.c.b16 %v4713, %v4709
        %v6450 = vpack.c.b16 %v4714, %v4710
        %v6451 = vpack.c.b16 %v4719, %v4715
        %v6452 = vpack.c.b16 %v4720, %v4716
        %v6453 = vpack.c.b16 %v4721, %v4717
        %v6454 = vpack.c.b16 %v4722, %v4718
        %v6455 = vpack.c.b16 %v4727, %v4723
        %v6456 = vpack.c.b16 %v4728, %v4724
        %v6457 = vpack.c.b16 %v4729, %v4725
        %v6458 = vpack.c.b16 %v4730, %v4726
        %v6459 = vpack.c.b16 %v4735, %v4731
        %v6460 = vpack.c.b16 %v4736, %v4732
        %v6461 = vpack.c.b16 %v4737, %v4733
        %v6462 = vpack.c.b16 %v4738, %v4734
        %v6463 = vpack.c.b16 %v4743, %v4739
        %v6464 = vpack.c.b16 %v4744, %v4740
        %v6465 = vpack.c.b16 %v4745, %v4741
        %v6466 = vpack.c.b16 %v4746, %v4742
        %v6467 = vpack.c.b16 %v4751, %v4747
        %v6468 = vpack.c.b16 %v4752, %v4748
        %v6469 = vpack.c.b16 %v4753, %v4749
        %v6470 = vpack.c.b16 %v4754, %v4750
        %v6471 = vpack.c.b16 %v4759, %v4755
        %v6472 = vpack.c.b16 %v4760, %v4756
        %v6473 = vpack.c.b16 %v4761, %v4757
        %v6474 = vpack.c.b16 %v4762, %v4758
        %v6475 = vpack.c.b16 %v4767, %v4763
        %v6476 = vpack.c.b16 %v4768, %v4764
        %v6477 = vpack.c.b16 %v4769, %v4765
        %v6478 = vpack.c.b16 %v4770, %v4766
        %v6479 = vpack.c.b16 %v4775, %v4771
        %v6480 = vpack.c.b16 %v4776, %v4772
        %v6481 = vpack.c.b16 %v4777, %v4773
        %v6482 = vpack.c.b16 %v4778, %v4774
        %v6483 = vpack.c.b16 %v4783, %v4779
        %v6484 = vpack.c.b16 %v4784, %v4780
        %v6485 = vpack.c.b16 %v4785, %v4781
        %v6486 = vpack.c.b16 %v4786, %v4782
        %v6487 = vpack.c.b16 %v4791, %v4787
        %v6488 = vpack.c.b16 %v4792, %v4788
        %v6489 = vpack.c.b16 %v4793, %v4789
        %v6490 = vpack.c.b16 %v4794, %v4790
        %v6491 = vpack.c.b16 %v4799, %v4795
        %v6492 = vpack.c.b16 %v4800, %v4796
        %v6493 = vpack.c.b16 %v4801, %v4797
        %v6494 = vpack.c.b16 %v4802, %v4798
        %v6495 = vpack.c.b16 %v4807, %v4803
        %v6496 = vpack.c.b16 %v4808, %v4804
        %v6497 = vpack.c.b16 %v4809, %v4805
        %v6498 = vpack.c.b16 %v4810, %v4806
        %v6499 = vpack.c.b16 %v4815, %v4811
        %v6500 = vpack.c.b16 %v4816, %v4812
        %v6501 = vpack.c.b16 %v4817, %v4813
        %v6502 = vpack.c.b16 %v4818, %v4814
        %v6503 = vpack.c.b16 %v4823, %v4819
        %v6504 = vpack.c.b16 %v4824, %v4820
        %v6505 = vpack.c.b16 %v4825, %v4821
        %v6506 = vpack.c.b16 %v4826, %v4822
        %v6507 = vpack.c.b16 %v4831, %v4827
        %v6508 = vpack.c.b16 %v4832, %v4828
        %v6509 = vpack.c.b16 %v4833, %v4829
        %v6510 = vpack.c.b16 %v4834, %v4830
        %v6511 = vpack.c.b16 %v4839, %v4835
        %v6512 = vpack.c.b16 %v4840, %v4836
        %v6513 = vpack.c.b16 %v4841, %v4837
        %v6514 = vpack.c.b16 %v4842, %v4838
        %v6515 = vpack.c.b16 %v4847, %v4843
        %v6516 = vpack.c.b16 %v4848, %v4844
        %v6517 = vpack.c.b16 %v4849, %v4845
        %v6518 = vpack.c.b16 %v4850, %v4846
        %v6519 = vpack.c.b16 %v4855, %v4851
        %v6520 = vpack.c.b16 %v4856, %v4852
        %v6521 = vpack.c.b16 %v4857, %v4853
        %v6522 = vpack.c.b16 %v4858, %v4854
        %v6523 = vpack.c.b16 %v4863, %v4859
        %v6524 = vpack.c.b16 %v4864, %v4860
        %v6525 = vpack.c.b16 %v4865, %v4861
        %v6526 = vpack.c.b16 %v4866, %v4862
        %v6527 = vpack.c.b16 %v4871, %v4867
        %v6528 = vpack.c.b16 %v4872, %v4868
        %v6529 = vpack.c.b16 %v4873, %v4869
        %v6530 = vpack.c.b16 %v4874, %v4870
        %v6531 = vpack.c.b16 %v4879, %v4875
        %v6532 = vpack.c.b16 %v4880, %v4876
        %v6533 = vpack.c.b16 %v4881, %v4877
        %v6534 = vpack.c.b16 %v4882, %v4878
        %v6535 = vpack.c.b16 %v4887, %v4883
        %v6536 = vpack.c.b16 %v4888, %v4884
        %v6537 = vpack.c.b16 %v4889, %v4885
        %v6538 = vpack.c.b16 %v4890, %v4886
        %v6539 = vpack.c.b16 %v4895, %v4891
        %v6540 = vpack.c.b16 %v4896, %v4892
        %v6541 = vpack.c.b16 %v4897, %v4893
        %v6542 = vpack.c.b16 %v4898, %v4894
        %v6543 = vpack.c.b16 %v4903, %v4899
        %v6544 = vpack.c.b16 %v4904, %v4900
        %v6545 = vpack.c.b16 %v4905, %v4901
        %v6546 = vpack.c.b16 %v4906, %v4902
        %v6547 = vpack.c.b16 %v4911, %v4907
        %v6548 = vpack.c.b16 %v4912, %v4908
        %v6549 = vpack.c.b16 %v4913, %v4909
        %v6550 = vpack.c.b16 %v4914, %v4910
        %v6551 = vpack.c.b16 %v4919, %v4915
        %v6552 = vpack.c.b16 %v4920, %v4916
        %v6553 = vpack.c.b16 %v4921, %v4917
        %v6554 = vpack.c.b16 %v4922, %v4918
        %v6555 = vpack.c.b16 %v4927, %v4923
        %v6556 = vpack.c.b16 %v4928, %v4924
        %v6557 = vpack.c.b16 %v4929, %v4925
        %v6558 = vpack.c.b16 %v4930, %v4926
        %v6559 = vpack.c.b16 %v4935, %v4931
        %v6560 = vpack.c.b16 %v4936, %v4932
        %v6561 = vpack.c.b16 %v4937, %v4933
        %v6562 = vpack.c.b16 %v4938, %v4934
        %v6563 = vpack.c.b16 %v4943, %v4939
        %v6564 = vpack.c.b16 %v4944, %v4940
        %v6565 = vpack.c.b16 %v4945, %v4941
        %v6566 = vpack.c.b16 %v4946, %v4942
        %v6567 = vpack.c.b16 %v4951, %v4947
        %v6568 = vpack.c.b16 %v4952, %v4948
        %v6569 = vpack.c.b16 %v4953, %v4949
        %v6570 = vpack.c.b16 %v4954, %v4950
        %v6571 = vpack.c.b16 %v4959, %v4955
        %v6572 = vpack.c.b16 %v4960, %v4956
        %v6573 = vpack.c.b16 %v4961, %v4957
        %v6574 = vpack.c.b16 %v4962, %v4958
        %v6575 = vpack.c.b16 %v4967, %v4963
        %v6576 = vpack.c.b16 %v4968, %v4964
        %v6577 = vpack.c.b16 %v4969, %v4965
        %v6578 = vpack.c.b16 %v4970, %v4966
        %v6579 = vpack.c.b16 %v4975, %v4971
        %v6580 = vpack.c.b16 %v4976, %v4972
        %v6581 = vpack.c.b16 %v4977, %v4973
        %v6582 = vpack.c.b16 %v4978, %v4974
        %v6583 = vpack.c.b16 %v4983, %v4979
        %v6584 = vpack.c.b16 %v4984, %v4980
        %v6585 = vpack.c.b16 %v4985, %v4981
        %v6586 = vpack.c.b16 %v4986, %v4982
        %v6587 = vpack.c.b16 %v4991, %v4987
        %v6588 = vpack.c.b16 %v4992, %v4988
        %v6589 = vpack.c.b16 %v4993, %v4989
        %v6590 = vpack.c.b16 %v4994, %v4990
        %v6591 = vpack.c.b16 %v4999, %v4995
        %v6592 = vpack.c.b16 %v5000, %v4996
        %v6593 = vpack.c.b16 %v5001, %v4997
        %v6594 = vpack.c.b16 %v5002, %v4998
        %v6595 = vpack.c.b16 %v5007, %v5003
        %v6596 = vpack.c.b16 %v5008, %v5004
        %v6597 = vpack.c.b16 %v5009, %v5005
        %v6598 = vpack.c.b16 %v5010, %v5006
        %v6599 = vpack.c.b16 %v5015, %v5011
        %v6600 = vpack.c.b16 %v5016, %v5012
        %v6601 = vpack.c.b16 %v5017, %v5013
        %v6602 = vpack.c.b16 %v5018, %v5014
        %v6603 = vpack.c.b16 %v5023, %v5019
        %v6604 = vpack.c.b16 %v5024, %v5020
        %v6605 = vpack.c.b16 %v5025, %v5021
        %v6606 = vpack.c.b16 %v5026, %v5022
        %v6607 = vpack.c.b16 %v5031, %v5027
        %v6608 = vpack.c.b16 %v5032, %v5028
        %v6609 = vpack.c.b16 %v5033, %v5029
        %v6610 = vpack.c.b16 %v5034, %v5030
        %v6611 = vpack.c.b16 %v5039, %v5035
        %v6612 = vpack.c.b16 %v5040, %v5036
        %v6613 = vpack.c.b16 %v5041, %v5037
        %v6614 = vpack.c.b16 %v5042, %v5038
        %v6615 = vpack.c.b16 %v5047, %v5043
        %v6616 = vpack.c.b16 %v5048, %v5044
        %v6617 = vpack.c.b16 %v5049, %v5045
        %v6618 = vpack.c.b16 %v5050, %v5046
        %v6619 = vpack.c.b16 %v5055, %v5051
        %v6620 = vpack.c.b16 %v5056, %v5052
        %v6621 = vpack.c.b16 %v5057, %v5053
        %v6622 = vpack.c.b16 %v5058, %v5054
        %v6623 = vpack.c.b16 %v5063, %v5059
        %v6624 = vpack.c.b16 %v5064, %v5060
        %v6625 = vpack.c.b16 %v5065, %v5061
        %v6626 = vpack.c.b16 %v5066, %v5062
        %v6627 = vpack.c.b16 %v5071, %v5067
        %v6628 = vpack.c.b16 %v5072, %v5068
        %v6629 = vpack.c.b16 %v5073, %v5069
        %v6630 = vpack.c.b16 %v5074, %v5070
        %v6631 = vpack.c.b16 %v5079, %v5075
        %v6632 = vpack.c.b16 %v5080, %v5076
        %v6633 = vpack.c.b16 %v5081, %v5077
        %v6634 = vpack.c.b16 %v5082, %v5078
        %v6635 = vpack.c.b16 %v5087, %v5083
        %v6636 = vpack.c.b16 %v5088, %v5084
        %v6637 = vpack.c.b16 %v5089, %v5085
        %v6638 = vpack.c.b16 %v5090, %v5086
        %v6639 = vpack.c.b16 %v5095, %v5091
        %v6640 = vpack.c.b16 %v5096, %v5092
        %v6641 = vpack.c.b16 %v5097, %v5093
        %v6642 = vpack.c.b16 %v5098, %v5094
        %v6643 = vpack.c.b16 %v5103, %v5099
        %v6644 = vpack.c.b16 %v5104, %v5100
        %v6645 = vpack.c.b16 %v5105, %v5101
        %v6646 = vpack.c.b16 %v5106, %v5102
        %v6647 = vpack.c.b16 %v5111, %v5107
        %v6648 = vpack.c.b16 %v5112, %v5108
        %v6649 = vpack.c.b16 %v5113, %v5109
        %v6650 = vpack.c.b16 %v5114, %v5110
        %v6651 = vpack.c.b16 %v5119, %v5115
        %v6652 = vpack.c.b16 %v5120, %v5116
        %v6653 = vpack.c.b16 %v5121, %v5117
        %v6654 = vpack.c.b16 %v5122, %v5118
        %v6655 = vpack.c.b16 %v5127, %v5123
        %v6656 = vpack.c.b16 %v5128, %v5124
        %v6657 = vpack.c.b16 %v5129, %v5125
        %v6658 = vpack.c.b16 %v5130, %v5126
        %v6659 = vpack.c.b16 %v5135, %v5131
        %v6660 = vpack.c.b16 %v5136, %v5132
        %v6661 = vpack.c.b16 %v5137, %v5133
        %v6662 = vpack.c.b16 %v5138, %v5134
        %v6663 = vpack.c.b16 %v5143, %v5139
        %v6664 = vpack.c.b16 %v5144, %v5140
        %v6665 = vpack.c.b16 %v5145, %v5141
        %v6666 = vpack.c.b16 %v5146, %v5142
        %v6667 = vpack.c.b16 %v5151, %v5147
        %v6668 = vpack.c.b16 %v5152, %v5148
        %v6669 = vpack.c.b16 %v5153, %v5149
        %v6670 = vpack.c.b16 %v5154, %v5150
        %v6671 = vpack.c.b16 %v5159, %v5155
        %v6672 = vpack.c.b16 %v5160, %v5156
        %v6673 = vpack.c.b16 %v5161, %v5157
        %v6674 = vpack.c.b16 %v5162, %v5158
        %v6675 = vpack.c.b16 %v5167, %v5163
        %v6676 = vpack.c.b16 %v5168, %v5164
        %v6677 = vpack.c.b16 %v5169, %v5165
        %v6678 = vpack.c.b16 %v5170, %v5166
        %v6679 = vpack.c.b16 %v5175, %v5171
        %v6680 = vpack.c.b16 %v5176, %v5172
        %v6681 = vpack.c.b16 %v5177, %v5173
        %v6682 = vpack.c.b16 %v5178, %v5174
        %v6683 = vpack.c.b16 %v5183, %v5179
        %v6684 = vpack.c.b16 %v5184, %v5180
        %v6685 = vpack.c.b16 %v5185, %v5181
        %v6686 = vpack.c.b16 %v5186, %v5182
        %v6687 = vpack.c.b16 %v5191, %v5187
        %v6688 = vpack.c.b16 %v5192, %v5188
        %v6689 = vpack.c.b16 %v5193, %v5189
        %v6690 = vpack.c.b16 %v5194, %v5190
        %v6691 = vpack.c.b16 %v5199, %v5195
        %v6692 = vpack.c.b16 %v5200, %v5196
        %v6693 = vpack.c.b16 %v5201, %v5197
        %v6694 = vpack.c.b16 %v5202, %v5198
        %v6695 = vpack.c.b16 %v5207, %v5203
        %v6696 = vpack.c.b16 %v5208, %v5204
        %v6697 = vpack.c.b16 %v5209, %v5205
        %v6698 = vpack.c.b16 %v5210, %v5206
        %v6699 = vpack.c.b16 %v5215, %v5211
        %v6700 = vpack.c.b16 %v5216, %v5212
        %v6701 = vpack.c.b16 %v5217, %v5213
        %v6702 = vpack.c.b16 %v5218, %v5214
        %v6703 = vpack.c.b16 %v5223, %v5219
        %v6704 = vpack.c.b16 %v5224, %v5220
        %v6705 = vpack.c.b16 %v5225, %v5221
        %v6706 = vpack.c.b16 %v5226, %v5222
        %v6707 = vpack.c.b16 %v5231, %v5227
        %v6708 = vpack.c.b16 %v5232, %v5228
        %v6709 = vpack.c.b16 %v5233, %v5229
        %v6710 = vpack.c.b16 %v5234, %v5230
        %v6711 = vpack.c.b16 %v5239, %v5235
        %v6712 = vpack.c.b16 %v5240, %v5236
        %v6713 = vpack.c.b16 %v5241, %v5237
        %v6714 = vpack.c.b16 %v5242, %v5238
        %v6715 = vpack.c.b16 %v5247, %v5243
        %v6716 = vpack.c.b16 %v5248, %v5244
        %v6717 = vpack.c.b16 %v5249, %v5245
        %v6718 = vpack.c.b16 %v5250, %v5246
        %v6719 = vpack.c.b16 %v5255, %v5251
        %v6720 = vpack.c.b16 %v5256, %v5252
        %v6721 = vpack.c.b16 %v5257, %v5253
        %v6722 = vpack.c.b16 %v5258, %v5254
        %v6723 = vpack.c.b16 %v5263, %v5259
        %v6724 = vpack.c.b16 %v5264, %v5260
        %v6725 = vpack.c.b16 %v5265, %v5261
        %v6726 = vpack.c.b16 %v5266, %v5262
        %v6727 = vpack.c.b16 %v5271, %v5267
        %v6728 = vpack.c.b16 %v5272, %v5268
        %v6729 = vpack.c.b16 %v5273, %v5269
        %v6730 = vpack.c.b16 %v5274, %v5270
        %v6731 = vpack.c.b16 %v5279, %v5275
        %v6732 = vpack.c.b16 %v5280, %v5276
        %v6733 = vpack.c.b16 %v5281, %v5277
        %v6734 = vpack.c.b16 %v5282, %v5278
        %v6735 = vpack.c.b16 %v5287, %v5283
        %v6736 = vpack.c.b16 %v5288, %v5284
        %v6737 = vpack.c.b16 %v5289, %v5285
        %v6738 = vpack.c.b16 %v5290, %v5286
        %v6739 = vpack.c.b16 %v5295, %v5291
        %v6740 = vpack.c.b16 %v5296, %v5292
        %v6741 = vpack.c.b16 %v5297, %v5293
        %v6742 = vpack.c.b16 %v5298, %v5294
        %v6743 = vpack.c.b16 %v5303, %v5299
        %v6744 = vpack.c.b16 %v5304, %v5300
        %v6745 = vpack.c.b16 %v5305, %v5301
        %v6746 = vpack.c.b16 %v5306, %v5302
        %v6747 = vpack.c.b16 %v5311, %v5307
        %v6748 = vpack.c.b16 %v5312, %v5308
        %v6749 = vpack.c.b16 %v5313, %v5309
        %v6750 = vpack.c.b16 %v5314, %v5310
        %v6751 = vpack.c.b16 %v5319, %v5315
        %v6752 = vpack.c.b16 %v5320, %v5316
        %v6753 = vpack.c.b16 %v5321, %v5317
        %v6754 = vpack.c.b16 %v5322, %v5318
        %v6755 = vpack.c.b16 %v5327, %v5323
        %v6756 = vpack.c.b16 %v5328, %v5324
        %v6757 = vpack.c.b16 %v5329, %v5325
        %v6758 = vpack.c.b16 %v5330, %v5326
        %v6759 = vpack.c.b16 %v5335, %v5331
        %v6760 = vpack.c.b16 %v5336, %v5332
        %v6761 = vpack.c.b16 %v5337, %v5333
        %v6762 = vpack.c.b16 %v5338, %v5334
        %v6763 = vpack.c.b16 %v5343, %v5339
        %v6764 = vpack.c.b16 %v5344, %v5340
        %v6765 = vpack.c.b16 %v5345, %v5341
        %v6766 = vpack.c.b16 %v5346, %v5342
        %v6767 = vpack.c.b16 %v5351, %v5347
        %v6768 = vpack.c.b16 %v5352, %v5348
        %v6769 = vpack.c.b16 %v5353, %v5349
        %v6770 = vpack.c.b16 %v5354, %v5350
        %v6771 = vpack.c.b16 %v5359, %v5355
        %v6772 = vpack.c.b16 %v5360, %v5356
        %v6773 = vpack.c.b16 %v5361, %v5357
        %v6774 = vpack.c.b16 %v5362, %v5358
        %v6775 = vpack.c.b16 %v5367, %v5363
        %v6776 = vpack.c.b16 %v5368, %v5364
        %v6777 = vpack.c.b16 %v5369, %v5365
        %v6778 = vpack.c.b16 %v5370, %v5366
        %v6779 = vpack.c.b16 %v5375, %v5371
        %v6780 = vpack.c.b16 %v5376, %v5372
        %v6781 = vpack.c.b16 %v5377, %v5373
        %v6782 = vpack.c.b16 %v5378, %v5374
        %v6783 = vpack.c.b16 %v5383, %v5379
        %v6784 = vpack.c.b16 %v5384, %v5380
        %v6785 = vpack.c.b16 %v5385, %v5381
        %v6786 = vpack.c.b16 %v5386, %v5382
        %v6787 = vpack.c.b16 %v5391, %v5387
        %v6788 = vpack.c.b16 %v5392, %v5388
        %v6789 = vpack.c.b16 %v5393, %v5389
        %v6790 = vpack.c.b16 %v5394, %v5390
        %v6791 = vpack.c.b16 %v5399, %v5395
        %v6792 = vpack.c.b16 %v5400, %v5396
        %v6793 = vpack.c.b16 %v5401, %v5397
        %v6794 = vpack.c.b16 %v5402, %v5398
        %v6795 = vpack.c.b16 %v5407, %v5403
        %v6796 = vpack.c.b16 %v5408, %v5404
        %v6797 = vpack.c.b16 %v5409, %v5405
        %v6798 = vpack.c.b16 %v5410, %v5406
        %v6799 = vpack.c.b16 %v5415, %v5411
        %v6800 = vpack.c.b16 %v5416, %v5412
        %v6801 = vpack.c.b16 %v5417, %v5413
        %v6802 = vpack.c.b16 %v5418, %v5414
        %v6803 = vpack.c.b16 %v5423, %v5419
        %v6804 = vpack.c.b16 %v5424, %v5420
        %v6805 = vpack.c.b16 %v5425, %v5421
        %v6806 = vpack.c.b16 %v5426, %v5422
        %v6807 = vpack.c.b16 %v5431, %v5427
        %v6808 = vpack.c.b16 %v5432, %v5428
        %v6809 = vpack.c.b16 %v5433, %v5429
        %v6810 = vpack.c.b16 %v5434, %v5430
        %v6811 = vpack.c.b16 %v5439, %v5435
        %v6812 = vpack.c.b16 %v5440, %v5436
        %v6813 = vpack.c.b16 %v5441, %v5437
        %v6814 = vpack.c.b16 %v5442, %v5438
        %v6815 = vpack.c.b16 %v5447, %v5443
        %v6816 = vpack.c.b16 %v5448, %v5444
        %v6817 = vpack.c.b16 %v5449, %v5445
        %v6818 = vpack.c.b16 %v5450, %v5446
        %v6819 = vpack.c.b16 %v5455, %v5451
        %v6820 = vpack.c.b16 %v5456, %v5452
        %v6821 = vpack.c.b16 %v5457, %v5453
        %v6822 = vpack.c.b16 %v5458, %v5454
        %v6823 = vpack.c.b16 %v5463, %v5459
        %v6824 = vpack.c.b16 %v5464, %v5460
        %v6825 = vpack.c.b16 %v5465, %v5461
        %v6826 = vpack.c.b16 %v5466, %v5462
        %v6827 = vpack.c.b16 %v5471, %v5467
        %v6828 = vpack.c.b16 %v5472, %v5468
        %v6829 = vpack.c.b16 %v5473, %v5469
        %v6830 = vpack.c.b16 %v5474, %v5470
        %v6831 = vpack.c.b16 %v5479, %v5475
        %v6832 = vpack.c.b16 %v5480, %v5476
        %v6833 = vpack.c.b16 %v5481, %v5477
        %v6834 = vpack.c.b16 %v5482, %v5478
        %v6835 = vpack.c.b16 %v5487, %v5483
        %v6836 = vpack.c.b16 %v5488, %v5484
        %v6837 = vpack.c.b16 %v5489, %v5485
        %v6838 = vpack.c.b16 %v5490, %v5486
        %v6839 = vpack.c.b16 %v5495, %v5491
        %v6840 = vpack.c.b16 %v5496, %v5492
        %v6841 = vpack.c.b16 %v5497, %v5493
        %v6842 = vpack.c.b16 %v5498, %v5494
        %v6843 = vpack.c.b16 %v5503, %v5499
        %v6844 = vpack.c.b16 %v5504, %v5500
        %v6845 = vpack.c.b16 %v5505, %v5501
        %v6846 = vpack.c.b16 %v5506, %v5502
        %v6847 = vpack.c.b16 %v5511, %v5507
        %v6848 = vpack.c.b16 %v5512, %v5508
        %v6849 = vpack.c.b16 %v5513, %v5509
        %v6850 = vpack.c.b16 %v5514, %v5510
        %v6851 = vpack.c.b16 %v5519, %v5515
        %v6852 = vpack.c.b16 %v5520, %v5516
        %v6853 = vpack.c.b16 %v5521, %v5517
        %v6854 = vpack.c.b16 %v5522, %v5518
        %v6855 = vpack.c.b16 %v5527, %v5523
        %v6856 = vpack.c.b16 %v5528, %v5524
        %v6857 = vpack.c.b16 %v5529, %v5525
        %v6858 = vpack.c.b16 %v5530, %v5526
        %v6859 = vpack.c.b16 %v5535, %v5531
        %v6860 = vpack.c.b16 %v5536, %v5532
        %v6861 = vpack.c.b16 %v5537, %v5533
        %v6862 = vpack.c.b16 %v5538, %v5534
        %v6863 = vpack.c.b16 %v5543, %v5539
        %v6864 = vpack.c.b16 %v5544, %v5540
        %v6865 = vpack.c.b16 %v5545, %v5541
        %v6866 = vpack.c.b16 %v5546, %v5542
        %v6867 = vpack.c.b16 %v5551, %v5547
        %v6868 = vpack.c.b16 %v5552, %v5548
        %v6869 = vpack.c.b16 %v5553, %v5549
        %v6870 = vpack.c.b16 %v5554, %v5550
        %v6871 = vpack.c.b16 %v5559, %v5555
        %v6872 = vpack.c.b16 %v5560, %v5556
        %v6873 = vpack.c.b16 %v5561, %v5557
        %v6874 = vpack.c.b16 %v5562, %v5558
        %v6875 = vpack.c.b16 %v5567, %v5563
        %v6876 = vpack.c.b16 %v5568, %v5564
        %v6877 = vpack.c.b16 %v5569, %v5565
        %v6878 = vpack.c.b16 %v5570, %v5566
        %v6879 = vpack.c.b16 %v5575, %v5571
        %v6880 = vpack.c.b16 %v5576, %v5572
        %v6881 = vpack.c.b16 %v5577, %v5573
        %v6882 = vpack.c.b16 %v5578, %v5574
        %v6883 = vpack.c.b16 %v5583, %v5579
        %v6884 = vpack.c.b16 %v5584, %v5580
        %v6885 = vpack.c.b16 %v5585, %v5581
        %v6886 = vpack.c.b16 %v5586, %v5582
        %v6887 = vpack.c.b16 %v5591, %v5587
        %v6888 = vpack.c.b16 %v5592, %v5588
        %v6889 = vpack.c.b16 %v5593, %v5589
        %v6890 = vpack.c.b16 %v5594, %v5590
        %v6891 = vpack.c.b16 %v5599, %v5595
        %v6892 = vpack.c.b16 %v5600, %v5596
        %v6893 = vpack.c.b16 %v5601, %v5597
        %v6894 = vpack.c.b16 %v5602, %v5598
        %v6895 = vpack.c.b16 %v5607, %v5603
        %v6896 = vpack.c.b16 %v5608, %v5604
        %v6897 = vpack.c.b16 %v5609, %v5605
        %v6898 = vpack.c.b16 %v5610, %v5606
        %v6899 = vpack.c.b16 %v5615, %v5611
        %v6900 = vpack.c.b16 %v5616, %v5612
        %v6901 = vpack.c.b16 %v5617, %v5613
        %v6902 = vpack.c.b16 %v5618, %v5614
        %v6903 = vpack.c.b16 %v5623, %v5619
        %v6904 = vpack.c.b16 %v5624, %v5620
        %v6905 = vpack.c.b16 %v5625, %v5621
        %v6906 = vpack.c.b16 %v5626, %v5622
        %v6907 = vpack.c.b16 %v5631, %v5627
        %v6908 = vpack.c.b16 %v5632, %v5628
        %v6909 = vpack.c.b16 %v5633, %v5629
        %v6910 = vpack.c.b16 %v5634, %v5630
        %v6911 = vpack.c.b16 %v5639, %v5635
        %v6912 = vpack.c.b16 %v5640, %v5636
        %v6913 = vpack.c.b16 %v5641, %v5637
        %v6914 = vpack.c.b16 %v5642, %v5638
        %v6915 = vpack.c.b16 %v5647, %v5643
        %v6916 = vpack.c.b16 %v5648, %v5644
        %v6917 = vpack.c.b16 %v5649, %v5645
        %v6918 = vpack.c.b16 %v5650, %v5646
        %v6919 = vpack.c.b16 %v5655, %v5651
        %v6920 = vpack.c.b16 %v5656, %v5652
        %v6921 = vpack.c.b16 %v5657, %v5653
        %v6922 = vpack.c.b16 %v5658, %v5654
        %v6923 = vpack.c.b16 %v5663, %v5659
        %v6924 = vpack.c.b16 %v5664, %v5660
        %v6925 = vpack.c.b16 %v5665, %v5661
        %v6926 = vpack.c.b16 %v5666, %v5662
        %v6927 = vpack.c.b16 %v5671, %v5667
        %v6928 = vpack.c.b16 %v5672, %v5668
        %v6929 = vpack.c.b16 %v5673, %v5669
        %v6930 = vpack.c.b16 %v5674, %v5670
        %v6931 = vpack.c.b16 %v5679, %v5675
        %v6932 = vpack.c.b16 %v5680, %v5676
        %v6933 = vpack.c.b16 %v5681, %v5677
        %v6934 = vpack.c.b16 %v5682, %v5678
        %v6935 = vpack.c.b16 %v5687, %v5683
        %v6936 = vpack.c.b16 %v5688, %v5684
        %v6937 = vpack.c.b16 %v5689, %v5685
        %v6938 = vpack.c.b16 %v5690, %v5686
        %v6939 = vpack.c.b16 %v5695, %v5691
        %v6940 = vpack.c.b16 %v5696, %v5692
        %v6941 = vpack.c.b16 %v5697, %v5693
        %v6942 = vpack.c.b16 %v5698, %v5694
        %v6943 = vpack.c.b16 %v5703, %v5699
        %v6944 = vpack.c.b16 %v5704, %v5700
        %v6945 = vpack.c.b16 %v5705, %v5701
        %v6946 = vpack.c.b16 %v5706, %v5702
        %v6947 = vpack.c.b16 %v5711, %v5707
        %v6948 = vpack.c.b16 %v5712, %v5708
        %v6949 = vpack.c.b16 %v5713, %v5709
        %v6950 = vpack.c.b16 %v5714, %v5710
        %v6951 = vpack.c.b16 %v5719, %v5715
        %v6952 = vpack.c.b16 %v5720, %v5716
        %v6953 = vpack.c.b16 %v5721, %v5717
        %v6954 = vpack.c.b16 %v5722, %v5718
        %v6955 = vpack.c.b16 %v5727, %v5723
        %v6956 = vpack.c.b16 %v5728, %v5724
        %v6957 = vpack.c.b16 %v5729, %v5725
        %v6958 = vpack.c.b16 %v5730, %v5726
        %v6959 = vpack.c.b16 %v5735, %v5731
        %v6960 = vpack.c.b16 %v5736, %v5732
        %v6961 = vpack.c.b16 %v5737, %v5733
        %v6962 = vpack.c.b16 %v5738, %v5734
        %v6963 = vpack.c.b16 %v5743, %v5739
        %v6964 = vpack.c.b16 %v5744, %v5740
        %v6965 = vpack.c.b16 %v5745, %v5741
        %v6966 = vpack.c.b16 %v5746, %v5742
        %v6967 = vpack.c.b16 %v5751, %v5747
        %v6968 = vpack.c.b16 %v5752, %v5748
        %v6969 = vpack.c.b16 %v5753, %v5749
        %v6970 = vpack.c.b16 %v5754, %v5750
        %v6971 = vpack.c.b16 %v5759, %v5755
        %v6972 = vpack.c.b16 %v5760, %v5756
        %v6973 = vpack.c.b16 %v5761, %v5757
        %v6974 = vpack.c.b16 %v5762, %v5758
        %v6975 = vpack.c.b16 %v5767, %v5763
        %v6976 = vpack.c.b16 %v5768, %v5764
        %v6977 = vpack.c.b16 %v5769, %v5765
        %v6978 = vpack.c.b16 %v5770, %v5766
        %v6979 = vpack.c.b16 %v5775, %v5771
        %v6980 = vpack.c.b16 %v5776, %v5772
        %v6981 = vpack.c.b16 %v5777, %v5773
        %v6982 = vpack.c.b16 %v5778, %v5774
        %v6983 = vpack.c.b16 %v5783, %v5779
        %v6984 = vpack.c.b16 %v5784, %v5780
        %v6985 = vpack.c.b16 %v5785, %v5781
        %v6986 = vpack.c.b16 %v5786, %v5782
        %v6987 = vpack.c.b16 %v5791, %v5787
        %v6988 = vpack.c.b16 %v5792, %v5788
        %v6989 = vpack.c.b16 %v5793, %v5789
        %v6990 = vpack.c.b16 %v5794, %v5790
        %v6991 = vpack.c.b16 %v5799, %v5795
        %v6992 = vpack.c.b16 %v5800, %v5796
        %v6993 = vpack.c.b16 %v5801, %v5797
        %v6994 = vpack.c.b16 %v5802, %v5798
        %v6995 = vpack.c.b16 %v5807, %v5803
        %v6996 = vpack.c.b16 %v5808, %v5804
        %v6997 = vpack.c.b16 %v5809, %v5805
        %v6998 = vpack.c.b16 %v5810, %v5806
        %v6999 = vpack.c.b16 %v5815, %v5811
        %v7000 = vpack.c.b16 %v5816, %v5812
        %v7001 = vpack.c.b16 %v5817, %v5813
        %v7002 = vpack.c.b16 %v5818, %v5814
        %v7003 = vpack.c.b16 %v5823, %v5819
        %v7004 = vpack.c.b16 %v5824, %v5820
        %v7005 = vpack.c.b16 %v5825, %v5821
        %v7006 = vpack.c.b16 %v5826, %v5822
        %v7007 = vpack.c.b16 %v5831, %v5827
        %v7008 = vpack.c.b16 %v5832, %v5828
        %v7009 = vpack.c.b16 %v5833, %v5829
        %v7010 = vpack.c.b16 %v5834, %v5830
        %v7011 = vpack.c.b16 %v5839, %v5835
        %v7012 = vpack.c.b16 %v5840, %v5836
        %v7013 = vpack.c.b16 %v5841, %v5837
        %v7014 = vpack.c.b16 %v5842, %v5838
        %v7015 = vpack.c.b16 %v5847, %v5843
        %v7016 = vpack.c.b16 %v5848, %v5844
        %v7017 = vpack.c.b16 %v5849, %v5845
        %v7018 = vpack.c.b16 %v5850, %v5846
        %v7019 = vpack.c.b16 %v5855, %v5851
        %v7020 = vpack.c.b16 %v5856, %v5852
        %v7021 = vpack.c.b16 %v5857, %v5853
        %v7022 = vpack.c.b16 %v5858, %v5854
        %v7023 = vpack.c.b16 %v5863, %v5859
        %v7024 = vpack.c.b16 %v5864, %v5860
        %v7025 = vpack.c.b16 %v5865, %v5861
        %v7026 = vpack.c.b16 %v5866, %v5862
        %v7027 = vpack.c.b16 %v5871, %v5867
        %v7028 = vpack.c.b16 %v5872, %v5868
        %v7029 = vpack.c.b16 %v5873, %v5869
        %v7030 = vpack.c.b16 %v5874, %v5870
        %v7031 = vpack.c.b16 %v5879, %v5875
        %v7032 = vpack.c.b16 %v5880, %v5876
        %v7033 = vpack.c.b16 %v5881, %v5877
        %v7034 = vpack.c.b16 %v5882, %v5878
        %8187 = vmatprep.subr.bf16.mxu0 %v5884
        %8188 = vmatpush1.bf16.msra.mxu0 %v5883
        %8189 = vmatprep.subr.bf16.mxu0 %v5888
        %8190 = vmatpush1.bf16.msra.mxu0 %v5887
        %8191 = vmatprep.subr.bf16.mxu0 %v5892
        %8192 = vmatpush1.bf16.msra.mxu0 %v5891
        %8193 = vmatprep.subr.bf16.mxu0 %v5896
        %8194 = vmatpush1.bf16.msra.mxu0 %v5895
        %8195 = vmatprep.subr.bf16.mxu0 %v5900
        %8196 = vmatpush1.bf16.msra.mxu0 %v5899
        %8197 = vmatprep.subr.bf16.mxu0 %v5904
        %8198 = vmatpush1.bf16.msra.mxu0 %v5903
        %8199 = vmatprep.subr.bf16.mxu0 %v5908
        %8200 = vmatpush1.bf16.msra.mxu0 %v5907
        %8201 = vmatprep.subr.bf16.mxu0 %v5912
        %8202 = vmatpush1.bf16.msra.mxu0 %v5911
        %8203 = vmatprep.subr.bf16.mxu0 %v5916
        %8204 = vmatpush1.bf16.msra.mxu0 %v5915
        %8205 = vmatprep.subr.bf16.mxu0 %v5920
        %8206 = vmatpush1.bf16.msra.mxu0 %v5919
        %8207 = vmatprep.subr.bf16.mxu0 %v5924
        %8208 = vmatpush1.bf16.msra.mxu0 %v5923
        %8209 = vmatprep.subr.bf16.mxu0 %v5928
        %8210 = vmatpush1.bf16.msra.mxu0 %v5927
        %8211 = vmatprep.subr.bf16.mxu0 %v5932
        %8212 = vmatpush1.bf16.msra.mxu0 %v5931
        %8213 = vmatprep.subr.bf16.mxu0 %v5936
        %8214 = vmatpush1.bf16.msra.mxu0 %v5935
        %8215 = vmatprep.subr.bf16.mxu0 %v5940
        %8216 = vmatpush1.bf16.msra.mxu0 %v5939
        %8217 = vmatprep.subr.bf16.mxu0 %v5944
        %8218 = vmatpush1.bf16.msra.mxu0 %v5943
        %8219 = vmatprep.mubr.bf16.mxu0 %v2208
        %8220 = vmatmul.mubr.bf16.gmra.mrb[0].mxu0 %v2194
        %v8221 = vpop.f32.mrb[0].mxu0
        %v8222 = vadd.f32 0.0, %v8221
        %v8223 = vpop.f32.mrb[0].mxu0
        %v8224 = vadd.f32 0.0, %v8223
        %v8225 = vpop.f32.mrb[0].mxu0
        %v8226 = vpop.f32.mrb[0].mxu0
        %8227 = vdwg.mxu0
        %8228 = vmatprep.subr.bf16.mxu0 %v5948
        %8229 = vmatpush1.bf16.msra.mxu0 %v5947
        %8230 = vmatprep.subr.bf16.mxu0 %v5952
        %8231 = vmatpush1.bf16.msra.mxu0 %v5951
        %8232 = vmatprep.subr.bf16.mxu0 %v5956
        %8233 = vmatpush1.bf16.msra.mxu0 %v5955
        %8234 = vmatprep.subr.bf16.mxu0 %v5960
        %8235 = vmatpush1.bf16.msra.mxu0 %v5959
        %8236 = vmatprep.subr.bf16.mxu0 %v5964
        %8237 = vmatpush1.bf16.msra.mxu0 %v5963
        %8238 = vmatprep.subr.bf16.mxu0 %v5968
        %8239 = vmatpush1.bf16.msra.mxu0 %v5967
        %8240 = vmatprep.subr.bf16.mxu0 %v5972
        %8241 = vmatpush1.bf16.msra.mxu0 %v5971
        %8242 = vmatprep.subr.bf16.mxu0 %v5976
        %8243 = vmatpush1.bf16.msra.mxu0 %v5975
        %8244 = vmatprep.subr.bf16.mxu0 %v5980
        %8245 = vmatpush1.bf16.msra.mxu0 %v5979
        %8246 = vmatprep.subr.bf16.mxu0 %v5984
        %8247 = vmatpush1.bf16.msra.mxu0 %v5983
        %8248 = vmatprep.subr.bf16.mxu0 %v5988
        %8249 = vmatpush1.bf16.msra.mxu0 %v5987
        %8250 = vmatprep.subr.bf16.mxu0 %v5992
        %8251 = vmatpush1.bf16.msra.mxu0 %v5991
        %8252 = vmatprep.subr.bf16.mxu0 %v5996
        %8253 = vmatpush1.bf16.msra.mxu0 %v5995
        %8254 = vmatprep.subr.bf16.mxu0 %v6000
        %8255 = vmatpush1.bf16.msra.mxu0 %v5999
        %8256 = vmatprep.subr.bf16.mxu0 %v6004
        %8257 = vmatpush1.bf16.msra.mxu0 %v6003
        %8258 = vmatprep.subr.bf16.mxu0 %v6008
        %8259 = vmatpush1.bf16.msra.mxu0 %v6007
        %8260 = vmatprep.mubr.bf16.mxu0 %v2218
        %8261 = vmatmul.mubr.bf16.gmra.mrb[0].mxu0 %v2216
        %v8262 = vpop.f32.mrb[0].mxu0
        %v8263 = vadd.f32 %v8222, %v8262
        %v8264 = vpop.f32.mrb[0].mxu0
        %v8265 = vadd.f32 %v8224, %v8264
        %v8266 = vpop.f32.mrb[0].mxu0
        %v8267 = vpop.f32.mrb[0].mxu0
        %8268 = vdwg.mxu0
        %8269 = vmatprep.subr.bf16.mxu0 %v6012
        %8270 = vmatpush1.bf16.msra.mxu0 %v6011
        %8271 = vmatprep.subr.bf16.mxu0 %v6016
        %8272 = vmatpush1.bf16.msra.mxu0 %v6015
        %8273 = vmatprep.subr.bf16.mxu0 %v6020
        %8274 = vmatpush1.bf16.msra.mxu0 %v6019
        %8275 = vmatprep.subr.bf16.mxu0 %v6024
        %8276 = vmatpush1.bf16.msra.mxu0 %v6023
        %8277 = vmatprep.subr.bf16.mxu0 %v6028
        %8278 = vmatpush1.bf16.msra.mxu0 %v6027
        %8279 = vmatprep.subr.bf16.mxu0 %v6032
        %8280 = vmatpush1.bf16.msra.mxu0 %v6031
        %8281 = vmatprep.subr.bf16.mxu0 %v6036
        %8282 = vmatpush1.bf16.msra.mxu0 %v6035
        %8283 = vmatprep.subr.bf16.mxu0 %v6040
        %8284 = vmatpush1.bf16.msra.mxu0 %v6039
        %8285 = vmatprep.subr.bf16.mxu0 %v6044
        %8286 = vmatpush1.bf16.msra.mxu0 %v6043
        %8287 = vmatprep.subr.bf16.mxu0 %v6048
        %8288 = vmatpush1.bf16.msra.mxu0 %v6047
        %8289 = vmatprep.subr.bf16.mxu0 %v6052
        %8290 = vmatpush1.bf16.msra.mxu0 %v6051
        %8291 = vmatprep.subr.bf16.mxu0 %v6056
        %8292 = vmatpush1.bf16.msra.mxu0 %v6055
        %8293 = vmatprep.subr.bf16.mxu0 %v6060
        %8294 = vmatpush1.bf16.msra.mxu0 %v6059
        %8295 = vmatprep.subr.bf16.mxu0 %v6064
        %8296 = vmatpush1.bf16.msra.mxu0 %v6063
        %8297 = vmatprep.subr.bf16.mxu0 %v6068
        %8298 = vmatpush1.bf16.msra.mxu0 %v6067
        %8299 = vmatprep.subr.bf16.mxu0 %v6072
        %8300 = vmatpush1.bf16.msra.mxu0 %v6071
        %8301 = vmatprep.mubr.bf16.mxu0 %v2215
        %8302 = vmatmul.mubr.bf16.gmra.mrb[0].mxu0 %v2201
        %v8303 = vpop.f32.mrb[0].mxu0
        %v8304 = vadd.f32 %v8263, %v8303
        %v8305 = vpop.f32.mrb[0].mxu0
        %v8306 = vadd.f32 %v8265, %v8305
        %v8307 = vpop.f32.mrb[0].mxu0
        %v8308 = vpop.f32.mrb[0].mxu0
        %8309 = vdwg.mxu0
        %8310 = vmatprep.subr.bf16.mxu0 %v6076
        %8311 = vmatpush1.bf16.msra.mxu0 %v6075
        %8312 = vmatprep.subr.bf16.mxu0 %v6080
        %8313 = vmatpush1.bf16.msra.mxu0 %v6079
        %8314 = vmatprep.subr.bf16.mxu0 %v6084
        %8315 = vmatpush1.bf16.msra.mxu0 %v6083
        %8316 = vmatprep.subr.bf16.mxu0 %v6088
        %8317 = vmatpush1.bf16.msra.mxu0 %v6087
        %8318 = vmatprep.subr.bf16.mxu0 %v6092
        %8319 = vmatpush1.bf16.msra.mxu0 %v6091
        %8320 = vmatprep.subr.bf16.mxu0 %v6096
        %8321 = vmatpush1.bf16.msra.mxu0 %v6095
        %8322 = vmatprep.subr.bf16.mxu0 %v6100
        %8323 = vmatpush1.bf16.msra.mxu0 %v6099
        %8324 = vmatprep.subr.bf16.mxu0 %v6104
        %8325 = vmatpush1.bf16.msra.mxu0 %v6103
        %8326 = vmatprep.subr.bf16.mxu0 %v6108
        %8327 = vmatpush1.bf16.msra.mxu0 %v6107
        %8328 = vmatprep.subr.bf16.mxu0 %v6112
        %8329 = vmatpush1.bf16.msra.mxu0 %v6111
        %8330 = vmatprep.subr.bf16.mxu0 %v6116
        %8331 = vmatpush1.bf16.msra.mxu0 %v6115
        %8332 = vmatprep.subr.bf16.mxu0 %v6120
        %8333 = vmatpush1.bf16.msra.mxu0 %v6119
        %8334 = vmatprep.subr.bf16.mxu0 %v6124
        %8335 = vmatpush1.bf16.msra.mxu0 %v6123
        %8336 = vmatprep.subr.bf16.mxu0 %v6128
        %8337 = vmatpush1.bf16.msra.mxu0 %v6127
        %8338 = vmatprep.subr.bf16.mxu0 %v6132
        %8339 = vmatpush1.bf16.msra.mxu0 %v6131
        %8340 = vmatprep.subr.bf16.mxu0 %v6136
        %8341 = vmatpush1.bf16.msra.mxu0 %v6135
        %8342 = vmatprep.mubr.bf16.mxu0 %v2219
        %8343 = vmatmul.mubr.bf16.gmra.mrb[0].mxu0 %v2217
        %v8344 = vpop.f32.mrb[0].mxu0
        %v8345 = vadd.f32 %v8304, %v8344
        %v8346 = vpop.f32.mrb[0].mxu0
        %v8347 = vadd.f32 %v8306, %v8346
        %v8348 = vpop.f32.mrb[0].mxu0
        %v8349 = vpop.f32.mrb[0].mxu0
        %8350 = vdwg.mxu0
        %8351 = vmatprep.subr.bf16.mxu0 %v6140
        %8352 = vmatpush1.bf16.msra.mxu0 %v6139
        %8353 = vmatprep.subr.bf16.mxu0 %v6144
        %8354 = vmatpush1.bf16.msra.mxu0 %v6143
        %8355 = vmatprep.subr.bf16.mxu0 %v6148
        %8356 = vmatpush1.bf16.msra.mxu0 %v6147
        %8357 = vmatprep.subr.bf16.mxu0 %v6152
        %8358 = vmatpush1.bf16.msra.mxu0 %v6151
        %8359 = vmatprep.subr.bf16.mxu0 %v6156
        %8360 = vmatpush1.bf16.msra.mxu0 %v6155
        %8361 = vmatprep.subr.bf16.mxu0 %v6160
        %8362 = vmatpush1.bf16.msra.mxu0 %v6159
        %8363 = vmatprep.subr.bf16.mxu0 %v6164
        %8364 = vmatpush1.bf16.msra.mxu0 %v6163
        %8365 = vmatprep.subr.bf16.mxu0 %v6168
        %8366 = vmatpush1.bf16.msra.mxu0 %v6167
        %8367 = vmatprep.subr.bf16.mxu0 %v6172
        %8368 = vmatpush1.bf16.msra.mxu0 %v6171
        %8369 = vmatprep.subr.bf16.mxu0 %v6176
        %8370 = vmatpush1.bf16.msra.mxu0 %v6175
        %8371 = vmatprep.subr.bf16.mxu0 %v6180
        %8372 = vmatpush1.bf16.msra.mxu0 %v6179
        %8373 = vmatprep.subr.bf16.mxu0 %v6184
        %8374 = vmatpush1.bf16.msra.mxu0 %v6183
        %8375 = vmatprep.subr.bf16.mxu0 %v6188
        %8376 = vmatpush1.bf16.msra.mxu0 %v6187
        %8377 = vmatprep.subr.bf16.mxu0 %v6192
        %8378 = vmatpush1.bf16.msra.mxu0 %v6191
        %8379 = vmatprep.subr.bf16.mxu0 %v6196
        %8380 = vmatpush1.bf16.msra.mxu0 %v6195
        %8381 = vmatprep.subr.bf16.mxu0 %v6200
        %8382 = vmatpush1.bf16.msra.mxu0 %v6199
        %8383 = vmatprep.mubr.bf16.mxu0 %v2257
        %8384 = vmatmul.mubr.bf16.gmra.mrb[0].mxu0 %v2243
        %v8385 = vpop.f32.mrb[0].mxu0
        %v8386 = vadd.f32 %v8345, %v8385
        %v8387 = vpop.f32.mrb[0].mxu0
        %v8388 = vadd.f32 %v8347, %v8387
        %v8389 = vpop.f32.mrb[0].mxu0
        %v8390 = vpop.f32.mrb[0].mxu0
        %8391 = vdwg.mxu0
        %8392 = vmatprep.subr.bf16.mxu0 %v6204
        %8393 = vmatpush1.bf16.msra.mxu0 %v6203
        %8394 = vmatprep.subr.bf16.mxu0 %v6208
        %8395 = vmatpush1.bf16.msra.mxu0 %v6207
        %8396 = vmatprep.subr.bf16.mxu0 %v6212
        %8397 = vmatpush1.bf16.msra.mxu0 %v6211
        %8398 = vmatprep.subr.bf16.mxu0 %v6216
        %8399 = vmatpush1.bf16.msra.mxu0 %v6215
        %8400 = vmatprep.subr.bf16.mxu0 %v6220
        %8401 = vmatpush1.bf16.msra.mxu0 %v6219
        %8402 = vmatprep.subr.bf16.mxu0 %v6224
        %8403 = vmatpush1.bf16.msra.mxu0 %v6223
        %8404 = vmatprep.subr.bf16.mxu0 %v6228
        %8405 = vmatpush1.bf16.msra.mxu0 %v6227
        %8406 = vmatprep.subr.bf16.mxu0 %v6232
        %8407 = vmatpush1.bf16.msra.mxu0 %v6231
        %8408 = vmatprep.subr.bf16.mxu0 %v6236
        %8409 = vmatpush1.bf16.msra.mxu0 %v6235
        %8410 = vmatprep.subr.bf16.mxu0 %v6240
        %8411 = vmatpush1.bf16.msra.mxu0 %v6239
        %8412 = vmatprep.subr.bf16.mxu0 %v6244
        %8413 = vmatpush1.bf16.msra.mxu0 %v6243
        %8414 = vmatprep.subr.bf16.mxu0 %v6248
        %8415 = vmatpush1.bf16.msra.mxu0 %v6247
        %8416 = vmatprep.subr.bf16.mxu0 %v6252
        %8417 = vmatpush1.bf16.msra.mxu0 %v6251
        %8418 = vmatprep.subr.bf16.mxu0 %v6256
        %8419 = vmatpush1.bf16.msra.mxu0 %v6255
        %8420 = vmatprep.subr.bf16.mxu0 %v6260
        %8421 = vmatpush1.bf16.msra.mxu0 %v6259
        %8422 = vmatprep.subr.bf16.mxu0 %v6264
        %8423 = vmatpush1.bf16.msra.mxu0 %v6263
        %8424 = vmatprep.mubr.bf16.mxu0 %v2267
        %8425 = vmatmul.mubr.bf16.gmra.mrb[0].mxu0 %v2265
        %v8426 = vpop.f32.mrb[0].mxu0
        %v8427 = vadd.f32 %v8386, %v8426
        %v8428 = vpop.f32.mrb[0].mxu0
        %v8429 = vadd.f32 %v8388, %v8428
        %v8430 = vpop.f32.mrb[0].mxu0
        %v8431 = vpop.f32.mrb[0].mxu0
        %8432 = vdwg.mxu0
        %8433 = vmatprep.subr.bf16.mxu0 %v6268
        %8434 = vmatpush1.bf16.msra.mxu0 %v6267
        %8435 = vmatprep.subr.bf16.mxu0 %v6272
        %8436 = vmatpush1.bf16.msra.mxu0 %v6271
        %8437 = vmatprep.subr.bf16.mxu0 %v6276
        %8438 = vmatpush1.bf16.msra.mxu0 %v6275
        %8439 = vmatprep.subr.bf16.mxu0 %v6280
        %8440 = vmatpush1.bf16.msra.mxu0 %v6279
        %8441 = vmatprep.subr.bf16.mxu0 %v6284
        %8442 = vmatpush1.bf16.msra.mxu0 %v6283
        %8443 = vmatprep.subr.bf16.mxu0 %v6288
        %8444 = vmatpush1.bf16.msra.mxu0 %v6287
        %8445 = vmatprep.subr.bf16.mxu0 %v6292
        %8446 = vmatpush1.bf16.msra.mxu0 %v6291
        %8447 = vmatprep.subr.bf16.mxu0 %v6296
        %8448 = vmatpush1.bf16.msra.mxu0 %v6295
        %8449 = vmatprep.subr.bf16.mxu0 %v6300
        %8450 = vmatpush1.bf16.msra.mxu0 %v6299
        %8451 = vmatprep.subr.bf16.mxu0 %v6304
        %8452 = vmatpush1.bf16.msra.mxu0 %v6303
        %8453 = vmatprep.subr.bf16.mxu0 %v6308
        %8454 = vmatpush1.bf16.msra.mxu0 %v6307
        %8455 = vmatprep.subr.bf16.mxu0 %v6312
        %8456 = vmatpush1.bf16.msra.mxu0 %v6311
        %8457 = vmatprep.subr.bf16.mxu0 %v6316
        %8458 = vmatpush1.bf16.msra.mxu0 %v6315
        %8459 = vmatprep.subr.bf16.mxu0 %v6320
        %8460 = vmatpush1.bf16.msra.mxu0 %v6319
        %8461 = vmatprep.subr.bf16.mxu0 %v6324
        %8462 = vmatpush1.bf16.msra.mxu0 %v6323
        %8463 = vmatprep.subr.bf16.mxu0 %v6328
        %8464 = vmatpush1.bf16.msra.mxu0 %v6327
        %8465 = vmatprep.mubr.bf16.mxu0 %v2264
        %8466 = vmatmul.mubr.bf16.gmra.mrb[0].mxu0 %v2250
        %v8467 = vpop.f32.mrb[0].mxu0
        %v8468 = vadd.f32 %v8427, %v8467
        %v8469 = vpop.f32.mrb[0].mxu0
        %v8470 = vadd.f32 %v8429, %v8469
        %v8471 = vpop.f32.mrb[0].mxu0
        %v8472 = vpop.f32.mrb[0].mxu0
        %8473 = vdwg.mxu0
        %8474 = vmatprep.subr.bf16.mxu0 %v6332
        %8475 = vmatpush1.bf16.msra.mxu0 %v6331
        %8476 = vmatprep.subr.bf16.mxu0 %v6336
        %8477 = vmatpush1.bf16.msra.mxu0 %v6335
        %8478 = vmatprep.subr.bf16.mxu0 %v6340
        %8479 = vmatpush1.bf16.msra.mxu0 %v6339
        %8480 = vmatprep.subr.bf16.mxu0 %v6344
        %8481 = vmatpush1.bf16.msra.mxu0 %v6343
        %8482 = vmatprep.subr.bf16.mxu0 %v6348
        %8483 = vmatpush1.bf16.msra.mxu0 %v6347
        %8484 = vmatprep.subr.bf16.mxu0 %v6352
        %8485 = vmatpush1.bf16.msra.mxu0 %v6351
        %8486 = vmatprep.subr.bf16.mxu0 %v6356
        %8487 = vmatpush1.bf16.msra.mxu0 %v6355
        %8488 = vmatprep.subr.bf16.mxu0 %v6360
        %8489 = vmatpush1.bf16.msra.mxu0 %v6359
        %8490 = vmatprep.subr.bf16.mxu0 %v6364
        %8491 = vmatpush1.bf16.msra.mxu0 %v6363
        %8492 = vmatprep.subr.bf16.mxu0 %v6368
        %8493 = vmatpush1.bf16.msra.mxu0 %v6367
        %8494 = vmatprep.subr.bf16.mxu0 %v6372
        %8495 = vmatpush1.bf16.msra.mxu0 %v6371
        %8496 = vmatprep.subr.bf16.mxu0 %v6376
        %8497 = vmatpush1.bf16.msra.mxu0 %v6375
        %8498 = vmatprep.subr.bf16.mxu0 %v6380
        %8499 = vmatpush1.bf16.msra.mxu0 %v6379
        %8500 = vmatprep.subr.bf16.mxu0 %v6384
        %8501 = vmatpush1.bf16.msra.mxu0 %v6383
        %8502 = vmatprep.subr.bf16.mxu0 %v6388
        %8503 = vmatpush1.bf16.msra.mxu0 %v6387
        %8504 = vmatprep.subr.bf16.mxu0 %v6392
        %8505 = vmatpush1.bf16.msra.mxu0 %v6391
        %8506 = vmatprep.mubr.bf16.mxu0 %v2268
        %8507 = vmatmul.mubr.bf16.gmra.mrb[0].mxu0 %v2266
        %v8508 = vpop.f32.mrb[0].mxu0
        %v8509 = vadd.f32 %v8468, %v8508
        %v8510 = vpop.f32.mrb[0].mxu0
        %v8511 = vadd.f32 %v8470, %v8510
        %v8512 = vpop.f32.mrb[0].mxu0
        %v8513 = vpop.f32.mrb[0].mxu0
        %8514 = vdwg.mxu0
        %8515 = vmatprep.subr.bf16.mxu0 %v6396
        %8516 = vmatpush1.bf16.msra.mxu0 %v6395
        %8517 = vmatprep.subr.bf16.mxu0 %v6400
        %8518 = vmatpush1.bf16.msra.mxu0 %v6399
        %8519 = vmatprep.subr.bf16.mxu0 %v6404
        %8520 = vmatpush1.bf16.msra.mxu0 %v6403
        %8521 = vmatprep.subr.bf16.mxu0 %v6408
        %8522 = vmatpush1.bf16.msra.mxu0 %v6407
        %8523 = vmatprep.subr.bf16.mxu0 %v6412
        %8524 = vmatpush1.bf16.msra.mxu0 %v6411
        %8525 = vmatprep.subr.bf16.mxu0 %v6416
        %8526 = vmatpush1.bf16.msra.mxu0 %v6415
        %8527 = vmatprep.subr.bf16.mxu0 %v6420
        %8528 = vmatpush1.bf16.msra.mxu0 %v6419
        %8529 = vmatprep.subr.bf16.mxu0 %v6424
        %8530 = vmatpush1.bf16.msra.mxu0 %v6423
        %8531 = vmatprep.subr.bf16.mxu0 %v6428
        %8532 = vmatpush1.bf16.msra.mxu0 %v6427
        %8533 = vmatprep.subr.bf16.mxu0 %v6432
        %8534 = vmatpush1.bf16.msra.mxu0 %v6431
        %8535 = vmatprep.subr.bf16.mxu0 %v6436
        %8536 = vmatpush1.bf16.msra.mxu0 %v6435
        %8537 = vmatprep.subr.bf16.mxu0 %v6440
        %8538 = vmatpush1.bf16.msra.mxu0 %v6439
        %8539 = vmatprep.subr.bf16.mxu0 %v6444
        %8540 = vmatpush1.bf16.msra.mxu0 %v6443
        %8541 = vmatprep.subr.bf16.mxu0 %v6448
        %8542 = vmatpush1.bf16.msra.mxu0 %v6447
        %8543 = vmatprep.subr.bf16.mxu0 %v6452
        %8544 = vmatpush1.bf16.msra.mxu0 %v6451
        %8545 = vmatprep.subr.bf16.mxu0 %v6456
        %8546 = vmatpush1.bf16.msra.mxu0 %v6455
        %8547 = vmatprep.mubr.bf16.mxu0 %v2306
        %8548 = vmatmul.mubr.bf16.gmra.mrb[0].mxu0 %v2292
        %v8549 = vpop.f32.mrb[0].mxu0
        %v8550 = vadd.f32 %v8509, %v8549
        %v8551 = vpop.f32.mrb[0].mxu0
        %v8552 = vadd.f32 %v8511, %v8551
        %v8553 = vpop.f32.mrb[0].mxu0
        %v8554 = vpop.f32.mrb[0].mxu0
        %8555 = vdwg.mxu0
        %8556 = vmatprep.subr.bf16.mxu0 %v6460
        %8557 = vmatpush1.bf16.msra.mxu0 %v6459
        %8558 = vmatprep.subr.bf16.mxu0 %v6464
        %8559 = vmatpush1.bf16.msra.mxu0 %v6463
        %8560 = vmatprep.subr.bf16.mxu0 %v6468
        %8561 = vmatpush1.bf16.msra.mxu0 %v6467
        %8562 = vmatprep.subr.bf16.mxu0 %v6472
        %8563 = vmatpush1.bf16.msra.mxu0 %v6471
        %8564 = vmatprep.subr.bf16.mxu0 %v6476
        %8565 = vmatpush1.bf16.msra.mxu0 %v6475
        %8566 = vmatprep.subr.bf16.mxu0 %v6480
        %8567 = vmatpush1.bf16.msra.mxu0 %v6479
        %8568 = vmatprep.subr.bf16.mxu0 %v6484
        %8569 = vmatpush1.bf16.msra.mxu0 %v6483
        %8570 = vmatprep.subr.bf16.mxu0 %v6488
        %8571 = vmatpush1.bf16.msra.mxu0 %v6487
        %8572 = vmatprep.subr.bf16.mxu0 %v6492
        %8573 = vmatpush1.bf16.msra.mxu0 %v6491
        %8574 = vmatprep.subr.bf16.mxu0 %v6496
        %8575 = vmatpush1.bf16.msra.mxu0 %v6495
        %8576 = vmatprep.subr.bf16.mxu0 %v6500
        %8577 = vmatpush1.bf16.msra.mxu0 %v6499
        %8578 = vmatprep.subr.bf16.mxu0 %v6504
        %8579 = vmatpush1.bf16.msra.mxu0 %v6503
        %8580 = vmatprep.subr.bf16.mxu0 %v6508
        %8581 = vmatpush1.bf16.msra.mxu0 %v6507
        %8582 = vmatprep.subr.bf16.mxu0 %v6512
        %8583 = vmatpush1.bf16.msra.mxu0 %v6511
        %8584 = vmatprep.subr.bf16.mxu0 %v6516
        %8585 = vmatpush1.bf16.msra.mxu0 %v6515
        %8586 = vmatprep.subr.bf16.mxu0 %v6520
        %8587 = vmatpush1.bf16.msra.mxu0 %v6519
        %8588 = vmatprep.mubr.bf16.mxu0 %v2316
        %8589 = vmatmul.mubr.bf16.gmra.mrb[0].mxu0 %v2314
        %v8590 = vpop.f32.mrb[0].mxu0
        %v8591 = vadd.f32 %v8550, %v8590
        %v8592 = vpop.f32.mrb[0].mxu0
        %v8593 = vadd.f32 %v8552, %v8592
        %v8594 = vpop.f32.mrb[0].mxu0
        %v8595 = vpop.f32.mrb[0].mxu0
        %8596 = vdwg.mxu0
        %8597 = vmatprep.subr.bf16.mxu0 %v6524
        %8598 = vmatpush1.bf16.msra.mxu0 %v6523
        %8599 = vmatprep.subr.bf16.mxu0 %v6528
        %8600 = vmatpush1.bf16.msra.mxu0 %v6527
        %8601 = vmatprep.subr.bf16.mxu0 %v6532
        %8602 = vmatpush1.bf16.msra.mxu0 %v6531
        %8603 = vmatprep.subr.bf16.mxu0 %v6536
        %8604 = vmatpush1.bf16.msra.mxu0 %v6535
        %8605 = vmatprep.subr.bf16.mxu0 %v6540
        %8606 = vmatpush1.bf16.msra.mxu0 %v6539
        %8607 = vmatprep.subr.bf16.mxu0 %v6544
        %8608 = vmatpush1.bf16.msra.mxu0 %v6543
        %8609 = vmatprep.subr.bf16.mxu0 %v6548
        %8610 = vmatpush1.bf16.msra.mxu0 %v6547
        %8611 = vmatprep.subr.bf16.mxu0 %v6552
        %8612 = vmatpush1.bf16.msra.mxu0 %v6551
        %8613 = vmatprep.subr.bf16.mxu0 %v6556
        %8614 = vmatpush1.bf16.msra.mxu0 %v6555
        %8615 = vmatprep.subr.bf16.mxu0 %v6560
        %8616 = vmatpush1.bf16.msra.mxu0 %v6559
        %8617 = vmatprep.subr.bf16.mxu0 %v6564
        %8618 = vmatpush1.bf16.msra.mxu0 %v6563
        %8619 = vmatprep.subr.bf16.mxu0 %v6568
        %8620 = vmatpush1.bf16.msra.mxu0 %v6567
        %8621 = vmatprep.subr.bf16.mxu0 %v6572
        %8622 = vmatpush1.bf16.msra.mxu0 %v6571
        %8623 = vmatprep.subr.bf16.mxu0 %v6576
        %8624 = vmatpush1.bf16.msra.mxu0 %v6575
        %8625 = vmatprep.subr.bf16.mxu0 %v6580
        %8626 = vmatpush1.bf16.msra.mxu0 %v6579
        %8627 = vmatprep.subr.bf16.mxu0 %v6584
        %8628 = vmatpush1.bf16.msra.mxu0 %v6583
        %8629 = vmatprep.mubr.bf16.mxu0 %v2313
        %8630 = vmatmul.mubr.bf16.gmra.mrb[0].mxu0 %v2299
        %v8631 = vpop.f32.mrb[0].mxu0
        %v8632 = vadd.f32 %v8591, %v8631
        %v8633 = vpop.f32.mrb[0].mxu0
        %v8634 = vadd.f32 %v8593, %v8633
        %v8635 = vpop.f32.mrb[0].mxu0
        %v8636 = vpop.f32.mrb[0].mxu0
        %8637 = vdwg.mxu0
        %8638 = vmatprep.subr.bf16.mxu0 %v6588
        %8639 = vmatpush1.bf16.msra.mxu0 %v6587
        %8640 = vmatprep.subr.bf16.mxu0 %v6592
        %8641 = vmatpush1.bf16.msra.mxu0 %v6591
        %8642 = vmatprep.subr.bf16.mxu0 %v6596
        %8643 = vmatpush1.bf16.msra.mxu0 %v6595
        %8644 = vmatprep.subr.bf16.mxu0 %v6600
        %8645 = vmatpush1.bf16.msra.mxu0 %v6599
        %8646 = vmatprep.subr.bf16.mxu0 %v6604
        %8647 = vmatpush1.bf16.msra.mxu0 %v6603
        %8648 = vmatprep.subr.bf16.mxu0 %v6608
        %8649 = vmatpush1.bf16.msra.mxu0 %v6607
        %8650 = vmatprep.subr.bf16.mxu0 %v6612
        %8651 = vmatpush1.bf16.msra.mxu0 %v6611
        %8652 = vmatprep.subr.bf16.mxu0 %v6616
        %8653 = vmatpush1.bf16.msra.mxu0 %v6615
        %8654 = vmatprep.subr.bf16.mxu0 %v6620
        %8655 = vmatpush1.bf16.msra.mxu0 %v6619
        %8656 = vmatprep.subr.bf16.mxu0 %v6624
        %8657 = vmatpush1.bf16.msra.mxu0 %v6623
        %8658 = vmatprep.subr.bf16.mxu0 %v6628
        %8659 = vmatpush1.bf16.msra.mxu0 %v6627
        %8660 = vmatprep.subr.bf16.mxu0 %v6632
        %8661 = vmatpush1.bf16.msra.mxu0 %v6631
        %8662 = vmatprep.subr.bf16.mxu0 %v6636
        %8663 = vmatpush1.bf16.msra.mxu0 %v6635
        %8664 = vmatprep.subr.bf16.mxu0 %v6640
        %8665 = vmatpush1.bf16.msra.mxu0 %v6639
        %8666 = vmatprep.subr.bf16.mxu0 %v6644
        %8667 = vmatpush1.bf16.msra.mxu0 %v6643
        %8668 = vmatprep.subr.bf16.mxu0 %v6648
        %8669 = vmatpush1.bf16.msra.mxu0 %v6647
        %8670 = vmatprep.mubr.bf16.mxu0 %v2317
        %8671 = vmatmul.mubr.bf16.gmra.mrb[0].mxu0 %v2315
        %v8672 = vpop.f32.mrb[0].mxu0
        %v8673 = vadd.f32 %v8632, %v8672
        %v8674 = vpop.f32.mrb[0].mxu0
        %v8675 = vadd.f32 %v8634, %v8674
        %v8676 = vpop.f32.mrb[0].mxu0
        %v8677 = vpop.f32.mrb[0].mxu0
        %8678 = vdwg.mxu0
        %8679 = vmatprep.subr.bf16.mxu0 %v6652
        %8680 = vmatpush1.bf16.msra.mxu0 %v6651
        %8681 = vmatprep.subr.bf16.mxu0 %v6656
        %8682 = vmatpush1.bf16.msra.mxu0 %v6655
        %8683 = vmatprep.subr.bf16.mxu0 %v6660
        %8684 = vmatpush1.bf16.msra.mxu0 %v6659
        %8685 = vmatprep.subr.bf16.mxu0 %v6664
        %8686 = vmatpush1.bf16.msra.mxu0 %v6663
        %8687 = vmatprep.subr.bf16.mxu0 %v6668
        %8688 = vmatpush1.bf16.msra.mxu0 %v6667
        %8689 = vmatprep.subr.bf16.mxu0 %v6672
        %8690 = vmatpush1.bf16.msra.mxu0 %v6671
        %8691 = vmatprep.subr.bf16.mxu0 %v6676
        %8692 = vmatpush1.bf16.msra.mxu0 %v6675
        %8693 = vmatprep.subr.bf16.mxu0 %v6680
        %8694 = vmatpush1.bf16.msra.mxu0 %v6679
        %8695 = vmatprep.subr.bf16.mxu0 %v6684
        %8696 = vmatpush1.bf16.msra.mxu0 %v6683
        %8697 = vmatprep.subr.bf16.mxu0 %v6688
        %8698 = vmatpush1.bf16.msra.mxu0 %v6687
        %8699 = vmatprep.subr.bf16.mxu0 %v6692
        %8700 = vmatpush1.bf16.msra.mxu0 %v6691
        %8701 = vmatprep.subr.bf16.mxu0 %v6696
        %8702 = vmatpush1.bf16.msra.mxu0 %v6695
        %8703 = vmatprep.subr.bf16.mxu0 %v6700
        %8704 = vmatpush1.bf16.msra.mxu0 %v6699
        %8705 = vmatprep.subr.bf16.mxu0 %v6704
        %8706 = vmatpush1.bf16.msra.mxu0 %v6703
        %8707 = vmatprep.subr.bf16.mxu0 %v6708
        %8708 = vmatpush1.bf16.msra.mxu0 %v6707
        %8709 = vmatprep.subr.bf16.mxu0 %v6712
        %8710 = vmatpush1.bf16.msra.mxu0 %v6711
        %8711 = vmatprep.mubr.bf16.mxu0 %v2355
        %8712 = vmatmul.mubr.bf16.gmra.mrb[0].mxu0 %v2341
        %v8713 = vpop.f32.mrb[0].mxu0
        %v8714 = vadd.f32 %v8673, %v8713
        %v8715 = vpop.f32.mrb[0].mxu0
        %v8716 = vadd.f32 %v8675, %v8715
        %v8717 = vpop.f32.mrb[0].mxu0
        %v8718 = vpop.f32.mrb[0].mxu0
        %8719 = vdwg.mxu0
        %8720 = vmatprep.subr.bf16.mxu0 %v6716
        %8721 = vmatpush1.bf16.msra.mxu0 %v6715
        %8722 = vmatprep.subr.bf16.mxu0 %v6720
        %8723 = vmatpush1.bf16.msra.mxu0 %v6719
        %8724 = vmatprep.subr.bf16.mxu0 %v6724
        %8725 = vmatpush1.bf16.msra.mxu0 %v6723
        %8726 = vmatprep.subr.bf16.mxu0 %v6728
        %8727 = vmatpush1.bf16.msra.mxu0 %v6727
        %8728 = vmatprep.subr.bf16.mxu0 %v6732
        %8729 = vmatpush1.bf16.msra.mxu0 %v6731
        %8730 = vmatprep.subr.bf16.mxu0 %v6736
        %8731 = vmatpush1.bf16.msra.mxu0 %v6735
        %8732 = vmatprep.subr.bf16.mxu0 %v6740
        %8733 = vmatpush1.bf16.msra.mxu0 %v6739
        %8734 = vmatprep.subr.bf16.mxu0 %v6744
        %8735 = vmatpush1.bf16.msra.mxu0 %v6743
        %8736 = vmatprep.subr.bf16.mxu0 %v6748
        %8737 = vmatpush1.bf16.msra.mxu0 %v6747
        %8738 = vmatprep.subr.bf16.mxu0 %v6752
        %8739 = vmatpush1.bf16.msra.mxu0 %v6751
        %8740 = vmatprep.subr.bf16.mxu0 %v6756
        %8741 = vmatpush1.bf16.msra.mxu0 %v6755
        %8742 = vmatprep.subr.bf16.mxu0 %v6760
        %8743 = vmatpush1.bf16.msra.mxu0 %v6759
        %8744 = vmatprep.subr.bf16.mxu0 %v6764
        %8745 = vmatpush1.bf16.msra.mxu0 %v6763
        %8746 = vmatprep.subr.bf16.mxu0 %v6768
        %8747 = vmatpush1.bf16.msra.mxu0 %v6767
        %8748 = vmatprep.subr.bf16.mxu0 %v6772
        %8749 = vmatpush1.bf16.msra.mxu0 %v6771
        %8750 = vmatprep.subr.bf16.mxu0 %v6776
        %8751 = vmatpush1.bf16.msra.mxu0 %v6775
        %8752 = vmatprep.mubr.bf16.mxu0 %v2365
        %8753 = vmatmul.mubr.bf16.gmra.mrb[0].mxu0 %v2363
        %v8754 = vpop.f32.mrb[0].mxu0
        %v8755 = vadd.f32 %v8714, %v8754
        %v8756 = vpop.f32.mrb[0].mxu0
        %v8757 = vadd.f32 %v8716, %v8756
        %v8758 = vpop.f32.mrb[0].mxu0
        %v8759 = vpop.f32.mrb[0].mxu0
        %8760 = vdwg.mxu0
        %8761 = vmatprep.subr.bf16.mxu0 %v6780
        %8762 = vmatpush1.bf16.msra.mxu0 %v6779
        %8763 = vmatprep.subr.bf16.mxu0 %v6784
        %8764 = vmatpush1.bf16.msra.mxu0 %v6783
        %8765 = vmatprep.subr.bf16.mxu0 %v6788
        %8766 = vmatpush1.bf16.msra.mxu0 %v6787
        %8767 = vmatprep.subr.bf16.mxu0 %v6792
        %8768 = vmatpush1.bf16.msra.mxu0 %v6791
        %8769 = vmatprep.subr.bf16.mxu0 %v6796
        %8770 = vmatpush1.bf16.msra.mxu0 %v6795
        %8771 = vmatprep.subr.bf16.mxu0 %v6800
        %8772 = vmatpush1.bf16.msra.mxu0 %v6799
        %8773 = vmatprep.subr.bf16.mxu0 %v6804
        %8774 = vmatpush1.bf16.msra.mxu0 %v6803
        %8775 = vmatprep.subr.bf16.mxu0 %v6808
        %8776 = vmatpush1.bf16.msra.mxu0 %v6807
        %8777 = vmatprep.subr.bf16.mxu0 %v6812
        %8778 = vmatpush1.bf16.msra.mxu0 %v6811
        %8779 = vmatprep.subr.bf16.mxu0 %v6816
        %8780 = vmatpush1.bf16.msra.mxu0 %v6815
        %8781 = vmatprep.subr.bf16.mxu0 %v6820
        %8782 = vmatpush1.bf16.msra.mxu0 %v6819
        %8783 = vmatprep.subr.bf16.mxu0 %v6824
        %8784 = vmatpush1.bf16.msra.mxu0 %v6823
        %8785 = vmatprep.subr.bf16.mxu0 %v6828
        %8786 = vmatpush1.bf16.msra.mxu0 %v6827
        %8787 = vmatprep.subr.bf16.mxu0 %v6832
        %8788 = vmatpush1.bf16.msra.mxu0 %v6831
        %8789 = vmatprep.subr.bf16.mxu0 %v6836
        %8790 = vmatpush1.bf16.msra.mxu0 %v6835
        %8791 = vmatprep.subr.bf16.mxu0 %v6840
        %8792 = vmatpush1.bf16.msra.mxu0 %v6839
        %8793 = vmatprep.mubr.bf16.mxu0 %v2362
        %8794 = vmatmul.mubr.bf16.gmra.mrb[0].mxu0 %v2348
        %v8795 = vpop.f32.mrb[0].mxu0
        %v8796 = vadd.f32 %v8755, %v8795
        %v8797 = vpop.f32.mrb[0].mxu0
        %v8798 = vadd.f32 %v8757, %v8797
        %v8799 = vpop.f32.mrb[0].mxu0
        %v8800 = vpop.f32.mrb[0].mxu0
        %8801 = vdwg.mxu0
        %8802 = vmatprep.subr.bf16.mxu0 %v6844
        %8803 = vmatpush1.bf16.msra.mxu0 %v6843
        %8804 = vmatprep.subr.bf16.mxu0 %v6848
        %8805 = vmatpush1.bf16.msra.mxu0 %v6847
        %8806 = vmatprep.subr.bf16.mxu0 %v6852
        %8807 = vmatpush1.bf16.msra.mxu0 %v6851
        %8808 = vmatprep.subr.bf16.mxu0 %v6856
        %8809 = vmatpush1.bf16.msra.mxu0 %v6855
        %8810 = vmatprep.subr.bf16.mxu0 %v6860
        %8811 = vmatpush1.bf16.msra.mxu0 %v6859
        %8812 = vmatprep.subr.bf16.mxu0 %v6864
        %8813 = vmatpush1.bf16.msra.mxu0 %v6863
        %8814 = vmatprep.subr.bf16.mxu0 %v6868
        %8815 = vmatpush1.bf16.msra.mxu0 %v6867
        %8816 = vmatprep.subr.bf16.mxu0 %v6872
        %8817 = vmatpush1.bf16.msra.mxu0 %v6871
        %8818 = vmatprep.subr.bf16.mxu0 %v6876
        %8819 = vmatpush1.bf16.msra.mxu0 %v6875
        %8820 = vmatprep.subr.bf16.mxu0 %v6880
        %8821 = vmatpush1.bf16.msra.mxu0 %v6879
        %8822 = vmatprep.subr.bf16.mxu0 %v6884
        %8823 = vmatpush1.bf16.msra.mxu0 %v6883
        %8824 = vmatprep.subr.bf16.mxu0 %v6888
        %8825 = vmatpush1.bf16.msra.mxu0 %v6887
        %8826 = vmatprep.subr.bf16.mxu0 %v6892
        %8827 = vmatpush1.bf16.msra.mxu0 %v6891
        %8828 = vmatprep.subr.bf16.mxu0 %v6896
        %8829 = vmatpush1.bf16.msra.mxu0 %v6895
        %8830 = vmatprep.subr.bf16.mxu0 %v6900
        %8831 = vmatpush1.bf16.msra.mxu0 %v6899
        %8832 = vmatprep.subr.bf16.mxu0 %v6904
        %8833 = vmatpush1.bf16.msra.mxu0 %v6903
        %8834 = vmatprep.mubr.bf16.mxu0 %v2366
        %8835 = vmatmul.mubr.bf16.gmra.mrb[0].mxu0 %v2364
        %v8836 = vpop.f32.mrb[0].mxu0
        %v8837 = vadd.f32 %v8796, %v8836
        %v8838 = vpop.f32.mrb[0].mxu0
        %v8839 = vadd.f32 %v8798, %v8838
        %v8840 = vpop.f32.mrb[0].mxu0
        %v8841 = vpop.f32.mrb[0].mxu0
        %8842 = vdwg.mxu0
        %8843 = vmatprep.subr.bf16.mxu0 %v6908
        %8844 = vmatpush1.bf16.msra.mxu0 %v6907
        %8845 = vmatprep.subr.bf16.mxu0 %v6912
        %8846 = vmatpush1.bf16.msra.mxu0 %v6911
        %8847 = vmatprep.subr.bf16.mxu0 %v6916
        %8848 = vmatpush1.bf16.msra.mxu0 %v6915
        %8849 = vmatprep.subr.bf16.mxu0 %v6920
        %8850 = vmatpush1.bf16.msra.mxu0 %v6919
        %8851 = vmatprep.subr.bf16.mxu0 %v6924
        %8852 = vmatpush1.bf16.msra.mxu0 %v6923
        %8853 = vmatprep.subr.bf16.mxu0 %v6928
        %8854 = vmatpush1.bf16.msra.mxu0 %v6927
        %8855 = vmatprep.subr.bf16.mxu0 %v6932
        %8856 = vmatpush1.bf16.msra.mxu0 %v6931
        %8857 = vmatprep.subr.bf16.mxu0 %v6936
        %8858 = vmatpush1.bf16.msra.mxu0 %v6935
        %8859 = vmatprep.subr.bf16.mxu0 %v6940
        %8860 = vmatpush1.bf16.msra.mxu0 %v6939
        %8861 = vmatprep.subr.bf16.mxu0 %v6944
        %8862 = vmatpush1.bf16.msra.mxu0 %v6943
        %8863 = vmatprep.subr.bf16.mxu0 %v6948
        %8864 = vmatpush1.bf16.msra.mxu0 %v6947
        %8865 = vmatprep.subr.bf16.mxu0 %v6952
        %8866 = vmatpush1.bf16.msra.mxu0 %v6951
        %8867 = vmatprep.subr.bf16.mxu0 %v6956
        %8868 = vmatpush1.bf16.msra.mxu0 %v6955
        %8869 = vmatprep.subr.bf16.mxu0 %v6960
        %8870 = vmatpush1.bf16.msra.mxu0 %v6959
        %8871 = vmatprep.subr.bf16.mxu0 %v6964
        %8872 = vmatpush1.bf16.msra.mxu0 %v6963
        %8873 = vmatprep.subr.bf16.mxu0 %v6968
        %8874 = vmatpush1.bf16.msra.mxu0 %v6967
        %8875 = vmatprep.mubr.bf16.mxu0 %v2388
        %8876 = vmatmul.mubr.bf16.gmra.mrb[0].mxu0 %v2381
        %v8877 = vpop.f32.mrb[0].mxu0
        %v8878 = vadd.f32 %v8837, %v8877
        %v8879 = vpop.f32.mrb[0].mxu0
        %v8880 = vadd.f32 %v8839, %v8879
        %v8881 = vpop.f32.mrb[0].mxu0
        %v8882 = vpop.f32.mrb[0].mxu0
        %8883 = vdwg.mxu0
        %8884 = vmatprep.subr.bf16.mxu0 %v6972
        %8885 = vmatpush1.bf16.msra.mxu0 %v6971
        %8886 = vmatprep.subr.bf16.mxu0 %v6976
        %8887 = vmatpush1.bf16.msra.mxu0 %v6975
        %8888 = vmatprep.subr.bf16.mxu0 %v6980
        %8889 = vmatpush1.bf16.msra.mxu0 %v6979
        %8890 = vmatprep.subr.bf16.mxu0 %v6984
        %8891 = vmatpush1.bf16.msra.mxu0 %v6983
        %8892 = vmatprep.subr.bf16.mxu0 %v6988
        %8893 = vmatpush1.bf16.msra.mxu0 %v6987
        %8894 = vmatprep.subr.bf16.mxu0 %v6992
        %8895 = vmatpush1.bf16.msra.mxu0 %v6991
        %8896 = vmatprep.subr.bf16.mxu0 %v6996
        %8897 = vmatpush1.bf16.msra.mxu0 %v6995
        %8898 = vmatprep.subr.bf16.mxu0 %v7000
        %8899 = vmatpush1.bf16.msra.mxu0 %v6999
        %8900 = vmatprep.subr.bf16.mxu0 %v7004
        %8901 = vmatpush1.bf16.msra.mxu0 %v7003
        %8902 = vmatprep.subr.bf16.mxu0 %v7008
        %8903 = vmatpush1.bf16.msra.mxu0 %v7007
        %8904 = vmatprep.subr.bf16.mxu0 %v7012
        %8905 = vmatpush1.bf16.msra.mxu0 %v7011
        %8906 = vmatprep.subr.bf16.mxu0 %v7016
        %8907 = vmatpush1.bf16.msra.mxu0 %v7015
        %8908 = vmatprep.subr.bf16.mxu0 %v7020
        %8909 = vmatpush1.bf16.msra.mxu0 %v7019
        %8910 = vmatprep.subr.bf16.mxu0 %v7024
        %8911 = vmatpush1.bf16.msra.mxu0 %v7023
        %8912 = vmatprep.subr.bf16.mxu0 %v7028
        %8913 = vmatpush1.bf16.msra.mxu0 %v7027
        %8914 = vmatprep.subr.bf16.mxu0 %v7032
        %8915 = vmatpush1.bf16.msra.mxu0 %v7031
        %8916 = vmatprep.mubr.bf16.mxu0 %v2390
        %8917 = vmatmul.mubr.bf16.gmra.mrb[0].mxu0 %v2389
        %v8918 = vpop.f32.mrb[0].mxu0
        %v8919 = vadd.f32 %v8878, %v8918
        %v8920 = vpop.f32.mrb[0].mxu0
        %v8921 = vadd.f32 %v8880, %v8920
        %v8922 = vpop.f32.mrb[0].mxu0
        %v8923 = vpop.f32.mrb[0].mxu0
        %8924 = vdwg.mxu0
        %8925 = vmatprep.subr.bf16.mxu0 %v5886
        %8926 = vmatpush1.bf16.msra.mxu0 %v5885
        %8927 = vmatprep.subr.bf16.mxu0 %v5890
        %8928 = vmatpush1.bf16.msra.mxu0 %v5889
        %8929 = vmatprep.subr.bf16.mxu0 %v5894
        %8930 = vmatpush1.bf16.msra.mxu0 %v5893
        %8931 = vmatprep.subr.bf16.mxu0 %v5898
        %8932 = vmatpush1.bf16.msra.mxu0 %v5897
        %8933 = vmatprep.subr.bf16.mxu0 %v5902
        %8934 = vmatpush1.bf16.msra.mxu0 %v5901
        %8935 = vmatprep.subr.bf16.mxu0 %v5906
        %8936 = vmatpush1.bf16.msra.mxu0 %v5905
        %8937 = vmatprep.subr.bf16.mxu0 %v5910
        %8938 = vmatpush1.bf16.msra.mxu0 %v5909
        %8939 = vmatprep.subr.bf16.mxu0 %v5914
        %8940 = vmatpush1.bf16.msra.mxu0 %v5913
        %8941 = vmatprep.subr.bf16.mxu0 %v5918
        %8942 = vmatpush1.bf16.msra.mxu0 %v5917
        %8943 = vmatprep.subr.bf16.mxu0 %v5922
        %8944 = vmatpush1.bf16.msra.mxu0 %v5921
        %8945 = vmatprep.subr.bf16.mxu0 %v5926
        %8946 = vmatpush1.bf16.msra.mxu0 %v5925
        %8947 = vmatprep.subr.bf16.mxu0 %v5930
        %8948 = vmatpush1.bf16.msra.mxu0 %v5929
        %8949 = vmatprep.subr.bf16.mxu0 %v5934
        %8950 = vmatpush1.bf16.msra.mxu0 %v5933
        %8951 = vmatprep.subr.bf16.mxu0 %v5938
        %8952 = vmatpush1.bf16.msra.mxu0 %v5937
        %8953 = vmatprep.subr.bf16.mxu0 %v5942
        %8954 = vmatpush1.bf16.msra.mxu0 %v5941
        %8955 = vmatprep.subr.bf16.mxu0 %v5946
        %8956 = vmatpush1.bf16.msra.mxu0 %v5945
        %8957 = vmatprep.mubr.bf16.mxu0 %v2208
        %8958 = vmatmul.mubr.bf16.gmra.mrb[0].mxu0 %v2194
        %v8959 = vpop.f32.mrb[0].mxu0
        %v8960 = vadd.f32 0.0, %v8959
        %v8961 = vpop.f32.mrb[0].mxu0
        %v8962 = vadd.f32 0.0, %v8961
        %v8963 = vpop.f32.mrb[0].mxu0
        %v8964 = vpop.f32.mrb[0].mxu0
        %8965 = vdwg.mxu0
        %8966 = vmatprep.subr.bf16.mxu0 %v5950
        %8967 = vmatpush1.bf16.msra.mxu0 %v5949
        %8968 = vmatprep.subr.bf16.mxu0 %v5954
        %8969 = vmatpush1.bf16.msra.mxu0 %v5953
        %8970 = vmatprep.subr.bf16.mxu0 %v5958
        %8971 = vmatpush1.bf16.msra.mxu0 %v5957
        %8972 = vmatprep.subr.bf16.mxu0 %v5962
        %8973 = vmatpush1.bf16.msra.mxu0 %v5961
        %8974 = vmatprep.subr.bf16.mxu0 %v5966
        %8975 = vmatpush1.bf16.msra.mxu0 %v5965
        %8976 = vmatprep.subr.bf16.mxu0 %v5970
        %8977 = vmatpush1.bf16.msra.mxu0 %v5969
        %8978 = vmatprep.subr.bf16.mxu0 %v5974
        %8979 = vmatpush1.bf16.msra.mxu0 %v5973
        %8980 = vmatprep.subr.bf16.mxu0 %v5978
        %8981 = vmatpush1.bf16.msra.mxu0 %v5977
        %8982 = vmatprep.subr.bf16.mxu0 %v5982
        %8983 = vmatpush1.bf16.msra.mxu0 %v5981
        %8984 = vmatprep.subr.bf16.mxu0 %v5986
        %8985 = vmatpush1.bf16.msra.mxu0 %v5985
        %8986 = vmatprep.subr.bf16.mxu0 %v5990
        %8987 = vmatpush1.bf16.msra.mxu0 %v5989
        %8988 = vmatprep.subr.bf16.mxu0 %v5994
        %8989 = vmatpush1.bf16.msra.mxu0 %v5993
        %8990 = vmatprep.subr.bf16.mxu0 %v5998
        %8991 = vmatpush1.bf16.msra.mxu0 %v5997
        %8992 = vmatprep.subr.bf16.mxu0 %v6002
        %8993 = vmatpush1.bf16.msra.mxu0 %v6001
        %8994 = vmatprep.subr.bf16.mxu0 %v6006
        %8995 = vmatpush1.bf16.msra.mxu0 %v6005
        %8996 = vmatprep.subr.bf16.mxu0 %v6010
        %8997 = vmatpush1.bf16.msra.mxu0 %v6009
        %8998 = vmatprep.mubr.bf16.mxu0 %v2218
        %8999 = vmatmul.mubr.bf16.gmra.mrb[0].mxu0 %v2216
        %v9000 = vpop.f32.mrb[0].mxu0
        %v9001 = vadd.f32 %v8960, %v9000
        %v9002 = vpop.f32.mrb[0].mxu0
        %v9003 = vadd.f32 %v8962, %v9002
        %v9004 = vpop.f32.mrb[0].mxu0
        %v9005 = vpop.f32.mrb[0].mxu0
        %9006 = vdwg.mxu0
        %9007 = vmatprep.subr.bf16.mxu0 %v6014
        %9008 = vmatpush1.bf16.msra.mxu0 %v6013
        %9009 = vmatprep.subr.bf16.mxu0 %v6018
        %9010 = vmatpush1.bf16.msra.mxu0 %v6017
        %9011 = vmatprep.subr.bf16.mxu0 %v6022
        %9012 = vmatpush1.bf16.msra.mxu0 %v6021
        %9013 = vmatprep.subr.bf16.mxu0 %v6026
        %9014 = vmatpush1.bf16.msra.mxu0 %v6025
        %9015 = vmatprep.subr.bf16.mxu0 %v6030
        %9016 = vmatpush1.bf16.msra.mxu0 %v6029
        %9017 = vmatprep.subr.bf16.mxu0 %v6034
        %9018 = vmatpush1.bf16.msra.mxu0 %v6033
        %9019 = vmatprep.subr.bf16.mxu0 %v6038
        %9020 = vmatpush1.bf16.msra.mxu0 %v6037
        %9021 = vmatprep.subr.bf16.mxu0 %v6042
        %9022 = vmatpush1.bf16.msra.mxu0 %v6041
        %9023 = vmatprep.subr.bf16.mxu0 %v6046
        %9024 = vmatpush1.bf16.msra.mxu0 %v6045
        %9025 = vmatprep.subr.bf16.mxu0 %v6050
        %9026 = vmatpush1.bf16.msra.mxu0 %v6049
        %9027 = vmatprep.subr.bf16.mxu0 %v6054
        %9028 = vmatpush1.bf16.msra.mxu0 %v6053
        %9029 = vmatprep.subr.bf16.mxu0 %v6058
        %9030 = vmatpush1.bf16.msra.mxu0 %v6057
        %9031 = vmatprep.subr.bf16.mxu0 %v6062
        %9032 = vmatpush1.bf16.msra.mxu0 %v6061
        %9033 = vmatprep.subr.bf16.mxu0 %v6066
        %9034 = vmatpush1.bf16.msra.mxu0 %v6065
        %9035 = vmatprep.subr.bf16.mxu0 %v6070
        %9036 = vmatpush1.bf16.msra.mxu0 %v6069
        %9037 = vmatprep.subr.bf16.mxu0 %v6074
        %9038 = vmatpush1.bf16.msra.mxu0 %v6073
        %9039 = vmatprep.mubr.bf16.mxu0 %v2215
        %9040 = vmatmul.mubr.bf16.gmra.mrb[0].mxu0 %v2201
        %v9041 = vpop.f32.mrb[0].mxu0
        %v9042 = vadd.f32 %v9001, %v9041
        %v9043 = vpop.f32.mrb[0].mxu0
        %v9044 = vadd.f32 %v9003, %v9043
        %v9045 = vpop.f32.mrb[0].mxu0
        %v9046 = vpop.f32.mrb[0].mxu0
        %9047 = vdwg.mxu0
        %9048 = vmatprep.subr.bf16.mxu0 %v6078
        %9049 = vmatpush1.bf16.msra.mxu0 %v6077
        %9050 = vmatprep.subr.bf16.mxu0 %v6082
        %9051 = vmatpush1.bf16.msra.mxu0 %v6081
        %9052 = vmatprep.subr.bf16.mxu0 %v6086
        %9053 = vmatpush1.bf16.msra.mxu0 %v6085
        %9054 = vmatprep.subr.bf16.mxu0 %v6090
        %9055 = vmatpush1.bf16.msra.mxu0 %v6089
        %9056 = vmatprep.subr.bf16.mxu0 %v6094
        %9057 = vmatpush1.bf16.msra.mxu0 %v6093
        %9058 = vmatprep.subr.bf16.mxu0 %v6098
        %9059 = vmatpush1.bf16.msra.mxu0 %v6097
        %9060 = vmatprep.subr.bf16.mxu0 %v6102
        %9061 = vmatpush1.bf16.msra.mxu0 %v6101
        %9062 = vmatprep.subr.bf16.mxu0 %v6106
        %9063 = vmatpush1.bf16.msra.mxu0 %v6105
        %9064 = vmatprep.subr.bf16.mxu0 %v6110
        %9065 = vmatpush1.bf16.msra.mxu0 %v6109
        %9066 = vmatprep.subr.bf16.mxu0 %v6114
        %9067 = vmatpush1.bf16.msra.mxu0 %v6113
        %9068 = vmatprep.subr.bf16.mxu0 %v6118
        %9069 = vmatpush1.bf16.msra.mxu0 %v6117
        %9070 = vmatprep.subr.bf16.mxu0 %v6122
        %9071 = vmatpush1.bf16.msra.mxu0 %v6121
        %9072 = vmatprep.subr.bf16.mxu0 %v6126
        %9073 = vmatpush1.bf16.msra.mxu0 %v6125
        %9074 = vmatprep.subr.bf16.mxu0 %v6130
        %9075 = vmatpush1.bf16.msra.mxu0 %v6129
        %9076 = vmatprep.subr.bf16.mxu0 %v6134
        %9077 = vmatpush1.bf16.msra.mxu0 %v6133
        %9078 = vmatprep.subr.bf16.mxu0 %v6138
        %9079 = vmatpush1.bf16.msra.mxu0 %v6137
        %9080 = vmatprep.mubr.bf16.mxu0 %v2219
        %9081 = vmatmul.mubr.bf16.gmra.mrb[0].mxu0 %v2217
        %v9082 = vpop.f32.mrb[0].mxu0
        %v9083 = vadd.f32 %v9042, %v9082
        %v9084 = vpop.f32.mrb[0].mxu0
        %v9085 = vadd.f32 %v9044, %v9084
        %v9086 = vpop.f32.mrb[0].mxu0
        %v9087 = vpop.f32.mrb[0].mxu0
        %9088 = vdwg.mxu0
        %9089 = vmatprep.subr.bf16.mxu0 %v6142
        %9090 = vmatpush1.bf16.msra.mxu0 %v6141
        %9091 = vmatprep.subr.bf16.mxu0 %v6146
        %9092 = vmatpush1.bf16.msra.mxu0 %v6145
        %9093 = vmatprep.subr.bf16.mxu0 %v6150
        %9094 = vmatpush1.bf16.msra.mxu0 %v6149
        %9095 = vmatprep.subr.bf16.mxu0 %v6154
        %9096 = vmatpush1.bf16.msra.mxu0 %v6153
        %9097 = vmatprep.subr.bf16.mxu0 %v6158
        %9098 = vmatpush1.bf16.msra.mxu0 %v6157
        %9099 = vmatprep.subr.bf16.mxu0 %v6162
        %9100 = vmatpush1.bf16.msra.mxu0 %v6161
        %9101 = vmatprep.subr.bf16.mxu0 %v6166
        %9102 = vmatpush1.bf16.msra.mxu0 %v6165
        %9103 = vmatprep.subr.bf16.mxu0 %v6170
        %9104 = vmatpush1.bf16.msra.mxu0 %v6169
        %9105 = vmatprep.subr.bf16.mxu0 %v6174
        %9106 = vmatpush1.bf16.msra.mxu0 %v6173
        %9107 = vmatprep.subr.bf16.mxu0 %v6178
        %9108 = vmatpush1.bf16.msra.mxu0 %v6177
        %9109 = vmatprep.subr.bf16.mxu0 %v6182
        %9110 = vmatpush1.bf16.msra.mxu0 %v6181
        %9111 = vmatprep.subr.bf16.mxu0 %v6186
        %9112 = vmatpush1.bf16.msra.mxu0 %v6185
        %9113 = vmatprep.subr.bf16.mxu0 %v6190
        %9114 = vmatpush1.bf16.msra.mxu0 %v6189
        %9115 = vmatprep.subr.bf16.mxu0 %v6194
        %9116 = vmatpush1.bf16.msra.mxu0 %v6193
        %9117 = vmatprep.subr.bf16.mxu0 %v6198
        %9118 = vmatpush1.bf16.msra.mxu0 %v6197
        %9119 = vmatprep.subr.bf16.mxu0 %v6202
        %9120 = vmatpush1.bf16.msra.mxu0 %v6201
        %9121 = vmatprep.mubr.bf16.mxu0 %v2257
        %9122 = vmatmul.mubr.bf16.gmra.mrb[0].mxu0 %v2243
        %v9123 = vpop.f32.mrb[0].mxu0
        %v9124 = vadd.f32 %v9083, %v9123
        %v9125 = vpop.f32.mrb[0].mxu0
        %v9126 = vadd.f32 %v9085, %v9125
        %v9127 = vpop.f32.mrb[0].mxu0
        %v9128 = vpop.f32.mrb[0].mxu0
        %9129 = vdwg.mxu0
        %9130 = vmatprep.subr.bf16.mxu0 %v6206
        %9131 = vmatpush1.bf16.msra.mxu0 %v6205
        %9132 = vmatprep.subr.bf16.mxu0 %v6210
        %9133 = vmatpush1.bf16.msra.mxu0 %v6209
        %9134 = vmatprep.subr.bf16.mxu0 %v6214
        %9135 = vmatpush1.bf16.msra.mxu0 %v6213
        %9136 = vmatprep.subr.bf16.mxu0 %v6218
        %9137 = vmatpush1.bf16.msra.mxu0 %v6217
        %9138 = vmatprep.subr.bf16.mxu0 %v6222
        %9139 = vmatpush1.bf16.msra.mxu0 %v6221
        %9140 = vmatprep.subr.bf16.mxu0 %v6226
        %9141 = vmatpush1.bf16.msra.mxu0 %v6225
        %9142 = vmatprep.subr.bf16.mxu0 %v6230
        %9143 = vmatpush1.bf16.msra.mxu0 %v6229
        %9144 = vmatprep.subr.bf16.mxu0 %v6234
        %9145 = vmatpush1.bf16.msra.mxu0 %v6233
        %9146 = vmatprep.subr.bf16.mxu0 %v6238
        %9147 = vmatpush1.bf16.msra.mxu0 %v6237
        %9148 = vmatprep.subr.bf16.mxu0 %v6242
        %9149 = vmatpush1.bf16.msra.mxu0 %v6241
        %9150 = vmatprep.subr.bf16.mxu0 %v6246
        %9151 = vmatpush1.bf16.msra.mxu0 %v6245
        %9152 = vmatprep.subr.bf16.mxu0 %v6250
        %9153 = vmatpush1.bf16.msra.mxu0 %v6249
        %9154 = vmatprep.subr.bf16.mxu0 %v6254
        %9155 = vmatpush1.bf16.msra.mxu0 %v6253
        %9156 = vmatprep.subr.bf16.mxu0 %v6258
        %9157 = vmatpush1.bf16.msra.mxu0 %v6257
        %9158 = vmatprep.subr.bf16.mxu0 %v6262
        %9159 = vmatpush1.bf16.msra.mxu0 %v6261
        %9160 = vmatprep.subr.bf16.mxu0 %v6266
        %9161 = vmatpush1.bf16.msra.mxu0 %v6265
        %9162 = vmatprep.mubr.bf16.mxu0 %v2267
        %9163 = vmatmul.mubr.bf16.gmra.mrb[0].mxu0 %v2265
        %v9164 = vpop.f32.mrb[0].mxu0
        %v9165 = vadd.f32 %v9124, %v9164
        %v9166 = vpop.f32.mrb[0].mxu0
        %v9167 = vadd.f32 %v9126, %v9166
        %v9168 = vpop.f32.mrb[0].mxu0
        %v9169 = vpop.f32.mrb[0].mxu0
        %9170 = vdwg.mxu0
        %9171 = vmatprep.subr.bf16.mxu0 %v6270
        %9172 = vmatpush1.bf16.msra.mxu0 %v6269
        %9173 = vmatprep.subr.bf16.mxu0 %v6274
        %9174 = vmatpush1.bf16.msra.mxu0 %v6273
        %9175 = vmatprep.subr.bf16.mxu0 %v6278
        %9176 = vmatpush1.bf16.msra.mxu0 %v6277
        %9177 = vmatprep.subr.bf16.mxu0 %v6282
        %9178 = vmatpush1.bf16.msra.mxu0 %v6281
        %9179 = vmatprep.subr.bf16.mxu0 %v6286
        %9180 = vmatpush1.bf16.msra.mxu0 %v6285
        %9181 = vmatprep.subr.bf16.mxu0 %v6290
        %9182 = vmatpush1.bf16.msra.mxu0 %v6289
        %9183 = vmatprep.subr.bf16.mxu0 %v6294
        %9184 = vmatpush1.bf16.msra.mxu0 %v6293
        %9185 = vmatprep.subr.bf16.mxu0 %v6298
        %9186 = vmatpush1.bf16.msra.mxu0 %v6297
        %9187 = vmatprep.subr.bf16.mxu0 %v6302
        %9188 = vmatpush1.bf16.msra.mxu0 %v6301
        %9189 = vmatprep.subr.bf16.mxu0 %v6306
        %9190 = vmatpush1.bf16.msra.mxu0 %v6305
        %9191 = vmatprep.subr.bf16.mxu0 %v6310
        %9192 = vmatpush1.bf16.msra.mxu0 %v6309
        %9193 = vmatprep.subr.bf16.mxu0 %v6314
        %9194 = vmatpush1.bf16.msra.mxu0 %v6313
        %9195 = vmatprep.subr.bf16.mxu0 %v6318
        %9196 = vmatpush1.bf16.msra.mxu0 %v6317
        %9197 = vmatprep.subr.bf16.mxu0 %v6322
        %9198 = vmatpush1.bf16.msra.mxu0 %v6321
        %9199 = vmatprep.subr.bf16.mxu0 %v6326
        %9200 = vmatpush1.bf16.msra.mxu0 %v6325
        %9201 = vmatprep.subr.bf16.mxu0 %v6330
        %9202 = vmatpush1.bf16.msra.mxu0 %v6329
        %9203 = vmatprep.mubr.bf16.mxu0 %v2264
        %9204 = vmatmul.mubr.bf16.gmra.mrb[0].mxu0 %v2250
        %v9205 = vpop.f32.mrb[0].mxu0
        %v9206 = vadd.f32 %v9165, %v9205
        %v9207 = vpop.f32.mrb[0].mxu0
        %v9208 = vadd.f32 %v9167, %v9207
        %v9209 = vpop.f32.mrb[0].mxu0
        %v9210 = vpop.f32.mrb[0].mxu0
        %9211 = vdwg.mxu0
        %9212 = vmatprep.subr.bf16.mxu0 %v6334
        %9213 = vmatpush1.bf16.msra.mxu0 %v6333
        %9214 = vmatprep.subr.bf16.mxu0 %v6338
        %9215 = vmatpush1.bf16.msra.mxu0 %v6337
        %9216 = vmatprep.subr.bf16.mxu0 %v6342
        %9217 = vmatpush1.bf16.msra.mxu0 %v6341
        %9218 = vmatprep.subr.bf16.mxu0 %v6346
        %9219 = vmatpush1.bf16.msra.mxu0 %v6345
        %9220 = vmatprep.subr.bf16.mxu0 %v6350
        %9221 = vmatpush1.bf16.msra.mxu0 %v6349
        %9222 = vmatprep.subr.bf16.mxu0 %v6354
        %9223 = vmatpush1.bf16.msra.mxu0 %v6353
        %9224 = vmatprep.subr.bf16.mxu0 %v6358
        %9225 = vmatpush1.bf16.msra.mxu0 %v6357
        %9226 = vmatprep.subr.bf16.mxu0 %v6362
        %9227 = vmatpush1.bf16.msra.mxu0 %v6361
        %9228 = vmatprep.subr.bf16.mxu0 %v6366
        %9229 = vmatpush1.bf16.msra.mxu0 %v6365
        %9230 = vmatprep.subr.bf16.mxu0 %v6370
        %9231 = vmatpush1.bf16.msra.mxu0 %v6369
        %9232 = vmatprep.subr.bf16.mxu0 %v6374
        %9233 = vmatpush1.bf16.msra.mxu0 %v6373
        %9234 = vmatprep.subr.bf16.mxu0 %v6378
        %9235 = vmatpush1.bf16.msra.mxu0 %v6377
        %9236 = vmatprep.subr.bf16.mxu0 %v6382
        %9237 = vmatpush1.bf16.msra.mxu0 %v6381
        %9238 = vmatprep.subr.bf16.mxu0 %v6386
        %9239 = vmatpush1.bf16.msra.mxu0 %v6385
        %9240 = vmatprep.subr.bf16.mxu0 %v6390
        %9241 = vmatpush1.bf16.msra.mxu0 %v6389
        %9242 = vmatprep.subr.bf16.mxu0 %v6394
        %9243 = vmatpush1.bf16.msra.mxu0 %v6393
        %9244 = vmatprep.mubr.bf16.mxu0 %v2268
        %9245 = vmatmul.mubr.bf16.gmra.mrb[0].mxu0 %v2266
        %v9246 = vpop.f32.mrb[0].mxu0
        %v9247 = vadd.f32 %v9206, %v9246
        %v9248 = vpop.f32.mrb[0].mxu0
        %v9249 = vadd.f32 %v9208, %v9248
        %v9250 = vpop.f32.mrb[0].mxu0
        %v9251 = vpop.f32.mrb[0].mxu0
        %9252 = vdwg.mxu0
        %9253 = vmatprep.subr.bf16.mxu0 %v6398
        %9254 = vmatpush1.bf16.msra.mxu0 %v6397
        %9255 = vmatprep.subr.bf16.mxu0 %v6402
        %9256 = vmatpush1.bf16.msra.mxu0 %v6401
        %9257 = vmatprep.subr.bf16.mxu0 %v6406
        %9258 = vmatpush1.bf16.msra.mxu0 %v6405
        %9259 = vmatprep.subr.bf16.mxu0 %v6410
        %9260 = vmatpush1.bf16.msra.mxu0 %v6409
        %9261 = vmatprep.subr.bf16.mxu0 %v6414
        %9262 = vmatpush1.bf16.msra.mxu0 %v6413
        %9263 = vmatprep.subr.bf16.mxu0 %v6418
        %9264 = vmatpush1.bf16.msra.mxu0 %v6417
        %9265 = vmatprep.subr.bf16.mxu0 %v6422
        %9266 = vmatpush1.bf16.msra.mxu0 %v6421
        %9267 = vmatprep.subr.bf16.mxu0 %v6426
        %9268 = vmatpush1.bf16.msra.mxu0 %v6425
        %9269 = vmatprep.subr.bf16.mxu0 %v6430
        %9270 = vmatpush1.bf16.msra.mxu0 %v6429
        %9271 = vmatprep.subr.bf16.mxu0 %v6434
        %9272 = vmatpush1.bf16.msra.mxu0 %v6433
        %9273 = vmatprep.subr.bf16.mxu0 %v6438
        %9274 = vmatpush1.bf16.msra.mxu0 %v6437
        %9275 = vmatprep.subr.bf16.mxu0 %v6442
        %9276 = vmatpush1.bf16.msra.mxu0 %v6441
        %9277 = vmatprep.subr.bf16.mxu0 %v6446
        %9278 = vmatpush1.bf16.msra.mxu0 %v6445
        %9279 = vmatprep.subr.bf16.mxu0 %v6450
        %9280 = vmatpush1.bf16.msra.mxu0 %v6449
        %9281 = vmatprep.subr.bf16.mxu0 %v6454
        %9282 = vmatpush1.bf16.msra.mxu0 %v6453
        %9283 = vmatprep.subr.bf16.mxu0 %v6458
        %9284 = vmatpush1.bf16.msra.mxu0 %v6457
        %9285 = vmatprep.mubr.bf16.mxu0 %v2306
        %9286 = vmatmul.mubr.bf16.gmra.mrb[0].mxu0 %v2292
        %v9287 = vpop.f32.mrb[0].mxu0
        %v9288 = vadd.f32 %v9247, %v9287
        %v9289 = vpop.f32.mrb[0].mxu0
        %v9290 = vadd.f32 %v9249, %v9289
        %v9291 = vpop.f32.mrb[0].mxu0
        %v9292 = vpop.f32.mrb[0].mxu0
        %9293 = vdwg.mxu0
        %9294 = vmatprep.subr.bf16.mxu0 %v6462
        %9295 = vmatpush1.bf16.msra.mxu0 %v6461
        %9296 = vmatprep.subr.bf16.mxu0 %v6466
        %9297 = vmatpush1.bf16.msra.mxu0 %v6465
        %9298 = vmatprep.subr.bf16.mxu0 %v6470
        %9299 = vmatpush1.bf16.msra.mxu0 %v6469
        %9300 = vmatprep.subr.bf16.mxu0 %v6474
        %9301 = vmatpush1.bf16.msra.mxu0 %v6473
        %9302 = vmatprep.subr.bf16.mxu0 %v6478
        %9303 = vmatpush1.bf16.msra.mxu0 %v6477
        %9304 = vmatprep.subr.bf16.mxu0 %v6482
        %9305 = vmatpush1.bf16.msra.mxu0 %v6481
        %9306 = vmatprep.subr.bf16.mxu0 %v6486
        %9307 = vmatpush1.bf16.msra.mxu0 %v6485
        %9308 = vmatprep.subr.bf16.mxu0 %v6490
        %9309 = vmatpush1.bf16.msra.mxu0 %v6489
        %9310 = vmatprep.subr.bf16.mxu0 %v6494
        %9311 = vmatpush1.bf16.msra.mxu0 %v6493
        %9312 = vmatprep.subr.bf16.mxu0 %v6498
        %9313 = vmatpush1.bf16.msra.mxu0 %v6497
        %9314 = vmatprep.subr.bf16.mxu0 %v6502
        %9315 = vmatpush1.bf16.msra.mxu0 %v6501
        %9316 = vmatprep.subr.bf16.mxu0 %v6506
        %9317 = vmatpush1.bf16.msra.mxu0 %v6505
        %9318 = vmatprep.subr.bf16.mxu0 %v6510
        %9319 = vmatpush1.bf16.msra.mxu0 %v6509
        %9320 = vmatprep.subr.bf16.mxu0 %v6514
        %9321 = vmatpush1.bf16.msra.mxu0 %v6513
        %9322 = vmatprep.subr.bf16.mxu0 %v6518
        %9323 = vmatpush1.bf16.msra.mxu0 %v6517
        %9324 = vmatprep.subr.bf16.mxu0 %v6522
        %9325 = vmatpush1.bf16.msra.mxu0 %v6521
        %9326 = vmatprep.mubr.bf16.mxu0 %v2316
        %9327 = vmatmul.mubr.bf16.gmra.mrb[0].mxu0 %v2314
        %v9328 = vpop.f32.mrb[0].mxu0
        %v9329 = vadd.f32 %v9288, %v9328
        %v9330 = vpop.f32.mrb[0].mxu0
        %v9331 = vadd.f32 %v9290, %v9330
        %v9332 = vpop.f32.mrb[0].mxu0
        %v9333 = vpop.f32.mrb[0].mxu0
        %9334 = vdwg.mxu0
        %9335 = vmatprep.subr.bf16.mxu0 %v6526
        %9336 = vmatpush1.bf16.msra.mxu0 %v6525
        %9337 = vmatprep.subr.bf16.mxu0 %v6530
        %9338 = vmatpush1.bf16.msra.mxu0 %v6529
        %9339 = vmatprep.subr.bf16.mxu0 %v6534
        %9340 = vmatpush1.bf16.msra.mxu0 %v6533
        %9341 = vmatprep.subr.bf16.mxu0 %v6538
        %9342 = vmatpush1.bf16.msra.mxu0 %v6537
        %9343 = vmatprep.subr.bf16.mxu0 %v6542
        %9344 = vmatpush1.bf16.msra.mxu0 %v6541
        %9345 = vmatprep.subr.bf16.mxu0 %v6546
        %9346 = vmatpush1.bf16.msra.mxu0 %v6545
        %9347 = vmatprep.subr.bf16.mxu0 %v6550
        %9348 = vmatpush1.bf16.msra.mxu0 %v6549
        %9349 = vmatprep.subr.bf16.mxu0 %v6554
        %9350 = vmatpush1.bf16.msra.mxu0 %v6553
        %9351 = vmatprep.subr.bf16.mxu0 %v6558
        %9352 = vmatpush1.bf16.msra.mxu0 %v6557
        %9353 = vmatprep.subr.bf16.mxu0 %v6562
        %9354 = vmatpush1.bf16.msra.mxu0 %v6561
        %9355 = vmatprep.subr.bf16.mxu0 %v6566
        %9356 = vmatpush1.bf16.msra.mxu0 %v6565
        %9357 = vmatprep.subr.bf16.mxu0 %v6570
        %9358 = vmatpush1.bf16.msra.mxu0 %v6569
        %9359 = vmatprep.subr.bf16.mxu0 %v6574
        %9360 = vmatpush1.bf16.msra.mxu0 %v6573
        %9361 = vmatprep.subr.bf16.mxu0 %v6578
        %9362 = vmatpush1.bf16.msra.mxu0 %v6577
        %9363 = vmatprep.subr.bf16.mxu0 %v6582
        %9364 = vmatpush1.bf16.msra.mxu0 %v6581
        %9365 = vmatprep.subr.bf16.mxu0 %v6586
        %9366 = vmatpush1.bf16.msra.mxu0 %v6585
        %9367 = vmatprep.mubr.bf16.mxu0 %v2313
        %9368 = vmatmul.mubr.bf16.gmra.mrb[0].mxu0 %v2299
        %v9369 = vpop.f32.mrb[0].mxu0
        %v9370 = vadd.f32 %v9329, %v9369
        %v9371 = vpop.f32.mrb[0].mxu0
        %v9372 = vadd.f32 %v9331, %v9371
        %v9373 = vpop.f32.mrb[0].mxu0
        %v9374 = vpop.f32.mrb[0].mxu0
        %9375 = vdwg.mxu0
        %9376 = vmatprep.subr.bf16.mxu0 %v6590
        %9377 = vmatpush1.bf16.msra.mxu0 %v6589
        %9378 = vmatprep.subr.bf16.mxu0 %v6594
        %9379 = vmatpush1.bf16.msra.mxu0 %v6593
        %9380 = vmatprep.subr.bf16.mxu0 %v6598
        %9381 = vmatpush1.bf16.msra.mxu0 %v6597
        %9382 = vmatprep.subr.bf16.mxu0 %v6602
        %9383 = vmatpush1.bf16.msra.mxu0 %v6601
        %9384 = vmatprep.subr.bf16.mxu0 %v6606
        %9385 = vmatpush1.bf16.msra.mxu0 %v6605
        %9386 = vmatprep.subr.bf16.mxu0 %v6610
        %9387 = vmatpush1.bf16.msra.mxu0 %v6609
        %9388 = vmatprep.subr.bf16.mxu0 %v6614
        %9389 = vmatpush1.bf16.msra.mxu0 %v6613
        %9390 = vmatprep.subr.bf16.mxu0 %v6618
        %9391 = vmatpush1.bf16.msra.mxu0 %v6617
        %9392 = vmatprep.subr.bf16.mxu0 %v6622
        %9393 = vmatpush1.bf16.msra.mxu0 %v6621
        %9394 = vmatprep.subr.bf16.mxu0 %v6626
        %9395 = vmatpush1.bf16.msra.mxu0 %v6625
        %9396 = vmatprep.subr.bf16.mxu0 %v6630
        %9397 = vmatpush1.bf16.msra.mxu0 %v6629
        %9398 = vmatprep.subr.bf16.mxu0 %v6634
        %9399 = vmatpush1.bf16.msra.mxu0 %v6633
        %9400 = vmatprep.subr.bf16.mxu0 %v6638
        %9401 = vmatpush1.bf16.msra.mxu0 %v6637
        %9402 = vmatprep.subr.bf16.mxu0 %v6642
        %9403 = vmatpush1.bf16.msra.mxu0 %v6641
        %9404 = vmatprep.subr.bf16.mxu0 %v6646
        %9405 = vmatpush1.bf16.msra.mxu0 %v6645
        %9406 = vmatprep.subr.bf16.mxu0 %v6650
        %9407 = vmatpush1.bf16.msra.mxu0 %v6649
        %9408 = vmatprep.mubr.bf16.mxu0 %v2317
        %9409 = vmatmul.mubr.bf16.gmra.mrb[0].mxu0 %v2315
        %v9410 = vpop.f32.mrb[0].mxu0
        %v9411 = vadd.f32 %v9370, %v9410
        %v9412 = vpop.f32.mrb[0].mxu0
        %v9413 = vadd.f32 %v9372, %v9412
        %v9414 = vpop.f32.mrb[0].mxu0
        %v9415 = vpop.f32.mrb[0].mxu0
        %9416 = vdwg.mxu0
        %9417 = vmatprep.subr.bf16.mxu0 %v6654
        %9418 = vmatpush1.bf16.msra.mxu0 %v6653
        %9419 = vmatprep.subr.bf16.mxu0 %v6658
        %9420 = vmatpush1.bf16.msra.mxu0 %v6657
        %9421 = vmatprep.subr.bf16.mxu0 %v6662
        %9422 = vmatpush1.bf16.msra.mxu0 %v6661
        %9423 = vmatprep.subr.bf16.mxu0 %v6666
        %9424 = vmatpush1.bf16.msra.mxu0 %v6665
        %9425 = vmatprep.subr.bf16.mxu0 %v6670
        %9426 = vmatpush1.bf16.msra.mxu0 %v6669
        %9427 = vmatprep.subr.bf16.mxu0 %v6674
        %9428 = vmatpush1.bf16.msra.mxu0 %v6673
        %9429 = vmatprep.subr.bf16.mxu0 %v6678
        %9430 = vmatpush1.bf16.msra.mxu0 %v6677
        %9431 = vmatprep.subr.bf16.mxu0 %v6682
        %9432 = vmatpush1.bf16.msra.mxu0 %v6681
        %9433 = vmatprep.subr.bf16.mxu0 %v6686
        %9434 = vmatpush1.bf16.msra.mxu0 %v6685
        %9435 = vmatprep.subr.bf16.mxu0 %v6690
        %9436 = vmatpush1.bf16.msra.mxu0 %v6689
        %9437 = vmatprep.subr.bf16.mxu0 %v6694
        %9438 = vmatpush1.bf16.msra.mxu0 %v6693
        %9439 = vmatprep.subr.bf16.mxu0 %v6698
        %9440 = vmatpush1.bf16.msra.mxu0 %v6697
        %9441 = vmatprep.subr.bf16.mxu0 %v6702
        %9442 = vmatpush1.bf16.msra.mxu0 %v6701
        %9443 = vmatprep.subr.bf16.mxu0 %v6706
        %9444 = vmatpush1.bf16.msra.mxu0 %v6705
        %9445 = vmatprep.subr.bf16.mxu0 %v6710
        %9446 = vmatpush1.bf16.msra.mxu0 %v6709
        %9447 = vmatprep.subr.bf16.mxu0 %v6714
        %9448 = vmatpush1.bf16.msra.mxu0 %v6713
        %9449 = vmatprep.mubr.bf16.mxu0 %v2355
        %9450 = vmatmul.mubr.bf16.gmra.mrb[0].mxu0 %v2341
        %v9451 = vpop.f32.mrb[0].mxu0
        %v9452 = vadd.f32 %v9411, %v9451
        %v9453 = vpop.f32.mrb[0].mxu0
        %v9454 = vadd.f32 %v9413, %v9453
        %v9455 = vpop.f32.mrb[0].mxu0
        %v9456 = vpop.f32.mrb[0].mxu0
        %9457 = vdwg.mxu0
        %9458 = vmatprep.subr.bf16.mxu0 %v6718
        %9459 = vmatpush1.bf16.msra.mxu0 %v6717
        %9460 = vmatprep.subr.bf16.mxu0 %v6722
        %9461 = vmatpush1.bf16.msra.mxu0 %v6721
        %9462 = vmatprep.subr.bf16.mxu0 %v6726
        %9463 = vmatpush1.bf16.msra.mxu0 %v6725
        %9464 = vmatprep.subr.bf16.mxu0 %v6730
        %9465 = vmatpush1.bf16.msra.mxu0 %v6729
        %9466 = vmatprep.subr.bf16.mxu0 %v6734
        %9467 = vmatpush1.bf16.msra.mxu0 %v6733
        %9468 = vmatprep.subr.bf16.mxu0 %v6738
        %9469 = vmatpush1.bf16.msra.mxu0 %v6737
        %9470 = vmatprep.subr.bf16.mxu0 %v6742
        %9471 = vmatpush1.bf16.msra.mxu0 %v6741
        %9472 = vmatprep.subr.bf16.mxu0 %v6746
        %9473 = vmatpush1.bf16.msra.mxu0 %v6745
        %9474 = vmatprep.subr.bf16.mxu0 %v6750
        %9475 = vmatpush1.bf16.msra.mxu0 %v6749
        %9476 = vmatprep.subr.bf16.mxu0 %v6754
        %9477 = vmatpush1.bf16.msra.mxu0 %v6753
        %9478 = vmatprep.subr.bf16.mxu0 %v6758
        %9479 = vmatpush1.bf16.msra.mxu0 %v6757
        %9480 = vmatprep.subr.bf16.mxu0 %v6762
        %9481 = vmatpush1.bf16.msra.mxu0 %v6761
        %9482 = vmatprep.subr.bf16.mxu0 %v6766
        %9483 = vmatpush1.bf16.msra.mxu0 %v6765
        %9484 = vmatprep.subr.bf16.mxu0 %v6770
        %9485 = vmatpush1.bf16.msra.mxu0 %v6769
        %9486 = vmatprep.subr.bf16.mxu0 %v6774
        %9487 = vmatpush1.bf16.msra.mxu0 %v6773
        %9488 = vmatprep.subr.bf16.mxu0 %v6778
        %9489 = vmatpush1.bf16.msra.mxu0 %v6777
        %9490 = vmatprep.mubr.bf16.mxu0 %v2365
        %9491 = vmatmul.mubr.bf16.gmra.mrb[0].mxu0 %v2363
        %v9492 = vpop.f32.mrb[0].mxu0
        %v9493 = vadd.f32 %v9452, %v9492
        %v9494 = vpop.f32.mrb[0].mxu0
        %v9495 = vadd.f32 %v9454, %v9494
        %v9496 = vpop.f32.mrb[0].mxu0
        %v9497 = vpop.f32.mrb[0].mxu0
        %9498 = vdwg.mxu0
        %9499 = vmatprep.subr.bf16.mxu0 %v6782
        %9500 = vmatpush1.bf16.msra.mxu0 %v6781
        %9501 = vmatprep.subr.bf16.mxu0 %v6786
        %9502 = vmatpush1.bf16.msra.mxu0 %v6785
        %9503 = vmatprep.subr.bf16.mxu0 %v6790
        %9504 = vmatpush1.bf16.msra.mxu0 %v6789
        %9505 = vmatprep.subr.bf16.mxu0 %v6794
        %9506 = vmatpush1.bf16.msra.mxu0 %v6793
        %9507 = vmatprep.subr.bf16.mxu0 %v6798
        %9508 = vmatpush1.bf16.msra.mxu0 %v6797
        %9509 = vmatprep.subr.bf16.mxu0 %v6802
        %9510 = vmatpush1.bf16.msra.mxu0 %v6801
        %9511 = vmatprep.subr.bf16.mxu0 %v6806
        %9512 = vmatpush1.bf16.msra.mxu0 %v6805
        %9513 = vmatprep.subr.bf16.mxu0 %v6810
        %9514 = vmatpush1.bf16.msra.mxu0 %v6809
        %9515 = vmatprep.subr.bf16.mxu0 %v6814
        %9516 = vmatpush1.bf16.msra.mxu0 %v6813
        %9517 = vmatprep.subr.bf16.mxu0 %v6818
        %9518 = vmatpush1.bf16.msra.mxu0 %v6817
        %9519 = vmatprep.subr.bf16.mxu0 %v6822
        %9520 = vmatpush1.bf16.msra.mxu0 %v6821
        %9521 = vmatprep.subr.bf16.mxu0 %v6826
        %9522 = vmatpush1.bf16.msra.mxu0 %v6825
        %9523 = vmatprep.subr.bf16.mxu0 %v6830
        %9524 = vmatpush1.bf16.msra.mxu0 %v6829
        %9525 = vmatprep.subr.bf16.mxu0 %v6834
        %9526 = vmatpush1.bf16.msra.mxu0 %v6833
        %9527 = vmatprep.subr.bf16.mxu0 %v6838
        %9528 = vmatpush1.bf16.msra.mxu0 %v6837
        %9529 = vmatprep.subr.bf16.mxu0 %v6842
        %9530 = vmatpush1.bf16.msra.mxu0 %v6841
        %9531 = vmatprep.mubr.bf16.mxu0 %v2362
        %9532 = vmatmul.mubr.bf16.gmra.mrb[0].mxu0 %v2348
        %v9533 = vpop.f32.mrb[0].mxu0
        %v9534 = vadd.f32 %v9493, %v9533
        %v9535 = vpop.f32.mrb[0].mxu0
        %v9536 = vadd.f32 %v9495, %v9535
        %v9537 = vpop.f32.mrb[0].mxu0
        %v9538 = vpop.f32.mrb[0].mxu0
        %9539 = vdwg.mxu0
        %9540 = vmatprep.subr.bf16.mxu0 %v6846
        %9541 = vmatpush1.bf16.msra.mxu0 %v6845
        %9542 = vmatprep.subr.bf16.mxu0 %v6850
        %9543 = vmatpush1.bf16.msra.mxu0 %v6849
        %9544 = vmatprep.subr.bf16.mxu0 %v6854
        %9545 = vmatpush1.bf16.msra.mxu0 %v6853
        %9546 = vmatprep.subr.bf16.mxu0 %v6858
        %9547 = vmatpush1.bf16.msra.mxu0 %v6857
        %9548 = vmatprep.subr.bf16.mxu0 %v6862
        %9549 = vmatpush1.bf16.msra.mxu0 %v6861
        %9550 = vmatprep.subr.bf16.mxu0 %v6866
        %9551 = vmatpush1.bf16.msra.mxu0 %v6865
        %9552 = vmatprep.subr.bf16.mxu0 %v6870
        %9553 = vmatpush1.bf16.msra.mxu0 %v6869
        %9554 = vmatprep.subr.bf16.mxu0 %v6874
        %9555 = vmatpush1.bf16.msra.mxu0 %v6873
        %9556 = vmatprep.subr.bf16.mxu0 %v6878
        %9557 = vmatpush1.bf16.msra.mxu0 %v6877
        %9558 = vmatprep.subr.bf16.mxu0 %v6882
        %9559 = vmatpush1.bf16.msra.mxu0 %v6881
        %9560 = vmatprep.subr.bf16.mxu0 %v6886
        %9561 = vmatpush1.bf16.msra.mxu0 %v6885
        %9562 = vmatprep.subr.bf16.mxu0 %v6890
        %9563 = vmatpush1.bf16.msra.mxu0 %v6889
        %9564 = vmatprep.subr.bf16.mxu0 %v6894
        %9565 = vmatpush1.bf16.msra.mxu0 %v6893
        %9566 = vmatprep.subr.bf16.mxu0 %v6898
        %9567 = vmatpush1.bf16.msra.mxu0 %v6897
        %9568 = vmatprep.subr.bf16.mxu0 %v6902
        %9569 = vmatpush1.bf16.msra.mxu0 %v6901
        %9570 = vmatprep.subr.bf16.mxu0 %v6906
        %9571 = vmatpush1.bf16.msra.mxu0 %v6905
        %9572 = vmatprep.mubr.bf16.mxu0 %v2366
        %9573 = vmatmul.mubr.bf16.gmra.mrb[0].mxu0 %v2364
        %v9574 = vpop.f32.mrb[0].mxu0
        %v9575 = vadd.f32 %v9534, %v9574
        %v9576 = vpop.f32.mrb[0].mxu0
        %v9577 = vadd.f32 %v9536, %v9576
        %v9578 = vpop.f32.mrb[0].mxu0
        %v9579 = vpop.f32.mrb[0].mxu0
        %9580 = vdwg.mxu0
        %9581 = vmatprep.subr.bf16.mxu0 %v6910
        %9582 = vmatpush1.bf16.msra.mxu0 %v6909
        %9583 = vmatprep.subr.bf16.mxu0 %v6914
        %9584 = vmatpush1.bf16.msra.mxu0 %v6913
        %9585 = vmatprep.subr.bf16.mxu0 %v6918
        %9586 = vmatpush1.bf16.msra.mxu0 %v6917
        %9587 = vmatprep.subr.bf16.mxu0 %v6922
        %9588 = vmatpush1.bf16.msra.mxu0 %v6921
        %9589 = vmatprep.subr.bf16.mxu0 %v6926
        %9590 = vmatpush1.bf16.msra.mxu0 %v6925
        %9591 = vmatprep.subr.bf16.mxu0 %v6930
        %9592 = vmatpush1.bf16.msra.mxu0 %v6929
        %9593 = vmatprep.subr.bf16.mxu0 %v6934
        %9594 = vmatpush1.bf16.msra.mxu0 %v6933
        %9595 = vmatprep.subr.bf16.mxu0 %v6938
        %9596 = vmatpush1.bf16.msra.mxu0 %v6937
        %9597 = vmatprep.subr.bf16.mxu0 %v6942
        %9598 = vmatpush1.bf16.msra.mxu0 %v6941
        %9599 = vmatprep.subr.bf16.mxu0 %v6946
        %9600 = vmatpush1.bf16.msra.mxu0 %v6945
        %9601 = vmatprep.subr.bf16.mxu0 %v6950
        %9602 = vmatpush1.bf16.msra.mxu0 %v6949
        %9603 = vmatprep.subr.bf16.mxu0 %v6954
        %9604 = vmatpush1.bf16.msra.mxu0 %v6953
        %9605 = vmatprep.subr.bf16.mxu0 %v6958
        %9606 = vmatpush1.bf16.msra.mxu0 %v6957
        %9607 = vmatprep.subr.bf16.mxu0 %v6962
        %9608 = vmatpush1.bf16.msra.mxu0 %v6961
        %9609 = vmatprep.subr.bf16.mxu0 %v6966
        %9610 = vmatpush1.bf16.msra.mxu0 %v6965
        %9611 = vmatprep.subr.bf16.mxu0 %v6970
        %9612 = vmatpush1.bf16.msra.mxu0 %v6969
        %9613 = vmatprep.mubr.bf16.mxu0 %v2388
        %9614 = vmatmul.mubr.bf16.gmra.mrb[0].mxu0 %v2381
        %v9615 = vpop.f32.mrb[0].mxu0
        %v9616 = vadd.f32 %v9575, %v9615
        %v9617 = vpop.f32.mrb[0].mxu0
        %v9618 = vadd.f32 %v9577, %v9617
        %v9619 = vpop.f32.mrb[0].mxu0
        %v9620 = vpop.f32.mrb[0].mxu0
        %9621 = vdwg.mxu0
        %9622 = vmatprep.subr.bf16.mxu0 %v6974
        %9623 = vmatpush1.bf16.msra.mxu0 %v6973
        %9624 = vmatprep.subr.bf16.mxu0 %v6978
        %9625 = vmatpush1.bf16.msra.mxu0 %v6977
        %9626 = vmatprep.subr.bf16.mxu0 %v6982
        %9627 = vmatpush1.bf16.msra.mxu0 %v6981
        %9628 = vmatprep.subr.bf16.mxu0 %v6986
        %9629 = vmatpush1.bf16.msra.mxu0 %v6985
        %9630 = vmatprep.subr.bf16.mxu0 %v6990
        %9631 = vmatpush1.bf16.msra.mxu0 %v6989
        %9632 = vmatprep.subr.bf16.mxu0 %v6994
        %9633 = vmatpush1.bf16.msra.mxu0 %v6993
        %9634 = vmatprep.subr.bf16.mxu0 %v6998
        %9635 = vmatpush1.bf16.msra.mxu0 %v6997
        %9636 = vmatprep.subr.bf16.mxu0 %v7002
        %9637 = vmatpush1.bf16.msra.mxu0 %v7001
        %9638 = vmatprep.subr.bf16.mxu0 %v7006
        %9639 = vmatpush1.bf16.msra.mxu0 %v7005
        %9640 = vmatprep.subr.bf16.mxu0 %v7010
        %9641 = vmatpush1.bf16.msra.mxu0 %v7009
        %9642 = vmatprep.subr.bf16.mxu0 %v7014
        %9643 = vmatpush1.bf16.msra.mxu0 %v7013
        %9644 = vmatprep.subr.bf16.mxu0 %v7018
        %9645 = vmatpush1.bf16.msra.mxu0 %v7017
        %9646 = vmatprep.subr.bf16.mxu0 %v7022
        %9647 = vmatpush1.bf16.msra.mxu0 %v7021
        %9648 = vmatprep.subr.bf16.mxu0 %v7026
        %9649 = vmatpush1.bf16.msra.mxu0 %v7025
        %9650 = vmatprep.subr.bf16.mxu0 %v7030
        %9651 = vmatpush1.bf16.msra.mxu0 %v7029
        %9652 = vmatprep.subr.bf16.mxu0 %v7034
        %9653 = vmatpush1.bf16.msra.mxu0 %v7033
        %9654 = vmatprep.mubr.bf16.mxu0 %v2390
        %9655 = vmatmul.mubr.bf16.gmra.mrb[0].mxu0 %v2389
        %v9656 = vpop.f32.mrb[0].mxu0
        %v9657 = vadd.f32 %v9616, %v9656
        %v9658 = vpop.f32.mrb[0].mxu0
        %v9659 = vadd.f32 %v9618, %v9658
        %v9660 = vpop.f32.mrb[0].mxu0
        %v9661 = vpop.f32.mrb[0].mxu0
        %9662 = vdwg.mxu0
        %v9667 = vcombine.low %v8919, %v8921
        %v9668 = vcombine.low %v9657, %v9659
        %v9670 = vunpack.c.l.s4 1983009808
        %v9671 = vunpack.c.0.s8 %v9670
        %v9672 = vlaneseq
        %v9673 = vshrl.u32 %v9672, 7
        %v9674 = vsub.s32 %v9671, %v9673
        %v9675 = vrot.slane %v9667, %v9674
        %v9677 = vunpack.c.l.s4 1983009808
        %v9678 = vunpack.c.0.s8 %v9677
        %v9679 = vlaneseq
        %v9680 = vshrl.u32 %v9679, 7
        %v9681 = vsub.s32 %v9678, %v9680
        %v9682 = vrot.slane %v9668, %v9681
        %v9683 = vcombine.low %v9675, %v9682
        %v9685 = vadd.f32 %v1006, %v9683
        %9686 = vst [vmem:[#allocation3] sm:$0xff] %v9685
        %p9687 = scmp.eq.s32.totalorder %s21, 1
        // Predicated region
        $region61: #{net_forward.1} parent=55 // pred_check
          %p9688 = pneg %p9687
        $region62: #{net_forward.1} parent=55 // pred_check_branch
          %9690 = sbr.rel (%p9688) target = $region64
        $region63: #{net_forward.1} parent=55 // pred_region
          %v9691 = vld [vmem:[#allocation3] sm:$0xff]
          %v9692 = vld [vmem:[%s4] sm:$0xf]
          %v9694 = vlaneseq
          %v9695 = vshrl.u32 %v9694, 7
          %v9696 = vsub.s32 0, %v9695
          %v9697 = vrot.slane %v9692, %v9696
          %v9698 = vlaneseq
          %v9699 = vshrl.u32 %v9698, 7
          %v9700 = vsub.s32 1, %v9699
          %v9701 = vrot.slane %v9692, %v9700
          %v9702 = vlaneseq
          %v9703 = vshrl.u32 %v9702, 7
          %v9704 = vsub.s32 2, %v9703
          %v9705 = vrot.slane %v9692, %v9704
          %v9706 = vlaneseq
          %v9707 = vshrl.u32 %v9706, 7
          %v9708 = vsub.s32 3, %v9707
          %v9709 = vrot.slane %v9692, %v9708
          %v9710 = vcombine.low %v9697, %v9701
          %v9711 = vcombine.low %v9705, %v9709
          %v9713 = vunpack.c.l.s4 1983009808
          %v9714 = vunpack.c.0.s8 %v9713
          %v9715 = vlaneseq
          %v9716 = vshrl.u32 %v9715, 7
          %v9717 = vsub.s32 %v9714, %v9716
          %v9718 = vrot.slane %v9710, %v9717
          %v9720 = vunpack.c.l.s4 1983009808
          %v9721 = vunpack.c.0.s8 %v9720
          %v9722 = vlaneseq
          %v9723 = vshrl.u32 %v9722, 7
          %v9724 = vsub.s32 %v9721, %v9723
          %v9725 = vrot.slane %v9711, %v9724
          %v9726 = vcombine.low %v9718, %v9725
          %v9728 = vadd.f32 %v9691, %v9726
          %v9729 = vmax.f32 %v9728, 0.0
          %v9731 = vcombine.high %v9729, %v9729
          %v9733 = vunpack.c.l.s4 1983009808
          %v9734 = vunpack.c.0.s8 %v9733
          %v9735 = vlaneseq
          %v9736 = vshrl.u32 %v9735, 7
          %v9737 = vsub.s32 %v9734, %v9736
          %v9738 = vrot.slane %v9729, %v9737
          %v9740 = vunpack.c.l.s4 1983009808
          %v9741 = vunpack.c.0.s8 %v9740
          %v9742 = vlaneseq
          %v9743 = vshrl.u32 %v9742, 7
          %v9744 = vsub.s32 %v9741, %v9743
          %v9745 = vrot.slane %v9731, %v9744
          %v9746 = vcombine.high %v9738, %v9738
          %v9747 = vcombine.high %v9745, %v9745
          %v9752 = vpack.c.bf16 %v9738, %v9738
          %v9753 = vpack.c.bf16 %v9746, %v9746
          %v9754 = vpack.c.bf16 %v9745, %v9745
          %v9755 = vpack.c.bf16 %v9747, %v9747
          %v9756 = vld [vmem:[%s5] sm:$0xff]
          %v9757 = vld [vmem:[%s5 + $0x8] sm:$0xff]
          %v9758 = vld [vmem:[%s5 + $0x10] sm:$0xff]
          %v9759 = vld [vmem:[%s5 + $0x18] sm:$0xff]
          %v9760 = vld [vmem:[%s5 + $0x20] sm:$0xff]
          %v9761 = vld [vmem:[%s5 + $0x28] sm:$0xff]
          %v9762 = vld [vmem:[%s5 + $0x30] sm:$0xff]
          %v9763 = vld [vmem:[%s5 + $0x38] sm:$0xff]
          %v9764 = vld [vmem:[%s5 + $0x40] sm:$0xff]
          %v9765 = vld [vmem:[%s5 + $0x48] sm:$0xff]
          %v9766 = vld [vmem:[%s5 + $0x50] sm:$0xff]
          %v9767 = vld [vmem:[%s5 + $0x58] sm:$0xff]
          %v9768 = vld [vmem:[%s5 + $0x60] sm:$0xff]
          %v9769 = vld [vmem:[%s5 + $0x68] sm:$0xff]
          %v9770 = vld [vmem:[%s5 + $0x70] sm:$0xff]
          %v9771 = vld [vmem:[%s5 + $0x78] sm:$0xff]
          %v9772 = vld [vmem:[%s5 + $0x80] sm:$0xff]
          %v9773 = vld [vmem:[%s5 + $0x88] sm:$0xff]
          %v9774 = vld [vmem:[%s5 + $0x90] sm:$0xff]
          %v9775 = vld [vmem:[%s5 + $0x98] sm:$0xff]
          %v9776 = vld [vmem:[%s5 + $0xa0] sm:$0xff]
          %v9777 = vld [vmem:[%s5 + $0xa8] sm:$0xff]
          %v9778 = vld [vmem:[%s5 + $0xb0] sm:$0xff]
          %v9779 = vld [vmem:[%s5 + $0xb8] sm:$0xff]
          %v9780 = vld [vmem:[%s5 + $0xc0] sm:$0xff]
          %v9781 = vld [vmem:[%s5 + $0xc8] sm:$0xff]
          %v9782 = vld [vmem:[%s5 + $0xd0] sm:$0xff]
          %v9783 = vld [vmem:[%s5 + $0xd8] sm:$0xff]
          %v9784 = vld [vmem:[%s5 + $0xe0] sm:$0xff]
          %v9785 = vld [vmem:[%s5 + $0xe8] sm:$0xff]
          %v9786 = vld [vmem:[%s5 + $0xf0] sm:$0xff]
          %v9787 = vld [vmem:[%s5 + $0xf8] sm:$0xff]
          %v9788 = vld [vmem:[%s5 + $0x100] sm:$0xff]
          %v9789 = vld [vmem:[%s5 + $0x108] sm:$0xff]
          %v9790 = vld [vmem:[%s5 + $0x110] sm:$0xff]
          %v9791 = vld [vmem:[%s5 + $0x118] sm:$0xff]
          %v9792 = vld [vmem:[%s5 + $0x120] sm:$0xff]
          %v9793 = vld [vmem:[%s5 + $0x128] sm:$0xff]
          %v9794 = vld [vmem:[%s5 + $0x130] sm:$0xff]
          %v9795 = vld [vmem:[%s5 + $0x138] sm:$0xff]
          %v9796 = vld [vmem:[%s5 + $0x140] sm:$0xff]
          %v9797 = vld [vmem:[%s5 + $0x148] sm:$0xff]
          %v9798 = vld [vmem:[%s5 + $0x150] sm:$0xff]
          %v9799 = vld [vmem:[%s5 + $0x158] sm:$0xff]
          %v9800 = vld [vmem:[%s5 + $0x160] sm:$0xff]
          %v9801 = vld [vmem:[%s5 + $0x168] sm:$0xff]
          %v9802 = vld [vmem:[%s5 + $0x170] sm:$0xff]
          %v9803 = vld [vmem:[%s5 + $0x178] sm:$0xff]
          %v9804 = vld [vmem:[%s5 + $0x180] sm:$0xff]
          %v9805 = vld [vmem:[%s5 + $0x188] sm:$0xff]
          %v9806 = vld [vmem:[%s5 + $0x190] sm:$0xff]
          %v9807 = vld [vmem:[%s5 + $0x198] sm:$0xff]
          %v9808 = vld [vmem:[%s5 + $0x1a0] sm:$0xff]
          %v9809 = vld [vmem:[%s5 + $0x1a8] sm:$0xff]
          %v9810 = vld [vmem:[%s5 + $0x1b0] sm:$0xff]
          %v9811 = vld [vmem:[%s5 + $0x1b8] sm:$0xff]
          %v9812 = vld [vmem:[%s5 + $0x1c0] sm:$0xff]
          %v9813 = vld [vmem:[%s5 + $0x1c8] sm:$0xff]
          %v9814 = vld [vmem:[%s5 + $0x1d0] sm:$0xff]
          %v9815 = vld [vmem:[%s5 + $0x1d8] sm:$0xff]
          %v9816 = vld [vmem:[%s5 + $0x1e0] sm:$0xff]
          %v9817 = vld [vmem:[%s5 + $0x1e8] sm:$0xff]
          %v9818 = vld [vmem:[%s5 + $0x1f0] sm:$0xff]
          %v9819 = vld [vmem:[%s5 + $0x1f8] sm:$0xff]
          %v9820 = vld [vmem:[%s5 + $0x200] sm:$0xff]
          %v9821 = vld [vmem:[%s5 + $0x208] sm:$0xff]
          %v9822 = vld [vmem:[%s5 + $0x210] sm:$0xff]
          %v9823 = vld [vmem:[%s5 + $0x218] sm:$0xff]
          %v9824 = vld [vmem:[%s5 + $0x220] sm:$0xff]
          %v9825 = vld [vmem:[%s5 + $0x228] sm:$0xff]
          %v9826 = vld [vmem:[%s5 + $0x230] sm:$0xff]
          %v9827 = vld [vmem:[%s5 + $0x238] sm:$0xff]
          %v9828 = vld [vmem:[%s5 + $0x240] sm:$0xff]
          %v9829 = vld [vmem:[%s5 + $0x248] sm:$0xff]
          %v9830 = vld [vmem:[%s5 + $0x250] sm:$0xff]
          %v9831 = vld [vmem:[%s5 + $0x258] sm:$0xff]
          %v9832 = vld [vmem:[%s5 + $0x260] sm:$0xff]
          %v9833 = vld [vmem:[%s5 + $0x268] sm:$0xff]
          %v9834 = vld [vmem:[%s5 + $0x270] sm:$0xff]
          %v9835 = vld [vmem:[%s5 + $0x278] sm:$0xff]
          %v9836 = vld [vmem:[%s5 + $0x280] sm:$0xff]
          %v9837 = vld [vmem:[%s5 + $0x288] sm:$0xff]
          %v9838 = vld [vmem:[%s5 + $0x290] sm:$0xff]
          %v9839 = vld [vmem:[%s5 + $0x298] sm:$0xff]
          %v9840 = vld [vmem:[%s5 + $0x2a0] sm:$0xff]
          %v9841 = vld [vmem:[%s5 + $0x2a8] sm:$0xff]
          %v9842 = vld [vmem:[%s5 + $0x2b0] sm:$0xff]
          %v9843 = vld [vmem:[%s5 + $0x2b8] sm:$0xff]
          %v9844 = vld [vmem:[%s5 + $0x2c0] sm:$0xff]
          %v9845 = vld [vmem:[%s5 + $0x2c8] sm:$0xff]
          %v9846 = vld [vmem:[%s5 + $0x2d0] sm:$0xff]
          %v9847 = vld [vmem:[%s5 + $0x2d8] sm:$0xff]
          %v9848 = vld [vmem:[%s5 + $0x2e0] sm:$0xff]
          %v9849 = vld [vmem:[%s5 + $0x2e8] sm:$0xff]
          %v9850 = vld [vmem:[%s5 + $0x2f0] sm:$0xff]
          %v9851 = vld [vmem:[%s5 + $0x2f8] sm:$0xff]
          %v9852 = vld [vmem:[%s5 + $0x300] sm:$0xff]
          %v9853 = vld [vmem:[%s5 + $0x308] sm:$0xff]
          %v9854 = vld [vmem:[%s5 + $0x310] sm:$0xff]
          %v9855 = vld [vmem:[%s5 + $0x318] sm:$0xff]
          %v9856 = vld [vmem:[%s5 + $0x320] sm:$0xff]
          %v9857 = vld [vmem:[%s5 + $0x328] sm:$0xff]
          %v9858 = vld [vmem:[%s5 + $0x330] sm:$0xff]
          %v9859 = vld [vmem:[%s5 + $0x338] sm:$0xff]
          %v9860 = vld [vmem:[%s5 + $0x340] sm:$0xff]
          %v9861 = vld [vmem:[%s5 + $0x348] sm:$0xff]
          %v9862 = vld [vmem:[%s5 + $0x350] sm:$0xff]
          %v9863 = vld [vmem:[%s5 + $0x358] sm:$0xff]
          %v9864 = vld [vmem:[%s5 + $0x360] sm:$0xff]
          %v9865 = vld [vmem:[%s5 + $0x368] sm:$0xff]
          %v9866 = vld [vmem:[%s5 + $0x370] sm:$0xff]
          %v9867 = vld [vmem:[%s5 + $0x378] sm:$0xff]
          %v9868 = vld [vmem:[%s5 + $0x380] sm:$0xff]
          %v9869 = vld [vmem:[%s5 + $0x388] sm:$0xff]
          %v9870 = vld [vmem:[%s5 + $0x390] sm:$0xff]
          %v9871 = vld [vmem:[%s5 + $0x398] sm:$0xff]
          %v9872 = vld [vmem:[%s5 + $0x3a0] sm:$0xff]
          %v9873 = vld [vmem:[%s5 + $0x3a8] sm:$0xff]
          %v9874 = vld [vmem:[%s5 + $0x3b0] sm:$0xff]
          %v9875 = vld [vmem:[%s5 + $0x3b8] sm:$0xff]
          %v9876 = vld [vmem:[%s5 + $0x3c0] sm:$0xff]
          %v9877 = vld [vmem:[%s5 + $0x3c8] sm:$0xff]
          %v9878 = vld [vmem:[%s5 + $0x3d0] sm:$0xff]
          %v9879 = vld [vmem:[%s5 + $0x3d8] sm:$0xff]
          %v9880 = vld [vmem:[%s5 + $0x3e0] sm:$0xff]
          %v9881 = vld [vmem:[%s5 + $0x3e8] sm:$0xff]
          %v9882 = vld [vmem:[%s5 + $0x3f0] sm:$0xff]
          %v9883 = vld [vmem:[%s5 + $0x3f8] sm:$0xff]
          %v9884 = vld [vmem:[%s6] sm:$0xf]
          %v9886 = vlaneseq
          %v9887 = vshrl.u32 %v9886, 7
          %v9888 = vsub.s32 0, %v9887
          %v9889 = vrot.slane %v9884, %v9888
          %v9890 = vlaneseq
          %v9891 = vshrl.u32 %v9890, 7
          %v9892 = vsub.s32 1, %v9891
          %v9893 = vrot.slane %v9884, %v9892
          %v9894 = vlaneseq
          %v9895 = vshrl.u32 %v9894, 7
          %v9896 = vsub.s32 2, %v9895
          %v9897 = vrot.slane %v9884, %v9896
          %v9898 = vlaneseq
          %v9899 = vshrl.u32 %v9898, 7
          %v9900 = vsub.s32 3, %v9899
          %v9901 = vrot.slane %v9884, %v9900
          %v10034 = vunpack.c.l.b16 %v9756
          %v10035 = vunpack.c.h.b16 %v9756
          %v10036 = vunpack.c.l.b16 %v9757
          %v10037 = vunpack.c.h.b16 %v9757
          %v10038 = vunpack.c.l.b16 %v9758
          %v10039 = vunpack.c.h.b16 %v9758
          %v10040 = vunpack.c.l.b16 %v9759
          %v10041 = vunpack.c.h.b16 %v9759
          %v10042 = vunpack.c.l.b16 %v9760
          %v10043 = vunpack.c.h.b16 %v9760
          %v10044 = vunpack.c.l.b16 %v9761
          %v10045 = vunpack.c.h.b16 %v9761
          %v10046 = vunpack.c.l.b16 %v9762
          %v10047 = vunpack.c.h.b16 %v9762
          %v10048 = vunpack.c.l.b16 %v9763
          %v10049 = vunpack.c.h.b16 %v9763
          %v10050 = vunpack.c.l.b16 %v9764
          %v10051 = vunpack.c.h.b16 %v9764
          %v10052 = vunpack.c.l.b16 %v9765
          %v10053 = vunpack.c.h.b16 %v9765
          %v10054 = vunpack.c.l.b16 %v9766
          %v10055 = vunpack.c.h.b16 %v9766
          %v10056 = vunpack.c.l.b16 %v9767
          %v10057 = vunpack.c.h.b16 %v9767
          %v10058 = vunpack.c.l.b16 %v9768
          %v10059 = vunpack.c.h.b16 %v9768
          %v10060 = vunpack.c.l.b16 %v9769
          %v10061 = vunpack.c.h.b16 %v9769
          %v10062 = vunpack.c.l.b16 %v9770
          %v10063 = vunpack.c.h.b16 %v9770
          %v10064 = vunpack.c.l.b16 %v9771
          %v10065 = vunpack.c.h.b16 %v9771
          %v10066 = vunpack.c.l.b16 %v9772
          %v10067 = vunpack.c.h.b16 %v9772
          %v10068 = vunpack.c.l.b16 %v9773
          %v10069 = vunpack.c.h.b16 %v9773
          %v10070 = vunpack.c.l.b16 %v9774
          %v10071 = vunpack.c.h.b16 %v9774
          %v10072 = vunpack.c.l.b16 %v9775
          %v10073 = vunpack.c.h.b16 %v9775
          %v10074 = vunpack.c.l.b16 %v9776
          %v10075 = vunpack.c.h.b16 %v9776
          %v10076 = vunpack.c.l.b16 %v9777
          %v10077 = vunpack.c.h.b16 %v9777
          %v10078 = vunpack.c.l.b16 %v9778
          %v10079 = vunpack.c.h.b16 %v9778
          %v10080 = vunpack.c.l.b16 %v9779
          %v10081 = vunpack.c.h.b16 %v9779
          %v10082 = vunpack.c.l.b16 %v9780
          %v10083 = vunpack.c.h.b16 %v9780
          %v10084 = vunpack.c.l.b16 %v9781
          %v10085 = vunpack.c.h.b16 %v9781
          %v10086 = vunpack.c.l.b16 %v9782
          %v10087 = vunpack.c.h.b16 %v9782
          %v10088 = vunpack.c.l.b16 %v9783
          %v10089 = vunpack.c.h.b16 %v9783
          %v10090 = vunpack.c.l.b16 %v9784
          %v10091 = vunpack.c.h.b16 %v9784
          %v10092 = vunpack.c.l.b16 %v9785
          %v10093 = vunpack.c.h.b16 %v9785
          %v10094 = vunpack.c.l.b16 %v9786
          %v10095 = vunpack.c.h.b16 %v9786
          %v10096 = vunpack.c.l.b16 %v9787
          %v10097 = vunpack.c.h.b16 %v9787
          %v10098 = vunpack.c.l.b16 %v9788
          %v10099 = vunpack.c.h.b16 %v9788
          %v10100 = vunpack.c.l.b16 %v9789
          %v10101 = vunpack.c.h.b16 %v9789
          %v10102 = vunpack.c.l.b16 %v9790
          %v10103 = vunpack.c.h.b16 %v9790
          %v10104 = vunpack.c.l.b16 %v9791
          %v10105 = vunpack.c.h.b16 %v9791
          %v10106 = vunpack.c.l.b16 %v9792
          %v10107 = vunpack.c.h.b16 %v9792
          %v10108 = vunpack.c.l.b16 %v9793
          %v10109 = vunpack.c.h.b16 %v9793
          %v10110 = vunpack.c.l.b16 %v9794
          %v10111 = vunpack.c.h.b16 %v9794
          %v10112 = vunpack.c.l.b16 %v9795
          %v10113 = vunpack.c.h.b16 %v9795
          %v10114 = vunpack.c.l.b16 %v9796
          %v10115 = vunpack.c.h.b16 %v9796
          %v10116 = vunpack.c.l.b16 %v9797
          %v10117 = vunpack.c.h.b16 %v9797
          %v10118 = vunpack.c.l.b16 %v9798
          %v10119 = vunpack.c.h.b16 %v9798
          %v10120 = vunpack.c.l.b16 %v9799
          %v10121 = vunpack.c.h.b16 %v9799
          %v10122 = vunpack.c.l.b16 %v9800
          %v10123 = vunpack.c.h.b16 %v9800
          %v10124 = vunpack.c.l.b16 %v9801
          %v10125 = vunpack.c.h.b16 %v9801
          %v10126 = vunpack.c.l.b16 %v9802
          %v10127 = vunpack.c.h.b16 %v9802
          %v10128 = vunpack.c.l.b16 %v9803
          %v10129 = vunpack.c.h.b16 %v9803
          %v10130 = vunpack.c.l.b16 %v9804
          %v10131 = vunpack.c.h.b16 %v9804
          %v10132 = vunpack.c.l.b16 %v9805
          %v10133 = vunpack.c.h.b16 %v9805
          %v10134 = vunpack.c.l.b16 %v9806
          %v10135 = vunpack.c.h.b16 %v9806
          %v10136 = vunpack.c.l.b16 %v9807
          %v10137 = vunpack.c.h.b16 %v9807
          %v10138 = vunpack.c.l.b16 %v9808
          %v10139 = vunpack.c.h.b16 %v9808
          %v10140 = vunpack.c.l.b16 %v9809
          %v10141 = vunpack.c.h.b16 %v9809
          %v10142 = vunpack.c.l.b16 %v9810
          %v10143 = vunpack.c.h.b16 %v9810
          %v10144 = vunpack.c.l.b16 %v9811
          %v10145 = vunpack.c.h.b16 %v9811
          %v10146 = vunpack.c.l.b16 %v9812
          %v10147 = vunpack.c.h.b16 %v9812
          %v10148 = vunpack.c.l.b16 %v9813
          %v10149 = vunpack.c.h.b16 %v9813
          %v10150 = vunpack.c.l.b16 %v9814
          %v10151 = vunpack.c.h.b16 %v9814
          %v10152 = vunpack.c.l.b16 %v9815
          %v10153 = vunpack.c.h.b16 %v9815
          %v10154 = vunpack.c.l.b16 %v9816
          %v10155 = vunpack.c.h.b16 %v9816
          %v10156 = vunpack.c.l.b16 %v9817
          %v10157 = vunpack.c.h.b16 %v9817
          %v10158 = vunpack.c.l.b16 %v9818
          %v10159 = vunpack.c.h.b16 %v9818
          %v10160 = vunpack.c.l.b16 %v9819
          %v10161 = vunpack.c.h.b16 %v9819
          %v10162 = vunpack.c.l.b16 %v9820
          %v10163 = vunpack.c.h.b16 %v9820
          %v10164 = vunpack.c.l.b16 %v9821
          %v10165 = vunpack.c.h.b16 %v9821
          %v10166 = vunpack.c.l.b16 %v9822
          %v10167 = vunpack.c.h.b16 %v9822
          %v10168 = vunpack.c.l.b16 %v9823
          %v10169 = vunpack.c.h.b16 %v9823
          %v10170 = vunpack.c.l.b16 %v9824
          %v10171 = vunpack.c.h.b16 %v9824
          %v10172 = vunpack.c.l.b16 %v9825
          %v10173 = vunpack.c.h.b16 %v9825
          %v10174 = vunpack.c.l.b16 %v9826
          %v10175 = vunpack.c.h.b16 %v9826
          %v10176 = vunpack.c.l.b16 %v9827
          %v10177 = vunpack.c.h.b16 %v9827
          %v10178 = vunpack.c.l.b16 %v9828
          %v10179 = vunpack.c.h.b16 %v9828
          %v10180 = vunpack.c.l.b16 %v9829
          %v10181 = vunpack.c.h.b16 %v9829
          %v10182 = vunpack.c.l.b16 %v9830
          %v10183 = vunpack.c.h.b16 %v9830
          %v10184 = vunpack.c.l.b16 %v9831
          %v10185 = vunpack.c.h.b16 %v9831
          %v10186 = vunpack.c.l.b16 %v9832
          %v10187 = vunpack.c.h.b16 %v9832
          %v10188 = vunpack.c.l.b16 %v9833
          %v10189 = vunpack.c.h.b16 %v9833
          %v10190 = vunpack.c.l.b16 %v9834
          %v10191 = vunpack.c.h.b16 %v9834
          %v10192 = vunpack.c.l.b16 %v9835
          %v10193 = vunpack.c.h.b16 %v9835
          %v10194 = vunpack.c.l.b16 %v9836
          %v10195 = vunpack.c.h.b16 %v9836
          %v10196 = vunpack.c.l.b16 %v9837
          %v10197 = vunpack.c.h.b16 %v9837
          %v10198 = vunpack.c.l.b16 %v9838
          %v10199 = vunpack.c.h.b16 %v9838
          %v10200 = vunpack.c.l.b16 %v9839
          %v10201 = vunpack.c.h.b16 %v9839
          %v10202 = vunpack.c.l.b16 %v9840
          %v10203 = vunpack.c.h.b16 %v9840
          %v10204 = vunpack.c.l.b16 %v9841
          %v10205 = vunpack.c.h.b16 %v9841
          %v10206 = vunpack.c.l.b16 %v9842
          %v10207 = vunpack.c.h.b16 %v9842
          %v10208 = vunpack.c.l.b16 %v9843
          %v10209 = vunpack.c.h.b16 %v9843
          %v10210 = vunpack.c.l.b16 %v9844
          %v10211 = vunpack.c.h.b16 %v9844
          %v10212 = vunpack.c.l.b16 %v9845
          %v10213 = vunpack.c.h.b16 %v9845
          %v10214 = vunpack.c.l.b16 %v9846
          %v10215 = vunpack.c.h.b16 %v9846
          %v10216 = vunpack.c.l.b16 %v9847
          %v10217 = vunpack.c.h.b16 %v9847
          %v10218 = vunpack.c.l.b16 %v9848
          %v10219 = vunpack.c.h.b16 %v9848
          %v10220 = vunpack.c.l.b16 %v9849
          %v10221 = vunpack.c.h.b16 %v9849
          %v10222 = vunpack.c.l.b16 %v9850
          %v10223 = vunpack.c.h.b16 %v9850
          %v10224 = vunpack.c.l.b16 %v9851
          %v10225 = vunpack.c.h.b16 %v9851
          %v10226 = vunpack.c.l.b16 %v9852
          %v10227 = vunpack.c.h.b16 %v9852
          %v10228 = vunpack.c.l.b16 %v9853
          %v10229 = vunpack.c.h.b16 %v9853
          %v10230 = vunpack.c.l.b16 %v9854
          %v10231 = vunpack.c.h.b16 %v9854
          %v10232 = vunpack.c.l.b16 %v9855
          %v10233 = vunpack.c.h.b16 %v9855
          %v10234 = vunpack.c.l.b16 %v9856
          %v10235 = vunpack.c.h.b16 %v9856
          %v10236 = vunpack.c.l.b16 %v9857
          %v10237 = vunpack.c.h.b16 %v9857
          %v10238 = vunpack.c.l.b16 %v9858
          %v10239 = vunpack.c.h.b16 %v9858
          %v10240 = vunpack.c.l.b16 %v9859
          %v10241 = vunpack.c.h.b16 %v9859
          %v10242 = vunpack.c.l.b16 %v9860
          %v10243 = vunpack.c.h.b16 %v9860
          %v10244 = vunpack.c.l.b16 %v9861
          %v10245 = vunpack.c.h.b16 %v9861
          %v10246 = vunpack.c.l.b16 %v9862
          %v10247 = vunpack.c.h.b16 %v9862
          %v10248 = vunpack.c.l.b16 %v9863
          %v10249 = vunpack.c.h.b16 %v9863
          %v10250 = vunpack.c.l.b16 %v9864
          %v10251 = vunpack.c.h.b16 %v9864
          %v10252 = vunpack.c.l.b16 %v9865
          %v10253 = vunpack.c.h.b16 %v9865
          %v10254 = vunpack.c.l.b16 %v9866
          %v10255 = vunpack.c.h.b16 %v9866
          %v10256 = vunpack.c.l.b16 %v9867
          %v10257 = vunpack.c.h.b16 %v9867
          %v10258 = vunpack.c.l.b16 %v9868
          %v10259 = vunpack.c.h.b16 %v9868
          %v10260 = vunpack.c.l.b16 %v9869
          %v10261 = vunpack.c.h.b16 %v9869
          %v10262 = vunpack.c.l.b16 %v9870
          %v10263 = vunpack.c.h.b16 %v9870
          %v10264 = vunpack.c.l.b16 %v9871
          %v10265 = vunpack.c.h.b16 %v9871
          %v10266 = vunpack.c.l.b16 %v9872
          %v10267 = vunpack.c.h.b16 %v9872
          %v10268 = vunpack.c.l.b16 %v9873
          %v10269 = vunpack.c.h.b16 %v9873
          %v10270 = vunpack.c.l.b16 %v9874
          %v10271 = vunpack.c.h.b16 %v9874
          %v10272 = vunpack.c.l.b16 %v9875
          %v10273 = vunpack.c.h.b16 %v9875
          %v10274 = vunpack.c.l.b16 %v9876
          %v10275 = vunpack.c.h.b16 %v9876
          %v10276 = vunpack.c.l.b16 %v9877
          %v10277 = vunpack.c.h.b16 %v9877
          %v10278 = vunpack.c.l.b16 %v9878
          %v10279 = vunpack.c.h.b16 %v9878
          %v10280 = vunpack.c.l.b16 %v9879
          %v10281 = vunpack.c.h.b16 %v9879
          %v10282 = vunpack.c.l.b16 %v9880
          %v10283 = vunpack.c.h.b16 %v9880
          %v10284 = vunpack.c.l.b16 %v9881
          %v10285 = vunpack.c.h.b16 %v9881
          %v10286 = vunpack.c.l.b16 %v9882
          %v10287 = vunpack.c.h.b16 %v9882
          %v10288 = vunpack.c.l.b16 %v9883
          %v10289 = vunpack.c.h.b16 %v9883
          %v10290 = vpack.c.b16 %v10038, %v10034
          %v10291 = vpack.c.b16 %v10039, %v10035
          %v10292 = vpack.c.b16 %v10040, %v10036
          %v10293 = vpack.c.b16 %v10041, %v10037
          %v10294 = vpack.c.b16 %v10046, %v10042
          %v10295 = vpack.c.b16 %v10047, %v10043
          %v10296 = vpack.c.b16 %v10048, %v10044
          %v10297 = vpack.c.b16 %v10049, %v10045
          %v10298 = vpack.c.b16 %v10054, %v10050
          %v10299 = vpack.c.b16 %v10055, %v10051
          %v10300 = vpack.c.b16 %v10056, %v10052
          %v10301 = vpack.c.b16 %v10057, %v10053
          %v10302 = vpack.c.b16 %v10062, %v10058
          %v10303 = vpack.c.b16 %v10063, %v10059
          %v10304 = vpack.c.b16 %v10064, %v10060
          %v10305 = vpack.c.b16 %v10065, %v10061
          %v10306 = vpack.c.b16 %v10070, %v10066
          %v10307 = vpack.c.b16 %v10071, %v10067
          %v10308 = vpack.c.b16 %v10072, %v10068
          %v10309 = vpack.c.b16 %v10073, %v10069
          %v10310 = vpack.c.b16 %v10078, %v10074
          %v10311 = vpack.c.b16 %v10079, %v10075
          %v10312 = vpack.c.b16 %v10080, %v10076
          %v10313 = vpack.c.b16 %v10081, %v10077
          %v10314 = vpack.c.b16 %v10086, %v10082
          %v10315 = vpack.c.b16 %v10087, %v10083
          %v10316 = vpack.c.b16 %v10088, %v10084
          %v10317 = vpack.c.b16 %v10089, %v10085
          %v10318 = vpack.c.b16 %v10094, %v10090
          %v10319 = vpack.c.b16 %v10095, %v10091
          %v10320 = vpack.c.b16 %v10096, %v10092
          %v10321 = vpack.c.b16 %v10097, %v10093
          %v10322 = vpack.c.b16 %v10102, %v10098
          %v10323 = vpack.c.b16 %v10103, %v10099
          %v10324 = vpack.c.b16 %v10104, %v10100
          %v10325 = vpack.c.b16 %v10105, %v10101
          %v10326 = vpack.c.b16 %v10110, %v10106
          %v10327 = vpack.c.b16 %v10111, %v10107
          %v10328 = vpack.c.b16 %v10112, %v10108
          %v10329 = vpack.c.b16 %v10113, %v10109
          %v10330 = vpack.c.b16 %v10118, %v10114
          %v10331 = vpack.c.b16 %v10119, %v10115
          %v10332 = vpack.c.b16 %v10120, %v10116
          %v10333 = vpack.c.b16 %v10121, %v10117
          %v10334 = vpack.c.b16 %v10126, %v10122
          %v10335 = vpack.c.b16 %v10127, %v10123
          %v10336 = vpack.c.b16 %v10128, %v10124
          %v10337 = vpack.c.b16 %v10129, %v10125
          %v10338 = vpack.c.b16 %v10134, %v10130
          %v10339 = vpack.c.b16 %v10135, %v10131
          %v10340 = vpack.c.b16 %v10136, %v10132
          %v10341 = vpack.c.b16 %v10137, %v10133
          %v10342 = vpack.c.b16 %v10142, %v10138
          %v10343 = vpack.c.b16 %v10143, %v10139
          %v10344 = vpack.c.b16 %v10144, %v10140
          %v10345 = vpack.c.b16 %v10145, %v10141
          %v10346 = vpack.c.b16 %v10150, %v10146
          %v10347 = vpack.c.b16 %v10151, %v10147
          %v10348 = vpack.c.b16 %v10152, %v10148
          %v10349 = vpack.c.b16 %v10153, %v10149
          %v10350 = vpack.c.b16 %v10158, %v10154
          %v10351 = vpack.c.b16 %v10159, %v10155
          %v10352 = vpack.c.b16 %v10160, %v10156
          %v10353 = vpack.c.b16 %v10161, %v10157
          %v10354 = vpack.c.b16 %v10166, %v10162
          %v10355 = vpack.c.b16 %v10167, %v10163
          %v10356 = vpack.c.b16 %v10168, %v10164
          %v10357 = vpack.c.b16 %v10169, %v10165
          %v10358 = vpack.c.b16 %v10174, %v10170
          %v10359 = vpack.c.b16 %v10175, %v10171
          %v10360 = vpack.c.b16 %v10176, %v10172
          %v10361 = vpack.c.b16 %v10177, %v10173
          %v10362 = vpack.c.b16 %v10182, %v10178
          %v10363 = vpack.c.b16 %v10183, %v10179
          %v10364 = vpack.c.b16 %v10184, %v10180
          %v10365 = vpack.c.b16 %v10185, %v10181
          %v10366 = vpack.c.b16 %v10190, %v10186
          %v10367 = vpack.c.b16 %v10191, %v10187
          %v10368 = vpack.c.b16 %v10192, %v10188
          %v10369 = vpack.c.b16 %v10193, %v10189
          %v10370 = vpack.c.b16 %v10198, %v10194
          %v10371 = vpack.c.b16 %v10199, %v10195
          %v10372 = vpack.c.b16 %v10200, %v10196
          %v10373 = vpack.c.b16 %v10201, %v10197
          %v10374 = vpack.c.b16 %v10206, %v10202
          %v10375 = vpack.c.b16 %v10207, %v10203
          %v10376 = vpack.c.b16 %v10208, %v10204
          %v10377 = vpack.c.b16 %v10209, %v10205
          %v10378 = vpack.c.b16 %v10214, %v10210
          %v10379 = vpack.c.b16 %v10215, %v10211
          %v10380 = vpack.c.b16 %v10216, %v10212
          %v10381 = vpack.c.b16 %v10217, %v10213
          %v10382 = vpack.c.b16 %v10222, %v10218
          %v10383 = vpack.c.b16 %v10223, %v10219
          %v10384 = vpack.c.b16 %v10224, %v10220
          %v10385 = vpack.c.b16 %v10225, %v10221
          %v10386 = vpack.c.b16 %v10230, %v10226
          %v10387 = vpack.c.b16 %v10231, %v10227
          %v10388 = vpack.c.b16 %v10232, %v10228
          %v10389 = vpack.c.b16 %v10233, %v10229
          %v10390 = vpack.c.b16 %v10238, %v10234
          %v10391 = vpack.c.b16 %v10239, %v10235
          %v10392 = vpack.c.b16 %v10240, %v10236
          %v10393 = vpack.c.b16 %v10241, %v10237
          %v10394 = vpack.c.b16 %v10246, %v10242
          %v10395 = vpack.c.b16 %v10247, %v10243
          %v10396 = vpack.c.b16 %v10248, %v10244
          %v10397 = vpack.c.b16 %v10249, %v10245
          %v10398 = vpack.c.b16 %v10254, %v10250
          %v10399 = vpack.c.b16 %v10255, %v10251
          %v10400 = vpack.c.b16 %v10256, %v10252
          %v10401 = vpack.c.b16 %v10257, %v10253
          %v10402 = vpack.c.b16 %v10262, %v10258
          %v10403 = vpack.c.b16 %v10263, %v10259
          %v10404 = vpack.c.b16 %v10264, %v10260
          %v10405 = vpack.c.b16 %v10265, %v10261
          %v10406 = vpack.c.b16 %v10270, %v10266
          %v10407 = vpack.c.b16 %v10271, %v10267
          %v10408 = vpack.c.b16 %v10272, %v10268
          %v10409 = vpack.c.b16 %v10273, %v10269
          %v10410 = vpack.c.b16 %v10278, %v10274
          %v10411 = vpack.c.b16 %v10279, %v10275
          %v10412 = vpack.c.b16 %v10280, %v10276
          %v10413 = vpack.c.b16 %v10281, %v10277
          %v10414 = vpack.c.b16 %v10286, %v10282
          %v10415 = vpack.c.b16 %v10287, %v10283
          %v10416 = vpack.c.b16 %v10288, %v10284
          %v10417 = vpack.c.b16 %v10289, %v10285
          %10546 = vmatprep.subr.bf16.mxu0 %v10291
          %10547 = vmatpush1.bf16.msra.mxu0 %v10290
          %10548 = vmatprep.subr.bf16.mxu0 %v10295
          %10549 = vmatpush1.bf16.msra.mxu0 %v10294
          %10550 = vmatprep.subr.bf16.mxu0 %v10299
          %10551 = vmatpush1.bf16.msra.mxu0 %v10298
          %10552 = vmatprep.subr.bf16.mxu0 %v10303
          %10553 = vmatpush1.bf16.msra.mxu0 %v10302
          %10554 = vmatprep.subr.bf16.mxu0 %v10307
          %10555 = vmatpush1.bf16.msra.mxu0 %v10306
          %10556 = vmatprep.subr.bf16.mxu0 %v10311
          %10557 = vmatpush1.bf16.msra.mxu0 %v10310
          %10558 = vmatprep.subr.bf16.mxu0 %v10315
          %10559 = vmatpush1.bf16.msra.mxu0 %v10314
          %10560 = vmatprep.subr.bf16.mxu0 %v10319
          %10561 = vmatpush1.bf16.msra.mxu0 %v10318
          %10562 = vmatprep.subr.bf16.mxu0 %v10323
          %10563 = vmatpush1.bf16.msra.mxu0 %v10322
          %10564 = vmatprep.subr.bf16.mxu0 %v10327
          %10565 = vmatpush1.bf16.msra.mxu0 %v10326
          %10566 = vmatprep.subr.bf16.mxu0 %v10331
          %10567 = vmatpush1.bf16.msra.mxu0 %v10330
          %10568 = vmatprep.subr.bf16.mxu0 %v10335
          %10569 = vmatpush1.bf16.msra.mxu0 %v10334
          %10570 = vmatprep.subr.bf16.mxu0 %v10339
          %10571 = vmatpush1.bf16.msra.mxu0 %v10338
          %10572 = vmatprep.subr.bf16.mxu0 %v10343
          %10573 = vmatpush1.bf16.msra.mxu0 %v10342
          %10574 = vmatprep.subr.bf16.mxu0 %v10347
          %10575 = vmatpush1.bf16.msra.mxu0 %v10346
          %10576 = vmatprep.subr.bf16.mxu0 %v10351
          %10577 = vmatpush1.bf16.msra.mxu0 %v10350
          %10578 = vmatprep.mubr.bf16.mxu0 %v9753
          %10579 = vmatmul.mubr.bf16.gmra.mrb[0].mxu0 %v9752
          %v10580 = vpop.f32.mrb[0].mxu0
          %v10581 = vadd.f32 %v9889, %v10580
          %v10582 = vpop.f32.mrb[0].mxu0
          %v10583 = vadd.f32 %v9893, %v10582
          %v10584 = vpop.f32.mrb[0].mxu0
          %v10585 = vpop.f32.mrb[0].mxu0
          %10586 = vdwg.mxu0
          %10587 = vmatprep.subr.bf16.mxu0 %v10355
          %10588 = vmatpush1.bf16.msra.mxu0 %v10354
          %10589 = vmatprep.subr.bf16.mxu0 %v10359
          %10590 = vmatpush1.bf16.msra.mxu0 %v10358
          %10591 = vmatprep.subr.bf16.mxu0 %v10363
          %10592 = vmatpush1.bf16.msra.mxu0 %v10362
          %10593 = vmatprep.subr.bf16.mxu0 %v10367
          %10594 = vmatpush1.bf16.msra.mxu0 %v10366
          %10595 = vmatprep.subr.bf16.mxu0 %v10371
          %10596 = vmatpush1.bf16.msra.mxu0 %v10370
          %10597 = vmatprep.subr.bf16.mxu0 %v10375
          %10598 = vmatpush1.bf16.msra.mxu0 %v10374
          %10599 = vmatprep.subr.bf16.mxu0 %v10379
          %10600 = vmatpush1.bf16.msra.mxu0 %v10378
          %10601 = vmatprep.subr.bf16.mxu0 %v10383
          %10602 = vmatpush1.bf16.msra.mxu0 %v10382
          %10603 = vmatprep.subr.bf16.mxu0 %v10387
          %10604 = vmatpush1.bf16.msra.mxu0 %v10386
          %10605 = vmatprep.subr.bf16.mxu0 %v10391
          %10606 = vmatpush1.bf16.msra.mxu0 %v10390
          %10607 = vmatprep.subr.bf16.mxu0 %v10395
          %10608 = vmatpush1.bf16.msra.mxu0 %v10394
          %10609 = vmatprep.subr.bf16.mxu0 %v10399
          %10610 = vmatpush1.bf16.msra.mxu0 %v10398
          %10611 = vmatprep.subr.bf16.mxu0 %v10403
          %10612 = vmatpush1.bf16.msra.mxu0 %v10402
          %10613 = vmatprep.subr.bf16.mxu0 %v10407
          %10614 = vmatpush1.bf16.msra.mxu0 %v10406
          %10615 = vmatprep.subr.bf16.mxu0 %v10411
          %10616 = vmatpush1.bf16.msra.mxu0 %v10410
          %10617 = vmatprep.subr.bf16.mxu0 %v10415
          %10618 = vmatpush1.bf16.msra.mxu0 %v10414
          %10619 = vmatprep.mubr.bf16.mxu0 %v9755
          %10620 = vmatmul.mubr.bf16.gmra.mrb[0].mxu0 %v9754
          %v10621 = vpop.f32.mrb[0].mxu0
          %v10622 = vadd.f32 %v10581, %v10621
          %v10623 = vpop.f32.mrb[0].mxu0
          %v10624 = vadd.f32 %v10583, %v10623
          %v10625 = vpop.f32.mrb[0].mxu0
          %v10626 = vpop.f32.mrb[0].mxu0
          %10627 = vdwg.mxu0
          %10628 = vmatprep.subr.bf16.mxu0 %v10293
          %10629 = vmatpush1.bf16.msra.mxu0 %v10292
          %10630 = vmatprep.subr.bf16.mxu0 %v10297
          %10631 = vmatpush1.bf16.msra.mxu0 %v10296
          %10632 = vmatprep.subr.bf16.mxu0 %v10301
          %10633 = vmatpush1.bf16.msra.mxu0 %v10300
          %10634 = vmatprep.subr.bf16.mxu0 %v10305
          %10635 = vmatpush1.bf16.msra.mxu0 %v10304
          %10636 = vmatprep.subr.bf16.mxu0 %v10309
          %10637 = vmatpush1.bf16.msra.mxu0 %v10308
          %10638 = vmatprep.subr.bf16.mxu0 %v10313
          %10639 = vmatpush1.bf16.msra.mxu0 %v10312
          %10640 = vmatprep.subr.bf16.mxu0 %v10317
          %10641 = vmatpush1.bf16.msra.mxu0 %v10316
          %10642 = vmatprep.subr.bf16.mxu0 %v10321
          %10643 = vmatpush1.bf16.msra.mxu0 %v10320
          %10644 = vmatprep.subr.bf16.mxu0 %v10325
          %10645 = vmatpush1.bf16.msra.mxu0 %v10324
          %10646 = vmatprep.subr.bf16.mxu0 %v10329
          %10647 = vmatpush1.bf16.msra.mxu0 %v10328
          %10648 = vmatprep.subr.bf16.mxu0 %v10333
          %10649 = vmatpush1.bf16.msra.mxu0 %v10332
          %10650 = vmatprep.subr.bf16.mxu0 %v10337
          %10651 = vmatpush1.bf16.msra.mxu0 %v10336
          %10652 = vmatprep.subr.bf16.mxu0 %v10341
          %10653 = vmatpush1.bf16.msra.mxu0 %v10340
          %10654 = vmatprep.subr.bf16.mxu0 %v10345
          %10655 = vmatpush1.bf16.msra.mxu0 %v10344
          %10656 = vmatprep.subr.bf16.mxu0 %v10349
          %10657 = vmatpush1.bf16.msra.mxu0 %v10348
          %10658 = vmatprep.subr.bf16.mxu0 %v10353
          %10659 = vmatpush1.bf16.msra.mxu0 %v10352
          %10660 = vmatprep.mubr.bf16.mxu0 %v9753
          %10661 = vmatmul.mubr.bf16.gmra.mrb[0].mxu0 %v9752
          %v10662 = vpop.f32.mrb[0].mxu0
          %v10663 = vadd.f32 %v9897, %v10662
          %v10664 = vpop.f32.mrb[0].mxu0
          %v10665 = vadd.f32 %v9901, %v10664
          %v10666 = vpop.f32.mrb[0].mxu0
          %v10667 = vpop.f32.mrb[0].mxu0
          %10668 = vdwg.mxu0
          %10669 = vmatprep.subr.bf16.mxu0 %v10357
          %10670 = vmatpush1.bf16.msra.mxu0 %v10356
          %10671 = vmatprep.subr.bf16.mxu0 %v10361
          %10672 = vmatpush1.bf16.msra.mxu0 %v10360
          %10673 = vmatprep.subr.bf16.mxu0 %v10365
          %10674 = vmatpush1.bf16.msra.mxu0 %v10364
          %10675 = vmatprep.subr.bf16.mxu0 %v10369
          %10676 = vmatpush1.bf16.msra.mxu0 %v10368
          %10677 = vmatprep.subr.bf16.mxu0 %v10373
          %10678 = vmatpush1.bf16.msra.mxu0 %v10372
          %10679 = vmatprep.subr.bf16.mxu0 %v10377
          %10680 = vmatpush1.bf16.msra.mxu0 %v10376
          %10681 = vmatprep.subr.bf16.mxu0 %v10381
          %10682 = vmatpush1.bf16.msra.mxu0 %v10380
          %10683 = vmatprep.subr.bf16.mxu0 %v10385
          %10684 = vmatpush1.bf16.msra.mxu0 %v10384
          %10685 = vmatprep.subr.bf16.mxu0 %v10389
          %10686 = vmatpush1.bf16.msra.mxu0 %v10388
          %10687 = vmatprep.subr.bf16.mxu0 %v10393
          %10688 = vmatpush1.bf16.msra.mxu0 %v10392
          %10689 = vmatprep.subr.bf16.mxu0 %v10397
          %10690 = vmatpush1.bf16.msra.mxu0 %v10396
          %10691 = vmatprep.subr.bf16.mxu0 %v10401
          %10692 = vmatpush1.bf16.msra.mxu0 %v10400
          %10693 = vmatprep.subr.bf16.mxu0 %v10405
          %10694 = vmatpush1.bf16.msra.mxu0 %v10404
          %10695 = vmatprep.subr.bf16.mxu0 %v10409
          %10696 = vmatpush1.bf16.msra.mxu0 %v10408
          %10697 = vmatprep.subr.bf16.mxu0 %v10413
          %10698 = vmatpush1.bf16.msra.mxu0 %v10412
          %10699 = vmatprep.subr.bf16.mxu0 %v10417
          %10700 = vmatpush1.bf16.msra.mxu0 %v10416
          %10701 = vmatprep.mubr.bf16.mxu0 %v9755
          %10702 = vmatmul.mubr.bf16.gmra.mrb[0].mxu0 %v9754
          %v10703 = vpop.f32.mrb[0].mxu0
          %v10704 = vadd.f32 %v10663, %v10703
          %v10705 = vpop.f32.mrb[0].mxu0
          %v10706 = vadd.f32 %v10665, %v10705
          %v10707 = vpop.f32.mrb[0].mxu0
          %v10708 = vpop.f32.mrb[0].mxu0
          %10709 = vdwg.mxu0
          %v10710 = vld [vmem:[%s7] sm:$0xff]
          %v10711 = vld [vmem:[%s7 + $0x8] sm:$0xff]
          %v10712 = vld [vmem:[%s7 + $0x10] sm:$0xff]
          %v10713 = vld [vmem:[%s7 + $0x18] sm:$0xff]
          %v10714 = vld [vmem:[%s7 + $0x20] sm:$0xff]
          %v10715 = vld [vmem:[%s7 + $0x28] sm:$0xff]
          %v10716 = vld [vmem:[%s7 + $0x30] sm:$0xff]
          %v10717 = vld [vmem:[%s7 + $0x38] sm:$0xff]
          %v10718 = vld [vmem:[%s7 + $0x40] sm:$0xff]
          %v10719 = vld [vmem:[%s7 + $0x48] sm:$0xff]
          %v10720 = vld [vmem:[%s7 + $0x50] sm:$0xff]
          %v10721 = vld [vmem:[%s7 + $0x58] sm:$0xff]
          %v10722 = vld [vmem:[%s7 + $0x60] sm:$0xff]
          %v10723 = vld [vmem:[%s7 + $0x68] sm:$0xff]
          %v10724 = vld [vmem:[%s7 + $0x70] sm:$0xff]
          %v10725 = vld [vmem:[%s7 + $0x78] sm:$0xff]
          %v10726 = vld [vmem:[%s7 + $0x80] sm:$0xff]
          %v10727 = vld [vmem:[%s7 + $0x88] sm:$0xff]
          %v10728 = vld [vmem:[%s7 + $0x90] sm:$0xff]
          %v10729 = vld [vmem:[%s7 + $0x98] sm:$0xff]
          %v10730 = vld [vmem:[%s7 + $0xa0] sm:$0xff]
          %v10731 = vld [vmem:[%s7 + $0xa8] sm:$0xff]
          %v10732 = vld [vmem:[%s7 + $0xb0] sm:$0xff]
          %v10733 = vld [vmem:[%s7 + $0xb8] sm:$0xff]
          %v10734 = vld [vmem:[%s7 + $0xc0] sm:$0xff]
          %v10735 = vld [vmem:[%s7 + $0xc8] sm:$0xff]
          %v10736 = vld [vmem:[%s7 + $0xd0] sm:$0xff]
          %v10737 = vld [vmem:[%s7 + $0xd8] sm:$0xff]
          %v10738 = vld [vmem:[%s7 + $0xe0] sm:$0xff]
          %v10739 = vld [vmem:[%s7 + $0xe8] sm:$0xff]
          %v10740 = vld [vmem:[%s7 + $0xf0] sm:$0xff]
          %v10741 = vld [vmem:[%s7 + $0xf8] sm:$0xff]
          %v10742 = vld [vmem:[%s7 + $0x100] sm:$0xff]
          %v10743 = vld [vmem:[%s7 + $0x108] sm:$0xff]
          %v10744 = vld [vmem:[%s7 + $0x110] sm:$0xff]
          %v10745 = vld [vmem:[%s7 + $0x118] sm:$0xff]
          %v10746 = vld [vmem:[%s7 + $0x120] sm:$0xff]
          %v10747 = vld [vmem:[%s7 + $0x128] sm:$0xff]
          %v10748 = vld [vmem:[%s7 + $0x130] sm:$0xff]
          %v10749 = vld [vmem:[%s7 + $0x138] sm:$0xff]
          %v10750 = vld [vmem:[%s7 + $0x140] sm:$0xff]
          %v10751 = vld [vmem:[%s7 + $0x148] sm:$0xff]
          %v10752 = vld [vmem:[%s7 + $0x150] sm:$0xff]
          %v10753 = vld [vmem:[%s7 + $0x158] sm:$0xff]
          %v10754 = vld [vmem:[%s7 + $0x160] sm:$0xff]
          %v10755 = vld [vmem:[%s7 + $0x168] sm:$0xff]
          %v10756 = vld [vmem:[%s7 + $0x170] sm:$0xff]
          %v10757 = vld [vmem:[%s7 + $0x178] sm:$0xff]
          %v10758 = vld [vmem:[%s7 + $0x180] sm:$0xff]
          %v10759 = vld [vmem:[%s7 + $0x188] sm:$0xff]
          %v10760 = vld [vmem:[%s7 + $0x190] sm:$0xff]
          %v10761 = vld [vmem:[%s7 + $0x198] sm:$0xff]
          %v10762 = vld [vmem:[%s7 + $0x1a0] sm:$0xff]
          %v10763 = vld [vmem:[%s7 + $0x1a8] sm:$0xff]
          %v10764 = vld [vmem:[%s7 + $0x1b0] sm:$0xff]
          %v10765 = vld [vmem:[%s7 + $0x1b8] sm:$0xff]
          %v10766 = vld [vmem:[%s7 + $0x1c0] sm:$0xff]
          %v10767 = vld [vmem:[%s7 + $0x1c8] sm:$0xff]
          %v10768 = vld [vmem:[%s7 + $0x1d0] sm:$0xff]
          %v10769 = vld [vmem:[%s7 + $0x1d8] sm:$0xff]
          %v10770 = vld [vmem:[%s7 + $0x1e0] sm:$0xff]
          %v10771 = vld [vmem:[%s7 + $0x1e8] sm:$0xff]
          %v10772 = vld [vmem:[%s7 + $0x1f0] sm:$0xff]
          %v10773 = vld [vmem:[%s7 + $0x1f8] sm:$0xff]
          %v10774 = vld [vmem:[%s8] sm:$0x1]
          %v10776 = vlaneseq
          %v10777 = vshrl.u32 %v10776, 7
          %v10778 = vsub.s32 0, %v10777
          %v10779 = vrot.slane %v10774, %v10778
          %10781 = vmatprep.subr.mxu0 0.0
          %10782 = vmatpush1.msra.mxu0 %v10710
          %10783 = vmatprep.subr.mxu0 0.0
          %10784 = vmatpush1.msra.mxu0 %v10711
          %10785 = vmatprep.subr.mxu0 0.0
          %10786 = vmatpush1.msra.mxu0 %v10712
          %10787 = vmatprep.subr.mxu0 0.0
          %10788 = vmatpush1.msra.mxu0 %v10713
          %10789 = vmatprep.subr.mxu0 0.0
          %10790 = vmatpush1.msra.mxu0 %v10714
          %10791 = vmatprep.subr.mxu0 0.0
          %10792 = vmatpush1.msra.mxu0 %v10715
          %10793 = vmatprep.subr.mxu0 0.0
          %10794 = vmatpush1.msra.mxu0 %v10716
          %10795 = vmatprep.subr.mxu0 0.0
          %10796 = vmatpush1.msra.mxu0 %v10717
          %10797 = vmatprep.subr.mxu0 0.0
          %10798 = vmatpush1.msra.mxu0 %v10718
          %10799 = vmatprep.subr.mxu0 0.0
          %10800 = vmatpush1.msra.mxu0 %v10719
          %10801 = vmatprep.subr.mxu0 0.0
          %10802 = vmatpush1.msra.mxu0 %v10720
          %10803 = vmatprep.subr.mxu0 0.0
          %10804 = vmatpush1.msra.mxu0 %v10721
          %10805 = vmatprep.subr.mxu0 0.0
          %10806 = vmatpush1.msra.mxu0 %v10722
          %10807 = vmatprep.subr.mxu0 0.0
          %10808 = vmatpush1.msra.mxu0 %v10723
          %10809 = vmatprep.subr.mxu0 0.0
          %10810 = vmatpush1.msra.mxu0 %v10724
          %10811 = vmatprep.subr.mxu0 0.0
          %10812 = vmatpush1.msra.mxu0 %v10725
          %10813 = vmatprep.subr.mxu0 0.0
          %10814 = vmatpush1.msra.mxu0 %v10726
          %10815 = vmatprep.subr.mxu0 0.0
          %10816 = vmatpush1.msra.mxu0 %v10727
          %10817 = vmatprep.subr.mxu0 0.0
          %10818 = vmatpush1.msra.mxu0 %v10728
          %10819 = vmatprep.subr.mxu0 0.0
          %10820 = vmatpush1.msra.mxu0 %v10729
          %10821 = vmatprep.subr.mxu0 0.0
          %10822 = vmatpush1.msra.mxu0 %v10730
          %10823 = vmatprep.subr.mxu0 0.0
          %10824 = vmatpush1.msra.mxu0 %v10731
          %10825 = vmatprep.subr.mxu0 0.0
          %10826 = vmatpush1.msra.mxu0 %v10732
          %10827 = vmatprep.subr.mxu0 0.0
          %10828 = vmatpush1.msra.mxu0 %v10733
          %10829 = vmatprep.subr.mxu0 0.0
          %10830 = vmatpush1.msra.mxu0 %v10734
          %10831 = vmatprep.subr.mxu0 0.0
          %10832 = vmatpush1.msra.mxu0 %v10735
          %10833 = vmatprep.subr.mxu0 0.0
          %10834 = vmatpush1.msra.mxu0 %v10736
          %10835 = vmatprep.subr.mxu0 0.0
          %10836 = vmatpush1.msra.mxu0 %v10737
          %10837 = vmatprep.subr.mxu0 0.0
          %10838 = vmatpush1.msra.mxu0 %v10738
          %10839 = vmatprep.subr.mxu0 0.0
          %10840 = vmatpush1.msra.mxu0 %v10739
          %10841 = vmatprep.subr.mxu0 0.0
          %10842 = vmatpush1.msra.mxu0 %v10740
          %10843 = vmatprep.subr.mxu0 0.0
          %10844 = vmatpush1.msra.mxu0 %v10741
          %10845 = vmatprep.mubr.f32.mxu0 %v10624
          %10846 = vmatmul.mubr.f32.gmra.mrb[0].mxu0 %v10622
          %v10847 = vpop.f32.mrb[0].mxu0
          %v10848 = vadd.f32 %v10779, %v10847
          %v10849 = vpop.f32.mrb[0].mxu0
          %10850 = vdwg.mxu0
          %10851 = vmatprep.subr.mxu0 0.0
          %10852 = vmatpush1.msra.mxu0 %v10742
          %10853 = vmatprep.subr.mxu0 0.0
          %10854 = vmatpush1.msra.mxu0 %v10743
          %10855 = vmatprep.subr.mxu0 0.0
          %10856 = vmatpush1.msra.mxu0 %v10744
          %10857 = vmatprep.subr.mxu0 0.0
          %10858 = vmatpush1.msra.mxu0 %v10745
          %10859 = vmatprep.subr.mxu0 0.0
          %10860 = vmatpush1.msra.mxu0 %v10746
          %10861 = vmatprep.subr.mxu0 0.0
          %10862 = vmatpush1.msra.mxu0 %v10747
          %10863 = vmatprep.subr.mxu0 0.0
          %10864 = vmatpush1.msra.mxu0 %v10748
          %10865 = vmatprep.subr.mxu0 0.0
          %10866 = vmatpush1.msra.mxu0 %v10749
          %10867 = vmatprep.subr.mxu0 0.0
          %10868 = vmatpush1.msra.mxu0 %v10750
          %10869 = vmatprep.subr.mxu0 0.0
          %10870 = vmatpush1.msra.mxu0 %v10751
          %10871 = vmatprep.subr.mxu0 0.0
          %10872 = vmatpush1.msra.mxu0 %v10752
          %10873 = vmatprep.subr.mxu0 0.0
          %10874 = vmatpush1.msra.mxu0 %v10753
          %10875 = vmatprep.subr.mxu0 0.0
          %10876 = vmatpush1.msra.mxu0 %v10754
          %10877 = vmatprep.subr.mxu0 0.0
          %10878 = vmatpush1.msra.mxu0 %v10755
          %10879 = vmatprep.subr.mxu0 0.0
          %10880 = vmatpush1.msra.mxu0 %v10756
          %10881 = vmatprep.subr.mxu0 0.0
          %10882 = vmatpush1.msra.mxu0 %v10757
          %10883 = vmatprep.subr.mxu0 0.0
          %10884 = vmatpush1.msra.mxu0 %v10758
          %10885 = vmatprep.subr.mxu0 0.0
          %10886 = vmatpush1.msra.mxu0 %v10759
          %10887 = vmatprep.subr.mxu0 0.0
          %10888 = vmatpush1.msra.mxu0 %v10760
          %10889 = vmatprep.subr.mxu0 0.0
          %10890 = vmatpush1.msra.mxu0 %v10761
          %10891 = vmatprep.subr.mxu0 0.0
          %10892 = vmatpush1.msra.mxu0 %v10762
          %10893 = vmatprep.subr.mxu0 0.0
          %10894 = vmatpush1.msra.mxu0 %v10763
          %10895 = vmatprep.subr.mxu0 0.0
          %10896 = vmatpush1.msra.mxu0 %v10764
          %10897 = vmatprep.subr.mxu0 0.0
          %10898 = vmatpush1.msra.mxu0 %v10765
          %10899 = vmatprep.subr.mxu0 0.0
          %10900 = vmatpush1.msra.mxu0 %v10766
          %10901 = vmatprep.subr.mxu0 0.0
          %10902 = vmatpush1.msra.mxu0 %v10767
          %10903 = vmatprep.subr.mxu0 0.0
          %10904 = vmatpush1.msra.mxu0 %v10768
          %10905 = vmatprep.subr.mxu0 0.0
          %10906 = vmatpush1.msra.mxu0 %v10769
          %10907 = vmatprep.subr.mxu0 0.0
          %10908 = vmatpush1.msra.mxu0 %v10770
          %10909 = vmatprep.subr.mxu0 0.0
          %10910 = vmatpush1.msra.mxu0 %v10771
          %10911 = vmatprep.subr.mxu0 0.0
          %10912 = vmatpush1.msra.mxu0 %v10772
          %10913 = vmatprep.subr.mxu0 0.0
          %10914 = vmatpush1.msra.mxu0 %v10773
          %10915 = vmatprep.mubr.f32.mxu0 %v10706
          %10916 = vmatmul.mubr.f32.gmra.mrb[0].mxu0 %v10704
          %v10917 = vpop.f32.mrb[0].mxu0
          %v10918 = vadd.f32 %v10848, %v10917
          %v10919 = vpop.f32.mrb[0].mxu0
          %10920 = vdwg.mxu0
          %vm10921 = vcmask 9216
          %v10922 = vsel %vm10921, %v10918, -inf
          %10923 = vmax.xlane.f32.xlu0 %v10922
          %v10924 = vpop.xlane.xlu0 %10923
          %v10925 = vsub.f32 %v10918, %v10924
          %v10926 = vmul.f32 %v10925, 1.442695
          %v10927 = vpow.pop %v10926
          %v10928 = vsel %vm10921, %v10927, 0.0
          %10929 = vadd.xlane.f32.xlu0 %v10928
          %v10930 = vpop.xlane.xlu0 %10929
          %v10931 = vlog2.pop %v10930
          %v10932 = vmul.f32 %v10931, 0.6931472
          %v10933 = vsub.f32 %v10925, %v10932
          %10934 = vst.msk [vmem:[#allocation4] sm:$0x3] %vm10921, %v10933
        $region64: #{net_forward.1} parent=55 // pred_fallthru
          _
        // Predicated region
        $region65: #{net_forward.1} parent=55 // pred_check
          %p10935 = pneg %p228
        $region66: #{net_forward.1} parent=55 // pred_check_branch
          %10937 = sbr.rel (%p10935) target = $region68
        $region67: #{net_forward.1} parent=55 // pred_region
          %s10939 = ssub.s32 32, 32
          %10940 = vsyncadd [#allocation5], %s10939
          %s10942 = sshll.u32 [#allocation4], 4
          %s10943 = int_to_ptr.vmem [resolvable:$true] %s10942
          %10945 = dma.vmem_to_hbm [thread:$0]  %s10943, 32, %s9, [#allocation5]
        $region68: #{net_forward.1} parent=55 // pred_fallthru
          _
        // Predicated region
        $region69: #{net_forward.1} parent=55 // pred_check
          %p10946 = pneg %p228
        $region70: #{net_forward.1} parent=55 // pred_check_branch
          %10948 = sbr.rel (%p10946) target = $region72
        $region71: #{net_forward.1} parent=55 // pred_region
          %10949 = dma.done [#allocation5], 32
        $region72: #{net_forward.1} parent=55 // pred_fallthru
          _
      $region56: #{net_forward.1} parent=5 // pred_fallthru
        _
      %p10950 = scmp.le.s32.totalorder 2, %s16
      // Predicated region
      $region73: #{net_forward.1} parent=5 // pred_check
        %p10951 = pneg %p10950
      $region74: #{net_forward.1} parent=5 // pred_check_branch
        %10953 = sbr.rel (%p10951) target = $region76
      $region75: #{net_forward.1} parent=5 // pred_region
        %s10954 = ssub.s32 %s16, 2
      $region76: #{net_forward.1} parent=5 // pred_fallthru
        _
    $region6: #{net_forward.1} parent=1 // loop_footer
      %s20 = sadd.s32 1, %s16
    $region7: #{net_forward.1} parent=1 // loop_footer_branch
      %15 = sbr.rel target = $region3
    $region8: #{net_forward.1} parent=1 // loop_exit
      _
    %10955 = vsyncpa [#allocation5], 1
    %s10956 = scalar_lea.sflag [#allocation5], 1
    %10957 = vsyncpa %s10956, 1

</llo_original>
